<compile_context>
chip_gen: v7x
topology: tpu7x:2x2x1
jax: 0.10.0
libtpu: 0.0.40
codegen_flags: <defaults>
</compile_context>

<pallas_src>
import functools

import jax
import jax.numpy as jnp
from jax.experimental import pallas as pl
from jax.experimental.pallas import tpu as pltpu


# ------------------------------ fused kernel ---------------------------------

def _decoder_fused_kernel(x_ref, mask_ref,
                          w1, b1, w2, b2, w3, b3, w4, b4, w5, b5, w6, b6,
                          o_ref, *, width):
    """All six conv3x3 + bias + LeakyReLU(0.1) stages for one batch element.

    x_ref:    (1, Cin0, HW)   f32, channel-major, spatial flattened on lanes
    mask_ref: (9, HW)         f32 {0,1} border-validity mask per 3x3 tap
    w{i}:     (9, Cout, Cin)  bf16 per-tap weights (channel_shuffle folded in)
    b{i}:     (Cout, 1)       f32 bias
    o_ref:    (1, 32, HW)     f32, lane-dense output
    """
    hw = x_ref.shape[2]

    def conv3x3_lrelu(act_f32, w_ref, b_ref):
        # 9 accumulated MXU dots, one per (dy, dx) tap.  The spatial shift of
        # the activation is a lane rotation (XLU, has slack); invalid border
        # lanes are zeroed post-matmul with the precomputed f32 mask (VPU).
        x_bf = act_f32.astype(jnp.bfloat16)
        # Center tap (dy, dx) = (1, 1): no shift, no mask needed.
        acc = jnp.dot(w_ref[4], x_bf, preferred_element_type=jnp.float32)
        for k in range(9):
            if k == 4:
                continue
            dy, dx = divmod(k, 3)
            shift = (dy - 1) * width + (dx - 1)      # out[q] needs in[q + shift]
            x_k = pltpu.roll(act_f32, (-shift) % hw, axis=1).astype(jnp.bfloat16)
            part = jnp.dot(w_ref[k], x_k, preferred_element_type=jnp.float32)
            acc = acc + mask_ref[k:k + 1, :] * part  # (1, HW) broadcast, f32
        acc = acc + b_ref[...]                       # (Cout, 1) broadcast over lanes
        return jnp.maximum(acc, 0.1 * acc)           # LeakyReLU(0.1)

    act = x_ref[0]                                    # (Cin0, HW) f32
    for w_ref, b_ref in ((w1, b1), (w2, b2), (w3, b3),
                         (w4, b4), (w5, b5), (w6, b6)):
        act = conv3x3_lrelu(act, w_ref, b_ref)

    o_ref[0] = act.astype(o_ref.dtype)                # (32, HW) lane-dense store


def _border_masks(H, W):
    """(9, H*W) f32 {0,1} masks: tap (dy,dx) is valid at flattened pixel q."""
    q = jnp.arange(H * W, dtype=jnp.int32)
    y = q // W
    x = q % W
    rows = []
    for dy in range(3):
        for dx in range(3):
            valid = ((y + dy - 1 >= 0) & (y + dy - 1 < H) &
                     (x + dx - 1 >= 0) & (x + dx - 1 < W))
            rows.append(valid.astype(jnp.float32))
    return jnp.stack(rows, axis=0)


def decoder_forward(kernel_params, x_nchw):
    """Fused Decoder forward.  kernel_params from prepare_kernel_params()."""
    N, cin, H, W = x_nchw.shape
    hw = H * W
    x = x_nchw.reshape(N, cin, hw)                    # NCHW is already channel-major
    mask = _border_masks(H, W)

    ws = [kernel_params[f"w{i}"] for i in range(1, 7)]
    bs = [kernel_params[f"b{i}"] for i in range(1, 7)]
    cout_final = ws[-1].shape[1]

    in_specs = [
        pl.BlockSpec((1, cin, hw), lambda n: (n, 0, 0)),
        pl.BlockSpec(mask.shape, lambda n: (0, 0)),
    ]
    operands = [x, mask]
    for w, b in zip(ws, bs):
        # Constant across the grid; Pallas keeps the same block resident.
        in_specs.append(pl.BlockSpec(w.shape, lambda n: (0, 0, 0)))
        in_specs.append(pl.BlockSpec(b.shape, lambda n: (0, 0)))
        operands.append(w)
        operands.append(b)

    out = pl.pallas_call(
        functools.partial(_decoder_fused_kernel, width=W),
        out_shape=jax.ShapeDtypeStruct((N, cout_final, hw), x.dtype),
        grid=(N,),
        in_specs=in_specs,
        out_specs=pl.BlockSpec((1, cout_final, hw), lambda n: (n, 0, 0)),
        compiler_params=pltpu.CompilerParams(
            dimension_semantics=("parallel",)),
    )(*operands)

    return out.reshape(N, cout_final, H, W)


# --------------------------- parameter handling -------------------------------

def channel_shuffle_nhwc(x, groups):
    # PyTorch channel_shuffle on NCHW == this permutation of the channel axis.
    N, H, W, C = x.shape
    cpg = C // groups
    x = x.reshape(N, H, W, groups, cpg)
    x = jnp.transpose(x, (0, 1, 2, 4, 3))
    return x.reshape(N, H, W, C)


def grouped_oihw_to_dense_hwio(w_oihw, groups):
    """(Cout, Cin//groups, 3, 3) grouped weight -> block-diagonal dense HWIO."""
    Cout, Cin_g, kh, kw = w_oihw.shape
    Cin = Cin_g * groups
    Cout_g = Cout // groups
    w_hwio_g = jnp.transpose(w_oihw, (2, 3, 1, 0))            # (3,3,Cin_g,Cout)
    dense = jnp.zeros((kh, kw, Cin, Cout), w_oihw.dtype)
    for g in range(groups):
        dense = dense.at[:, :,
                         g * Cin_g:(g + 1) * Cin_g,
                         g * Cout_g:(g + 1) * Cout_g].set(
            w_hwio_g[:, :, :, g * Cout_g:(g + 1) * Cout_g])
    return dense


def init_decoder_params(key, in_channels, hidden_channels, groups):
    """Module-semantics params: dense HWIO f32 weights + f32 biases."""
    assert hidden_channels % groups == 0
    specs = [
        (hidden_channels, in_channels, 1),            # conv1
        (hidden_channels, hidden_channels, groups),   # conv2
        (hidden_channels, hidden_channels, groups),   # conv3
        (hidden_channels, hidden_channels, groups),   # conv4
        (64, hidden_channels, 1),                     # conv5
        (32, 64, 1),                                  # conv6
    ]
    params = {}
    for i, (cout, cin, g) in enumerate(specs, start=1):
        key, k_w, k_b = jax.random.split(key, 3)
        w_oihw = 0.1 * jax.random.normal(k_w, (cout, cin // g, 3, 3),
                                         dtype=jnp.float32)
        b = 0.05 * jax.random.normal(k_b, (cout,), dtype=jnp.float32)
        if g == 1:
            w_hwio = jnp.transpose(w_oihw, (2, 3, 1, 0))
        else:
            w_hwio = grouped_oihw_to_dense_hwio(w_oihw, g)
        params[f"w{i}"] = w_hwio
        params[f"b{i}"] = b
    return params


def prepare_kernel_params(params, groups):
    """Fold channel_shuffle into the Cin axis of w3/w4/w5, reshape HWIO weights
    to per-tap (9, Cout, Cin) bf16, biases to (Cout, 1) f32."""
    kparams = {}
    for i in range(1, 7):
        w = params[f"w{i}"]                                    # (3,3,Cin,Cout)
        if groups > 1 and i in (3, 4, 5):
            # shuffle: y[..., j] = x[..., perm[j]], perm[j] = (j % g)*cpg + j // g
            # => conv(shuffle(x), w) == conv(x, w indexed by perm_inv on Cin),
            #    perm_inv[k] = (k % cpg)*g + k // cpg
            C = w.shape[2]
            cpg = C // groups
            k = jnp.arange(C)
            perm_inv = (k % cpg) * groups + k // cpg
            w = jnp.take(w, perm_inv, axis=2)
        kh, kw, cin, cout = w.shape
        w = jnp.transpose(w, (0, 1, 3, 2)).reshape(kh * kw, cout, cin)
        kparams[f"w{i}"] = w.astype(jnp.bfloat16)              # (9, Cout, Cin)
        kparams[f"b{i}"] = params[f"b{i}"].reshape(cout, 1).astype(jnp.float32)
    return kparams


# ------------------------- pure-JAX reference check ---------------------------
# Reference uses the ORIGINAL (unfolded) weights + runtime channel_shuffle, so
# it independently validates both the shuffle-folding and the per-tap conv.
# Conv inputs are cast to bf16 (f32 accumulation) to match the kernel's MXU
# precision.

def _ref_conv3x3_lrelu(x_nhwc, w_hwio, bias):
    y = jax.lax.conv_general_dilated(
        x_nhwc.astype(jnp.bfloat16), w_hwio.astype(jnp.bfloat16),
        window_strides=(1, 1), padding="SAME",
        dimension_numbers=("NHWC", "HWIO", "NHWC"),
        preferred_element_type=jnp.float32)
    y = y + bias[None, None, None, :]
    return jnp.where(y >= 0.0, y, 0.1 * y)


def _ref_decoder_forward(params, x_nchw, groups):
    x = jnp.transpose(x_nchw, (0, 2, 3, 1))
    out = _ref_conv3x3_lrelu(x, params["w1"], params["b1"])
    out = _ref_conv3x3_lrelu(out, params["w2"], params["b2"])
    if groups > 1:
        out = channel_shuffle_nhwc(out, groups)
    out = _ref_conv3x3_lrelu(out, params["w3"], params["b3"])
    if groups > 1:
        out = channel_shuffle_nhwc(out, groups)
    out = _ref_conv3x3_lrelu(out, params["w4"], params["b4"])
    if groups > 1:
        out = channel_shuffle_nhwc(out, groups)
    out = _ref_conv3x3_lrelu(out, params["w5"], params["b5"])
    out = _ref_conv3x3_lrelu(out, params["w6"], params["b6"])
    return jnp.transpose(out, (0, 3, 1, 2))


# ----------------------------------- main -------------------------------------

if __name__ == "__main__":
    batch, in_channels, H, W = 2, 4, 16, 16
    hidden_channels, groups = 32, 2

    key = jax.random.PRNGKey(0)
    key, k_x, k_p = jax.random.split(key, 3)

    x = jax.random.normal(k_x, (batch, in_channels, H, W), dtype=jnp.float32)
    params = init_decoder_params(k_p, in_channels, hidden_channels, groups)
    kparams = prepare_kernel_params(params, groups)

    fwd = jax.jit(decoder_forward)
    out = jax.block_until_ready(fwd(kparams, x))
    assert out.shape == (batch, 32, H, W), out.shape

    ref = jax.block_until_ready(_ref_decoder_forward(params, x, groups))
    max_err = float(jnp.max(jnp.abs(out - ref)))
    # bf16 rounding-boundary noise compounded over 6 layers is O(3e-3); real
    # bugs (shift/mask/shuffle/bias) are O(0.1-1), so 3e-2 is still a sharp test.
    assert jnp.allclose(out, ref, atol=3e-2, rtol=3e-2), max_err

    print("KERNEL_OK")
</pallas_src>

<mosaic_0001>
module attributes {stable_mosaic.version = 11 : i64} {
  func.func @_decoder_fused_kernel(%arg0: i32, %arg1: memref<1x4x256xf32, #tpu.memory_space<vmem>>, %arg2: memref<9x256xf32, #tpu.memory_space<vmem>>, %arg3: memref<9x32x4xbf16, #tpu.memory_space<vmem>>, %arg4: memref<32x1xf32, #tpu.memory_space<vmem>>, %arg5: memref<9x32x32xbf16, #tpu.memory_space<vmem>>, %arg6: memref<32x1xf32, #tpu.memory_space<vmem>>, %arg7: memref<9x32x32xbf16, #tpu.memory_space<vmem>>, %arg8: memref<32x1xf32, #tpu.memory_space<vmem>>, %arg9: memref<9x32x32xbf16, #tpu.memory_space<vmem>>, %arg10: memref<32x1xf32, #tpu.memory_space<vmem>>, %arg11: memref<9x64x32xbf16, #tpu.memory_space<vmem>>, %arg12: memref<64x1xf32, #tpu.memory_space<vmem>>, %arg13: memref<9x32x64xbf16, #tpu.memory_space<vmem>>, %arg14: memref<32x1xf32, #tpu.memory_space<vmem>>, %arg15: memref<1x32x256xf32, #tpu.memory_space<vmem>>) attributes {dimension_semantics = [#tpu.dimension_semantics<parallel>], iteration_bounds = array<i64: 2>, scalar_prefetch = 0 : i64, scratch_operands = 0 : i64, tpu.core_type = #tpu.core_type<tc>, window_params = [{transform_indices = @transform_0, window_bounds = array<i64: 1, 4, 256>}, {pipeline_mode = #tpu.pipeline_mode<synchronous>, transform_indices = @transform_1, window_bounds = array<i64: 9, 256>}, {pipeline_mode = #tpu.pipeline_mode<synchronous>, transform_indices = @transform_2, window_bounds = array<i64: 9, 32, 4>}, {pipeline_mode = #tpu.pipeline_mode<synchronous>, transform_indices = @transform_3, window_bounds = array<i64: 32, 1>}, {pipeline_mode = #tpu.pipeline_mode<synchronous>, transform_indices = @transform_4, window_bounds = array<i64: 9, 32, 32>}, {pipeline_mode = #tpu.pipeline_mode<synchronous>, transform_indices = @transform_5, window_bounds = array<i64: 32, 1>}, {pipeline_mode = #tpu.pipeline_mode<synchronous>, transform_indices = @transform_6, window_bounds = array<i64: 9, 32, 32>}, {pipeline_mode = #tpu.pipeline_mode<synchronous>, transform_indices = @transform_7, window_bounds = array<i64: 32, 1>}, {pipeline_mode = #tpu.pipeline_mode<synchronous>, transform_indices = @transform_8, window_bounds = array<i64: 9, 32, 32>}, {pipeline_mode = #tpu.pipeline_mode<synchronous>, transform_indices = @transform_9, window_bounds = array<i64: 32, 1>}, {pipeline_mode = #tpu.pipeline_mode<synchronous>, transform_indices = @transform_10, window_bounds = array<i64: 9, 64, 32>}, {pipeline_mode = #tpu.pipeline_mode<synchronous>, transform_indices = @transform_11, window_bounds = array<i64: 64, 1>}, {pipeline_mode = #tpu.pipeline_mode<synchronous>, transform_indices = @transform_12, window_bounds = array<i64: 9, 32, 64>}, {pipeline_mode = #tpu.pipeline_mode<synchronous>, transform_indices = @transform_13, window_bounds = array<i64: 32, 1>}, {transform_indices = @transform_14, window_bounds = array<i64: 1, 32, 256>}]} {
    %c0 = arith.constant 0 : index
    %c0_0 = arith.constant 0 : index
    %c0_1 = arith.constant 0 : index
    %0 = vector.load %arg1[%c0, %c0_0, %c0_1] : memref<1x4x256xf32, #tpu.memory_space<vmem>>, vector<1x4x256xf32>
    %1 = vector.shape_cast %0 : vector<1x4x256xf32> to vector<4x256xf32>
    %2 = arith.truncf %1 : vector<4x256xf32> to vector<4x256xbf16>
    %c4 = arith.constant 4 : index
    %c0_2 = arith.constant 0 : index
    %c0_3 = arith.constant 0 : index
    %3 = vector.load %arg3[%c4, %c0_2, %c0_3] : memref<9x32x4xbf16, #tpu.memory_space<vmem>>, vector<1x32x4xbf16>
    %4 = vector.shape_cast %3 : vector<1x32x4xbf16> to vector<32x4xbf16>
    %cst = arith.constant dense<0.000000e+00> : vector<32x256xf32>
    %5 = tpu.matmul %4, %2, %cst {dimension_numbers = #tpu.dot_dimension_numbers<[1], [0], [0], [1], [0, 0, 1, 1], [], []>} : vector<32x4xbf16>, vector<4x256xbf16>, vector<32x256xf32> -> vector<32x256xf32>
    %c17_i32 = arith.constant 17 : i32
    %6 = tpu.dynamic_rotate %1 by %c17_i32 dim 1 : vector<4x256xf32>, i32 -> vector<4x256xf32>
    %7 = arith.truncf %6 : vector<4x256xf32> to vector<4x256xbf16>
    %c0_4 = arith.constant 0 : index
    %c0_5 = arith.constant 0 : index
    %c0_6 = arith.constant 0 : index
    %8 = vector.load %arg3[%c0_4, %c0_5, %c0_6] : memref<9x32x4xbf16, #tpu.memory_space<vmem>>, vector<1x32x4xbf16>
    %9 = vector.shape_cast %8 : vector<1x32x4xbf16> to vector<32x4xbf16>
    %cst_7 = arith.constant dense<0.000000e+00> : vector<32x256xf32>
    %10 = tpu.matmul %9, %7, %cst_7 {dimension_numbers = #tpu.dot_dimension_numbers<[1], [0], [0], [1], [0, 0, 1, 1], [], []>} : vector<32x4xbf16>, vector<4x256xbf16>, vector<32x256xf32> -> vector<32x256xf32>
    %c0_8 = arith.constant 0 : index
    %c0_9 = arith.constant 0 : index
    %11 = vector.load %arg2[%c0_8, %c0_9] : memref<9x256xf32, #tpu.memory_space<vmem>>, vector<1x256xf32>
    %12 = vector.broadcast %11 : vector<1x256xf32> to vector<32x256xf32>
    %13 = arith.mulf %12, %10 : vector<32x256xf32>
    %14 = arith.addf %5, %13 : vector<32x256xf32>
    %c16_i32 = arith.constant 16 : i32
    %15 = tpu.dynamic_rotate %1 by %c16_i32 dim 1 : vector<4x256xf32>, i32 -> vector<4x256xf32>
    %16 = arith.truncf %15 : vector<4x256xf32> to vector<4x256xbf16>
    %c1 = arith.constant 1 : index
    %c0_10 = arith.constant 0 : index
    %c0_11 = arith.constant 0 : index
    %17 = vector.load %arg3[%c1, %c0_10, %c0_11] : memref<9x32x4xbf16, #tpu.memory_space<vmem>>, vector<1x32x4xbf16>
    %18 = vector.shape_cast %17 : vector<1x32x4xbf16> to vector<32x4xbf16>
    %cst_12 = arith.constant dense<0.000000e+00> : vector<32x256xf32>
    %19 = tpu.matmul %18, %16, %cst_12 {dimension_numbers = #tpu.dot_dimension_numbers<[1], [0], [0], [1], [0, 0, 1, 1], [], []>} : vector<32x4xbf16>, vector<4x256xbf16>, vector<32x256xf32> -> vector<32x256xf32>
    %c1_13 = arith.constant 1 : index
    %c0_14 = arith.constant 0 : index
    %20 = vector.load %arg2[%c1_13, %c0_14] : memref<9x256xf32, #tpu.memory_space<vmem>>, vector<1x256xf32>
    %21 = vector.broadcast %20 : vector<1x256xf32> to vector<32x256xf32>
    %22 = arith.mulf %21, %19 : vector<32x256xf32>
    %23 = arith.addf %14, %22 : vector<32x256xf32>
    %c15_i32 = arith.constant 15 : i32
    %24 = tpu.dynamic_rotate %1 by %c15_i32 dim 1 : vector<4x256xf32>, i32 -> vector<4x256xf32>
    %25 = arith.truncf %24 : vector<4x256xf32> to vector<4x256xbf16>
    %c2 = arith.constant 2 : index
    %c0_15 = arith.constant 0 : index
    %c0_16 = arith.constant 0 : index
    %26 = vector.load %arg3[%c2, %c0_15, %c0_16] : memref<9x32x4xbf16, #tpu.memory_space<vmem>>, vector<1x32x4xbf16>
    %27 = vector.shape_cast %26 : vector<1x32x4xbf16> to vector<32x4xbf16>
    %cst_17 = arith.constant dense<0.000000e+00> : vector<32x256xf32>
    %28 = tpu.matmul %27, %25, %cst_17 {dimension_numbers = #tpu.dot_dimension_numbers<[1], [0], [0], [1], [0, 0, 1, 1], [], []>} : vector<32x4xbf16>, vector<4x256xbf16>, vector<32x256xf32> -> vector<32x256xf32>
    %c2_18 = arith.constant 2 : index
    %c0_19 = arith.constant 0 : index
    %29 = vector.load %arg2[%c2_18, %c0_19] : memref<9x256xf32, #tpu.memory_space<vmem>>, vector<1x256xf32>
    %30 = vector.broadcast %29 : vector<1x256xf32> to vector<32x256xf32>
    %31 = arith.mulf %30, %28 : vector<32x256xf32>
    %32 = arith.addf %23, %31 : vector<32x256xf32>
    %c1_i32 = arith.constant 1 : i32
    %33 = tpu.dynamic_rotate %1 by %c1_i32 dim 1 : vector<4x256xf32>, i32 -> vector<4x256xf32>
    %34 = arith.truncf %33 : vector<4x256xf32> to vector<4x256xbf16>
    %c3 = arith.constant 3 : index
    %c0_20 = arith.constant 0 : index
    %c0_21 = arith.constant 0 : index
    %35 = vector.load %arg3[%c3, %c0_20, %c0_21] : memref<9x32x4xbf16, #tpu.memory_space<vmem>>, vector<1x32x4xbf16>
    %36 = vector.shape_cast %35 : vector<1x32x4xbf16> to vector<32x4xbf16>
    %cst_22 = arith.constant dense<0.000000e+00> : vector<32x256xf32>
    %37 = tpu.matmul %36, %34, %cst_22 {dimension_numbers = #tpu.dot_dimension_numbers<[1], [0], [0], [1], [0, 0, 1, 1], [], []>} : vector<32x4xbf16>, vector<4x256xbf16>, vector<32x256xf32> -> vector<32x256xf32>
    %c3_23 = arith.constant 3 : index
    %c0_24 = arith.constant 0 : index
    %38 = vector.load %arg2[%c3_23, %c0_24] : memref<9x256xf32, #tpu.memory_space<vmem>>, vector<1x256xf32>
    %39 = vector.broadcast %38 : vector<1x256xf32> to vector<32x256xf32>
    %40 = arith.mulf %39, %37 : vector<32x256xf32>
    %41 = arith.addf %32, %40 : vector<32x256xf32>
    %c255_i32 = arith.constant 255 : i32
    %42 = tpu.dynamic_rotate %1 by %c255_i32 dim 1 : vector<4x256xf32>, i32 -> vector<4x256xf32>
    %43 = arith.truncf %42 : vector<4x256xf32> to vector<4x256xbf16>
    %c5 = arith.constant 5 : index
    %c0_25 = arith.constant 0 : index
    %c0_26 = arith.constant 0 : index
    %44 = vector.load %arg3[%c5, %c0_25, %c0_26] : memref<9x32x4xbf16, #tpu.memory_space<vmem>>, vector<1x32x4xbf16>
    %45 = vector.shape_cast %44 : vector<1x32x4xbf16> to vector<32x4xbf16>
    %cst_27 = arith.constant dense<0.000000e+00> : vector<32x256xf32>
    %46 = tpu.matmul %45, %43, %cst_27 {dimension_numbers = #tpu.dot_dimension_numbers<[1], [0], [0], [1], [0, 0, 1, 1], [], []>} : vector<32x4xbf16>, vector<4x256xbf16>, vector<32x256xf32> -> vector<32x256xf32>
    %c5_28 = arith.constant 5 : index
    %c0_29 = arith.constant 0 : index
    %47 = vector.load %arg2[%c5_28, %c0_29] : memref<9x256xf32, #tpu.memory_space<vmem>>, vector<1x256xf32>
    %48 = vector.broadcast %47 : vector<1x256xf32> to vector<32x256xf32>
    %49 = arith.mulf %48, %46 : vector<32x256xf32>
    %50 = arith.addf %41, %49 : vector<32x256xf32>
    %c241_i32 = arith.constant 241 : i32
    %51 = tpu.dynamic_rotate %1 by %c241_i32 dim 1 : vector<4x256xf32>, i32 -> vector<4x256xf32>
    %52 = arith.truncf %51 : vector<4x256xf32> to vector<4x256xbf16>
    %c6 = arith.constant 6 : index
    %c0_30 = arith.constant 0 : index
    %c0_31 = arith.constant 0 : index
    %53 = vector.load %arg3[%c6, %c0_30, %c0_31] : memref<9x32x4xbf16, #tpu.memory_space<vmem>>, vector<1x32x4xbf16>
    %54 = vector.shape_cast %53 : vector<1x32x4xbf16> to vector<32x4xbf16>
    %cst_32 = arith.constant dense<0.000000e+00> : vector<32x256xf32>
    %55 = tpu.matmul %54, %52, %cst_32 {dimension_numbers = #tpu.dot_dimension_numbers<[1], [0], [0], [1], [0, 0, 1, 1], [], []>} : vector<32x4xbf16>, vector<4x256xbf16>, vector<32x256xf32> -> vector<32x256xf32>
    %c6_33 = arith.constant 6 : index
    %c0_34 = arith.constant 0 : index
    %56 = vector.load %arg2[%c6_33, %c0_34] : memref<9x256xf32, #tpu.memory_space<vmem>>, vector<1x256xf32>
    %57 = vector.broadcast %56 : vector<1x256xf32> to vector<32x256xf32>
    %58 = arith.mulf %57, %55 : vector<32x256xf32>
    %59 = arith.addf %50, %58 : vector<32x256xf32>
    %c240_i32 = arith.constant 240 : i32
    %60 = tpu.dynamic_rotate %1 by %c240_i32 dim 1 : vector<4x256xf32>, i32 -> vector<4x256xf32>
    %61 = arith.truncf %60 : vector<4x256xf32> to vector<4x256xbf16>
    %c7 = arith.constant 7 : index
    %c0_35 = arith.constant 0 : index
    %c0_36 = arith.constant 0 : index
    %62 = vector.load %arg3[%c7, %c0_35, %c0_36] : memref<9x32x4xbf16, #tpu.memory_space<vmem>>, vector<1x32x4xbf16>
    %63 = vector.shape_cast %62 : vector<1x32x4xbf16> to vector<32x4xbf16>
    %cst_37 = arith.constant dense<0.000000e+00> : vector<32x256xf32>
    %64 = tpu.matmul %63, %61, %cst_37 {dimension_numbers = #tpu.dot_dimension_numbers<[1], [0], [0], [1], [0, 0, 1, 1], [], []>} : vector<32x4xbf16>, vector<4x256xbf16>, vector<32x256xf32> -> vector<32x256xf32>
    %c7_38 = arith.constant 7 : index
    %c0_39 = arith.constant 0 : index
    %65 = vector.load %arg2[%c7_38, %c0_39] : memref<9x256xf32, #tpu.memory_space<vmem>>, vector<1x256xf32>
    %66 = vector.broadcast %65 : vector<1x256xf32> to vector<32x256xf32>
    %67 = arith.mulf %66, %64 : vector<32x256xf32>
    %68 = arith.addf %59, %67 : vector<32x256xf32>
    %c239_i32 = arith.constant 239 : i32
    %69 = tpu.dynamic_rotate %1 by %c239_i32 dim 1 : vector<4x256xf32>, i32 -> vector<4x256xf32>
    %70 = arith.truncf %69 : vector<4x256xf32> to vector<4x256xbf16>
    %c8 = arith.constant 8 : index
    %c0_40 = arith.constant 0 : index
    %c0_41 = arith.constant 0 : index
    %71 = vector.load %arg3[%c8, %c0_40, %c0_41] : memref<9x32x4xbf16, #tpu.memory_space<vmem>>, vector<1x32x4xbf16>
    %72 = vector.shape_cast %71 : vector<1x32x4xbf16> to vector<32x4xbf16>
    %cst_42 = arith.constant dense<0.000000e+00> : vector<32x256xf32>
    %73 = tpu.matmul %72, %70, %cst_42 {dimension_numbers = #tpu.dot_dimension_numbers<[1], [0], [0], [1], [0, 0, 1, 1], [], []>} : vector<32x4xbf16>, vector<4x256xbf16>, vector<32x256xf32> -> vector<32x256xf32>
    %c8_43 = arith.constant 8 : index
    %c0_44 = arith.constant 0 : index
    %74 = vector.load %arg2[%c8_43, %c0_44] : memref<9x256xf32, #tpu.memory_space<vmem>>, vector<1x256xf32>
    %75 = vector.broadcast %74 : vector<1x256xf32> to vector<32x256xf32>
    %76 = arith.mulf %75, %73 : vector<32x256xf32>
    %77 = arith.addf %68, %76 : vector<32x256xf32>
    %c0_45 = arith.constant 0 : index
    %c0_46 = arith.constant 0 : index
    %78 = vector.load %arg4[%c0_45, %c0_46] : memref<32x1xf32, #tpu.memory_space<vmem>>, vector<32x1xf32>
    %79 = vector.broadcast %78 : vector<32x1xf32> to vector<32x256xf32>
    %80 = arith.addf %77, %79 : vector<32x256xf32>
    %cst_47 = arith.constant 1.000000e-01 : f32
    %81 = vector.broadcast %cst_47 : f32 to vector<32x256xf32>
    %82 = arith.mulf %81, %80 : vector<32x256xf32>
    %83 = arith.maximumf %80, %82 : vector<32x256xf32>
    %84 = arith.truncf %83 : vector<32x256xf32> to vector<32x256xbf16>
    %c4_48 = arith.constant 4 : index
    %c0_49 = arith.constant 0 : index
    %c0_50 = arith.constant 0 : index
    %85 = vector.load %arg5[%c4_48, %c0_49, %c0_50] : memref<9x32x32xbf16, #tpu.memory_space<vmem>>, vector<1x32x32xbf16>
    %86 = vector.shape_cast %85 : vector<1x32x32xbf16> to vector<32x32xbf16>
    %cst_51 = arith.constant dense<0.000000e+00> : vector<32x256xf32>
    %87 = tpu.matmul %86, %84, %cst_51 {dimension_numbers = #tpu.dot_dimension_numbers<[1], [0], [0], [1], [0, 0, 1, 1], [], []>} : vector<32x32xbf16>, vector<32x256xbf16>, vector<32x256xf32> -> vector<32x256xf32>
    %c17_i32_52 = arith.constant 17 : i32
    %88 = tpu.dynamic_rotate %83 by %c17_i32_52 dim 1 : vector<32x256xf32>, i32 -> vector<32x256xf32>
    %89 = arith.truncf %88 : vector<32x256xf32> to vector<32x256xbf16>
    %c0_53 = arith.constant 0 : index
    %c0_54 = arith.constant 0 : index
    %c0_55 = arith.constant 0 : index
    %90 = vector.load %arg5[%c0_53, %c0_54, %c0_55] : memref<9x32x32xbf16, #tpu.memory_space<vmem>>, vector<1x32x32xbf16>
    %91 = vector.shape_cast %90 : vector<1x32x32xbf16> to vector<32x32xbf16>
    %cst_56 = arith.constant dense<0.000000e+00> : vector<32x256xf32>
    %92 = tpu.matmul %91, %89, %cst_56 {dimension_numbers = #tpu.dot_dimension_numbers<[1], [0], [0], [1], [0, 0, 1, 1], [], []>} : vector<32x32xbf16>, vector<32x256xbf16>, vector<32x256xf32> -> vector<32x256xf32>
    %c0_57 = arith.constant 0 : index
    %c0_58 = arith.constant 0 : index
    %93 = vector.load %arg2[%c0_57, %c0_58] : memref<9x256xf32, #tpu.memory_space<vmem>>, vector<1x256xf32>
    %94 = vector.broadcast %93 : vector<1x256xf32> to vector<32x256xf32>
    %95 = arith.mulf %94, %92 : vector<32x256xf32>
    %96 = arith.addf %87, %95 : vector<32x256xf32>
    %c16_i32_59 = arith.constant 16 : i32
    %97 = tpu.dynamic_rotate %83 by %c16_i32_59 dim 1 : vector<32x256xf32>, i32 -> vector<32x256xf32>
    %98 = arith.truncf %97 : vector<32x256xf32> to vector<32x256xbf16>
    %c1_60 = arith.constant 1 : index
    %c0_61 = arith.constant 0 : index
    %c0_62 = arith.constant 0 : index
    %99 = vector.load %arg5[%c1_60, %c0_61, %c0_62] : memref<9x32x32xbf16, #tpu.memory_space<vmem>>, vector<1x32x32xbf16>
    %100 = vector.shape_cast %99 : vector<1x32x32xbf16> to vector<32x32xbf16>
    %cst_63 = arith.constant dense<0.000000e+00> : vector<32x256xf32>
    %101 = tpu.matmul %100, %98, %cst_63 {dimension_numbers = #tpu.dot_dimension_numbers<[1], [0], [0], [1], [0, 0, 1, 1], [], []>} : vector<32x32xbf16>, vector<32x256xbf16>, vector<32x256xf32> -> vector<32x256xf32>
    %c1_64 = arith.constant 1 : index
    %c0_65 = arith.constant 0 : index
    %102 = vector.load %arg2[%c1_64, %c0_65] : memref<9x256xf32, #tpu.memory_space<vmem>>, vector<1x256xf32>
    %103 = vector.broadcast %102 : vector<1x256xf32> to vector<32x256xf32>
    %104 = arith.mulf %103, %101 : vector<32x256xf32>
    %105 = arith.addf %96, %104 : vector<32x256xf32>
    %c15_i32_66 = arith.constant 15 : i32
    %106 = tpu.dynamic_rotate %83 by %c15_i32_66 dim 1 : vector<32x256xf32>, i32 -> vector<32x256xf32>
    %107 = arith.truncf %106 : vector<32x256xf32> to vector<32x256xbf16>
    %c2_67 = arith.constant 2 : index
    %c0_68 = arith.constant 0 : index
    %c0_69 = arith.constant 0 : index
    %108 = vector.load %arg5[%c2_67, %c0_68, %c0_69] : memref<9x32x32xbf16, #tpu.memory_space<vmem>>, vector<1x32x32xbf16>
    %109 = vector.shape_cast %108 : vector<1x32x32xbf16> to vector<32x32xbf16>
    %cst_70 = arith.constant dense<0.000000e+00> : vector<32x256xf32>
    %110 = tpu.matmul %109, %107, %cst_70 {dimension_numbers = #tpu.dot_dimension_numbers<[1], [0], [0], [1], [0, 0, 1, 1], [], []>} : vector<32x32xbf16>, vector<32x256xbf16>, vector<32x256xf32> -> vector<32x256xf32>
    %c2_71 = arith.constant 2 : index
    %c0_72 = arith.constant 0 : index
    %111 = vector.load %arg2[%c2_71, %c0_72] : memref<9x256xf32, #tpu.memory_space<vmem>>, vector<1x256xf32>
    %112 = vector.broadcast %111 : vector<1x256xf32> to vector<32x256xf32>
    %113 = arith.mulf %112, %110 : vector<32x256xf32>
    %114 = arith.addf %105, %113 : vector<32x256xf32>
    %c1_i32_73 = arith.constant 1 : i32
    %115 = tpu.dynamic_rotate %83 by %c1_i32_73 dim 1 : vector<32x256xf32>, i32 -> vector<32x256xf32>
    %116 = arith.truncf %115 : vector<32x256xf32> to vector<32x256xbf16>
    %c3_74 = arith.constant 3 : index
    %c0_75 = arith.constant 0 : index
    %c0_76 = arith.constant 0 : index
    %117 = vector.load %arg5[%c3_74, %c0_75, %c0_76] : memref<9x32x32xbf16, #tpu.memory_space<vmem>>, vector<1x32x32xbf16>
    %118 = vector.shape_cast %117 : vector<1x32x32xbf16> to vector<32x32xbf16>
    %cst_77 = arith.constant dense<0.000000e+00> : vector<32x256xf32>
    %119 = tpu.matmul %118, %116, %cst_77 {dimension_numbers = #tpu.dot_dimension_numbers<[1], [0], [0], [1], [0, 0, 1, 1], [], []>} : vector<32x32xbf16>, vector<32x256xbf16>, vector<32x256xf32> -> vector<32x256xf32>
    %c3_78 = arith.constant 3 : index
    %c0_79 = arith.constant 0 : index
    %120 = vector.load %arg2[%c3_78, %c0_79] : memref<9x256xf32, #tpu.memory_space<vmem>>, vector<1x256xf32>
    %121 = vector.broadcast %120 : vector<1x256xf32> to vector<32x256xf32>
    %122 = arith.mulf %121, %119 : vector<32x256xf32>
    %123 = arith.addf %114, %122 : vector<32x256xf32>
    %c255_i32_80 = arith.constant 255 : i32
    %124 = tpu.dynamic_rotate %83 by %c255_i32_80 dim 1 : vector<32x256xf32>, i32 -> vector<32x256xf32>
    %125 = arith.truncf %124 : vector<32x256xf32> to vector<32x256xbf16>
    %c5_81 = arith.constant 5 : index
    %c0_82 = arith.constant 0 : index
    %c0_83 = arith.constant 0 : index
    %126 = vector.load %arg5[%c5_81, %c0_82, %c0_83] : memref<9x32x32xbf16, #tpu.memory_space<vmem>>, vector<1x32x32xbf16>
    %127 = vector.shape_cast %126 : vector<1x32x32xbf16> to vector<32x32xbf16>
    %cst_84 = arith.constant dense<0.000000e+00> : vector<32x256xf32>
    %128 = tpu.matmul %127, %125, %cst_84 {dimension_numbers = #tpu.dot_dimension_numbers<[1], [0], [0], [1], [0, 0, 1, 1], [], []>} : vector<32x32xbf16>, vector<32x256xbf16>, vector<32x256xf32> -> vector<32x256xf32>
    %c5_85 = arith.constant 5 : index
    %c0_86 = arith.constant 0 : index
    %129 = vector.load %arg2[%c5_85, %c0_86] : memref<9x256xf32, #tpu.memory_space<vmem>>, vector<1x256xf32>
    %130 = vector.broadcast %129 : vector<1x256xf32> to vector<32x256xf32>
    %131 = arith.mulf %130, %128 : vector<32x256xf32>
    %132 = arith.addf %123, %131 : vector<32x256xf32>
    %c241_i32_87 = arith.constant 241 : i32
    %133 = tpu.dynamic_rotate %83 by %c241_i32_87 dim 1 : vector<32x256xf32>, i32 -> vector<32x256xf32>
    %134 = arith.truncf %133 : vector<32x256xf32> to vector<32x256xbf16>
    %c6_88 = arith.constant 6 : index
    %c0_89 = arith.constant 0 : index
    %c0_90 = arith.constant 0 : index
    %135 = vector.load %arg5[%c6_88, %c0_89, %c0_90] : memref<9x32x32xbf16, #tpu.memory_space<vmem>>, vector<1x32x32xbf16>
    %136 = vector.shape_cast %135 : vector<1x32x32xbf16> to vector<32x32xbf16>
    %cst_91 = arith.constant dense<0.000000e+00> : vector<32x256xf32>
    %137 = tpu.matmul %136, %134, %cst_91 {dimension_numbers = #tpu.dot_dimension_numbers<[1], [0], [0], [1], [0, 0, 1, 1], [], []>} : vector<32x32xbf16>, vector<32x256xbf16>, vector<32x256xf32> -> vector<32x256xf32>
    %c6_92 = arith.constant 6 : index
    %c0_93 = arith.constant 0 : index
    %138 = vector.load %arg2[%c6_92, %c0_93] : memref<9x256xf32, #tpu.memory_space<vmem>>, vector<1x256xf32>
    %139 = vector.broadcast %138 : vector<1x256xf32> to vector<32x256xf32>
    %140 = arith.mulf %139, %137 : vector<32x256xf32>
    %141 = arith.addf %132, %140 : vector<32x256xf32>
    %c240_i32_94 = arith.constant 240 : i32
    %142 = tpu.dynamic_rotate %83 by %c240_i32_94 dim 1 : vector<32x256xf32>, i32 -> vector<32x256xf32>
    %143 = arith.truncf %142 : vector<32x256xf32> to vector<32x256xbf16>
    %c7_95 = arith.constant 7 : index
    %c0_96 = arith.constant 0 : index
    %c0_97 = arith.constant 0 : index
    %144 = vector.load %arg5[%c7_95, %c0_96, %c0_97] : memref<9x32x32xbf16, #tpu.memory_space<vmem>>, vector<1x32x32xbf16>
    %145 = vector.shape_cast %144 : vector<1x32x32xbf16> to vector<32x32xbf16>
    %cst_98 = arith.constant dense<0.000000e+00> : vector<32x256xf32>
    %146 = tpu.matmul %145, %143, %cst_98 {dimension_numbers = #tpu.dot_dimension_numbers<[1], [0], [0], [1], [0, 0, 1, 1], [], []>} : vector<32x32xbf16>, vector<32x256xbf16>, vector<32x256xf32> -> vector<32x256xf32>
    %c7_99 = arith.constant 7 : index
    %c0_100 = arith.constant 0 : index
    %147 = vector.load %arg2[%c7_99, %c0_100] : memref<9x256xf32, #tpu.memory_space<vmem>>, vector<1x256xf32>
    %148 = vector.broadcast %147 : vector<1x256xf32> to vector<32x256xf32>
    %149 = arith.mulf %148, %146 : vector<32x256xf32>
    %150 = arith.addf %141, %149 : vector<32x256xf32>
    %c239_i32_101 = arith.constant 239 : i32
    %151 = tpu.dynamic_rotate %83 by %c239_i32_101 dim 1 : vector<32x256xf32>, i32 -> vector<32x256xf32>
    %152 = arith.truncf %151 : vector<32x256xf32> to vector<32x256xbf16>
    %c8_102 = arith.constant 8 : index
    %c0_103 = arith.constant 0 : index
    %c0_104 = arith.constant 0 : index
    %153 = vector.load %arg5[%c8_102, %c0_103, %c0_104] : memref<9x32x32xbf16, #tpu.memory_space<vmem>>, vector<1x32x32xbf16>
    %154 = vector.shape_cast %153 : vector<1x32x32xbf16> to vector<32x32xbf16>
    %cst_105 = arith.constant dense<0.000000e+00> : vector<32x256xf32>
    %155 = tpu.matmul %154, %152, %cst_105 {dimension_numbers = #tpu.dot_dimension_numbers<[1], [0], [0], [1], [0, 0, 1, 1], [], []>} : vector<32x32xbf16>, vector<32x256xbf16>, vector<32x256xf32> -> vector<32x256xf32>
    %c8_106 = arith.constant 8 : index
    %c0_107 = arith.constant 0 : index
    %156 = vector.load %arg2[%c8_106, %c0_107] : memref<9x256xf32, #tpu.memory_space<vmem>>, vector<1x256xf32>
    %157 = vector.broadcast %156 : vector<1x256xf32> to vector<32x256xf32>
    %158 = arith.mulf %157, %155 : vector<32x256xf32>
    %159 = arith.addf %150, %158 : vector<32x256xf32>
    %c0_108 = arith.constant 0 : index
    %c0_109 = arith.constant 0 : index
    %160 = vector.load %arg6[%c0_108, %c0_109] : memref<32x1xf32, #tpu.memory_space<vmem>>, vector<32x1xf32>
    %161 = vector.broadcast %160 : vector<32x1xf32> to vector<32x256xf32>
    %162 = arith.addf %159, %161 : vector<32x256xf32>
    %cst_110 = arith.constant 1.000000e-01 : f32
    %163 = vector.broadcast %cst_110 : f32 to vector<32x256xf32>
    %164 = arith.mulf %163, %162 : vector<32x256xf32>
    %165 = arith.maximumf %162, %164 : vector<32x256xf32>
    %166 = arith.truncf %165 : vector<32x256xf32> to vector<32x256xbf16>
    %c4_111 = arith.constant 4 : index
    %c0_112 = arith.constant 0 : index
    %c0_113 = arith.constant 0 : index
    %167 = vector.load %arg7[%c4_111, %c0_112, %c0_113] : memref<9x32x32xbf16, #tpu.memory_space<vmem>>, vector<1x32x32xbf16>
    %168 = vector.shape_cast %167 : vector<1x32x32xbf16> to vector<32x32xbf16>
    %cst_114 = arith.constant dense<0.000000e+00> : vector<32x256xf32>
    %169 = tpu.matmul %168, %166, %cst_114 {dimension_numbers = #tpu.dot_dimension_numbers<[1], [0], [0], [1], [0, 0, 1, 1], [], []>} : vector<32x32xbf16>, vector<32x256xbf16>, vector<32x256xf32> -> vector<32x256xf32>
    %c17_i32_115 = arith.constant 17 : i32
    %170 = tpu.dynamic_rotate %165 by %c17_i32_115 dim 1 : vector<32x256xf32>, i32 -> vector<32x256xf32>
    %171 = arith.truncf %170 : vector<32x256xf32> to vector<32x256xbf16>
    %c0_116 = arith.constant 0 : index
    %c0_117 = arith.constant 0 : index
    %c0_118 = arith.constant 0 : index
    %172 = vector.load %arg7[%c0_116, %c0_117, %c0_118] : memref<9x32x32xbf16, #tpu.memory_space<vmem>>, vector<1x32x32xbf16>
    %173 = vector.shape_cast %172 : vector<1x32x32xbf16> to vector<32x32xbf16>
    %cst_119 = arith.constant dense<0.000000e+00> : vector<32x256xf32>
    %174 = tpu.matmul %173, %171, %cst_119 {dimension_numbers = #tpu.dot_dimension_numbers<[1], [0], [0], [1], [0, 0, 1, 1], [], []>} : vector<32x32xbf16>, vector<32x256xbf16>, vector<32x256xf32> -> vector<32x256xf32>
    %c0_120 = arith.constant 0 : index
    %c0_121 = arith.constant 0 : index
    %175 = vector.load %arg2[%c0_120, %c0_121] : memref<9x256xf32, #tpu.memory_space<vmem>>, vector<1x256xf32>
    %176 = vector.broadcast %175 : vector<1x256xf32> to vector<32x256xf32>
    %177 = arith.mulf %176, %174 : vector<32x256xf32>
    %178 = arith.addf %169, %177 : vector<32x256xf32>
    %c16_i32_122 = arith.constant 16 : i32
    %179 = tpu.dynamic_rotate %165 by %c16_i32_122 dim 1 : vector<32x256xf32>, i32 -> vector<32x256xf32>
    %180 = arith.truncf %179 : vector<32x256xf32> to vector<32x256xbf16>
    %c1_123 = arith.constant 1 : index
    %c0_124 = arith.constant 0 : index
    %c0_125 = arith.constant 0 : index
    %181 = vector.load %arg7[%c1_123, %c0_124, %c0_125] : memref<9x32x32xbf16, #tpu.memory_space<vmem>>, vector<1x32x32xbf16>
    %182 = vector.shape_cast %181 : vector<1x32x32xbf16> to vector<32x32xbf16>
    %cst_126 = arith.constant dense<0.000000e+00> : vector<32x256xf32>
    %183 = tpu.matmul %182, %180, %cst_126 {dimension_numbers = #tpu.dot_dimension_numbers<[1], [0], [0], [1], [0, 0, 1, 1], [], []>} : vector<32x32xbf16>, vector<32x256xbf16>, vector<32x256xf32> -> vector<32x256xf32>
    %c1_127 = arith.constant 1 : index
    %c0_128 = arith.constant 0 : index
    %184 = vector.load %arg2[%c1_127, %c0_128] : memref<9x256xf32, #tpu.memory_space<vmem>>, vector<1x256xf32>
    %185 = vector.broadcast %184 : vector<1x256xf32> to vector<32x256xf32>
    %186 = arith.mulf %185, %183 : vector<32x256xf32>
    %187 = arith.addf %178, %186 : vector<32x256xf32>
    %c15_i32_129 = arith.constant 15 : i32
    %188 = tpu.dynamic_rotate %165 by %c15_i32_129 dim 1 : vector<32x256xf32>, i32 -> vector<32x256xf32>
    %189 = arith.truncf %188 : vector<32x256xf32> to vector<32x256xbf16>
    %c2_130 = arith.constant 2 : index
    %c0_131 = arith.constant 0 : index
    %c0_132 = arith.constant 0 : index
    %190 = vector.load %arg7[%c2_130, %c0_131, %c0_132] : memref<9x32x32xbf16, #tpu.memory_space<vmem>>, vector<1x32x32xbf16>
    %191 = vector.shape_cast %190 : vector<1x32x32xbf16> to vector<32x32xbf16>
    %cst_133 = arith.constant dense<0.000000e+00> : vector<32x256xf32>
    %192 = tpu.matmul %191, %189, %cst_133 {dimension_numbers = #tpu.dot_dimension_numbers<[1], [0], [0], [1], [0, 0, 1, 1], [], []>} : vector<32x32xbf16>, vector<32x256xbf16>, vector<32x256xf32> -> vector<32x256xf32>
    %c2_134 = arith.constant 2 : index
    %c0_135 = arith.constant 0 : index
    %193 = vector.load %arg2[%c2_134, %c0_135] : memref<9x256xf32, #tpu.memory_space<vmem>>, vector<1x256xf32>
    %194 = vector.broadcast %193 : vector<1x256xf32> to vector<32x256xf32>
    %195 = arith.mulf %194, %192 : vector<32x256xf32>
    %196 = arith.addf %187, %195 : vector<32x256xf32>
    %c1_i32_136 = arith.constant 1 : i32
    %197 = tpu.dynamic_rotate %165 by %c1_i32_136 dim 1 : vector<32x256xf32>, i32 -> vector<32x256xf32>
    %198 = arith.truncf %197 : vector<32x256xf32> to vector<32x256xbf16>
    %c3_137 = arith.constant 3 : index
    %c0_138 = arith.constant 0 : index
    %c0_139 = arith.constant 0 : index
    %199 = vector.load %arg7[%c3_137, %c0_138, %c0_139] : memref<9x32x32xbf16, #tpu.memory_space<vmem>>, vector<1x32x32xbf16>
    %200 = vector.shape_cast %199 : vector<1x32x32xbf16> to vector<32x32xbf16>
    %cst_140 = arith.constant dense<0.000000e+00> : vector<32x256xf32>
    %201 = tpu.matmul %200, %198, %cst_140 {dimension_numbers = #tpu.dot_dimension_numbers<[1], [0], [0], [1], [0, 0, 1, 1], [], []>} : vector<32x32xbf16>, vector<32x256xbf16>, vector<32x256xf32> -> vector<32x256xf32>
    %c3_141 = arith.constant 3 : index
    %c0_142 = arith.constant 0 : index
    %202 = vector.load %arg2[%c3_141, %c0_142] : memref<9x256xf32, #tpu.memory_space<vmem>>, vector<1x256xf32>
    %203 = vector.broadcast %202 : vector<1x256xf32> to vector<32x256xf32>
    %204 = arith.mulf %203, %201 : vector<32x256xf32>
    %205 = arith.addf %196, %204 : vector<32x256xf32>
    %c255_i32_143 = arith.constant 255 : i32
    %206 = tpu.dynamic_rotate %165 by %c255_i32_143 dim 1 : vector<32x256xf32>, i32 -> vector<32x256xf32>
    %207 = arith.truncf %206 : vector<32x256xf32> to vector<32x256xbf16>
    %c5_144 = arith.constant 5 : index
    %c0_145 = arith.constant 0 : index
    %c0_146 = arith.constant 0 : index
    %208 = vector.load %arg7[%c5_144, %c0_145, %c0_146] : memref<9x32x32xbf16, #tpu.memory_space<vmem>>, vector<1x32x32xbf16>
    %209 = vector.shape_cast %208 : vector<1x32x32xbf16> to vector<32x32xbf16>
    %cst_147 = arith.constant dense<0.000000e+00> : vector<32x256xf32>
    %210 = tpu.matmul %209, %207, %cst_147 {dimension_numbers = #tpu.dot_dimension_numbers<[1], [0], [0], [1], [0, 0, 1, 1], [], []>} : vector<32x32xbf16>, vector<32x256xbf16>, vector<32x256xf32> -> vector<32x256xf32>
    %c5_148 = arith.constant 5 : index
    %c0_149 = arith.constant 0 : index
    %211 = vector.load %arg2[%c5_148, %c0_149] : memref<9x256xf32, #tpu.memory_space<vmem>>, vector<1x256xf32>
    %212 = vector.broadcast %211 : vector<1x256xf32> to vector<32x256xf32>
    %213 = arith.mulf %212, %210 : vector<32x256xf32>
    %214 = arith.addf %205, %213 : vector<32x256xf32>
    %c241_i32_150 = arith.constant 241 : i32
    %215 = tpu.dynamic_rotate %165 by %c241_i32_150 dim 1 : vector<32x256xf32>, i32 -> vector<32x256xf32>
    %216 = arith.truncf %215 : vector<32x256xf32> to vector<32x256xbf16>
    %c6_151 = arith.constant 6 : index
    %c0_152 = arith.constant 0 : index
    %c0_153 = arith.constant 0 : index
    %217 = vector.load %arg7[%c6_151, %c0_152, %c0_153] : memref<9x32x32xbf16, #tpu.memory_space<vmem>>, vector<1x32x32xbf16>
    %218 = vector.shape_cast %217 : vector<1x32x32xbf16> to vector<32x32xbf16>
    %cst_154 = arith.constant dense<0.000000e+00> : vector<32x256xf32>
    %219 = tpu.matmul %218, %216, %cst_154 {dimension_numbers = #tpu.dot_dimension_numbers<[1], [0], [0], [1], [0, 0, 1, 1], [], []>} : vector<32x32xbf16>, vector<32x256xbf16>, vector<32x256xf32> -> vector<32x256xf32>
    %c6_155 = arith.constant 6 : index
    %c0_156 = arith.constant 0 : index
    %220 = vector.load %arg2[%c6_155, %c0_156] : memref<9x256xf32, #tpu.memory_space<vmem>>, vector<1x256xf32>
    %221 = vector.broadcast %220 : vector<1x256xf32> to vector<32x256xf32>
    %222 = arith.mulf %221, %219 : vector<32x256xf32>
    %223 = arith.addf %214, %222 : vector<32x256xf32>
    %c240_i32_157 = arith.constant 240 : i32
    %224 = tpu.dynamic_rotate %165 by %c240_i32_157 dim 1 : vector<32x256xf32>, i32 -> vector<32x256xf32>
    %225 = arith.truncf %224 : vector<32x256xf32> to vector<32x256xbf16>
    %c7_158 = arith.constant 7 : index
    %c0_159 = arith.constant 0 : index
    %c0_160 = arith.constant 0 : index
    %226 = vector.load %arg7[%c7_158, %c0_159, %c0_160] : memref<9x32x32xbf16, #tpu.memory_space<vmem>>, vector<1x32x32xbf16>
    %227 = vector.shape_cast %226 : vector<1x32x32xbf16> to vector<32x32xbf16>
    %cst_161 = arith.constant dense<0.000000e+00> : vector<32x256xf32>
    %228 = tpu.matmul %227, %225, %cst_161 {dimension_numbers = #tpu.dot_dimension_numbers<[1], [0], [0], [1], [0, 0, 1, 1], [], []>} : vector<32x32xbf16>, vector<32x256xbf16>, vector<32x256xf32> -> vector<32x256xf32>
    %c7_162 = arith.constant 7 : index
    %c0_163 = arith.constant 0 : index
    %229 = vector.load %arg2[%c7_162, %c0_163] : memref<9x256xf32, #tpu.memory_space<vmem>>, vector<1x256xf32>
    %230 = vector.broadcast %229 : vector<1x256xf32> to vector<32x256xf32>
    %231 = arith.mulf %230, %228 : vector<32x256xf32>
    %232 = arith.addf %223, %231 : vector<32x256xf32>
    %c239_i32_164 = arith.constant 239 : i32
    %233 = tpu.dynamic_rotate %165 by %c239_i32_164 dim 1 : vector<32x256xf32>, i32 -> vector<32x256xf32>
    %234 = arith.truncf %233 : vector<32x256xf32> to vector<32x256xbf16>
    %c8_165 = arith.constant 8 : index
    %c0_166 = arith.constant 0 : index
    %c0_167 = arith.constant 0 : index
    %235 = vector.load %arg7[%c8_165, %c0_166, %c0_167] : memref<9x32x32xbf16, #tpu.memory_space<vmem>>, vector<1x32x32xbf16>
    %236 = vector.shape_cast %235 : vector<1x32x32xbf16> to vector<32x32xbf16>
    %cst_168 = arith.constant dense<0.000000e+00> : vector<32x256xf32>
    %237 = tpu.matmul %236, %234, %cst_168 {dimension_numbers = #tpu.dot_dimension_numbers<[1], [0], [0], [1], [0, 0, 1, 1], [], []>} : vector<32x32xbf16>, vector<32x256xbf16>, vector<32x256xf32> -> vector<32x256xf32>
    %c8_169 = arith.constant 8 : index
    %c0_170 = arith.constant 0 : index
    %238 = vector.load %arg2[%c8_169, %c0_170] : memref<9x256xf32, #tpu.memory_space<vmem>>, vector<1x256xf32>
    %239 = vector.broadcast %238 : vector<1x256xf32> to vector<32x256xf32>
    %240 = arith.mulf %239, %237 : vector<32x256xf32>
    %241 = arith.addf %232, %240 : vector<32x256xf32>
    %c0_171 = arith.constant 0 : index
    %c0_172 = arith.constant 0 : index
    %242 = vector.load %arg8[%c0_171, %c0_172] : memref<32x1xf32, #tpu.memory_space<vmem>>, vector<32x1xf32>
    %243 = vector.broadcast %242 : vector<32x1xf32> to vector<32x256xf32>
    %244 = arith.addf %241, %243 : vector<32x256xf32>
    %cst_173 = arith.constant 1.000000e-01 : f32
    %245 = vector.broadcast %cst_173 : f32 to vector<32x256xf32>
    %246 = arith.mulf %245, %244 : vector<32x256xf32>
    %247 = arith.maximumf %244, %246 : vector<32x256xf32>
    %248 = arith.truncf %247 : vector<32x256xf32> to vector<32x256xbf16>
    %c4_174 = arith.constant 4 : index
    %c0_175 = arith.constant 0 : index
    %c0_176 = arith.constant 0 : index
    %249 = vector.load %arg9[%c4_174, %c0_175, %c0_176] : memref<9x32x32xbf16, #tpu.memory_space<vmem>>, vector<1x32x32xbf16>
    %250 = vector.shape_cast %249 : vector<1x32x32xbf16> to vector<32x32xbf16>
    %cst_177 = arith.constant dense<0.000000e+00> : vector<32x256xf32>
    %251 = tpu.matmul %250, %248, %cst_177 {dimension_numbers = #tpu.dot_dimension_numbers<[1], [0], [0], [1], [0, 0, 1, 1], [], []>} : vector<32x32xbf16>, vector<32x256xbf16>, vector<32x256xf32> -> vector<32x256xf32>
    %c17_i32_178 = arith.constant 17 : i32
    %252 = tpu.dynamic_rotate %247 by %c17_i32_178 dim 1 : vector<32x256xf32>, i32 -> vector<32x256xf32>
    %253 = arith.truncf %252 : vector<32x256xf32> to vector<32x256xbf16>
    %c0_179 = arith.constant 0 : index
    %c0_180 = arith.constant 0 : index
    %c0_181 = arith.constant 0 : index
    %254 = vector.load %arg9[%c0_179, %c0_180, %c0_181] : memref<9x32x32xbf16, #tpu.memory_space<vmem>>, vector<1x32x32xbf16>
    %255 = vector.shape_cast %254 : vector<1x32x32xbf16> to vector<32x32xbf16>
    %cst_182 = arith.constant dense<0.000000e+00> : vector<32x256xf32>
    %256 = tpu.matmul %255, %253, %cst_182 {dimension_numbers = #tpu.dot_dimension_numbers<[1], [0], [0], [1], [0, 0, 1, 1], [], []>} : vector<32x32xbf16>, vector<32x256xbf16>, vector<32x256xf32> -> vector<32x256xf32>
    %c0_183 = arith.constant 0 : index
    %c0_184 = arith.constant 0 : index
    %257 = vector.load %arg2[%c0_183, %c0_184] : memref<9x256xf32, #tpu.memory_space<vmem>>, vector<1x256xf32>
    %258 = vector.broadcast %257 : vector<1x256xf32> to vector<32x256xf32>
    %259 = arith.mulf %258, %256 : vector<32x256xf32>
    %260 = arith.addf %251, %259 : vector<32x256xf32>
    %c16_i32_185 = arith.constant 16 : i32
    %261 = tpu.dynamic_rotate %247 by %c16_i32_185 dim 1 : vector<32x256xf32>, i32 -> vector<32x256xf32>
    %262 = arith.truncf %261 : vector<32x256xf32> to vector<32x256xbf16>
    %c1_186 = arith.constant 1 : index
    %c0_187 = arith.constant 0 : index
    %c0_188 = arith.constant 0 : index
    %263 = vector.load %arg9[%c1_186, %c0_187, %c0_188] : memref<9x32x32xbf16, #tpu.memory_space<vmem>>, vector<1x32x32xbf16>
    %264 = vector.shape_cast %263 : vector<1x32x32xbf16> to vector<32x32xbf16>
    %cst_189 = arith.constant dense<0.000000e+00> : vector<32x256xf32>
    %265 = tpu.matmul %264, %262, %cst_189 {dimension_numbers = #tpu.dot_dimension_numbers<[1], [0], [0], [1], [0, 0, 1, 1], [], []>} : vector<32x32xbf16>, vector<32x256xbf16>, vector<32x256xf32> -> vector<32x256xf32>
    %c1_190 = arith.constant 1 : index
    %c0_191 = arith.constant 0 : index
    %266 = vector.load %arg2[%c1_190, %c0_191] : memref<9x256xf32, #tpu.memory_space<vmem>>, vector<1x256xf32>
    %267 = vector.broadcast %266 : vector<1x256xf32> to vector<32x256xf32>
    %268 = arith.mulf %267, %265 : vector<32x256xf32>
    %269 = arith.addf %260, %268 : vector<32x256xf32>
    %c15_i32_192 = arith.constant 15 : i32
    %270 = tpu.dynamic_rotate %247 by %c15_i32_192 dim 1 : vector<32x256xf32>, i32 -> vector<32x256xf32>
    %271 = arith.truncf %270 : vector<32x256xf32> to vector<32x256xbf16>
    %c2_193 = arith.constant 2 : index
    %c0_194 = arith.constant 0 : index
    %c0_195 = arith.constant 0 : index
    %272 = vector.load %arg9[%c2_193, %c0_194, %c0_195] : memref<9x32x32xbf16, #tpu.memory_space<vmem>>, vector<1x32x32xbf16>
    %273 = vector.shape_cast %272 : vector<1x32x32xbf16> to vector<32x32xbf16>
    %cst_196 = arith.constant dense<0.000000e+00> : vector<32x256xf32>
    %274 = tpu.matmul %273, %271, %cst_196 {dimension_numbers = #tpu.dot_dimension_numbers<[1], [0], [0], [1], [0, 0, 1, 1], [], []>} : vector<32x32xbf16>, vector<32x256xbf16>, vector<32x256xf32> -> vector<32x256xf32>
    %c2_197 = arith.constant 2 : index
    %c0_198 = arith.constant 0 : index
    %275 = vector.load %arg2[%c2_197, %c0_198] : memref<9x256xf32, #tpu.memory_space<vmem>>, vector<1x256xf32>
    %276 = vector.broadcast %275 : vector<1x256xf32> to vector<32x256xf32>
    %277 = arith.mulf %276, %274 : vector<32x256xf32>
    %278 = arith.addf %269, %277 : vector<32x256xf32>
    %c1_i32_199 = arith.constant 1 : i32
    %279 = tpu.dynamic_rotate %247 by %c1_i32_199 dim 1 : vector<32x256xf32>, i32 -> vector<32x256xf32>
    %280 = arith.truncf %279 : vector<32x256xf32> to vector<32x256xbf16>
    %c3_200 = arith.constant 3 : index
    %c0_201 = arith.constant 0 : index
    %c0_202 = arith.constant 0 : index
    %281 = vector.load %arg9[%c3_200, %c0_201, %c0_202] : memref<9x32x32xbf16, #tpu.memory_space<vmem>>, vector<1x32x32xbf16>
    %282 = vector.shape_cast %281 : vector<1x32x32xbf16> to vector<32x32xbf16>
    %cst_203 = arith.constant dense<0.000000e+00> : vector<32x256xf32>
    %283 = tpu.matmul %282, %280, %cst_203 {dimension_numbers = #tpu.dot_dimension_numbers<[1], [0], [0], [1], [0, 0, 1, 1], [], []>} : vector<32x32xbf16>, vector<32x256xbf16>, vector<32x256xf32> -> vector<32x256xf32>
    %c3_204 = arith.constant 3 : index
    %c0_205 = arith.constant 0 : index
    %284 = vector.load %arg2[%c3_204, %c0_205] : memref<9x256xf32, #tpu.memory_space<vmem>>, vector<1x256xf32>
    %285 = vector.broadcast %284 : vector<1x256xf32> to vector<32x256xf32>
    %286 = arith.mulf %285, %283 : vector<32x256xf32>
    %287 = arith.addf %278, %286 : vector<32x256xf32>
    %c255_i32_206 = arith.constant 255 : i32
    %288 = tpu.dynamic_rotate %247 by %c255_i32_206 dim 1 : vector<32x256xf32>, i32 -> vector<32x256xf32>
    %289 = arith.truncf %288 : vector<32x256xf32> to vector<32x256xbf16>
    %c5_207 = arith.constant 5 : index
    %c0_208 = arith.constant 0 : index
    %c0_209 = arith.constant 0 : index
    %290 = vector.load %arg9[%c5_207, %c0_208, %c0_209] : memref<9x32x32xbf16, #tpu.memory_space<vmem>>, vector<1x32x32xbf16>
    %291 = vector.shape_cast %290 : vector<1x32x32xbf16> to vector<32x32xbf16>
    %cst_210 = arith.constant dense<0.000000e+00> : vector<32x256xf32>
    %292 = tpu.matmul %291, %289, %cst_210 {dimension_numbers = #tpu.dot_dimension_numbers<[1], [0], [0], [1], [0, 0, 1, 1], [], []>} : vector<32x32xbf16>, vector<32x256xbf16>, vector<32x256xf32> -> vector<32x256xf32>
    %c5_211 = arith.constant 5 : index
    %c0_212 = arith.constant 0 : index
    %293 = vector.load %arg2[%c5_211, %c0_212] : memref<9x256xf32, #tpu.memory_space<vmem>>, vector<1x256xf32>
    %294 = vector.broadcast %293 : vector<1x256xf32> to vector<32x256xf32>
    %295 = arith.mulf %294, %292 : vector<32x256xf32>
    %296 = arith.addf %287, %295 : vector<32x256xf32>
    %c241_i32_213 = arith.constant 241 : i32
    %297 = tpu.dynamic_rotate %247 by %c241_i32_213 dim 1 : vector<32x256xf32>, i32 -> vector<32x256xf32>
    %298 = arith.truncf %297 : vector<32x256xf32> to vector<32x256xbf16>
    %c6_214 = arith.constant 6 : index
    %c0_215 = arith.constant 0 : index
    %c0_216 = arith.constant 0 : index
    %299 = vector.load %arg9[%c6_214, %c0_215, %c0_216] : memref<9x32x32xbf16, #tpu.memory_space<vmem>>, vector<1x32x32xbf16>
    %300 = vector.shape_cast %299 : vector<1x32x32xbf16> to vector<32x32xbf16>
    %cst_217 = arith.constant dense<0.000000e+00> : vector<32x256xf32>
    %301 = tpu.matmul %300, %298, %cst_217 {dimension_numbers = #tpu.dot_dimension_numbers<[1], [0], [0], [1], [0, 0, 1, 1], [], []>} : vector<32x32xbf16>, vector<32x256xbf16>, vector<32x256xf32> -> vector<32x256xf32>
    %c6_218 = arith.constant 6 : index
    %c0_219 = arith.constant 0 : index
    %302 = vector.load %arg2[%c6_218, %c0_219] : memref<9x256xf32, #tpu.memory_space<vmem>>, vector<1x256xf32>
    %303 = vector.broadcast %302 : vector<1x256xf32> to vector<32x256xf32>
    %304 = arith.mulf %303, %301 : vector<32x256xf32>
    %305 = arith.addf %296, %304 : vector<32x256xf32>
    %c240_i32_220 = arith.constant 240 : i32
    %306 = tpu.dynamic_rotate %247 by %c240_i32_220 dim 1 : vector<32x256xf32>, i32 -> vector<32x256xf32>
    %307 = arith.truncf %306 : vector<32x256xf32> to vector<32x256xbf16>
    %c7_221 = arith.constant 7 : index
    %c0_222 = arith.constant 0 : index
    %c0_223 = arith.constant 0 : index
    %308 = vector.load %arg9[%c7_221, %c0_222, %c0_223] : memref<9x32x32xbf16, #tpu.memory_space<vmem>>, vector<1x32x32xbf16>
    %309 = vector.shape_cast %308 : vector<1x32x32xbf16> to vector<32x32xbf16>
    %cst_224 = arith.constant dense<0.000000e+00> : vector<32x256xf32>
    %310 = tpu.matmul %309, %307, %cst_224 {dimension_numbers = #tpu.dot_dimension_numbers<[1], [0], [0], [1], [0, 0, 1, 1], [], []>} : vector<32x32xbf16>, vector<32x256xbf16>, vector<32x256xf32> -> vector<32x256xf32>
    %c7_225 = arith.constant 7 : index
    %c0_226 = arith.constant 0 : index
    %311 = vector.load %arg2[%c7_225, %c0_226] : memref<9x256xf32, #tpu.memory_space<vmem>>, vector<1x256xf32>
    %312 = vector.broadcast %311 : vector<1x256xf32> to vector<32x256xf32>
    %313 = arith.mulf %312, %310 : vector<32x256xf32>
    %314 = arith.addf %305, %313 : vector<32x256xf32>
    %c239_i32_227 = arith.constant 239 : i32
    %315 = tpu.dynamic_rotate %247 by %c239_i32_227 dim 1 : vector<32x256xf32>, i32 -> vector<32x256xf32>
    %316 = arith.truncf %315 : vector<32x256xf32> to vector<32x256xbf16>
    %c8_228 = arith.constant 8 : index
    %c0_229 = arith.constant 0 : index
    %c0_230 = arith.constant 0 : index
    %317 = vector.load %arg9[%c8_228, %c0_229, %c0_230] : memref<9x32x32xbf16, #tpu.memory_space<vmem>>, vector<1x32x32xbf16>
    %318 = vector.shape_cast %317 : vector<1x32x32xbf16> to vector<32x32xbf16>
    %cst_231 = arith.constant dense<0.000000e+00> : vector<32x256xf32>
    %319 = tpu.matmul %318, %316, %cst_231 {dimension_numbers = #tpu.dot_dimension_numbers<[1], [0], [0], [1], [0, 0, 1, 1], [], []>} : vector<32x32xbf16>, vector<32x256xbf16>, vector<32x256xf32> -> vector<32x256xf32>
    %c8_232 = arith.constant 8 : index
    %c0_233 = arith.constant 0 : index
    %320 = vector.load %arg2[%c8_232, %c0_233] : memref<9x256xf32, #tpu.memory_space<vmem>>, vector<1x256xf32>
    %321 = vector.broadcast %320 : vector<1x256xf32> to vector<32x256xf32>
    %322 = arith.mulf %321, %319 : vector<32x256xf32>
    %323 = arith.addf %314, %322 : vector<32x256xf32>
    %c0_234 = arith.constant 0 : index
    %c0_235 = arith.constant 0 : index
    %324 = vector.load %arg10[%c0_234, %c0_235] : memref<32x1xf32, #tpu.memory_space<vmem>>, vector<32x1xf32>
    %325 = vector.broadcast %324 : vector<32x1xf32> to vector<32x256xf32>
    %326 = arith.addf %323, %325 : vector<32x256xf32>
    %cst_236 = arith.constant 1.000000e-01 : f32
    %327 = vector.broadcast %cst_236 : f32 to vector<32x256xf32>
    %328 = arith.mulf %327, %326 : vector<32x256xf32>
    %329 = arith.maximumf %326, %328 : vector<32x256xf32>
    %330 = arith.truncf %329 : vector<32x256xf32> to vector<32x256xbf16>
    %c4_237 = arith.constant 4 : index
    %c0_238 = arith.constant 0 : index
    %c0_239 = arith.constant 0 : index
    %331 = vector.load %arg11[%c4_237, %c0_238, %c0_239] : memref<9x64x32xbf16, #tpu.memory_space<vmem>>, vector<1x64x32xbf16>
    %332 = vector.shape_cast %331 : vector<1x64x32xbf16> to vector<64x32xbf16>
    %cst_240 = arith.constant dense<0.000000e+00> : vector<64x256xf32>
    %333 = tpu.matmul %332, %330, %cst_240 {dimension_numbers = #tpu.dot_dimension_numbers<[1], [0], [0], [1], [0, 0, 1, 1], [], []>} : vector<64x32xbf16>, vector<32x256xbf16>, vector<64x256xf32> -> vector<64x256xf32>
    %c17_i32_241 = arith.constant 17 : i32
    %334 = tpu.dynamic_rotate %329 by %c17_i32_241 dim 1 : vector<32x256xf32>, i32 -> vector<32x256xf32>
    %335 = arith.truncf %334 : vector<32x256xf32> to vector<32x256xbf16>
    %c0_242 = arith.constant 0 : index
    %c0_243 = arith.constant 0 : index
    %c0_244 = arith.constant 0 : index
    %336 = vector.load %arg11[%c0_242, %c0_243, %c0_244] : memref<9x64x32xbf16, #tpu.memory_space<vmem>>, vector<1x64x32xbf16>
    %337 = vector.shape_cast %336 : vector<1x64x32xbf16> to vector<64x32xbf16>
    %cst_245 = arith.constant dense<0.000000e+00> : vector<64x256xf32>
    %338 = tpu.matmul %337, %335, %cst_245 {dimension_numbers = #tpu.dot_dimension_numbers<[1], [0], [0], [1], [0, 0, 1, 1], [], []>} : vector<64x32xbf16>, vector<32x256xbf16>, vector<64x256xf32> -> vector<64x256xf32>
    %c0_246 = arith.constant 0 : index
    %c0_247 = arith.constant 0 : index
    %339 = vector.load %arg2[%c0_246, %c0_247] : memref<9x256xf32, #tpu.memory_space<vmem>>, vector<1x256xf32>
    %340 = vector.broadcast %339 : vector<1x256xf32> to vector<64x256xf32>
    %341 = arith.mulf %340, %338 : vector<64x256xf32>
    %342 = arith.addf %333, %341 : vector<64x256xf32>
    %c16_i32_248 = arith.constant 16 : i32
    %343 = tpu.dynamic_rotate %329 by %c16_i32_248 dim 1 : vector<32x256xf32>, i32 -> vector<32x256xf32>
    %344 = arith.truncf %343 : vector<32x256xf32> to vector<32x256xbf16>
    %c1_249 = arith.constant 1 : index
    %c0_250 = arith.constant 0 : index
    %c0_251 = arith.constant 0 : index
    %345 = vector.load %arg11[%c1_249, %c0_250, %c0_251] : memref<9x64x32xbf16, #tpu.memory_space<vmem>>, vector<1x64x32xbf16>
    %346 = vector.shape_cast %345 : vector<1x64x32xbf16> to vector<64x32xbf16>
    %cst_252 = arith.constant dense<0.000000e+00> : vector<64x256xf32>
    %347 = tpu.matmul %346, %344, %cst_252 {dimension_numbers = #tpu.dot_dimension_numbers<[1], [0], [0], [1], [0, 0, 1, 1], [], []>} : vector<64x32xbf16>, vector<32x256xbf16>, vector<64x256xf32> -> vector<64x256xf32>
    %c1_253 = arith.constant 1 : index
    %c0_254 = arith.constant 0 : index
    %348 = vector.load %arg2[%c1_253, %c0_254] : memref<9x256xf32, #tpu.memory_space<vmem>>, vector<1x256xf32>
    %349 = vector.broadcast %348 : vector<1x256xf32> to vector<64x256xf32>
    %350 = arith.mulf %349, %347 : vector<64x256xf32>
    %351 = arith.addf %342, %350 : vector<64x256xf32>
    %c15_i32_255 = arith.constant 15 : i32
    %352 = tpu.dynamic_rotate %329 by %c15_i32_255 dim 1 : vector<32x256xf32>, i32 -> vector<32x256xf32>
    %353 = arith.truncf %352 : vector<32x256xf32> to vector<32x256xbf16>
    %c2_256 = arith.constant 2 : index
    %c0_257 = arith.constant 0 : index
    %c0_258 = arith.constant 0 : index
    %354 = vector.load %arg11[%c2_256, %c0_257, %c0_258] : memref<9x64x32xbf16, #tpu.memory_space<vmem>>, vector<1x64x32xbf16>
    %355 = vector.shape_cast %354 : vector<1x64x32xbf16> to vector<64x32xbf16>
    %cst_259 = arith.constant dense<0.000000e+00> : vector<64x256xf32>
    %356 = tpu.matmul %355, %353, %cst_259 {dimension_numbers = #tpu.dot_dimension_numbers<[1], [0], [0], [1], [0, 0, 1, 1], [], []>} : vector<64x32xbf16>, vector<32x256xbf16>, vector<64x256xf32> -> vector<64x256xf32>
    %c2_260 = arith.constant 2 : index
    %c0_261 = arith.constant 0 : index
    %357 = vector.load %arg2[%c2_260, %c0_261] : memref<9x256xf32, #tpu.memory_space<vmem>>, vector<1x256xf32>
    %358 = vector.broadcast %357 : vector<1x256xf32> to vector<64x256xf32>
    %359 = arith.mulf %358, %356 : vector<64x256xf32>
    %360 = arith.addf %351, %359 : vector<64x256xf32>
    %c1_i32_262 = arith.constant 1 : i32
    %361 = tpu.dynamic_rotate %329 by %c1_i32_262 dim 1 : vector<32x256xf32>, i32 -> vector<32x256xf32>
    %362 = arith.truncf %361 : vector<32x256xf32> to vector<32x256xbf16>
    %c3_263 = arith.constant 3 : index
    %c0_264 = arith.constant 0 : index
    %c0_265 = arith.constant 0 : index
    %363 = vector.load %arg11[%c3_263, %c0_264, %c0_265] : memref<9x64x32xbf16, #tpu.memory_space<vmem>>, vector<1x64x32xbf16>
    %364 = vector.shape_cast %363 : vector<1x64x32xbf16> to vector<64x32xbf16>
    %cst_266 = arith.constant dense<0.000000e+00> : vector<64x256xf32>
    %365 = tpu.matmul %364, %362, %cst_266 {dimension_numbers = #tpu.dot_dimension_numbers<[1], [0], [0], [1], [0, 0, 1, 1], [], []>} : vector<64x32xbf16>, vector<32x256xbf16>, vector<64x256xf32> -> vector<64x256xf32>
    %c3_267 = arith.constant 3 : index
    %c0_268 = arith.constant 0 : index
    %366 = vector.load %arg2[%c3_267, %c0_268] : memref<9x256xf32, #tpu.memory_space<vmem>>, vector<1x256xf32>
    %367 = vector.broadcast %366 : vector<1x256xf32> to vector<64x256xf32>
    %368 = arith.mulf %367, %365 : vector<64x256xf32>
    %369 = arith.addf %360, %368 : vector<64x256xf32>
    %c255_i32_269 = arith.constant 255 : i32
    %370 = tpu.dynamic_rotate %329 by %c255_i32_269 dim 1 : vector<32x256xf32>, i32 -> vector<32x256xf32>
    %371 = arith.truncf %370 : vector<32x256xf32> to vector<32x256xbf16>
    %c5_270 = arith.constant 5 : index
    %c0_271 = arith.constant 0 : index
    %c0_272 = arith.constant 0 : index
    %372 = vector.load %arg11[%c5_270, %c0_271, %c0_272] : memref<9x64x32xbf16, #tpu.memory_space<vmem>>, vector<1x64x32xbf16>
    %373 = vector.shape_cast %372 : vector<1x64x32xbf16> to vector<64x32xbf16>
    %cst_273 = arith.constant dense<0.000000e+00> : vector<64x256xf32>
    %374 = tpu.matmul %373, %371, %cst_273 {dimension_numbers = #tpu.dot_dimension_numbers<[1], [0], [0], [1], [0, 0, 1, 1], [], []>} : vector<64x32xbf16>, vector<32x256xbf16>, vector<64x256xf32> -> vector<64x256xf32>
    %c5_274 = arith.constant 5 : index
    %c0_275 = arith.constant 0 : index
    %375 = vector.load %arg2[%c5_274, %c0_275] : memref<9x256xf32, #tpu.memory_space<vmem>>, vector<1x256xf32>
    %376 = vector.broadcast %375 : vector<1x256xf32> to vector<64x256xf32>
    %377 = arith.mulf %376, %374 : vector<64x256xf32>
    %378 = arith.addf %369, %377 : vector<64x256xf32>
    %c241_i32_276 = arith.constant 241 : i32
    %379 = tpu.dynamic_rotate %329 by %c241_i32_276 dim 1 : vector<32x256xf32>, i32 -> vector<32x256xf32>
    %380 = arith.truncf %379 : vector<32x256xf32> to vector<32x256xbf16>
    %c6_277 = arith.constant 6 : index
    %c0_278 = arith.constant 0 : index
    %c0_279 = arith.constant 0 : index
    %381 = vector.load %arg11[%c6_277, %c0_278, %c0_279] : memref<9x64x32xbf16, #tpu.memory_space<vmem>>, vector<1x64x32xbf16>
    %382 = vector.shape_cast %381 : vector<1x64x32xbf16> to vector<64x32xbf16>
    %cst_280 = arith.constant dense<0.000000e+00> : vector<64x256xf32>
    %383 = tpu.matmul %382, %380, %cst_280 {dimension_numbers = #tpu.dot_dimension_numbers<[1], [0], [0], [1], [0, 0, 1, 1], [], []>} : vector<64x32xbf16>, vector<32x256xbf16>, vector<64x256xf32> -> vector<64x256xf32>
    %c6_281 = arith.constant 6 : index
    %c0_282 = arith.constant 0 : index
    %384 = vector.load %arg2[%c6_281, %c0_282] : memref<9x256xf32, #tpu.memory_space<vmem>>, vector<1x256xf32>
    %385 = vector.broadcast %384 : vector<1x256xf32> to vector<64x256xf32>
    %386 = arith.mulf %385, %383 : vector<64x256xf32>
    %387 = arith.addf %378, %386 : vector<64x256xf32>
    %c240_i32_283 = arith.constant 240 : i32
    %388 = tpu.dynamic_rotate %329 by %c240_i32_283 dim 1 : vector<32x256xf32>, i32 -> vector<32x256xf32>
    %389 = arith.truncf %388 : vector<32x256xf32> to vector<32x256xbf16>
    %c7_284 = arith.constant 7 : index
    %c0_285 = arith.constant 0 : index
    %c0_286 = arith.constant 0 : index
    %390 = vector.load %arg11[%c7_284, %c0_285, %c0_286] : memref<9x64x32xbf16, #tpu.memory_space<vmem>>, vector<1x64x32xbf16>
    %391 = vector.shape_cast %390 : vector<1x64x32xbf16> to vector<64x32xbf16>
    %cst_287 = arith.constant dense<0.000000e+00> : vector<64x256xf32>
    %392 = tpu.matmul %391, %389, %cst_287 {dimension_numbers = #tpu.dot_dimension_numbers<[1], [0], [0], [1], [0, 0, 1, 1], [], []>} : vector<64x32xbf16>, vector<32x256xbf16>, vector<64x256xf32> -> vector<64x256xf32>
    %c7_288 = arith.constant 7 : index
    %c0_289 = arith.constant 0 : index
    %393 = vector.load %arg2[%c7_288, %c0_289] : memref<9x256xf32, #tpu.memory_space<vmem>>, vector<1x256xf32>
    %394 = vector.broadcast %393 : vector<1x256xf32> to vector<64x256xf32>
    %395 = arith.mulf %394, %392 : vector<64x256xf32>
    %396 = arith.addf %387, %395 : vector<64x256xf32>
    %c239_i32_290 = arith.constant 239 : i32
    %397 = tpu.dynamic_rotate %329 by %c239_i32_290 dim 1 : vector<32x256xf32>, i32 -> vector<32x256xf32>
    %398 = arith.truncf %397 : vector<32x256xf32> to vector<32x256xbf16>
    %c8_291 = arith.constant 8 : index
    %c0_292 = arith.constant 0 : index
    %c0_293 = arith.constant 0 : index
    %399 = vector.load %arg11[%c8_291, %c0_292, %c0_293] : memref<9x64x32xbf16, #tpu.memory_space<vmem>>, vector<1x64x32xbf16>
    %400 = vector.shape_cast %399 : vector<1x64x32xbf16> to vector<64x32xbf16>
    %cst_294 = arith.constant dense<0.000000e+00> : vector<64x256xf32>
    %401 = tpu.matmul %400, %398, %cst_294 {dimension_numbers = #tpu.dot_dimension_numbers<[1], [0], [0], [1], [0, 0, 1, 1], [], []>} : vector<64x32xbf16>, vector<32x256xbf16>, vector<64x256xf32> -> vector<64x256xf32>
    %c8_295 = arith.constant 8 : index
    %c0_296 = arith.constant 0 : index
    %402 = vector.load %arg2[%c8_295, %c0_296] : memref<9x256xf32, #tpu.memory_space<vmem>>, vector<1x256xf32>
    %403 = vector.broadcast %402 : vector<1x256xf32> to vector<64x256xf32>
    %404 = arith.mulf %403, %401 : vector<64x256xf32>
    %405 = arith.addf %396, %404 : vector<64x256xf32>
    %c0_297 = arith.constant 0 : index
    %c0_298 = arith.constant 0 : index
    %406 = vector.load %arg12[%c0_297, %c0_298] : memref<64x1xf32, #tpu.memory_space<vmem>>, vector<64x1xf32>
    %407 = vector.broadcast %406 : vector<64x1xf32> to vector<64x256xf32>
    %408 = arith.addf %405, %407 : vector<64x256xf32>
    %cst_299 = arith.constant 1.000000e-01 : f32
    %409 = vector.broadcast %cst_299 : f32 to vector<64x256xf32>
    %410 = arith.mulf %409, %408 : vector<64x256xf32>
    %411 = arith.maximumf %408, %410 : vector<64x256xf32>
    %412 = arith.truncf %411 : vector<64x256xf32> to vector<64x256xbf16>
    %c4_300 = arith.constant 4 : index
    %c0_301 = arith.constant 0 : index
    %c0_302 = arith.constant 0 : index
    %413 = vector.load %arg13[%c4_300, %c0_301, %c0_302] : memref<9x32x64xbf16, #tpu.memory_space<vmem>>, vector<1x32x64xbf16>
    %414 = vector.shape_cast %413 : vector<1x32x64xbf16> to vector<32x64xbf16>
    %cst_303 = arith.constant dense<0.000000e+00> : vector<32x256xf32>
    %415 = tpu.matmul %414, %412, %cst_303 {dimension_numbers = #tpu.dot_dimension_numbers<[1], [0], [0], [1], [0, 0, 1, 1], [], []>} : vector<32x64xbf16>, vector<64x256xbf16>, vector<32x256xf32> -> vector<32x256xf32>
    %c17_i32_304 = arith.constant 17 : i32
    %416 = tpu.dynamic_rotate %411 by %c17_i32_304 dim 1 : vector<64x256xf32>, i32 -> vector<64x256xf32>
    %417 = arith.truncf %416 : vector<64x256xf32> to vector<64x256xbf16>
    %c0_305 = arith.constant 0 : index
    %c0_306 = arith.constant 0 : index
    %c0_307 = arith.constant 0 : index
    %418 = vector.load %arg13[%c0_305, %c0_306, %c0_307] : memref<9x32x64xbf16, #tpu.memory_space<vmem>>, vector<1x32x64xbf16>
    %419 = vector.shape_cast %418 : vector<1x32x64xbf16> to vector<32x64xbf16>
    %cst_308 = arith.constant dense<0.000000e+00> : vector<32x256xf32>
    %420 = tpu.matmul %419, %417, %cst_308 {dimension_numbers = #tpu.dot_dimension_numbers<[1], [0], [0], [1], [0, 0, 1, 1], [], []>} : vector<32x64xbf16>, vector<64x256xbf16>, vector<32x256xf32> -> vector<32x256xf32>
    %c0_309 = arith.constant 0 : index
    %c0_310 = arith.constant 0 : index
    %421 = vector.load %arg2[%c0_309, %c0_310] : memref<9x256xf32, #tpu.memory_space<vmem>>, vector<1x256xf32>
    %422 = vector.broadcast %421 : vector<1x256xf32> to vector<32x256xf32>
    %423 = arith.mulf %422, %420 : vector<32x256xf32>
    %424 = arith.addf %415, %423 : vector<32x256xf32>
    %c16_i32_311 = arith.constant 16 : i32
    %425 = tpu.dynamic_rotate %411 by %c16_i32_311 dim 1 : vector<64x256xf32>, i32 -> vector<64x256xf32>
    %426 = arith.truncf %425 : vector<64x256xf32> to vector<64x256xbf16>
    %c1_312 = arith.constant 1 : index
    %c0_313 = arith.constant 0 : index
    %c0_314 = arith.constant 0 : index
    %427 = vector.load %arg13[%c1_312, %c0_313, %c0_314] : memref<9x32x64xbf16, #tpu.memory_space<vmem>>, vector<1x32x64xbf16>
    %428 = vector.shape_cast %427 : vector<1x32x64xbf16> to vector<32x64xbf16>
    %cst_315 = arith.constant dense<0.000000e+00> : vector<32x256xf32>
    %429 = tpu.matmul %428, %426, %cst_315 {dimension_numbers = #tpu.dot_dimension_numbers<[1], [0], [0], [1], [0, 0, 1, 1], [], []>} : vector<32x64xbf16>, vector<64x256xbf16>, vector<32x256xf32> -> vector<32x256xf32>
    %c1_316 = arith.constant 1 : index
    %c0_317 = arith.constant 0 : index
    %430 = vector.load %arg2[%c1_316, %c0_317] : memref<9x256xf32, #tpu.memory_space<vmem>>, vector<1x256xf32>
    %431 = vector.broadcast %430 : vector<1x256xf32> to vector<32x256xf32>
    %432 = arith.mulf %431, %429 : vector<32x256xf32>
    %433 = arith.addf %424, %432 : vector<32x256xf32>
    %c15_i32_318 = arith.constant 15 : i32
    %434 = tpu.dynamic_rotate %411 by %c15_i32_318 dim 1 : vector<64x256xf32>, i32 -> vector<64x256xf32>
    %435 = arith.truncf %434 : vector<64x256xf32> to vector<64x256xbf16>
    %c2_319 = arith.constant 2 : index
    %c0_320 = arith.constant 0 : index
    %c0_321 = arith.constant 0 : index
    %436 = vector.load %arg13[%c2_319, %c0_320, %c0_321] : memref<9x32x64xbf16, #tpu.memory_space<vmem>>, vector<1x32x64xbf16>
    %437 = vector.shape_cast %436 : vector<1x32x64xbf16> to vector<32x64xbf16>
    %cst_322 = arith.constant dense<0.000000e+00> : vector<32x256xf32>
    %438 = tpu.matmul %437, %435, %cst_322 {dimension_numbers = #tpu.dot_dimension_numbers<[1], [0], [0], [1], [0, 0, 1, 1], [], []>} : vector<32x64xbf16>, vector<64x256xbf16>, vector<32x256xf32> -> vector<32x256xf32>
    %c2_323 = arith.constant 2 : index
    %c0_324 = arith.constant 0 : index
    %439 = vector.load %arg2[%c2_323, %c0_324] : memref<9x256xf32, #tpu.memory_space<vmem>>, vector<1x256xf32>
    %440 = vector.broadcast %439 : vector<1x256xf32> to vector<32x256xf32>
    %441 = arith.mulf %440, %438 : vector<32x256xf32>
    %442 = arith.addf %433, %441 : vector<32x256xf32>
    %c1_i32_325 = arith.constant 1 : i32
    %443 = tpu.dynamic_rotate %411 by %c1_i32_325 dim 1 : vector<64x256xf32>, i32 -> vector<64x256xf32>
    %444 = arith.truncf %443 : vector<64x256xf32> to vector<64x256xbf16>
    %c3_326 = arith.constant 3 : index
    %c0_327 = arith.constant 0 : index
    %c0_328 = arith.constant 0 : index
    %445 = vector.load %arg13[%c3_326, %c0_327, %c0_328] : memref<9x32x64xbf16, #tpu.memory_space<vmem>>, vector<1x32x64xbf16>
    %446 = vector.shape_cast %445 : vector<1x32x64xbf16> to vector<32x64xbf16>
    %cst_329 = arith.constant dense<0.000000e+00> : vector<32x256xf32>
    %447 = tpu.matmul %446, %444, %cst_329 {dimension_numbers = #tpu.dot_dimension_numbers<[1], [0], [0], [1], [0, 0, 1, 1], [], []>} : vector<32x64xbf16>, vector<64x256xbf16>, vector<32x256xf32> -> vector<32x256xf32>
    %c3_330 = arith.constant 3 : index
    %c0_331 = arith.constant 0 : index
    %448 = vector.load %arg2[%c3_330, %c0_331] : memref<9x256xf32, #tpu.memory_space<vmem>>, vector<1x256xf32>
    %449 = vector.broadcast %448 : vector<1x256xf32> to vector<32x256xf32>
    %450 = arith.mulf %449, %447 : vector<32x256xf32>
    %451 = arith.addf %442, %450 : vector<32x256xf32>
    %c255_i32_332 = arith.constant 255 : i32
    %452 = tpu.dynamic_rotate %411 by %c255_i32_332 dim 1 : vector<64x256xf32>, i32 -> vector<64x256xf32>
    %453 = arith.truncf %452 : vector<64x256xf32> to vector<64x256xbf16>
    %c5_333 = arith.constant 5 : index
    %c0_334 = arith.constant 0 : index
    %c0_335 = arith.constant 0 : index
    %454 = vector.load %arg13[%c5_333, %c0_334, %c0_335] : memref<9x32x64xbf16, #tpu.memory_space<vmem>>, vector<1x32x64xbf16>
    %455 = vector.shape_cast %454 : vector<1x32x64xbf16> to vector<32x64xbf16>
    %cst_336 = arith.constant dense<0.000000e+00> : vector<32x256xf32>
    %456 = tpu.matmul %455, %453, %cst_336 {dimension_numbers = #tpu.dot_dimension_numbers<[1], [0], [0], [1], [0, 0, 1, 1], [], []>} : vector<32x64xbf16>, vector<64x256xbf16>, vector<32x256xf32> -> vector<32x256xf32>
    %c5_337 = arith.constant 5 : index
    %c0_338 = arith.constant 0 : index
    %457 = vector.load %arg2[%c5_337, %c0_338] : memref<9x256xf32, #tpu.memory_space<vmem>>, vector<1x256xf32>
    %458 = vector.broadcast %457 : vector<1x256xf32> to vector<32x256xf32>
    %459 = arith.mulf %458, %456 : vector<32x256xf32>
    %460 = arith.addf %451, %459 : vector<32x256xf32>
    %c241_i32_339 = arith.constant 241 : i32
    %461 = tpu.dynamic_rotate %411 by %c241_i32_339 dim 1 : vector<64x256xf32>, i32 -> vector<64x256xf32>
    %462 = arith.truncf %461 : vector<64x256xf32> to vector<64x256xbf16>
    %c6_340 = arith.constant 6 : index
    %c0_341 = arith.constant 0 : index
    %c0_342 = arith.constant 0 : index
    %463 = vector.load %arg13[%c6_340, %c0_341, %c0_342] : memref<9x32x64xbf16, #tpu.memory_space<vmem>>, vector<1x32x64xbf16>
    %464 = vector.shape_cast %463 : vector<1x32x64xbf16> to vector<32x64xbf16>
    %cst_343 = arith.constant dense<0.000000e+00> : vector<32x256xf32>
    %465 = tpu.matmul %464, %462, %cst_343 {dimension_numbers = #tpu.dot_dimension_numbers<[1], [0], [0], [1], [0, 0, 1, 1], [], []>} : vector<32x64xbf16>, vector<64x256xbf16>, vector<32x256xf32> -> vector<32x256xf32>
    %c6_344 = arith.constant 6 : index
    %c0_345 = arith.constant 0 : index
    %466 = vector.load %arg2[%c6_344, %c0_345] : memref<9x256xf32, #tpu.memory_space<vmem>>, vector<1x256xf32>
    %467 = vector.broadcast %466 : vector<1x256xf32> to vector<32x256xf32>
    %468 = arith.mulf %467, %465 : vector<32x256xf32>
    %469 = arith.addf %460, %468 : vector<32x256xf32>
    %c240_i32_346 = arith.constant 240 : i32
    %470 = tpu.dynamic_rotate %411 by %c240_i32_346 dim 1 : vector<64x256xf32>, i32 -> vector<64x256xf32>
    %471 = arith.truncf %470 : vector<64x256xf32> to vector<64x256xbf16>
    %c7_347 = arith.constant 7 : index
    %c0_348 = arith.constant 0 : index
    %c0_349 = arith.constant 0 : index
    %472 = vector.load %arg13[%c7_347, %c0_348, %c0_349] : memref<9x32x64xbf16, #tpu.memory_space<vmem>>, vector<1x32x64xbf16>
    %473 = vector.shape_cast %472 : vector<1x32x64xbf16> to vector<32x64xbf16>
    %cst_350 = arith.constant dense<0.000000e+00> : vector<32x256xf32>
    %474 = tpu.matmul %473, %471, %cst_350 {dimension_numbers = #tpu.dot_dimension_numbers<[1], [0], [0], [1], [0, 0, 1, 1], [], []>} : vector<32x64xbf16>, vector<64x256xbf16>, vector<32x256xf32> -> vector<32x256xf32>
    %c7_351 = arith.constant 7 : index
    %c0_352 = arith.constant 0 : index
    %475 = vector.load %arg2[%c7_351, %c0_352] : memref<9x256xf32, #tpu.memory_space<vmem>>, vector<1x256xf32>
    %476 = vector.broadcast %475 : vector<1x256xf32> to vector<32x256xf32>
    %477 = arith.mulf %476, %474 : vector<32x256xf32>
    %478 = arith.addf %469, %477 : vector<32x256xf32>
    %c239_i32_353 = arith.constant 239 : i32
    %479 = tpu.dynamic_rotate %411 by %c239_i32_353 dim 1 : vector<64x256xf32>, i32 -> vector<64x256xf32>
    %480 = arith.truncf %479 : vector<64x256xf32> to vector<64x256xbf16>
    %c8_354 = arith.constant 8 : index
    %c0_355 = arith.constant 0 : index
    %c0_356 = arith.constant 0 : index
    %481 = vector.load %arg13[%c8_354, %c0_355, %c0_356] : memref<9x32x64xbf16, #tpu.memory_space<vmem>>, vector<1x32x64xbf16>
    %482 = vector.shape_cast %481 : vector<1x32x64xbf16> to vector<32x64xbf16>
    %cst_357 = arith.constant dense<0.000000e+00> : vector<32x256xf32>
    %483 = tpu.matmul %482, %480, %cst_357 {dimension_numbers = #tpu.dot_dimension_numbers<[1], [0], [0], [1], [0, 0, 1, 1], [], []>} : vector<32x64xbf16>, vector<64x256xbf16>, vector<32x256xf32> -> vector<32x256xf32>
    %c8_358 = arith.constant 8 : index
    %c0_359 = arith.constant 0 : index
    %484 = vector.load %arg2[%c8_358, %c0_359] : memref<9x256xf32, #tpu.memory_space<vmem>>, vector<1x256xf32>
    %485 = vector.broadcast %484 : vector<1x256xf32> to vector<32x256xf32>
    %486 = arith.mulf %485, %483 : vector<32x256xf32>
    %487 = arith.addf %478, %486 : vector<32x256xf32>
    %c0_360 = arith.constant 0 : index
    %c0_361 = arith.constant 0 : index
    %488 = vector.load %arg14[%c0_360, %c0_361] : memref<32x1xf32, #tpu.memory_space<vmem>>, vector<32x1xf32>
    %489 = vector.broadcast %488 : vector<32x1xf32> to vector<32x256xf32>
    %490 = arith.addf %487, %489 : vector<32x256xf32>
    %cst_362 = arith.constant 1.000000e-01 : f32
    %491 = vector.broadcast %cst_362 : f32 to vector<32x256xf32>
    %492 = arith.mulf %491, %490 : vector<32x256xf32>
    %493 = arith.maximumf %490, %492 : vector<32x256xf32>
    %c0_363 = arith.constant 0 : index
    %c0_364 = arith.constant 0 : index
    %c0_365 = arith.constant 0 : index
    %494 = vector.load %arg15[%c0_363, %c0_364, %c0_365] : memref<1x32x256xf32, #tpu.memory_space<vmem>>, vector<1x32x256xf32>
    %495 = vector.shape_cast %494 : vector<1x32x256xf32> to vector<32x256xf32>
    %496 = vector.shape_cast %493 : vector<32x256xf32> to vector<1x32x256xf32>
    tpu.vector_store %arg15[%c0_363, %c0_364, %c0_365], %496 {strides = array<i32>} : memref<1x32x256xf32, #tpu.memory_space<vmem>>, vector<1x32x256xf32>,
    return
  }
  func.func @transform_0(%arg0: i32) -> (i32, i32, i32) {
    %c0_i32 = arith.constant 0 : i32
    %c0_i32_0 = arith.constant 0 : i32
    %c0_i32_1 = arith.constant 0 : i32
    return %arg0, %c0_i32, %c0_i32_0 : i32, i32, i32
  }
  func.func @transform_1(%arg0: i32) -> (i32, i32) {
    %c0_i32 = arith.constant 0 : i32
    %c0_i32_0 = arith.constant 0 : i32
    %c0_i32_1 = arith.constant 0 : i32
    return %c0_i32, %c0_i32_0 : i32, i32
  }
  func.func @transform_2(%arg0: i32) -> (i32, i32, i32) {
    %c0_i32 = arith.constant 0 : i32
    %c0_i32_0 = arith.constant 0 : i32
    %c0_i32_1 = arith.constant 0 : i32
    %c0_i32_2 = arith.constant 0 : i32
    return %c0_i32, %c0_i32_0, %c0_i32_1 : i32, i32, i32
  }
  func.func @transform_3(%arg0: i32) -> (i32, i32) {
    %c0_i32 = arith.constant 0 : i32
    %c0_i32_0 = arith.constant 0 : i32
    %c0_i32_1 = arith.constant 0 : i32
    return %c0_i32, %c0_i32_0 : i32, i32
  }
  func.func @transform_4(%arg0: i32) -> (i32, i32, i32) {
    %c0_i32 = arith.constant 0 : i32
    %c0_i32_0 = arith.constant 0 : i32
    %c0_i32_1 = arith.constant 0 : i32
    %c0_i32_2 = arith.constant 0 : i32
    return %c0_i32, %c0_i32_0, %c0_i32_1 : i32, i32, i32
  }
  func.func @transform_5(%arg0: i32) -> (i32, i32) {
    %c0_i32 = arith.constant 0 : i32
    %c0_i32_0 = arith.constant 0 : i32
    %c0_i32_1 = arith.constant 0 : i32
    return %c0_i32, %c0_i32_0 : i32, i32
  }
  func.func @transform_6(%arg0: i32) -> (i32, i32, i32) {
    %c0_i32 = arith.constant 0 : i32
    %c0_i32_0 = arith.constant 0 : i32
    %c0_i32_1 = arith.constant 0 : i32
    %c0_i32_2 = arith.constant 0 : i32
    return %c0_i32, %c0_i32_0, %c0_i32_1 : i32, i32, i32
  }
  func.func @transform_7(%arg0: i32) -> (i32, i32) {
    %c0_i32 = arith.constant 0 : i32
    %c0_i32_0 = arith.constant 0 : i32
    %c0_i32_1 = arith.constant 0 : i32
    return %c0_i32, %c0_i32_0 : i32, i32
  }
  func.func @transform_8(%arg0: i32) -> (i32, i32, i32) {
    %c0_i32 = arith.constant 0 : i32
    %c0_i32_0 = arith.constant 0 : i32
    %c0_i32_1 = arith.constant 0 : i32
    %c0_i32_2 = arith.constant 0 : i32
    return %c0_i32, %c0_i32_0, %c0_i32_1 : i32, i32, i32
  }
  func.func @transform_9(%arg0: i32) -> (i32, i32) {
    %c0_i32 = arith.constant 0 : i32
    %c0_i32_0 = arith.constant 0 : i32
    %c0_i32_1 = arith.constant 0 : i32
    return %c0_i32, %c0_i32_0 : i32, i32
  }
  func.func @transform_10(%arg0: i32) -> (i32, i32, i32) {
    %c0_i32 = arith.constant 0 : i32
    %c0_i32_0 = arith.constant 0 : i32
    %c0_i32_1 = arith.constant 0 : i32
    %c0_i32_2 = arith.constant 0 : i32
    return %c0_i32, %c0_i32_0, %c0_i32_1 : i32, i32, i32
  }
  func.func @transform_11(%arg0: i32) -> (i32, i32) {
    %c0_i32 = arith.constant 0 : i32
    %c0_i32_0 = arith.constant 0 : i32
    %c0_i32_1 = arith.constant 0 : i32
    return %c0_i32, %c0_i32_0 : i32, i32
  }
  func.func @transform_12(%arg0: i32) -> (i32, i32, i32) {
    %c0_i32 = arith.constant 0 : i32
    %c0_i32_0 = arith.constant 0 : i32
    %c0_i32_1 = arith.constant 0 : i32
    %c0_i32_2 = arith.constant 0 : i32
    return %c0_i32, %c0_i32_0, %c0_i32_1 : i32, i32, i32
  }
  func.func @transform_13(%arg0: i32) -> (i32, i32) {
    %c0_i32 = arith.constant 0 : i32
    %c0_i32_0 = arith.constant 0 : i32
    %c0_i32_1 = arith.constant 0 : i32
    return %c0_i32, %c0_i32_0 : i32, i32
  }
  func.func @transform_14(%arg0: i32) -> (i32, i32, i32) {
    %c0_i32 = arith.constant 0 : i32
    %c0_i32_0 = arith.constant 0 : i32
    %c0_i32_1 = arith.constant 0 : i32
    return %arg0, %c0_i32, %c0_i32_0 : i32, i32, i32
  }
}

</mosaic_0001>

<llo_original>
// kernel: decoder_forward.1
$region0: #{decoder_forward.1}
  #allocation0 [shape = 'u32[]', space=smem, size = 0x4, offset = 0x4, fixed_abs, tag = 'smem constant byte address 0x4 - core index']
  #allocation1 [shape = 'u32[144,128]{1,0:T(1,128)}', space=vmem, size = 0x12000, scoped, tag = 'internal scratch']
  %s0 = inlined_call_operand.vmem [shape: f32[2,4,256], index: 0, kind: input, shape index: {}]
  %s1 = inlined_call_operand.vmem [shape: f32[9,256], index: 1, kind: input, shape index: {}]
  %s2 = inlined_call_operand.vmem [shape: bf16[9,32,4], index: 2, kind: input, shape index: {}]
  %s3 = inlined_call_operand.vmem [shape: f32[32,1], index: 3, kind: input, shape index: {}]
  %s4 = inlined_call_operand.vmem [shape: bf16[9,32,32], index: 4, kind: input, shape index: {}]
  %s5 = inlined_call_operand.vmem [shape: f32[32,1], index: 5, kind: input, shape index: {}]
  %s6 = inlined_call_operand.vmem [shape: bf16[9,32,32], index: 6, kind: input, shape index: {}]
  %s7 = inlined_call_operand.vmem [shape: f32[32,1], index: 7, kind: input, shape index: {}]
  %s8 = inlined_call_operand.vmem [shape: bf16[9,32,32], index: 8, kind: input, shape index: {}]
  %s9 = inlined_call_operand.vmem [shape: f32[32,1], index: 9, kind: input, shape index: {}]
  %s10 = inlined_call_operand.vmem [shape: bf16[9,64,32], index: 10, kind: input, shape index: {}]
  %s11 = inlined_call_operand.vmem [shape: f32[64,1], index: 11, kind: input, shape index: {}]
  %s12 = inlined_call_operand.vmem [shape: bf16[9,32,64], index: 12, kind: input, shape index: {}]
  %s13 = inlined_call_operand.vmem [shape: f32[32,1], index: 13, kind: input, shape index: {}]
  %s14 = inlined_call_operand.vmem [shape: f32[2,32,256], index: 14, kind: output, shape index: {}]
  %s15 = sld [smem:[#allocation0]]
  $region89: #{decoder_forward.1} parent=0
    _
  %s17 = ssub.s32 1, %s15
  %s18 = scalar_select 0, %s17, %s15
  loop: start=0, step=1, limit=4
  $region2: #{decoder_forward.1} parent=0 // loop_pre_header
    _
  $region3: #{decoder_forward.1} parent=0 // loop_header
    %s20 = sphi 0, %s24
    %p21 = scmp.ge.s32.totalorder %s20, 4
    %s30 = sphi 0, %s32
    %s33 = sphi 0, %s30
    %s34 = sphi 0, %s33
    %s50 = sphi 0, %s34
    %s54 = sphi 0, %s54
    %s56 = sphi 0, %s54
    %s57 = sphi 0, %s56
    %s71 = sphi 0, %s57
    %s75 = sphi 0, %s75
    %s77 = sphi 0, %s75
    %s78 = sphi 0, %s77
    %s92 = sphi 0, %s78
    %s96 = sphi 0, %s96
    %s98 = sphi 0, %s96
    %s99 = sphi 0, %s98
    %s113 = sphi 0, %s99
    %s117 = sphi 0, %s117
    %s119 = sphi 0, %s117
    %s120 = sphi 0, %s119
    %s134 = sphi 0, %s120
    %s138 = sphi 0, %s138
    %s140 = sphi 0, %s138
    %s141 = sphi 0, %s140
    %s155 = sphi 0, %s141
    %s159 = sphi 0, %s159
    %s161 = sphi 0, %s159
    %s162 = sphi 0, %s161
    %s176 = sphi 0, %s162
    %s180 = sphi 0, %s180
    %s182 = sphi 0, %s180
    %s183 = sphi 0, %s182
    %s197 = sphi 0, %s183
    %s201 = sphi 0, %s201
    %s203 = sphi 0, %s201
    %s204 = sphi 0, %s203
    %s218 = sphi 0, %s204
    %s222 = sphi 0, %s222
    %s224 = sphi 0, %s222
    %s225 = sphi 0, %s224
    %s239 = sphi 0, %s225
    %s243 = sphi 0, %s243
    %s245 = sphi 0, %s243
    %s246 = sphi 0, %s245
    %s260 = sphi 0, %s246
    %s264 = sphi 0, %s264
    %s266 = sphi 0, %s264
    %s267 = sphi 0, %s266
    %s281 = sphi 0, %s267
    %s285 = sphi 0, %s285
    %s287 = sphi 0, %s285
    %s288 = sphi 0, %s287
    %s302 = sphi 0, %s288
    %s306 = sphi 0, %s306
    %s308 = sphi 0, %s306
    %s309 = sphi 0, %s308
    %s323 = sphi 0, %s309
    %s329 = sphi 0, %s331
    %s332 = sphi 0, %s329
    %s333 = sphi 0, %s332
    %s349 = sphi 0, %s333
  $region4: #{decoder_forward.1} parent=0 // loop_header_branch
    %23 = sbr.rel (%p21) target = $region8
  $region5: #{decoder_forward.1} parent=0 // loop_body
    %s25 = ssub.s32 %s20, 1
    %s26 = ssub.s32 %s20, 2
    %s27 = sadd.s32 %s20, 1
    %s28 = ssub.s32 %s20, %s27
    %p29 = scmp.eq.s32.totalorder %s28, 0
    %s31 = sadd.s32 %s30, 1
    %s32 = scalar_select %p29, %s30, %s31
    %p35 = pneg %p29
    %p36 = scmp.eq.s32.totalorder %s20, 1
    %p37 = por %p35, %p36
    %p38 = scmp.ne.s32.totalorder %s30, %s33
    %p39 = scmp.eq.s32.totalorder %s20, 0
    %p40 = por %p38, %p39
    %p41 = scmp.ne.s32.totalorder %s30, %s33
    %p42 = scmp.eq.s32.totalorder %s25, 1
    %p43 = por %p41, %p42
    %p44 = scmp.ne.s32.totalorder %s33, %s34
    %p45 = scmp.eq.s32.totalorder %s25, 0
    %p46 = por %p44, %p45
    %p47 = scmp.ne.s32.totalorder %s33, %s34
    %p48 = scmp.eq.s32.totalorder %s26, 1
    %p49 = por %p47, %p48
    %p51 = scmp.ne.s32.totalorder %s34, %s50
    %p52 = scmp.eq.s32.totalorder %s26, 0
    %p53 = por %p51, %p52
    %s55 = sadd.s32 %s54, 1
    %p58 = scmp.eq.s32.totalorder %s20, 1
    %p59 = scmp.ne.s32.totalorder %s54, %s56
    %p60 = scmp.eq.s32.totalorder %s20, 0
    %p61 = por %p59, %p60
    %p62 = scmp.ne.s32.totalorder %s54, %s56
    %p63 = scmp.eq.s32.totalorder %s25, 1
    %p64 = por %p62, %p63
    %p65 = scmp.ne.s32.totalorder %s56, %s57
    %p66 = scmp.eq.s32.totalorder %s25, 0
    %p67 = por %p65, %p66
    %p68 = scmp.ne.s32.totalorder %s56, %s57
    %p69 = scmp.eq.s32.totalorder %s26, 1
    %p70 = por %p68, %p69
    %p72 = scmp.ne.s32.totalorder %s57, %s71
    %p73 = scmp.eq.s32.totalorder %s26, 0
    %p74 = por %p72, %p73
    %s76 = sadd.s32 %s75, 1
    %p79 = scmp.eq.s32.totalorder %s20, 1
    %p80 = scmp.ne.s32.totalorder %s75, %s77
    %p81 = scmp.eq.s32.totalorder %s20, 0
    %p82 = por %p80, %p81
    %p83 = scmp.ne.s32.totalorder %s75, %s77
    %p84 = scmp.eq.s32.totalorder %s25, 1
    %p85 = por %p83, %p84
    %p86 = scmp.ne.s32.totalorder %s77, %s78
    %p87 = scmp.eq.s32.totalorder %s25, 0
    %p88 = por %p86, %p87
    %p89 = scmp.ne.s32.totalorder %s77, %s78
    %p90 = scmp.eq.s32.totalorder %s26, 1
    %p91 = por %p89, %p90
    %p93 = scmp.ne.s32.totalorder %s78, %s92
    %p94 = scmp.eq.s32.totalorder %s26, 0
    %p95 = por %p93, %p94
    %s97 = sadd.s32 %s96, 1
    %p100 = scmp.eq.s32.totalorder %s20, 1
    %p101 = scmp.ne.s32.totalorder %s96, %s98
    %p102 = scmp.eq.s32.totalorder %s20, 0
    %p103 = por %p101, %p102
    %p104 = scmp.ne.s32.totalorder %s96, %s98
    %p105 = scmp.eq.s32.totalorder %s25, 1
    %p106 = por %p104, %p105
    %p107 = scmp.ne.s32.totalorder %s98, %s99
    %p108 = scmp.eq.s32.totalorder %s25, 0
    %p109 = por %p107, %p108
    %p110 = scmp.ne.s32.totalorder %s98, %s99
    %p111 = scmp.eq.s32.totalorder %s26, 1
    %p112 = por %p110, %p111
    %p114 = scmp.ne.s32.totalorder %s99, %s113
    %p115 = scmp.eq.s32.totalorder %s26, 0
    %p116 = por %p114, %p115
    %s118 = sadd.s32 %s117, 1
    %p121 = scmp.eq.s32.totalorder %s20, 1
    %p122 = scmp.ne.s32.totalorder %s117, %s119
    %p123 = scmp.eq.s32.totalorder %s20, 0
    %p124 = por %p122, %p123
    %p125 = scmp.ne.s32.totalorder %s117, %s119
    %p126 = scmp.eq.s32.totalorder %s25, 1
    %p127 = por %p125, %p126
    %p128 = scmp.ne.s32.totalorder %s119, %s120
    %p129 = scmp.eq.s32.totalorder %s25, 0
    %p130 = por %p128, %p129
    %p131 = scmp.ne.s32.totalorder %s119, %s120
    %p132 = scmp.eq.s32.totalorder %s26, 1
    %p133 = por %p131, %p132
    %p135 = scmp.ne.s32.totalorder %s120, %s134
    %p136 = scmp.eq.s32.totalorder %s26, 0
    %p137 = por %p135, %p136
    %s139 = sadd.s32 %s138, 1
    %p142 = scmp.eq.s32.totalorder %s20, 1
    %p143 = scmp.ne.s32.totalorder %s138, %s140
    %p144 = scmp.eq.s32.totalorder %s20, 0
    %p145 = por %p143, %p144
    %p146 = scmp.ne.s32.totalorder %s138, %s140
    %p147 = scmp.eq.s32.totalorder %s25, 1
    %p148 = por %p146, %p147
    %p149 = scmp.ne.s32.totalorder %s140, %s141
    %p150 = scmp.eq.s32.totalorder %s25, 0
    %p151 = por %p149, %p150
    %p152 = scmp.ne.s32.totalorder %s140, %s141
    %p153 = scmp.eq.s32.totalorder %s26, 1
    %p154 = por %p152, %p153
    %p156 = scmp.ne.s32.totalorder %s141, %s155
    %p157 = scmp.eq.s32.totalorder %s26, 0
    %p158 = por %p156, %p157
    %s160 = sadd.s32 %s159, 1
    %p163 = scmp.eq.s32.totalorder %s20, 1
    %p164 = scmp.ne.s32.totalorder %s159, %s161
    %p165 = scmp.eq.s32.totalorder %s20, 0
    %p166 = por %p164, %p165
    %p167 = scmp.ne.s32.totalorder %s159, %s161
    %p168 = scmp.eq.s32.totalorder %s25, 1
    %p169 = por %p167, %p168
    %p170 = scmp.ne.s32.totalorder %s161, %s162
    %p171 = scmp.eq.s32.totalorder %s25, 0
    %p172 = por %p170, %p171
    %p173 = scmp.ne.s32.totalorder %s161, %s162
    %p174 = scmp.eq.s32.totalorder %s26, 1
    %p175 = por %p173, %p174
    %p177 = scmp.ne.s32.totalorder %s162, %s176
    %p178 = scmp.eq.s32.totalorder %s26, 0
    %p179 = por %p177, %p178
    %s181 = sadd.s32 %s180, 1
    %p184 = scmp.eq.s32.totalorder %s20, 1
    %p185 = scmp.ne.s32.totalorder %s180, %s182
    %p186 = scmp.eq.s32.totalorder %s20, 0
    %p187 = por %p185, %p186
    %p188 = scmp.ne.s32.totalorder %s180, %s182
    %p189 = scmp.eq.s32.totalorder %s25, 1
    %p190 = por %p188, %p189
    %p191 = scmp.ne.s32.totalorder %s182, %s183
    %p192 = scmp.eq.s32.totalorder %s25, 0
    %p193 = por %p191, %p192
    %p194 = scmp.ne.s32.totalorder %s182, %s183
    %p195 = scmp.eq.s32.totalorder %s26, 1
    %p196 = por %p194, %p195
    %p198 = scmp.ne.s32.totalorder %s183, %s197
    %p199 = scmp.eq.s32.totalorder %s26, 0
    %p200 = por %p198, %p199
    %s202 = sadd.s32 %s201, 1
    %p205 = scmp.eq.s32.totalorder %s20, 1
    %p206 = scmp.ne.s32.totalorder %s201, %s203
    %p207 = scmp.eq.s32.totalorder %s20, 0
    %p208 = por %p206, %p207
    %p209 = scmp.ne.s32.totalorder %s201, %s203
    %p210 = scmp.eq.s32.totalorder %s25, 1
    %p211 = por %p209, %p210
    %p212 = scmp.ne.s32.totalorder %s203, %s204
    %p213 = scmp.eq.s32.totalorder %s25, 0
    %p214 = por %p212, %p213
    %p215 = scmp.ne.s32.totalorder %s203, %s204
    %p216 = scmp.eq.s32.totalorder %s26, 1
    %p217 = por %p215, %p216
    %p219 = scmp.ne.s32.totalorder %s204, %s218
    %p220 = scmp.eq.s32.totalorder %s26, 0
    %p221 = por %p219, %p220
    %s223 = sadd.s32 %s222, 1
    %p226 = scmp.eq.s32.totalorder %s20, 1
    %p227 = scmp.ne.s32.totalorder %s222, %s224
    %p228 = scmp.eq.s32.totalorder %s20, 0
    %p229 = por %p227, %p228
    %p230 = scmp.ne.s32.totalorder %s222, %s224
    %p231 = scmp.eq.s32.totalorder %s25, 1
    %p232 = por %p230, %p231
    %p233 = scmp.ne.s32.totalorder %s224, %s225
    %p234 = scmp.eq.s32.totalorder %s25, 0
    %p235 = por %p233, %p234
    %p236 = scmp.ne.s32.totalorder %s224, %s225
    %p237 = scmp.eq.s32.totalorder %s26, 1
    %p238 = por %p236, %p237
    %p240 = scmp.ne.s32.totalorder %s225, %s239
    %p241 = scmp.eq.s32.totalorder %s26, 0
    %p242 = por %p240, %p241
    %s244 = sadd.s32 %s243, 1
    %p247 = scmp.eq.s32.totalorder %s20, 1
    %p248 = scmp.ne.s32.totalorder %s243, %s245
    %p249 = scmp.eq.s32.totalorder %s20, 0
    %p250 = por %p248, %p249
    %p251 = scmp.ne.s32.totalorder %s243, %s245
    %p252 = scmp.eq.s32.totalorder %s25, 1
    %p253 = por %p251, %p252
    %p254 = scmp.ne.s32.totalorder %s245, %s246
    %p255 = scmp.eq.s32.totalorder %s25, 0
    %p256 = por %p254, %p255
    %p257 = scmp.ne.s32.totalorder %s245, %s246
    %p258 = scmp.eq.s32.totalorder %s26, 1
    %p259 = por %p257, %p258
    %p261 = scmp.ne.s32.totalorder %s246, %s260
    %p262 = scmp.eq.s32.totalorder %s26, 0
    %p263 = por %p261, %p262
    %s265 = sadd.s32 %s264, 1
    %p268 = scmp.eq.s32.totalorder %s20, 1
    %p269 = scmp.ne.s32.totalorder %s264, %s266
    %p270 = scmp.eq.s32.totalorder %s20, 0
    %p271 = por %p269, %p270
    %p272 = scmp.ne.s32.totalorder %s264, %s266
    %p273 = scmp.eq.s32.totalorder %s25, 1
    %p274 = por %p272, %p273
    %p275 = scmp.ne.s32.totalorder %s266, %s267
    %p276 = scmp.eq.s32.totalorder %s25, 0
    %p277 = por %p275, %p276
    %p278 = scmp.ne.s32.totalorder %s266, %s267
    %p279 = scmp.eq.s32.totalorder %s26, 1
    %p280 = por %p278, %p279
    %p282 = scmp.ne.s32.totalorder %s267, %s281
    %p283 = scmp.eq.s32.totalorder %s26, 0
    %p284 = por %p282, %p283
    %s286 = sadd.s32 %s285, 1
    %p289 = scmp.eq.s32.totalorder %s20, 1
    %p290 = scmp.ne.s32.totalorder %s285, %s287
    %p291 = scmp.eq.s32.totalorder %s20, 0
    %p292 = por %p290, %p291
    %p293 = scmp.ne.s32.totalorder %s285, %s287
    %p294 = scmp.eq.s32.totalorder %s25, 1
    %p295 = por %p293, %p294
    %p296 = scmp.ne.s32.totalorder %s287, %s288
    %p297 = scmp.eq.s32.totalorder %s25, 0
    %p298 = por %p296, %p297
    %p299 = scmp.ne.s32.totalorder %s287, %s288
    %p300 = scmp.eq.s32.totalorder %s26, 1
    %p301 = por %p299, %p300
    %p303 = scmp.ne.s32.totalorder %s288, %s302
    %p304 = scmp.eq.s32.totalorder %s26, 0
    %p305 = por %p303, %p304
    %s307 = sadd.s32 %s306, 1
    %p310 = scmp.eq.s32.totalorder %s20, 1
    %p311 = scmp.ne.s32.totalorder %s306, %s308
    %p312 = scmp.eq.s32.totalorder %s20, 0
    %p313 = por %p311, %p312
    %p314 = scmp.ne.s32.totalorder %s306, %s308
    %p315 = scmp.eq.s32.totalorder %s25, 1
    %p316 = por %p314, %p315
    %p317 = scmp.ne.s32.totalorder %s308, %s309
    %p318 = scmp.eq.s32.totalorder %s25, 0
    %p319 = por %p317, %p318
    %p320 = scmp.ne.s32.totalorder %s308, %s309
    %p321 = scmp.eq.s32.totalorder %s26, 1
    %p322 = por %p320, %p321
    %p324 = scmp.ne.s32.totalorder %s309, %s323
    %p325 = scmp.eq.s32.totalorder %s26, 0
    %p326 = por %p324, %p325
    %s327 = ssub.s32 %s20, %s27
    %p328 = scmp.eq.s32.totalorder %s327, 0
    %s330 = sadd.s32 %s329, 1
    %s331 = scalar_select %p328, %s329, %s330
    %p334 = pneg %p328
    %p335 = scmp.eq.s32.totalorder %s20, 1
    %p336 = por %p334, %p335
    %p337 = scmp.ne.s32.totalorder %s329, %s332
    %p338 = scmp.eq.s32.totalorder %s20, 0
    %p339 = por %p337, %p338
    %p340 = scmp.ne.s32.totalorder %s329, %s332
    %p341 = scmp.eq.s32.totalorder %s25, 1
    %p342 = por %p340, %p341
    %p343 = scmp.ne.s32.totalorder %s332, %s333
    %p344 = scmp.eq.s32.totalorder %s25, 0
    %p345 = por %p343, %p344
    %p346 = scmp.ne.s32.totalorder %s332, %s333
    %p347 = scmp.eq.s32.totalorder %s26, 1
    %p348 = por %p346, %p347
    %p350 = scmp.ne.s32.totalorder %s333, %s349
    %p351 = scmp.eq.s32.totalorder %s26, 0
    %p352 = por %p350, %p351
    %p353 = scmp.le.s32.totalorder 1, %s20
    %p354 = scmp.lt.s32.totalorder %s20, 3
    %p355 = pnand %p353, %p354
    %p356 = pneg %p355
    // Predicated region
    $region9: #{decoder_forward.1} parent=5 // pred_check
      _
    $region10: #{decoder_forward.1} parent=5 // pred_check_branch
      %358 = sbr.rel (%p355) target = $region12
    $region11: #{decoder_forward.1} parent=5 // pred_region
      %s359 = ssub.s32 %s20, 1
      // Predicated region
      $region13: #{decoder_forward.1} parent=11 // pred_check
        %p360 = pneg %p67
      $region14: #{decoder_forward.1} parent=11 // pred_check_branch
        %362 = sbr.rel (%p360) target = $region16
      $region15: #{decoder_forward.1} parent=11 // pred_region
        _
      $region16: #{decoder_forward.1} parent=11 // pred_fallthru
        _
      // Predicated region
      $region17: #{decoder_forward.1} parent=11 // pred_check
        %p363 = pneg %p88
      $region18: #{decoder_forward.1} parent=11 // pred_check_branch
        %365 = sbr.rel (%p363) target = $region20
      $region19: #{decoder_forward.1} parent=11 // pred_region
        _
      $region20: #{decoder_forward.1} parent=11 // pred_fallthru
        _
      // Predicated region
      $region21: #{decoder_forward.1} parent=11 // pred_check
        %p366 = pneg %p109
      $region22: #{decoder_forward.1} parent=11 // pred_check_branch
        %368 = sbr.rel (%p366) target = $region24
      $region23: #{decoder_forward.1} parent=11 // pred_region
        _
      $region24: #{decoder_forward.1} parent=11 // pred_fallthru
        _
      // Predicated region
      $region25: #{decoder_forward.1} parent=11 // pred_check
        %p369 = pneg %p130
      $region26: #{decoder_forward.1} parent=11 // pred_check_branch
        %371 = sbr.rel (%p369) target = $region28
      $region27: #{decoder_forward.1} parent=11 // pred_region
        _
      $region28: #{decoder_forward.1} parent=11 // pred_fallthru
        _
      // Predicated region
      $region29: #{decoder_forward.1} parent=11 // pred_check
        %p372 = pneg %p151
      $region30: #{decoder_forward.1} parent=11 // pred_check_branch
        %374 = sbr.rel (%p372) target = $region32
      $region31: #{decoder_forward.1} parent=11 // pred_region
        _
      $region32: #{decoder_forward.1} parent=11 // pred_fallthru
        _
      // Predicated region
      $region33: #{decoder_forward.1} parent=11 // pred_check
        %p375 = pneg %p172
      $region34: #{decoder_forward.1} parent=11 // pred_check_branch
        %377 = sbr.rel (%p375) target = $region36
      $region35: #{decoder_forward.1} parent=11 // pred_region
        _
      $region36: #{decoder_forward.1} parent=11 // pred_fallthru
        _
      // Predicated region
      $region37: #{decoder_forward.1} parent=11 // pred_check
        %p378 = pneg %p193
      $region38: #{decoder_forward.1} parent=11 // pred_check_branch
        %380 = sbr.rel (%p378) target = $region40
      $region39: #{decoder_forward.1} parent=11 // pred_region
        _
      $region40: #{decoder_forward.1} parent=11 // pred_fallthru
        _
      // Predicated region
      $region41: #{decoder_forward.1} parent=11 // pred_check
        %p381 = pneg %p214
      $region42: #{decoder_forward.1} parent=11 // pred_check_branch
        %383 = sbr.rel (%p381) target = $region44
      $region43: #{decoder_forward.1} parent=11 // pred_region
        _
      $region44: #{decoder_forward.1} parent=11 // pred_fallthru
        _
      // Predicated region
      $region45: #{decoder_forward.1} parent=11 // pred_check
        %p384 = pneg %p235
      $region46: #{decoder_forward.1} parent=11 // pred_check_branch
        %386 = sbr.rel (%p384) target = $region48
      $region47: #{decoder_forward.1} parent=11 // pred_region
        _
      $region48: #{decoder_forward.1} parent=11 // pred_fallthru
        _
      // Predicated region
      $region49: #{decoder_forward.1} parent=11 // pred_check
        %p387 = pneg %p256
      $region50: #{decoder_forward.1} parent=11 // pred_check_branch
        %389 = sbr.rel (%p387) target = $region52
      $region51: #{decoder_forward.1} parent=11 // pred_region
        _
      $region52: #{decoder_forward.1} parent=11 // pred_fallthru
        _
      // Predicated region
      $region53: #{decoder_forward.1} parent=11 // pred_check
        %p390 = pneg %p277
      $region54: #{decoder_forward.1} parent=11 // pred_check_branch
        %392 = sbr.rel (%p390) target = $region56
      $region55: #{decoder_forward.1} parent=11 // pred_region
        _
      $region56: #{decoder_forward.1} parent=11 // pred_fallthru
        _
      // Predicated region
      $region57: #{decoder_forward.1} parent=11 // pred_check
        %p393 = pneg %p298
      $region58: #{decoder_forward.1} parent=11 // pred_check_branch
        %395 = sbr.rel (%p393) target = $region60
      $region59: #{decoder_forward.1} parent=11 // pred_region
        _
      $region60: #{decoder_forward.1} parent=11 // pred_fallthru
        _
      // Predicated region
      $region61: #{decoder_forward.1} parent=11 // pred_check
        %p396 = pneg %p319
      $region62: #{decoder_forward.1} parent=11 // pred_check_branch
        %398 = sbr.rel (%p396) target = $region64
      $region63: #{decoder_forward.1} parent=11 // pred_region
        _
      $region64: #{decoder_forward.1} parent=11 // pred_fallthru
        _
    $region12: #{decoder_forward.1} parent=5 // pred_fallthru
      _
    %p399 = scmp.lt.s32.totalorder %s20, 2
    // Predicated region
    $region65: #{decoder_forward.1} parent=5 // pred_check
      %p400 = pneg %p399
    $region66: #{decoder_forward.1} parent=5 // pred_check_branch
      %402 = sbr.rel (%p400) target = $region68
    $region67: #{decoder_forward.1} parent=5 // pred_region
      // Predicated region
      $region69: #{decoder_forward.1} parent=67 // pred_check
        %p403 = pneg %p40
      $region70: #{decoder_forward.1} parent=67 // pred_check_branch
        %405 = sbr.rel (%p403) target = $region72
      $region71: #{decoder_forward.1} parent=67 // pred_region
        %p406 = scmp.lt.s32.totalorder %s20, 1
        %s407 = scalar_select %p406, %s20, 1
        %s408 = smul.addr %s407, 2
        %s409 = smul.addr %s408, 4
        %s410 = scalar_lea.vmem %s0, %s409
      $region72: #{decoder_forward.1} parent=67 // pred_fallthru
        _
    $region68: #{decoder_forward.1} parent=5 // pred_fallthru
      _
    %p411 = scmp.le.s32.totalorder 1, %s20
    %p412 = scmp.lt.s32.totalorder %s20, 3
    %p413 = pnand %p411, %p412
    %p414 = pneg %p413
    // Predicated region
    $region73: #{decoder_forward.1} parent=5 // pred_check
      _
    $region74: #{decoder_forward.1} parent=5 // pred_check_branch
      %416 = sbr.rel (%p413) target = $region76
    $region75: #{decoder_forward.1} parent=5 // pred_region
      %s417 = ssub.s32 %s20, 1
      %p418 = scmp.lt.s32.totalorder %s25, 1
      %s419 = scalar_select %p418, %s25, 1
      %s420 = smul.addr %s419, 2
      %s421 = smul.addr %s420, 4
      %s422 = scalar_lea.vmem %s0, %s421
      %p423 = pneg %p46
      %p424 = pneg %p43
      %p425 = pneg %p67
      %p426 = pneg %p64
      %p427 = pneg %p88
      %p428 = pneg %p85
      %p429 = pneg %p109
      %p430 = pneg %p106
      %p431 = pneg %p130
      %p432 = pneg %p127
      %p433 = pneg %p151
      %p434 = pneg %p148
      %p435 = pneg %p172
      %p436 = pneg %p169
      %p437 = pneg %p193
      %p438 = pneg %p190
      %p439 = pneg %p214
      %p440 = pneg %p211
      %p441 = pneg %p235
      %p442 = pneg %p232
      %p443 = pneg %p256
      %p444 = pneg %p253
      %p445 = pneg %p277
      %p446 = pneg %p274
      %p447 = pneg %p298
      %p448 = pneg %p295
      %p449 = pneg %p319
      %p450 = pneg %p316
      %p451 = pneg %p345
      %p452 = pneg %p342
      %p453 = scmp.lt.s32.totalorder %s25, 1
      %s454 = scalar_select %p453, %s25, 1
      %s455 = smul.addr %s454, 8
      %s456 = smul.addr %s455, 8
      %s457 = scalar_lea.vmem %s14, %s456
      %p458 = scmp.lt.s32.totalorder %s25, 1
      %s459 = scalar_select %p458, %s25, 1
      %s460 = smul.addr %s459, 2
      %s461 = smul.addr %s460, 4
      %s462 = scalar_lea.vmem %s0, %s461
      %p463 = scmp.lt.s32.totalorder %s25, 1
      %s464 = scalar_select %p463, %s25, 1
      %s465 = smul.addr %s464, 8
      %s466 = smul.addr %s465, 8
      %s467 = scalar_lea.vmem %s14, %s466
      %v469 = vld [vmem:[%s462] sm:$0xff]
      %v471 = vcombine.high %v469, %v469
      %v473 = vpack.c.bf16 %v469, %v469
      %v474 = vpack.c.bf16 %v471, %v471
      %s475 = scalar_lea.vmem %s2, 64
      %v476 = vld [vmem:[%s475] sm:$0xf]
      %v477 = vld [vmem:[%s475 + $0x4] sm:$0xf]
      %v478 = vld [vmem:[%s475 + $0x8] sm:$0xf]
      %v479 = vld [vmem:[%s475 + $0xc] sm:$0xf]
      %480 = vrot.lane.b32.xlu0 %v469, 17
      %v481 = vpop.permute.xlu0 %480
      %482 = vrot.lane.b32.xlu0 %v471, 17
      %v483 = vpop.permute.xlu0 %482
      %v484 = vlaneseq
      %v485 = vand.u32 %v484, 127
      %vm486 = vcmp.lt.s32.totalorder %v485, 17
      %v487 = vsel %vm486, %v481, %v483
      %v488 = vsel %vm486, %v483, %v481
      %v489 = vpack.c.bf16 %v488, %v488
      %v490 = vpack.c.bf16 %v487, %v487
      %v491 = vld [vmem:[%s2] sm:$0xf]
      %v492 = vld [vmem:[%s2 + $0x4] sm:$0xf]
      %v493 = vld [vmem:[%s2 + $0x8] sm:$0xf]
      %v494 = vld [vmem:[%s2 + $0xc] sm:$0xf]
      %v499 = vunpack.c.l.b16 %v491
      %v500 = vunpack.c.l.b16 %v492
      %v501 = vunpack.c.l.b16 %v493
      %v502 = vunpack.c.l.b16 %v494
      %v503 = vpack.c.b16 %v500, %v499
      %v504 = vpack.c.b16 %v502, %v501
      %vm505 = vcmask 31744
      %v507 = vsel %vm505, %v503, 0
      %v510 = vsel %vm505, %v504, 0
      %vm512 = vcmask 1041408
      %v514 = vsel %vm512, %v489, 0
      %v517 = vsel %vm512, %v490, 0
      %519 = vmatprep.subr.bf16.mxu0 %v517
      %520 = vmatpush1.bf16.msra.mxu0 %v514
      %521 = vmatprep.subr.bf16.mxu0 0
      %522 = vmatpush1.bf16.msra.mxu0 0
      %523 = vmatprep.subr.bf16.mxu0 0
      %524 = vmatpush1.bf16.msra.mxu0 0
      %525 = vmatprep.subr.bf16.mxu0 0
      %526 = vmatpush1.bf16.msra.mxu0 0
      %527 = vmatprep.subr.bf16.mxu0 0
      %528 = vmatpush1.bf16.msra.mxu0 0
      %529 = vmatprep.subr.bf16.mxu0 0
      %530 = vmatpush1.bf16.msra.mxu0 0
      %531 = vmatprep.subr.bf16.mxu0 0
      %532 = vmatpush1.bf16.msra.mxu0 0
      %533 = vmatprep.subr.bf16.mxu0 0
      %534 = vmatpush1.bf16.msra.mxu0 0
      %535 = vmatprep.subr.bf16.mxu0 0
      %536 = vmatpush1.bf16.msra.mxu0 0
      %537 = vmatprep.subr.bf16.mxu0 0
      %538 = vmatpush1.bf16.msra.mxu0 0
      %539 = vmatprep.subr.bf16.mxu0 0
      %540 = vmatpush1.bf16.msra.mxu0 0
      %541 = vmatprep.subr.bf16.mxu0 0
      %542 = vmatpush1.bf16.msra.mxu0 0
      %543 = vmatprep.subr.bf16.mxu0 0
      %544 = vmatpush1.bf16.msra.mxu0 0
      %545 = vmatprep.subr.bf16.mxu0 0
      %546 = vmatpush1.bf16.msra.mxu0 0
      %547 = vmatprep.subr.bf16.mxu0 0
      %548 = vmatpush1.bf16.msra.mxu0 0
      %549 = vmatprep.subr.bf16.mxu0 0
      %550 = vmatpush1.bf16.msra.mxu0 0
      %551 = vmatprep.mubr.bf16.mxu0 0
      %552 = vmatmul.mubr.bf16.gmra.mrb[0].mxu0 %v507
      %v553 = vpop.f32.mrb[0].mxu0
      %v554 = vadd.f32 0.0, %v553
      %v555 = vpop.f32.mrb[0].mxu0
      %v556 = vadd.f32 0.0, %v555
      %v557 = vpop.f32.mrb[0].mxu0
      %v558 = vadd.f32 0.0, %v557
      %v559 = vpop.f32.mrb[0].mxu0
      %v560 = vadd.f32 0.0, %v559
      %561 = vmatprep.mubr.bf16.mxu0 0
      %562 = vmatmul.mubr.bf16.gmra.mrb[0].mxu0 %v510
      %v563 = vpop.f32.mrb[0].mxu0
      %v564 = vadd.f32 0.0, %v563
      %v565 = vpop.f32.mrb[0].mxu0
      %v566 = vadd.f32 0.0, %v565
      %v567 = vpop.f32.mrb[0].mxu0
      %v568 = vadd.f32 0.0, %v567
      %v569 = vpop.f32.mrb[0].mxu0
      %v570 = vadd.f32 0.0, %v569
      %571 = vdwg.mxu0
      %v572 = vld [vmem:[%s1] ss:$8 sm:$0x3]
      %v574 = vlaneseq
      %v575 = vshrl.u32 %v574, 7
      %v576 = vsub.s32 0, %v575
      %v577 = vrot.slane %v572, %v576
      %v578 = vlaneseq
      %v579 = vshrl.u32 %v578, 7
      %v580 = vsub.s32 1, %v579
      %v581 = vrot.slane %v572, %v580
      %v584 = vmul.f32 %v577, %v554
      %v585 = vmul.f32 %v581, %v556
      %v586 = vmul.f32 %v577, %v558
      %v587 = vmul.f32 %v581, %v560
      %v588 = vmul.f32 %v577, %v564
      %v589 = vmul.f32 %v581, %v566
      %v590 = vmul.f32 %v577, %v568
      %v591 = vmul.f32 %v581, %v570
      %v596 = vunpack.c.l.b16 %v476
      %v597 = vunpack.c.l.b16 %v477
      %v598 = vunpack.c.l.b16 %v478
      %v599 = vunpack.c.l.b16 %v479
      %v600 = vpack.c.b16 %v597, %v596
      %v601 = vpack.c.b16 %v599, %v598
      %v603 = vsel %vm505, %v600, 0
      %v606 = vsel %vm505, %v601, 0
      %v609 = vsel %vm512, %v473, 0
      %v612 = vsel %vm512, %v474, 0
      %614 = vmatprep.subr.bf16.mxu0 %v612
      %615 = vmatpush1.bf16.msra.mxu0 %v609
      %616 = vmatprep.subr.bf16.mxu0 0
      %617 = vmatpush1.bf16.msra.mxu0 0
      %618 = vmatprep.subr.bf16.mxu0 0
      %619 = vmatpush1.bf16.msra.mxu0 0
      %620 = vmatprep.subr.bf16.mxu0 0
      %621 = vmatpush1.bf16.msra.mxu0 0
      %622 = vmatprep.subr.bf16.mxu0 0
      %623 = vmatpush1.bf16.msra.mxu0 0
      %624 = vmatprep.subr.bf16.mxu0 0
      %625 = vmatpush1.bf16.msra.mxu0 0
      %626 = vmatprep.subr.bf16.mxu0 0
      %627 = vmatpush1.bf16.msra.mxu0 0
      %628 = vmatprep.subr.bf16.mxu0 0
      %629 = vmatpush1.bf16.msra.mxu0 0
      %630 = vmatprep.subr.bf16.mxu0 0
      %631 = vmatpush1.bf16.msra.mxu0 0
      %632 = vmatprep.subr.bf16.mxu0 0
      %633 = vmatpush1.bf16.msra.mxu0 0
      %634 = vmatprep.subr.bf16.mxu0 0
      %635 = vmatpush1.bf16.msra.mxu0 0
      %636 = vmatprep.subr.bf16.mxu0 0
      %637 = vmatpush1.bf16.msra.mxu0 0
      %638 = vmatprep.subr.bf16.mxu0 0
      %639 = vmatpush1.bf16.msra.mxu0 0
      %640 = vmatprep.subr.bf16.mxu0 0
      %641 = vmatpush1.bf16.msra.mxu0 0
      %642 = vmatprep.subr.bf16.mxu0 0
      %643 = vmatpush1.bf16.msra.mxu0 0
      %644 = vmatprep.subr.bf16.mxu0 0
      %645 = vmatpush1.bf16.msra.mxu0 0
      %646 = vmatprep.mubr.bf16.mxu0 0
      %647 = vmatmul.mubr.bf16.gmra.mrb[0].mxu0 %v603
      %v648 = vpop.f32.mrb[0].mxu0
      %v649 = vadd.f32 %v584, %v648
      %v650 = vpop.f32.mrb[0].mxu0
      %v651 = vadd.f32 %v585, %v650
      %v652 = vpop.f32.mrb[0].mxu0
      %v653 = vadd.f32 %v586, %v652
      %v654 = vpop.f32.mrb[0].mxu0
      %v655 = vadd.f32 %v587, %v654
      %656 = vmatprep.mubr.bf16.mxu0 0
      %657 = vmatmul.mubr.bf16.gmra.mrb[0].mxu0 %v606
      %v658 = vpop.f32.mrb[0].mxu0
      %v659 = vadd.f32 %v588, %v658
      %v660 = vpop.f32.mrb[0].mxu0
      %v661 = vadd.f32 %v589, %v660
      %v662 = vpop.f32.mrb[0].mxu0
      %v663 = vadd.f32 %v590, %v662
      %v664 = vpop.f32.mrb[0].mxu0
      %v665 = vadd.f32 %v591, %v664
      %666 = vdwg.mxu0
      %667 = vrot.lane.b32.xlu0 %v469, 16
      %v668 = vpop.permute.xlu0 %667
      %669 = vrot.lane.b32.xlu0 %v471, 16
      %v670 = vpop.permute.xlu0 %669
      %vm671 = vcmp.lt.s32.totalorder %v485, 16
      %v672 = vsel %vm671, %v668, %v670
      %v673 = vsel %vm671, %v670, %v668
      %v674 = vpack.c.bf16 %v673, %v673
      %v675 = vpack.c.bf16 %v672, %v672
      %s676 = scalar_lea.vmem %s2, 16
      %v677 = vld [vmem:[%s676] sm:$0xf]
      %v678 = vld [vmem:[%s676 + $0x4] sm:$0xf]
      %v679 = vld [vmem:[%s676 + $0x8] sm:$0xf]
      %v680 = vld [vmem:[%s676 + $0xc] sm:$0xf]
      %v685 = vunpack.c.l.b16 %v677
      %v686 = vunpack.c.l.b16 %v678
      %v687 = vunpack.c.l.b16 %v679
      %v688 = vunpack.c.l.b16 %v680
      %v689 = vpack.c.b16 %v686, %v685
      %v690 = vpack.c.b16 %v688, %v687
      %v692 = vsel %vm505, %v689, 0
      %v695 = vsel %vm505, %v690, 0
      %v698 = vsel %vm512, %v674, 0
      %v701 = vsel %vm512, %v675, 0
      %703 = vmatprep.subr.bf16.mxu0 %v701
      %704 = vmatpush1.bf16.msra.mxu0 %v698
      %705 = vmatprep.subr.bf16.mxu0 0
      %706 = vmatpush1.bf16.msra.mxu0 0
      %707 = vmatprep.subr.bf16.mxu0 0
      %708 = vmatpush1.bf16.msra.mxu0 0
      %709 = vmatprep.subr.bf16.mxu0 0
      %710 = vmatpush1.bf16.msra.mxu0 0
      %711 = vmatprep.subr.bf16.mxu0 0
      %712 = vmatpush1.bf16.msra.mxu0 0
      %713 = vmatprep.subr.bf16.mxu0 0
      %714 = vmatpush1.bf16.msra.mxu0 0
      %715 = vmatprep.subr.bf16.mxu0 0
      %716 = vmatpush1.bf16.msra.mxu0 0
      %717 = vmatprep.subr.bf16.mxu0 0
      %718 = vmatpush1.bf16.msra.mxu0 0
      %719 = vmatprep.subr.bf16.mxu0 0
      %720 = vmatpush1.bf16.msra.mxu0 0
      %721 = vmatprep.subr.bf16.mxu0 0
      %722 = vmatpush1.bf16.msra.mxu0 0
      %723 = vmatprep.subr.bf16.mxu0 0
      %724 = vmatpush1.bf16.msra.mxu0 0
      %725 = vmatprep.subr.bf16.mxu0 0
      %726 = vmatpush1.bf16.msra.mxu0 0
      %727 = vmatprep.subr.bf16.mxu0 0
      %728 = vmatpush1.bf16.msra.mxu0 0
      %729 = vmatprep.subr.bf16.mxu0 0
      %730 = vmatpush1.bf16.msra.mxu0 0
      %731 = vmatprep.subr.bf16.mxu0 0
      %732 = vmatpush1.bf16.msra.mxu0 0
      %733 = vmatprep.subr.bf16.mxu0 0
      %734 = vmatpush1.bf16.msra.mxu0 0
      %735 = vmatprep.mubr.bf16.mxu0 0
      %736 = vmatmul.mubr.bf16.gmra.mrb[0].mxu0 %v692
      %v737 = vpop.f32.mrb[0].mxu0
      %v738 = vadd.f32 0.0, %v737
      %v739 = vpop.f32.mrb[0].mxu0
      %v740 = vadd.f32 0.0, %v739
      %v741 = vpop.f32.mrb[0].mxu0
      %v742 = vadd.f32 0.0, %v741
      %v743 = vpop.f32.mrb[0].mxu0
      %v744 = vadd.f32 0.0, %v743
      %745 = vmatprep.mubr.bf16.mxu0 0
      %746 = vmatmul.mubr.bf16.gmra.mrb[0].mxu0 %v695
      %v747 = vpop.f32.mrb[0].mxu0
      %v748 = vadd.f32 0.0, %v747
      %v749 = vpop.f32.mrb[0].mxu0
      %v750 = vadd.f32 0.0, %v749
      %v751 = vpop.f32.mrb[0].mxu0
      %v752 = vadd.f32 0.0, %v751
      %v753 = vpop.f32.mrb[0].mxu0
      %v754 = vadd.f32 0.0, %v753
      %755 = vdwg.mxu0
      %s756 = scalar_lea.vmem %s1, 1
      %v757 = vld [vmem:[%s756] ss:$8 sm:$0x3]
      %v759 = vlaneseq
      %v760 = vshrl.u32 %v759, 7
      %v761 = vsub.s32 0, %v760
      %v762 = vrot.slane %v757, %v761
      %v763 = vlaneseq
      %v764 = vshrl.u32 %v763, 7
      %v765 = vsub.s32 1, %v764
      %v766 = vrot.slane %v757, %v765
      %v769 = vmul.f32 %v762, %v738
      %v770 = vmul.f32 %v766, %v740
      %v771 = vmul.f32 %v762, %v742
      %v772 = vmul.f32 %v766, %v744
      %v773 = vmul.f32 %v762, %v748
      %v774 = vmul.f32 %v766, %v750
      %v775 = vmul.f32 %v762, %v752
      %v776 = vmul.f32 %v766, %v754
      %v777 = vadd.f32 %v649, %v769
      %v778 = vadd.f32 %v651, %v770
      %v779 = vadd.f32 %v653, %v771
      %v780 = vadd.f32 %v655, %v772
      %v781 = vadd.f32 %v659, %v773
      %v782 = vadd.f32 %v661, %v774
      %v783 = vadd.f32 %v663, %v775
      %v784 = vadd.f32 %v665, %v776
      %785 = vrot.lane.b32.xlu0 %v469, 15
      %v786 = vpop.permute.xlu0 %785
      %787 = vrot.lane.b32.xlu0 %v471, 15
      %v788 = vpop.permute.xlu0 %787
      %vm789 = vcmp.lt.s32.totalorder %v485, 15
      %v790 = vsel %vm789, %v786, %v788
      %v791 = vsel %vm789, %v788, %v786
      %v792 = vpack.c.bf16 %v791, %v791
      %v793 = vpack.c.bf16 %v790, %v790
      %s794 = scalar_lea.vmem %s2, 32
      %v795 = vld [vmem:[%s794] sm:$0xf]
      %v796 = vld [vmem:[%s794 + $0x4] sm:$0xf]
      %v797 = vld [vmem:[%s794 + $0x8] sm:$0xf]
      %v798 = vld [vmem:[%s794 + $0xc] sm:$0xf]
      %v803 = vunpack.c.l.b16 %v795
      %v804 = vunpack.c.l.b16 %v796
      %v805 = vunpack.c.l.b16 %v797
      %v806 = vunpack.c.l.b16 %v798
      %v807 = vpack.c.b16 %v804, %v803
      %v808 = vpack.c.b16 %v806, %v805
      %v810 = vsel %vm505, %v807, 0
      %v813 = vsel %vm505, %v808, 0
      %v816 = vsel %vm512, %v792, 0
      %v819 = vsel %vm512, %v793, 0
      %821 = vmatprep.subr.bf16.mxu0 %v819
      %822 = vmatpush1.bf16.msra.mxu0 %v816
      %823 = vmatprep.subr.bf16.mxu0 0
      %824 = vmatpush1.bf16.msra.mxu0 0
      %825 = vmatprep.subr.bf16.mxu0 0
      %826 = vmatpush1.bf16.msra.mxu0 0
      %827 = vmatprep.subr.bf16.mxu0 0
      %828 = vmatpush1.bf16.msra.mxu0 0
      %829 = vmatprep.subr.bf16.mxu0 0
      %830 = vmatpush1.bf16.msra.mxu0 0
      %831 = vmatprep.subr.bf16.mxu0 0
      %832 = vmatpush1.bf16.msra.mxu0 0
      %833 = vmatprep.subr.bf16.mxu0 0
      %834 = vmatpush1.bf16.msra.mxu0 0
      %835 = vmatprep.subr.bf16.mxu0 0
      %836 = vmatpush1.bf16.msra.mxu0 0
      %837 = vmatprep.subr.bf16.mxu0 0
      %838 = vmatpush1.bf16.msra.mxu0 0
      %839 = vmatprep.subr.bf16.mxu0 0
      %840 = vmatpush1.bf16.msra.mxu0 0
      %841 = vmatprep.subr.bf16.mxu0 0
      %842 = vmatpush1.bf16.msra.mxu0 0
      %843 = vmatprep.subr.bf16.mxu0 0
      %844 = vmatpush1.bf16.msra.mxu0 0
      %845 = vmatprep.subr.bf16.mxu0 0
      %846 = vmatpush1.bf16.msra.mxu0 0
      %847 = vmatprep.subr.bf16.mxu0 0
      %848 = vmatpush1.bf16.msra.mxu0 0
      %849 = vmatprep.subr.bf16.mxu0 0
      %850 = vmatpush1.bf16.msra.mxu0 0
      %851 = vmatprep.subr.bf16.mxu0 0
      %852 = vmatpush1.bf16.msra.mxu0 0
      %853 = vmatprep.mubr.bf16.mxu0 0
      %854 = vmatmul.mubr.bf16.gmra.mrb[0].mxu0 %v810
      %v855 = vpop.f32.mrb[0].mxu0
      %v856 = vadd.f32 0.0, %v855
      %v857 = vpop.f32.mrb[0].mxu0
      %v858 = vadd.f32 0.0, %v857
      %v859 = vpop.f32.mrb[0].mxu0
      %v860 = vadd.f32 0.0, %v859
      %v861 = vpop.f32.mrb[0].mxu0
      %v862 = vadd.f32 0.0, %v861
      %863 = vmatprep.mubr.bf16.mxu0 0
      %864 = vmatmul.mubr.bf16.gmra.mrb[0].mxu0 %v813
      %v865 = vpop.f32.mrb[0].mxu0
      %v866 = vadd.f32 0.0, %v865
      %v867 = vpop.f32.mrb[0].mxu0
      %v868 = vadd.f32 0.0, %v867
      %v869 = vpop.f32.mrb[0].mxu0
      %v870 = vadd.f32 0.0, %v869
      %v871 = vpop.f32.mrb[0].mxu0
      %v872 = vadd.f32 0.0, %v871
      %873 = vdwg.mxu0
      %s874 = scalar_lea.vmem %s1, 2
      %v875 = vld [vmem:[%s874] ss:$8 sm:$0x3]
      %v877 = vlaneseq
      %v878 = vshrl.u32 %v877, 7
      %v879 = vsub.s32 0, %v878
      %v880 = vrot.slane %v875, %v879
      %v881 = vlaneseq
      %v882 = vshrl.u32 %v881, 7
      %v883 = vsub.s32 1, %v882
      %v884 = vrot.slane %v875, %v883
      %v887 = vmul.f32 %v880, %v856
      %v888 = vmul.f32 %v884, %v858
      %v889 = vmul.f32 %v880, %v860
      %v890 = vmul.f32 %v884, %v862
      %v891 = vmul.f32 %v880, %v866
      %v892 = vmul.f32 %v884, %v868
      %v893 = vmul.f32 %v880, %v870
      %v894 = vmul.f32 %v884, %v872
      %v895 = vadd.f32 %v777, %v887
      %v896 = vadd.f32 %v778, %v888
      %v897 = vadd.f32 %v779, %v889
      %v898 = vadd.f32 %v780, %v890
      %v899 = vadd.f32 %v781, %v891
      %v900 = vadd.f32 %v782, %v892
      %v901 = vadd.f32 %v783, %v893
      %v902 = vadd.f32 %v784, %v894
      %903 = vrot.lane.b32.xlu0 %v469, 1
      %v904 = vpop.permute.xlu0 %903
      %905 = vrot.lane.b32.xlu0 %v471, 1
      %v906 = vpop.permute.xlu0 %905
      %vm907 = vcmp.lt.s32.totalorder %v485, 1
      %v908 = vsel %vm907, %v904, %v906
      %v909 = vsel %vm907, %v906, %v904
      %v910 = vpack.c.bf16 %v909, %v909
      %v911 = vpack.c.bf16 %v908, %v908
      %s912 = scalar_lea.vmem %s2, 48
      %v913 = vld [vmem:[%s912] sm:$0xf]
      %v914 = vld [vmem:[%s912 + $0x4] sm:$0xf]
      %v915 = vld [vmem:[%s912 + $0x8] sm:$0xf]
      %v916 = vld [vmem:[%s912 + $0xc] sm:$0xf]
      %v921 = vunpack.c.l.b16 %v913
      %v922 = vunpack.c.l.b16 %v914
      %v923 = vunpack.c.l.b16 %v915
      %v924 = vunpack.c.l.b16 %v916
      %v925 = vpack.c.b16 %v922, %v921
      %v926 = vpack.c.b16 %v924, %v923
      %v928 = vsel %vm505, %v925, 0
      %v931 = vsel %vm505, %v926, 0
      %v934 = vsel %vm512, %v910, 0
      %v937 = vsel %vm512, %v911, 0
      %939 = vmatprep.subr.bf16.mxu0 %v937
      %940 = vmatpush1.bf16.msra.mxu0 %v934
      %941 = vmatprep.subr.bf16.mxu0 0
      %942 = vmatpush1.bf16.msra.mxu0 0
      %943 = vmatprep.subr.bf16.mxu0 0
      %944 = vmatpush1.bf16.msra.mxu0 0
      %945 = vmatprep.subr.bf16.mxu0 0
      %946 = vmatpush1.bf16.msra.mxu0 0
      %947 = vmatprep.subr.bf16.mxu0 0
      %948 = vmatpush1.bf16.msra.mxu0 0
      %949 = vmatprep.subr.bf16.mxu0 0
      %950 = vmatpush1.bf16.msra.mxu0 0
      %951 = vmatprep.subr.bf16.mxu0 0
      %952 = vmatpush1.bf16.msra.mxu0 0
      %953 = vmatprep.subr.bf16.mxu0 0
      %954 = vmatpush1.bf16.msra.mxu0 0
      %955 = vmatprep.subr.bf16.mxu0 0
      %956 = vmatpush1.bf16.msra.mxu0 0
      %957 = vmatprep.subr.bf16.mxu0 0
      %958 = vmatpush1.bf16.msra.mxu0 0
      %959 = vmatprep.subr.bf16.mxu0 0
      %960 = vmatpush1.bf16.msra.mxu0 0
      %961 = vmatprep.subr.bf16.mxu0 0
      %962 = vmatpush1.bf16.msra.mxu0 0
      %963 = vmatprep.subr.bf16.mxu0 0
      %964 = vmatpush1.bf16.msra.mxu0 0
      %965 = vmatprep.subr.bf16.mxu0 0
      %966 = vmatpush1.bf16.msra.mxu0 0
      %967 = vmatprep.subr.bf16.mxu0 0
      %968 = vmatpush1.bf16.msra.mxu0 0
      %969 = vmatprep.subr.bf16.mxu0 0
      %970 = vmatpush1.bf16.msra.mxu0 0
      %971 = vmatprep.mubr.bf16.mxu0 0
      %972 = vmatmul.mubr.bf16.gmra.mrb[0].mxu0 %v928
      %v973 = vpop.f32.mrb[0].mxu0
      %v974 = vadd.f32 0.0, %v973
      %v975 = vpop.f32.mrb[0].mxu0
      %v976 = vadd.f32 0.0, %v975
      %v977 = vpop.f32.mrb[0].mxu0
      %v978 = vadd.f32 0.0, %v977
      %v979 = vpop.f32.mrb[0].mxu0
      %v980 = vadd.f32 0.0, %v979
      %981 = vmatprep.mubr.bf16.mxu0 0
      %982 = vmatmul.mubr.bf16.gmra.mrb[0].mxu0 %v931
      %v983 = vpop.f32.mrb[0].mxu0
      %v984 = vadd.f32 0.0, %v983
      %v985 = vpop.f32.mrb[0].mxu0
      %v986 = vadd.f32 0.0, %v985
      %v987 = vpop.f32.mrb[0].mxu0
      %v988 = vadd.f32 0.0, %v987
      %v989 = vpop.f32.mrb[0].mxu0
      %v990 = vadd.f32 0.0, %v989
      %991 = vdwg.mxu0
      %s992 = scalar_lea.vmem %s1, 3
      %v993 = vld [vmem:[%s992] ss:$8 sm:$0x3]
      %v995 = vlaneseq
      %v996 = vshrl.u32 %v995, 7
      %v997 = vsub.s32 0, %v996
      %v998 = vrot.slane %v993, %v997
      %v999 = vlaneseq
      %v1000 = vshrl.u32 %v999, 7
      %v1001 = vsub.s32 1, %v1000
      %v1002 = vrot.slane %v993, %v1001
      %v1005 = vmul.f32 %v998, %v974
      %v1006 = vmul.f32 %v1002, %v976
      %v1007 = vmul.f32 %v998, %v978
      %v1008 = vmul.f32 %v1002, %v980
      %v1009 = vmul.f32 %v998, %v984
      %v1010 = vmul.f32 %v1002, %v986
      %v1011 = vmul.f32 %v998, %v988
      %v1012 = vmul.f32 %v1002, %v990
      %v1013 = vadd.f32 %v895, %v1005
      %v1014 = vadd.f32 %v896, %v1006
      %v1015 = vadd.f32 %v897, %v1007
      %v1016 = vadd.f32 %v898, %v1008
      %v1017 = vadd.f32 %v899, %v1009
      %v1018 = vadd.f32 %v900, %v1010
      %v1019 = vadd.f32 %v901, %v1011
      %v1020 = vadd.f32 %v902, %v1012
      %1021 = vrot.lane.b32.xlu0 %v469, 127
      %v1022 = vpop.permute.xlu0 %1021
      %1023 = vrot.lane.b32.xlu0 %v471, 127
      %v1024 = vpop.permute.xlu0 %1023
      %vm1025 = vcmp.lt.s32.totalorder %v485, 127
      %v1026 = vsel %vm1025, %v1022, %v1024
      %v1027 = vsel %vm1025, %v1024, %v1022
      %v1028 = vpack.c.bf16 %v1026, %v1026
      %v1029 = vpack.c.bf16 %v1027, %v1027
      %s1030 = scalar_lea.vmem %s2, 80
      %v1031 = vld [vmem:[%s1030] sm:$0xf]
      %v1032 = vld [vmem:[%s1030 + $0x4] sm:$0xf]
      %v1033 = vld [vmem:[%s1030 + $0x8] sm:$0xf]
      %v1034 = vld [vmem:[%s1030 + $0xc] sm:$0xf]
      %v1039 = vunpack.c.l.b16 %v1031
      %v1040 = vunpack.c.l.b16 %v1032
      %v1041 = vunpack.c.l.b16 %v1033
      %v1042 = vunpack.c.l.b16 %v1034
      %v1043 = vpack.c.b16 %v1040, %v1039
      %v1044 = vpack.c.b16 %v1042, %v1041
      %v1046 = vsel %vm505, %v1043, 0
      %v1049 = vsel %vm505, %v1044, 0
      %v1052 = vsel %vm512, %v1028, 0
      %v1055 = vsel %vm512, %v1029, 0
      %1057 = vmatprep.subr.bf16.mxu0 %v1055
      %1058 = vmatpush1.bf16.msra.mxu0 %v1052
      %1059 = vmatprep.subr.bf16.mxu0 0
      %1060 = vmatpush1.bf16.msra.mxu0 0
      %1061 = vmatprep.subr.bf16.mxu0 0
      %1062 = vmatpush1.bf16.msra.mxu0 0
      %1063 = vmatprep.subr.bf16.mxu0 0
      %1064 = vmatpush1.bf16.msra.mxu0 0
      %1065 = vmatprep.subr.bf16.mxu0 0
      %1066 = vmatpush1.bf16.msra.mxu0 0
      %1067 = vmatprep.subr.bf16.mxu0 0
      %1068 = vmatpush1.bf16.msra.mxu0 0
      %1069 = vmatprep.subr.bf16.mxu0 0
      %1070 = vmatpush1.bf16.msra.mxu0 0
      %1071 = vmatprep.subr.bf16.mxu0 0
      %1072 = vmatpush1.bf16.msra.mxu0 0
      %1073 = vmatprep.subr.bf16.mxu0 0
      %1074 = vmatpush1.bf16.msra.mxu0 0
      %1075 = vmatprep.subr.bf16.mxu0 0
      %1076 = vmatpush1.bf16.msra.mxu0 0
      %1077 = vmatprep.subr.bf16.mxu0 0
      %1078 = vmatpush1.bf16.msra.mxu0 0
      %1079 = vmatprep.subr.bf16.mxu0 0
      %1080 = vmatpush1.bf16.msra.mxu0 0
      %1081 = vmatprep.subr.bf16.mxu0 0
      %1082 = vmatpush1.bf16.msra.mxu0 0
      %1083 = vmatprep.subr.bf16.mxu0 0
      %1084 = vmatpush1.bf16.msra.mxu0 0
      %1085 = vmatprep.subr.bf16.mxu0 0
      %1086 = vmatpush1.bf16.msra.mxu0 0
      %1087 = vmatprep.subr.bf16.mxu0 0
      %1088 = vmatpush1.bf16.msra.mxu0 0
      %1089 = vmatprep.mubr.bf16.mxu0 0
      %1090 = vmatmul.mubr.bf16.gmra.mrb[0].mxu0 %v1046
      %v1091 = vpop.f32.mrb[0].mxu0
      %v1092 = vadd.f32 0.0, %v1091
      %v1093 = vpop.f32.mrb[0].mxu0
      %v1094 = vadd.f32 0.0, %v1093
      %v1095 = vpop.f32.mrb[0].mxu0
      %v1096 = vadd.f32 0.0, %v1095
      %v1097 = vpop.f32.mrb[0].mxu0
      %v1098 = vadd.f32 0.0, %v1097
      %1099 = vmatprep.mubr.bf16.mxu0 0
      %1100 = vmatmul.mubr.bf16.gmra.mrb[0].mxu0 %v1049
      %v1101 = vpop.f32.mrb[0].mxu0
      %v1102 = vadd.f32 0.0, %v1101
      %v1103 = vpop.f32.mrb[0].mxu0
      %v1104 = vadd.f32 0.0, %v1103
      %v1105 = vpop.f32.mrb[0].mxu0
      %v1106 = vadd.f32 0.0, %v1105
      %v1107 = vpop.f32.mrb[0].mxu0
      %v1108 = vadd.f32 0.0, %v1107
      %1109 = vdwg.mxu0
      %s1110 = scalar_lea.vmem %s1, 5
      %v1111 = vld [vmem:[%s1110] ss:$8 sm:$0x3]
      %v1113 = vlaneseq
      %v1114 = vshrl.u32 %v1113, 7
      %v1115 = vsub.s32 0, %v1114
      %v1116 = vrot.slane %v1111, %v1115
      %v1117 = vlaneseq
      %v1118 = vshrl.u32 %v1117, 7
      %v1119 = vsub.s32 1, %v1118
      %v1120 = vrot.slane %v1111, %v1119
      %v1123 = vmul.f32 %v1116, %v1092
      %v1124 = vmul.f32 %v1120, %v1094
      %v1125 = vmul.f32 %v1116, %v1096
      %v1126 = vmul.f32 %v1120, %v1098
      %v1127 = vmul.f32 %v1116, %v1102
      %v1128 = vmul.f32 %v1120, %v1104
      %v1129 = vmul.f32 %v1116, %v1106
      %v1130 = vmul.f32 %v1120, %v1108
      %v1131 = vadd.f32 %v1013, %v1123
      %v1132 = vadd.f32 %v1014, %v1124
      %v1133 = vadd.f32 %v1015, %v1125
      %v1134 = vadd.f32 %v1016, %v1126
      %v1135 = vadd.f32 %v1017, %v1127
      %v1136 = vadd.f32 %v1018, %v1128
      %v1137 = vadd.f32 %v1019, %v1129
      %v1138 = vadd.f32 %v1020, %v1130
      %1139 = vrot.lane.b32.xlu0 %v469, 113
      %v1140 = vpop.permute.xlu0 %1139
      %1141 = vrot.lane.b32.xlu0 %v471, 113
      %v1142 = vpop.permute.xlu0 %1141
      %vm1143 = vcmp.lt.s32.totalorder %v485, 113
      %v1144 = vsel %vm1143, %v1140, %v1142
      %v1145 = vsel %vm1143, %v1142, %v1140
      %v1146 = vpack.c.bf16 %v1144, %v1144
      %v1147 = vpack.c.bf16 %v1145, %v1145
      %s1148 = scalar_lea.vmem %s2, 96
      %v1149 = vld [vmem:[%s1148] sm:$0xf]
      %v1150 = vld [vmem:[%s1148 + $0x4] sm:$0xf]
      %v1151 = vld [vmem:[%s1148 + $0x8] sm:$0xf]
      %v1152 = vld [vmem:[%s1148 + $0xc] sm:$0xf]
      %v1157 = vunpack.c.l.b16 %v1149
      %v1158 = vunpack.c.l.b16 %v1150
      %v1159 = vunpack.c.l.b16 %v1151
      %v1160 = vunpack.c.l.b16 %v1152
      %v1161 = vpack.c.b16 %v1158, %v1157
      %v1162 = vpack.c.b16 %v1160, %v1159
      %v1164 = vsel %vm505, %v1161, 0
      %v1167 = vsel %vm505, %v1162, 0
      %v1170 = vsel %vm512, %v1146, 0
      %v1173 = vsel %vm512, %v1147, 0
      %1175 = vmatprep.subr.bf16.mxu0 %v1173
      %1176 = vmatpush1.bf16.msra.mxu0 %v1170
      %1177 = vmatprep.subr.bf16.mxu0 0
      %1178 = vmatpush1.bf16.msra.mxu0 0
      %1179 = vmatprep.subr.bf16.mxu0 0
      %1180 = vmatpush1.bf16.msra.mxu0 0
      %1181 = vmatprep.subr.bf16.mxu0 0
      %1182 = vmatpush1.bf16.msra.mxu0 0
      %1183 = vmatprep.subr.bf16.mxu0 0
      %1184 = vmatpush1.bf16.msra.mxu0 0
      %1185 = vmatprep.subr.bf16.mxu0 0
      %1186 = vmatpush1.bf16.msra.mxu0 0
      %1187 = vmatprep.subr.bf16.mxu0 0
      %1188 = vmatpush1.bf16.msra.mxu0 0
      %1189 = vmatprep.subr.bf16.mxu0 0
      %1190 = vmatpush1.bf16.msra.mxu0 0
      %1191 = vmatprep.subr.bf16.mxu0 0
      %1192 = vmatpush1.bf16.msra.mxu0 0
      %1193 = vmatprep.subr.bf16.mxu0 0
      %1194 = vmatpush1.bf16.msra.mxu0 0
      %1195 = vmatprep.subr.bf16.mxu0 0
      %1196 = vmatpush1.bf16.msra.mxu0 0
      %1197 = vmatprep.subr.bf16.mxu0 0
      %1198 = vmatpush1.bf16.msra.mxu0 0
      %1199 = vmatprep.subr.bf16.mxu0 0
      %1200 = vmatpush1.bf16.msra.mxu0 0
      %1201 = vmatprep.subr.bf16.mxu0 0
      %1202 = vmatpush1.bf16.msra.mxu0 0
      %1203 = vmatprep.subr.bf16.mxu0 0
      %1204 = vmatpush1.bf16.msra.mxu0 0
      %1205 = vmatprep.subr.bf16.mxu0 0
      %1206 = vmatpush1.bf16.msra.mxu0 0
      %1207 = vmatprep.mubr.bf16.mxu0 0
      %1208 = vmatmul.mubr.bf16.gmra.mrb[0].mxu0 %v1164
      %v1209 = vpop.f32.mrb[0].mxu0
      %v1210 = vadd.f32 0.0, %v1209
      %v1211 = vpop.f32.mrb[0].mxu0
      %v1212 = vadd.f32 0.0, %v1211
      %v1213 = vpop.f32.mrb[0].mxu0
      %v1214 = vadd.f32 0.0, %v1213
      %v1215 = vpop.f32.mrb[0].mxu0
      %v1216 = vadd.f32 0.0, %v1215
      %1217 = vmatprep.mubr.bf16.mxu0 0
      %1218 = vmatmul.mubr.bf16.gmra.mrb[0].mxu0 %v1167
      %v1219 = vpop.f32.mrb[0].mxu0
      %v1220 = vadd.f32 0.0, %v1219
      %v1221 = vpop.f32.mrb[0].mxu0
      %v1222 = vadd.f32 0.0, %v1221
      %v1223 = vpop.f32.mrb[0].mxu0
      %v1224 = vadd.f32 0.0, %v1223
      %v1225 = vpop.f32.mrb[0].mxu0
      %v1226 = vadd.f32 0.0, %v1225
      %1227 = vdwg.mxu0
      %s1228 = scalar_lea.vmem %s1, 6
      %v1229 = vld [vmem:[%s1228] ss:$8 sm:$0x3]
      %v1231 = vlaneseq
      %v1232 = vshrl.u32 %v1231, 7
      %v1233 = vsub.s32 0, %v1232
      %v1234 = vrot.slane %v1229, %v1233
      %v1235 = vlaneseq
      %v1236 = vshrl.u32 %v1235, 7
      %v1237 = vsub.s32 1, %v1236
      %v1238 = vrot.slane %v1229, %v1237
      %v1241 = vmul.f32 %v1234, %v1210
      %v1242 = vmul.f32 %v1238, %v1212
      %v1243 = vmul.f32 %v1234, %v1214
      %v1244 = vmul.f32 %v1238, %v1216
      %v1245 = vmul.f32 %v1234, %v1220
      %v1246 = vmul.f32 %v1238, %v1222
      %v1247 = vmul.f32 %v1234, %v1224
      %v1248 = vmul.f32 %v1238, %v1226
      %v1249 = vadd.f32 %v1131, %v1241
      %v1250 = vadd.f32 %v1132, %v1242
      %v1251 = vadd.f32 %v1133, %v1243
      %v1252 = vadd.f32 %v1134, %v1244
      %v1253 = vadd.f32 %v1135, %v1245
      %v1254 = vadd.f32 %v1136, %v1246
      %v1255 = vadd.f32 %v1137, %v1247
      %v1256 = vadd.f32 %v1138, %v1248
      %1257 = vrot.lane.b32.xlu0 %v469, 112
      %v1258 = vpop.permute.xlu0 %1257
      %1259 = vrot.lane.b32.xlu0 %v471, 112
      %v1260 = vpop.permute.xlu0 %1259
      %vm1261 = vcmp.lt.s32.totalorder %v485, 112
      %v1262 = vsel %vm1261, %v1258, %v1260
      %v1263 = vsel %vm1261, %v1260, %v1258
      %v1264 = vpack.c.bf16 %v1262, %v1262
      %v1265 = vpack.c.bf16 %v1263, %v1263
      %s1266 = scalar_lea.vmem %s2, 112
      %v1267 = vld [vmem:[%s1266] sm:$0xf]
      %v1268 = vld [vmem:[%s1266 + $0x4] sm:$0xf]
      %v1269 = vld [vmem:[%s1266 + $0x8] sm:$0xf]
      %v1270 = vld [vmem:[%s1266 + $0xc] sm:$0xf]
      %v1275 = vunpack.c.l.b16 %v1267
      %v1276 = vunpack.c.l.b16 %v1268
      %v1277 = vunpack.c.l.b16 %v1269
      %v1278 = vunpack.c.l.b16 %v1270
      %v1279 = vpack.c.b16 %v1276, %v1275
      %v1280 = vpack.c.b16 %v1278, %v1277
      %v1282 = vsel %vm505, %v1279, 0
      %v1285 = vsel %vm505, %v1280, 0
      %v1288 = vsel %vm512, %v1264, 0
      %v1291 = vsel %vm512, %v1265, 0
      %1293 = vmatprep.subr.bf16.mxu0 %v1291
      %1294 = vmatpush1.bf16.msra.mxu0 %v1288
      %1295 = vmatprep.subr.bf16.mxu0 0
      %1296 = vmatpush1.bf16.msra.mxu0 0
      %1297 = vmatprep.subr.bf16.mxu0 0
      %1298 = vmatpush1.bf16.msra.mxu0 0
      %1299 = vmatprep.subr.bf16.mxu0 0
      %1300 = vmatpush1.bf16.msra.mxu0 0
      %1301 = vmatprep.subr.bf16.mxu0 0
      %1302 = vmatpush1.bf16.msra.mxu0 0
      %1303 = vmatprep.subr.bf16.mxu0 0
      %1304 = vmatpush1.bf16.msra.mxu0 0
      %1305 = vmatprep.subr.bf16.mxu0 0
      %1306 = vmatpush1.bf16.msra.mxu0 0
      %1307 = vmatprep.subr.bf16.mxu0 0
      %1308 = vmatpush1.bf16.msra.mxu0 0
      %1309 = vmatprep.subr.bf16.mxu0 0
      %1310 = vmatpush1.bf16.msra.mxu0 0
      %1311 = vmatprep.subr.bf16.mxu0 0
      %1312 = vmatpush1.bf16.msra.mxu0 0
      %1313 = vmatprep.subr.bf16.mxu0 0
      %1314 = vmatpush1.bf16.msra.mxu0 0
      %1315 = vmatprep.subr.bf16.mxu0 0
      %1316 = vmatpush1.bf16.msra.mxu0 0
      %1317 = vmatprep.subr.bf16.mxu0 0
      %1318 = vmatpush1.bf16.msra.mxu0 0
      %1319 = vmatprep.subr.bf16.mxu0 0
      %1320 = vmatpush1.bf16.msra.mxu0 0
      %1321 = vmatprep.subr.bf16.mxu0 0
      %1322 = vmatpush1.bf16.msra.mxu0 0
      %1323 = vmatprep.subr.bf16.mxu0 0
      %1324 = vmatpush1.bf16.msra.mxu0 0
      %1325 = vmatprep.mubr.bf16.mxu0 0
      %1326 = vmatmul.mubr.bf16.gmra.mrb[0].mxu0 %v1282
      %v1327 = vpop.f32.mrb[0].mxu0
      %v1328 = vadd.f32 0.0, %v1327
      %v1329 = vpop.f32.mrb[0].mxu0
      %v1330 = vadd.f32 0.0, %v1329
      %v1331 = vpop.f32.mrb[0].mxu0
      %v1332 = vadd.f32 0.0, %v1331
      %v1333 = vpop.f32.mrb[0].mxu0
      %v1334 = vadd.f32 0.0, %v1333
      %1335 = vmatprep.mubr.bf16.mxu0 0
      %1336 = vmatmul.mubr.bf16.gmra.mrb[0].mxu0 %v1285
      %v1337 = vpop.f32.mrb[0].mxu0
      %v1338 = vadd.f32 0.0, %v1337
      %v1339 = vpop.f32.mrb[0].mxu0
      %v1340 = vadd.f32 0.0, %v1339
      %v1341 = vpop.f32.mrb[0].mxu0
      %v1342 = vadd.f32 0.0, %v1341
      %v1343 = vpop.f32.mrb[0].mxu0
      %v1344 = vadd.f32 0.0, %v1343
      %1345 = vdwg.mxu0
      %s1346 = scalar_lea.vmem %s1, 7
      %v1347 = vld [vmem:[%s1346] ss:$8 sm:$0x3]
      %v1349 = vlaneseq
      %v1350 = vshrl.u32 %v1349, 7
      %v1351 = vsub.s32 0, %v1350
      %v1352 = vrot.slane %v1347, %v1351
      %v1353 = vlaneseq
      %v1354 = vshrl.u32 %v1353, 7
      %v1355 = vsub.s32 1, %v1354
      %v1356 = vrot.slane %v1347, %v1355
      %v1359 = vmul.f32 %v1352, %v1328
      %v1360 = vmul.f32 %v1356, %v1330
      %v1361 = vmul.f32 %v1352, %v1332
      %v1362 = vmul.f32 %v1356, %v1334
      %v1363 = vmul.f32 %v1352, %v1338
      %v1364 = vmul.f32 %v1356, %v1340
      %v1365 = vmul.f32 %v1352, %v1342
      %v1366 = vmul.f32 %v1356, %v1344
      %v1367 = vadd.f32 %v1249, %v1359
      %v1368 = vadd.f32 %v1250, %v1360
      %v1369 = vadd.f32 %v1251, %v1361
      %v1370 = vadd.f32 %v1252, %v1362
      %v1371 = vadd.f32 %v1253, %v1363
      %v1372 = vadd.f32 %v1254, %v1364
      %v1373 = vadd.f32 %v1255, %v1365
      %v1374 = vadd.f32 %v1256, %v1366
      %1375 = vrot.lane.b32.xlu0 %v469, 111
      %v1376 = vpop.permute.xlu0 %1375
      %1377 = vrot.lane.b32.xlu0 %v471, 111
      %v1378 = vpop.permute.xlu0 %1377
      %vm1379 = vcmp.lt.s32.totalorder %v485, 111
      %v1380 = vsel %vm1379, %v1376, %v1378
      %v1381 = vsel %vm1379, %v1378, %v1376
      %v1382 = vpack.c.bf16 %v1380, %v1380
      %v1383 = vpack.c.bf16 %v1381, %v1381
      %s1384 = scalar_lea.vmem %s2, 128
      %v1385 = vld [vmem:[%s1384] sm:$0xf]
      %v1386 = vld [vmem:[%s1384 + $0x4] sm:$0xf]
      %v1387 = vld [vmem:[%s1384 + $0x8] sm:$0xf]
      %v1388 = vld [vmem:[%s1384 + $0xc] sm:$0xf]
      %v1393 = vunpack.c.l.b16 %v1385
      %v1394 = vunpack.c.l.b16 %v1386
      %v1395 = vunpack.c.l.b16 %v1387
      %v1396 = vunpack.c.l.b16 %v1388
      %v1397 = vpack.c.b16 %v1394, %v1393
      %v1398 = vpack.c.b16 %v1396, %v1395
      %v1400 = vsel %vm505, %v1397, 0
      %v1403 = vsel %vm505, %v1398, 0
      %v1406 = vsel %vm512, %v1382, 0
      %v1409 = vsel %vm512, %v1383, 0
      %1411 = vmatprep.subr.bf16.mxu0 %v1409
      %1412 = vmatpush1.bf16.msra.mxu0 %v1406
      %1413 = vmatprep.subr.bf16.mxu0 0
      %1414 = vmatpush1.bf16.msra.mxu0 0
      %1415 = vmatprep.subr.bf16.mxu0 0
      %1416 = vmatpush1.bf16.msra.mxu0 0
      %1417 = vmatprep.subr.bf16.mxu0 0
      %1418 = vmatpush1.bf16.msra.mxu0 0
      %1419 = vmatprep.subr.bf16.mxu0 0
      %1420 = vmatpush1.bf16.msra.mxu0 0
      %1421 = vmatprep.subr.bf16.mxu0 0
      %1422 = vmatpush1.bf16.msra.mxu0 0
      %1423 = vmatprep.subr.bf16.mxu0 0
      %1424 = vmatpush1.bf16.msra.mxu0 0
      %1425 = vmatprep.subr.bf16.mxu0 0
      %1426 = vmatpush1.bf16.msra.mxu0 0
      %1427 = vmatprep.subr.bf16.mxu0 0
      %1428 = vmatpush1.bf16.msra.mxu0 0
      %1429 = vmatprep.subr.bf16.mxu0 0
      %1430 = vmatpush1.bf16.msra.mxu0 0
      %1431 = vmatprep.subr.bf16.mxu0 0
      %1432 = vmatpush1.bf16.msra.mxu0 0
      %1433 = vmatprep.subr.bf16.mxu0 0
      %1434 = vmatpush1.bf16.msra.mxu0 0
      %1435 = vmatprep.subr.bf16.mxu0 0
      %1436 = vmatpush1.bf16.msra.mxu0 0
      %1437 = vmatprep.subr.bf16.mxu0 0
      %1438 = vmatpush1.bf16.msra.mxu0 0
      %1439 = vmatprep.subr.bf16.mxu0 0
      %1440 = vmatpush1.bf16.msra.mxu0 0
      %1441 = vmatprep.subr.bf16.mxu0 0
      %1442 = vmatpush1.bf16.msra.mxu0 0
      %1443 = vmatprep.mubr.bf16.mxu0 0
      %1444 = vmatmul.mubr.bf16.gmra.mrb[0].mxu0 %v1400
      %v1445 = vpop.f32.mrb[0].mxu0
      %v1446 = vadd.f32 0.0, %v1445
      %v1447 = vpop.f32.mrb[0].mxu0
      %v1448 = vadd.f32 0.0, %v1447
      %v1449 = vpop.f32.mrb[0].mxu0
      %v1450 = vadd.f32 0.0, %v1449
      %v1451 = vpop.f32.mrb[0].mxu0
      %v1452 = vadd.f32 0.0, %v1451
      %1453 = vmatprep.mubr.bf16.mxu0 0
      %1454 = vmatmul.mubr.bf16.gmra.mrb[0].mxu0 %v1403
      %v1455 = vpop.f32.mrb[0].mxu0
      %v1456 = vadd.f32 0.0, %v1455
      %v1457 = vpop.f32.mrb[0].mxu0
      %v1458 = vadd.f32 0.0, %v1457
      %v1459 = vpop.f32.mrb[0].mxu0
      %v1460 = vadd.f32 0.0, %v1459
      %v1461 = vpop.f32.mrb[0].mxu0
      %v1462 = vadd.f32 0.0, %v1461
      %1463 = vdwg.mxu0
      %s1464 = scalar_lea.vmem %s1, 16
      %v1465 = vld [vmem:[%s1464] ss:$8 sm:$0x3]
      %v1467 = vlaneseq
      %v1468 = vshrl.u32 %v1467, 7
      %v1469 = vsub.s32 0, %v1468
      %v1470 = vrot.slane %v1465, %v1469
      %v1471 = vlaneseq
      %v1472 = vshrl.u32 %v1471, 7
      %v1473 = vsub.s32 1, %v1472
      %v1474 = vrot.slane %v1465, %v1473
      %v1477 = vmul.f32 %v1470, %v1446
      %v1478 = vmul.f32 %v1474, %v1448
      %v1479 = vmul.f32 %v1470, %v1450
      %v1480 = vmul.f32 %v1474, %v1452
      %v1481 = vmul.f32 %v1470, %v1456
      %v1482 = vmul.f32 %v1474, %v1458
      %v1483 = vmul.f32 %v1470, %v1460
      %v1484 = vmul.f32 %v1474, %v1462
      %v1485 = vadd.f32 %v1367, %v1477
      %v1486 = vadd.f32 %v1368, %v1478
      %v1487 = vadd.f32 %v1369, %v1479
      %v1488 = vadd.f32 %v1370, %v1480
      %v1489 = vadd.f32 %v1371, %v1481
      %v1490 = vadd.f32 %v1372, %v1482
      %v1491 = vadd.f32 %v1373, %v1483
      %v1492 = vadd.f32 %v1374, %v1484
      %v1493 = vld [vmem:[%s3] sm:$0xff]
      %v1494 = vld [vmem:[%s3 + $0x8] sm:$0xff]
      %v1495 = vld [vmem:[%s3 + $0x10] sm:$0xff]
      %v1496 = vld [vmem:[%s3 + $0x18] sm:$0xff]
      %1498 = vset.pattern.permute.xlu0 0
      %1499 = vperm.xlu0 %1498, %v1493
      %v1500 = vpop.permute.xlu0 %1499
      %1503 = vset.pattern.permute.xlu0 0
      %1504 = vperm.xlu0 %1503, %v1494
      %v1505 = vpop.permute.xlu0 %1504
      %1508 = vset.pattern.permute.xlu0 0
      %1509 = vperm.xlu0 %1508, %v1495
      %v1510 = vpop.permute.xlu0 %1509
      %1513 = vset.pattern.permute.xlu0 0
      %1514 = vperm.xlu0 %1513, %v1496
      %v1515 = vpop.permute.xlu0 %1514
      %v1517 = vadd.f32 %v1485, %v1500
      %v1518 = vadd.f32 %v1486, %v1500
      %v1519 = vadd.f32 %v1487, %v1505
      %v1520 = vadd.f32 %v1488, %v1505
      %v1521 = vadd.f32 %v1489, %v1510
      %v1522 = vadd.f32 %v1490, %v1510
      %v1523 = vadd.f32 %v1491, %v1515
      %v1524 = vadd.f32 %v1492, %v1515
      %v1525 = vmul.f32 %v1517, 0.1
      %v1526 = vmul.f32 %v1518, 0.1
      %v1527 = vmul.f32 %v1519, 0.1
      %v1528 = vmul.f32 %v1520, 0.1
      %v1529 = vmul.f32 %v1521, 0.1
      %v1530 = vmul.f32 %v1522, 0.1
      %v1531 = vmul.f32 %v1523, 0.1
      %v1532 = vmul.f32 %v1524, 0.1
      %v1533 = vmax.f32 %v1517, %v1525
      %v1534 = vmax.f32 %v1518, %v1526
      %v1535 = vmax.f32 %v1519, %v1527
      %v1536 = vmax.f32 %v1520, %v1528
      %v1537 = vmax.f32 %v1521, %v1529
      %v1538 = vmax.f32 %v1522, %v1530
      %v1539 = vmax.f32 %v1523, %v1531
      %v1540 = vmax.f32 %v1524, %v1532
      %v1541 = vpack.c.bf16 %v1535, %v1533
      %v1542 = vpack.c.bf16 %v1536, %v1534
      %v1543 = vpack.c.bf16 %v1539, %v1537
      %v1544 = vpack.c.bf16 %v1540, %v1538
      %s1545 = scalar_lea.vmem %s4, 64
      %v1546 = vld [vmem:[%s1545] sm:$0xf]
      %v1547 = vld [vmem:[%s1545 + $0x4] sm:$0xf]
      %v1548 = vld [vmem:[%s1545 + $0x8] sm:$0xf]
      %v1549 = vld [vmem:[%s1545 + $0xc] sm:$0xf]
      %1550 = vrot.lane.b32.xlu0 %v1533, 17
      %v1551 = vpop.permute.xlu0 %1550
      %1552 = vrot.lane.b32.xlu0 %v1535, 17
      %v1553 = vpop.permute.xlu0 %1552
      %1554 = vrot.lane.b32.xlu0 %v1537, 17
      %v1555 = vpop.permute.xlu0 %1554
      %1556 = vrot.lane.b32.xlu0 %v1539, 17
      %v1557 = vpop.permute.xlu0 %1556
      %1558 = vrot.lane.b32.xlu0 %v1534, 17
      %v1559 = vpop.permute.xlu0 %1558
      %1560 = vrot.lane.b32.xlu0 %v1536, 17
      %v1561 = vpop.permute.xlu0 %1560
      %1562 = vrot.lane.b32.xlu0 %v1538, 17
      %v1563 = vpop.permute.xlu0 %1562
      %1564 = vrot.lane.b32.xlu0 %v1540, 17
      %v1565 = vpop.permute.xlu0 %1564
      %v1566 = vsel %vm486, %v1551, %v1559
      %v1567 = vsel %vm486, %v1553, %v1561
      %v1568 = vsel %vm486, %v1555, %v1563
      %v1569 = vsel %vm486, %v1557, %v1565
      %v1570 = vsel %vm486, %v1559, %v1551
      %v1571 = vsel %vm486, %v1561, %v1553
      %v1572 = vsel %vm486, %v1563, %v1555
      %v1573 = vsel %vm486, %v1565, %v1557
      %v1574 = vpack.c.bf16 %v1571, %v1570
      %v1575 = vpack.c.bf16 %v1567, %v1566
      %v1576 = vpack.c.bf16 %v1573, %v1572
      %v1577 = vpack.c.bf16 %v1569, %v1568
      %v1578 = vld [vmem:[%s4] sm:$0xf]
      %v1579 = vld [vmem:[%s4 + $0x4] sm:$0xf]
      %v1580 = vld [vmem:[%s4 + $0x8] sm:$0xf]
      %v1581 = vld [vmem:[%s4 + $0xc] sm:$0xf]
      %v1586 = vunpack.c.l.b16 %v1578
      %v1587 = vunpack.c.l.b16 %v1579
      %v1588 = vunpack.c.l.b16 %v1580
      %v1589 = vunpack.c.l.b16 %v1581
      %v1590 = vpack.c.b16 %v1587, %v1586
      %v1591 = vpack.c.b16 %v1589, %v1588
      %vm1592 = vcmask 261120
      %v1594 = vsel %vm1592, %v1590, 0
      %v1597 = vsel %vm1592, %v1591, 0
      %1599 = vmatprep.subr.bf16.mxu0 %v1575
      %1600 = vmatpush1.bf16.msra.mxu0 %v1574
      %1601 = vmatprep.subr.bf16.mxu0 %v1577
      %1602 = vmatpush1.bf16.msra.mxu0 %v1576
      %1603 = vmatprep.subr.bf16.mxu0 0
      %1604 = vmatpush1.bf16.msra.mxu0 0
      %1605 = vmatprep.subr.bf16.mxu0 0
      %1606 = vmatpush1.bf16.msra.mxu0 0
      %1607 = vmatprep.subr.bf16.mxu0 0
      %1608 = vmatpush1.bf16.msra.mxu0 0
      %1609 = vmatprep.subr.bf16.mxu0 0
      %1610 = vmatpush1.bf16.msra.mxu0 0
      %1611 = vmatprep.subr.bf16.mxu0 0
      %1612 = vmatpush1.bf16.msra.mxu0 0
      %1613 = vmatprep.subr.bf16.mxu0 0
      %1614 = vmatpush1.bf16.msra.mxu0 0
      %1615 = vmatprep.subr.bf16.mxu0 0
      %1616 = vmatpush1.bf16.msra.mxu0 0
      %1617 = vmatprep.subr.bf16.mxu0 0
      %1618 = vmatpush1.bf16.msra.mxu0 0
      %1619 = vmatprep.subr.bf16.mxu0 0
      %1620 = vmatpush1.bf16.msra.mxu0 0
      %1621 = vmatprep.subr.bf16.mxu0 0
      %1622 = vmatpush1.bf16.msra.mxu0 0
      %1623 = vmatprep.subr.bf16.mxu0 0
      %1624 = vmatpush1.bf16.msra.mxu0 0
      %1625 = vmatprep.subr.bf16.mxu0 0
      %1626 = vmatpush1.bf16.msra.mxu0 0
      %1627 = vmatprep.subr.bf16.mxu0 0
      %1628 = vmatpush1.bf16.msra.mxu0 0
      %1629 = vmatprep.subr.bf16.mxu0 0
      %1630 = vmatpush1.bf16.msra.mxu0 0
      %1631 = vmatprep.mubr.bf16.mxu0 0
      %1632 = vmatmul.mubr.bf16.gmra.mrb[0].mxu0 %v1594
      %v1633 = vpop.f32.mrb[0].mxu0
      %v1634 = vadd.f32 0.0, %v1633
      %v1635 = vpop.f32.mrb[0].mxu0
      %v1636 = vadd.f32 0.0, %v1635
      %v1637 = vpop.f32.mrb[0].mxu0
      %v1638 = vadd.f32 0.0, %v1637
      %v1639 = vpop.f32.mrb[0].mxu0
      %v1640 = vadd.f32 0.0, %v1639
      %1641 = vmatprep.mubr.bf16.mxu0 0
      %1642 = vmatmul.mubr.bf16.gmra.mrb[0].mxu0 %v1597
      %v1643 = vpop.f32.mrb[0].mxu0
      %v1644 = vadd.f32 0.0, %v1643
      %v1645 = vpop.f32.mrb[0].mxu0
      %v1646 = vadd.f32 0.0, %v1645
      %v1647 = vpop.f32.mrb[0].mxu0
      %v1648 = vadd.f32 0.0, %v1647
      %v1649 = vpop.f32.mrb[0].mxu0
      %v1650 = vadd.f32 0.0, %v1649
      %1651 = vdwg.mxu0
      %v1652 = vmul.f32 %v577, %v1634
      %v1653 = vmul.f32 %v581, %v1636
      %v1654 = vmul.f32 %v577, %v1638
      %v1655 = vmul.f32 %v581, %v1640
      %v1656 = vmul.f32 %v577, %v1644
      %v1657 = vmul.f32 %v581, %v1646
      %v1658 = vmul.f32 %v577, %v1648
      %v1659 = vmul.f32 %v581, %v1650
      %v1664 = vunpack.c.l.b16 %v1546
      %v1665 = vunpack.c.l.b16 %v1547
      %v1666 = vunpack.c.l.b16 %v1548
      %v1667 = vunpack.c.l.b16 %v1549
      %v1668 = vpack.c.b16 %v1665, %v1664
      %v1669 = vpack.c.b16 %v1667, %v1666
      %v1671 = vsel %vm1592, %v1668, 0
      %v1674 = vsel %vm1592, %v1669, 0
      %1676 = vmatprep.subr.bf16.mxu0 %v1542
      %1677 = vmatpush1.bf16.msra.mxu0 %v1541
      %1678 = vmatprep.subr.bf16.mxu0 %v1544
      %1679 = vmatpush1.bf16.msra.mxu0 %v1543
      %1680 = vmatprep.subr.bf16.mxu0 0
      %1681 = vmatpush1.bf16.msra.mxu0 0
      %1682 = vmatprep.subr.bf16.mxu0 0
      %1683 = vmatpush1.bf16.msra.mxu0 0
      %1684 = vmatprep.subr.bf16.mxu0 0
      %1685 = vmatpush1.bf16.msra.mxu0 0
      %1686 = vmatprep.subr.bf16.mxu0 0
      %1687 = vmatpush1.bf16.msra.mxu0 0
      %1688 = vmatprep.subr.bf16.mxu0 0
      %1689 = vmatpush1.bf16.msra.mxu0 0
      %1690 = vmatprep.subr.bf16.mxu0 0
      %1691 = vmatpush1.bf16.msra.mxu0 0
      %1692 = vmatprep.subr.bf16.mxu0 0
      %1693 = vmatpush1.bf16.msra.mxu0 0
      %1694 = vmatprep.subr.bf16.mxu0 0
      %1695 = vmatpush1.bf16.msra.mxu0 0
      %1696 = vmatprep.subr.bf16.mxu0 0
      %1697 = vmatpush1.bf16.msra.mxu0 0
      %1698 = vmatprep.subr.bf16.mxu0 0
      %1699 = vmatpush1.bf16.msra.mxu0 0
      %1700 = vmatprep.subr.bf16.mxu0 0
      %1701 = vmatpush1.bf16.msra.mxu0 0
      %1702 = vmatprep.subr.bf16.mxu0 0
      %1703 = vmatpush1.bf16.msra.mxu0 0
      %1704 = vmatprep.subr.bf16.mxu0 0
      %1705 = vmatpush1.bf16.msra.mxu0 0
      %1706 = vmatprep.subr.bf16.mxu0 0
      %1707 = vmatpush1.bf16.msra.mxu0 0
      %1708 = vmatprep.mubr.bf16.mxu0 0
      %1709 = vmatmul.mubr.bf16.gmra.mrb[0].mxu0 %v1671
      %v1710 = vpop.f32.mrb[0].mxu0
      %v1711 = vadd.f32 %v1652, %v1710
      %v1712 = vpop.f32.mrb[0].mxu0
      %v1713 = vadd.f32 %v1653, %v1712
      %v1714 = vpop.f32.mrb[0].mxu0
      %v1715 = vadd.f32 %v1654, %v1714
      %v1716 = vpop.f32.mrb[0].mxu0
      %v1717 = vadd.f32 %v1655, %v1716
      %1718 = vmatprep.mubr.bf16.mxu0 0
      %1719 = vmatmul.mubr.bf16.gmra.mrb[0].mxu0 %v1674
      %v1720 = vpop.f32.mrb[0].mxu0
      %v1721 = vadd.f32 %v1656, %v1720
      %v1722 = vpop.f32.mrb[0].mxu0
      %v1723 = vadd.f32 %v1657, %v1722
      %v1724 = vpop.f32.mrb[0].mxu0
      %v1725 = vadd.f32 %v1658, %v1724
      %v1726 = vpop.f32.mrb[0].mxu0
      %v1727 = vadd.f32 %v1659, %v1726
      %1728 = vdwg.mxu0
      %1729 = vrot.lane.b32.xlu0 %v1533, 16
      %v1730 = vpop.permute.xlu0 %1729
      %1731 = vrot.lane.b32.xlu0 %v1535, 16
      %v1732 = vpop.permute.xlu0 %1731
      %1733 = vrot.lane.b32.xlu0 %v1537, 16
      %v1734 = vpop.permute.xlu0 %1733
      %1735 = vrot.lane.b32.xlu0 %v1539, 16
      %v1736 = vpop.permute.xlu0 %1735
      %1737 = vrot.lane.b32.xlu0 %v1534, 16
      %v1738 = vpop.permute.xlu0 %1737
      %1739 = vrot.lane.b32.xlu0 %v1536, 16
      %v1740 = vpop.permute.xlu0 %1739
      %1741 = vrot.lane.b32.xlu0 %v1538, 16
      %v1742 = vpop.permute.xlu0 %1741
      %1743 = vrot.lane.b32.xlu0 %v1540, 16
      %v1744 = vpop.permute.xlu0 %1743
      %v1745 = vsel %vm671, %v1730, %v1738
      %v1746 = vsel %vm671, %v1732, %v1740
      %v1747 = vsel %vm671, %v1734, %v1742
      %v1748 = vsel %vm671, %v1736, %v1744
      %v1749 = vsel %vm671, %v1738, %v1730
      %v1750 = vsel %vm671, %v1740, %v1732
      %v1751 = vsel %vm671, %v1742, %v1734
      %v1752 = vsel %vm671, %v1744, %v1736
      %v1753 = vpack.c.bf16 %v1750, %v1749
      %v1754 = vpack.c.bf16 %v1746, %v1745
      %v1755 = vpack.c.bf16 %v1752, %v1751
      %v1756 = vpack.c.bf16 %v1748, %v1747
      %s1757 = scalar_lea.vmem %s4, 16
      %v1758 = vld [vmem:[%s1757] sm:$0xf]
      %v1759 = vld [vmem:[%s1757 + $0x4] sm:$0xf]
      %v1760 = vld [vmem:[%s1757 + $0x8] sm:$0xf]
      %v1761 = vld [vmem:[%s1757 + $0xc] sm:$0xf]
      %v1766 = vunpack.c.l.b16 %v1758
      %v1767 = vunpack.c.l.b16 %v1759
      %v1768 = vunpack.c.l.b16 %v1760
      %v1769 = vunpack.c.l.b16 %v1761
      %v1770 = vpack.c.b16 %v1767, %v1766
      %v1771 = vpack.c.b16 %v1769, %v1768
      %v1773 = vsel %vm1592, %v1770, 0
      %v1776 = vsel %vm1592, %v1771, 0
      %1778 = vmatprep.subr.bf16.mxu0 %v1754
      %1779 = vmatpush1.bf16.msra.mxu0 %v1753
      %1780 = vmatprep.subr.bf16.mxu0 %v1756
      %1781 = vmatpush1.bf16.msra.mxu0 %v1755
      %1782 = vmatprep.subr.bf16.mxu0 0
      %1783 = vmatpush1.bf16.msra.mxu0 0
      %1784 = vmatprep.subr.bf16.mxu0 0
      %1785 = vmatpush1.bf16.msra.mxu0 0
      %1786 = vmatprep.subr.bf16.mxu0 0
      %1787 = vmatpush1.bf16.msra.mxu0 0
      %1788 = vmatprep.subr.bf16.mxu0 0
      %1789 = vmatpush1.bf16.msra.mxu0 0
      %1790 = vmatprep.subr.bf16.mxu0 0
      %1791 = vmatpush1.bf16.msra.mxu0 0
      %1792 = vmatprep.subr.bf16.mxu0 0
      %1793 = vmatpush1.bf16.msra.mxu0 0
      %1794 = vmatprep.subr.bf16.mxu0 0
      %1795 = vmatpush1.bf16.msra.mxu0 0
      %1796 = vmatprep.subr.bf16.mxu0 0
      %1797 = vmatpush1.bf16.msra.mxu0 0
      %1798 = vmatprep.subr.bf16.mxu0 0
      %1799 = vmatpush1.bf16.msra.mxu0 0
      %1800 = vmatprep.subr.bf16.mxu0 0
      %1801 = vmatpush1.bf16.msra.mxu0 0
      %1802 = vmatprep.subr.bf16.mxu0 0
      %1803 = vmatpush1.bf16.msra.mxu0 0
      %1804 = vmatprep.subr.bf16.mxu0 0
      %1805 = vmatpush1.bf16.msra.mxu0 0
      %1806 = vmatprep.subr.bf16.mxu0 0
      %1807 = vmatpush1.bf16.msra.mxu0 0
      %1808 = vmatprep.subr.bf16.mxu0 0
      %1809 = vmatpush1.bf16.msra.mxu0 0
      %1810 = vmatprep.mubr.bf16.mxu0 0
      %1811 = vmatmul.mubr.bf16.gmra.mrb[0].mxu0 %v1773
      %v1812 = vpop.f32.mrb[0].mxu0
      %v1813 = vadd.f32 0.0, %v1812
      %v1814 = vpop.f32.mrb[0].mxu0
      %v1815 = vadd.f32 0.0, %v1814
      %v1816 = vpop.f32.mrb[0].mxu0
      %v1817 = vadd.f32 0.0, %v1816
      %v1818 = vpop.f32.mrb[0].mxu0
      %v1819 = vadd.f32 0.0, %v1818
      %1820 = vmatprep.mubr.bf16.mxu0 0
      %1821 = vmatmul.mubr.bf16.gmra.mrb[0].mxu0 %v1776
      %v1822 = vpop.f32.mrb[0].mxu0
      %v1823 = vadd.f32 0.0, %v1822
      %v1824 = vpop.f32.mrb[0].mxu0
      %v1825 = vadd.f32 0.0, %v1824
      %v1826 = vpop.f32.mrb[0].mxu0
      %v1827 = vadd.f32 0.0, %v1826
      %v1828 = vpop.f32.mrb[0].mxu0
      %v1829 = vadd.f32 0.0, %v1828
      %1830 = vdwg.mxu0
      %v1831 = vmul.f32 %v762, %v1813
      %v1832 = vmul.f32 %v766, %v1815
      %v1833 = vmul.f32 %v762, %v1817
      %v1834 = vmul.f32 %v766, %v1819
      %v1835 = vmul.f32 %v762, %v1823
      %v1836 = vmul.f32 %v766, %v1825
      %v1837 = vmul.f32 %v762, %v1827
      %v1838 = vmul.f32 %v766, %v1829
      %v1839 = vadd.f32 %v1711, %v1831
      %v1840 = vadd.f32 %v1713, %v1832
      %v1841 = vadd.f32 %v1715, %v1833
      %v1842 = vadd.f32 %v1717, %v1834
      %v1843 = vadd.f32 %v1721, %v1835
      %v1844 = vadd.f32 %v1723, %v1836
      %v1845 = vadd.f32 %v1725, %v1837
      %v1846 = vadd.f32 %v1727, %v1838
      %1847 = vrot.lane.b32.xlu0 %v1533, 15
      %v1848 = vpop.permute.xlu0 %1847
      %1849 = vrot.lane.b32.xlu0 %v1535, 15
      %v1850 = vpop.permute.xlu0 %1849
      %1851 = vrot.lane.b32.xlu0 %v1537, 15
      %v1852 = vpop.permute.xlu0 %1851
      %1853 = vrot.lane.b32.xlu0 %v1539, 15
      %v1854 = vpop.permute.xlu0 %1853
      %1855 = vrot.lane.b32.xlu0 %v1534, 15
      %v1856 = vpop.permute.xlu0 %1855
      %1857 = vrot.lane.b32.xlu0 %v1536, 15
      %v1858 = vpop.permute.xlu0 %1857
      %1859 = vrot.lane.b32.xlu0 %v1538, 15
      %v1860 = vpop.permute.xlu0 %1859
      %1861 = vrot.lane.b32.xlu0 %v1540, 15
      %v1862 = vpop.permute.xlu0 %1861
      %v1863 = vsel %vm789, %v1848, %v1856
      %v1864 = vsel %vm789, %v1850, %v1858
      %v1865 = vsel %vm789, %v1852, %v1860
      %v1866 = vsel %vm789, %v1854, %v1862
      %v1867 = vsel %vm789, %v1856, %v1848
      %v1868 = vsel %vm789, %v1858, %v1850
      %v1869 = vsel %vm789, %v1860, %v1852
      %v1870 = vsel %vm789, %v1862, %v1854
      %v1871 = vpack.c.bf16 %v1868, %v1867
      %v1872 = vpack.c.bf16 %v1864, %v1863
      %v1873 = vpack.c.bf16 %v1870, %v1869
      %v1874 = vpack.c.bf16 %v1866, %v1865
      %s1875 = scalar_lea.vmem %s4, 32
      %v1876 = vld [vmem:[%s1875] sm:$0xf]
      %v1877 = vld [vmem:[%s1875 + $0x4] sm:$0xf]
      %v1878 = vld [vmem:[%s1875 + $0x8] sm:$0xf]
      %v1879 = vld [vmem:[%s1875 + $0xc] sm:$0xf]
      %v1884 = vunpack.c.l.b16 %v1876
      %v1885 = vunpack.c.l.b16 %v1877
      %v1886 = vunpack.c.l.b16 %v1878
      %v1887 = vunpack.c.l.b16 %v1879
      %v1888 = vpack.c.b16 %v1885, %v1884
      %v1889 = vpack.c.b16 %v1887, %v1886
      %v1891 = vsel %vm1592, %v1888, 0
      %v1894 = vsel %vm1592, %v1889, 0
      %1896 = vmatprep.subr.bf16.mxu0 %v1872
      %1897 = vmatpush1.bf16.msra.mxu0 %v1871
      %1898 = vmatprep.subr.bf16.mxu0 %v1874
      %1899 = vmatpush1.bf16.msra.mxu0 %v1873
      %1900 = vmatprep.subr.bf16.mxu0 0
      %1901 = vmatpush1.bf16.msra.mxu0 0
      %1902 = vmatprep.subr.bf16.mxu0 0
      %1903 = vmatpush1.bf16.msra.mxu0 0
      %1904 = vmatprep.subr.bf16.mxu0 0
      %1905 = vmatpush1.bf16.msra.mxu0 0
      %1906 = vmatprep.subr.bf16.mxu0 0
      %1907 = vmatpush1.bf16.msra.mxu0 0
      %1908 = vmatprep.subr.bf16.mxu0 0
      %1909 = vmatpush1.bf16.msra.mxu0 0
      %1910 = vmatprep.subr.bf16.mxu0 0
      %1911 = vmatpush1.bf16.msra.mxu0 0
      %1912 = vmatprep.subr.bf16.mxu0 0
      %1913 = vmatpush1.bf16.msra.mxu0 0
      %1914 = vmatprep.subr.bf16.mxu0 0
      %1915 = vmatpush1.bf16.msra.mxu0 0
      %1916 = vmatprep.subr.bf16.mxu0 0
      %1917 = vmatpush1.bf16.msra.mxu0 0
      %1918 = vmatprep.subr.bf16.mxu0 0
      %1919 = vmatpush1.bf16.msra.mxu0 0
      %1920 = vmatprep.subr.bf16.mxu0 0
      %1921 = vmatpush1.bf16.msra.mxu0 0
      %1922 = vmatprep.subr.bf16.mxu0 0
      %1923 = vmatpush1.bf16.msra.mxu0 0
      %1924 = vmatprep.subr.bf16.mxu0 0
      %1925 = vmatpush1.bf16.msra.mxu0 0
      %1926 = vmatprep.subr.bf16.mxu0 0
      %1927 = vmatpush1.bf16.msra.mxu0 0
      %1928 = vmatprep.mubr.bf16.mxu0 0
      %1929 = vmatmul.mubr.bf16.gmra.mrb[0].mxu0 %v1891
      %v1930 = vpop.f32.mrb[0].mxu0
      %v1931 = vadd.f32 0.0, %v1930
      %v1932 = vpop.f32.mrb[0].mxu0
      %v1933 = vadd.f32 0.0, %v1932
      %v1934 = vpop.f32.mrb[0].mxu0
      %v1935 = vadd.f32 0.0, %v1934
      %v1936 = vpop.f32.mrb[0].mxu0
      %v1937 = vadd.f32 0.0, %v1936
      %1938 = vmatprep.mubr.bf16.mxu0 0
      %1939 = vmatmul.mubr.bf16.gmra.mrb[0].mxu0 %v1894
      %v1940 = vpop.f32.mrb[0].mxu0
      %v1941 = vadd.f32 0.0, %v1940
      %v1942 = vpop.f32.mrb[0].mxu0
      %v1943 = vadd.f32 0.0, %v1942
      %v1944 = vpop.f32.mrb[0].mxu0
      %v1945 = vadd.f32 0.0, %v1944
      %v1946 = vpop.f32.mrb[0].mxu0
      %v1947 = vadd.f32 0.0, %v1946
      %1948 = vdwg.mxu0
      %v1949 = vmul.f32 %v880, %v1931
      %v1950 = vmul.f32 %v884, %v1933
      %v1951 = vmul.f32 %v880, %v1935
      %v1952 = vmul.f32 %v884, %v1937
      %v1953 = vmul.f32 %v880, %v1941
      %v1954 = vmul.f32 %v884, %v1943
      %v1955 = vmul.f32 %v880, %v1945
      %v1956 = vmul.f32 %v884, %v1947
      %v1957 = vadd.f32 %v1839, %v1949
      %v1958 = vadd.f32 %v1840, %v1950
      %v1959 = vadd.f32 %v1841, %v1951
      %v1960 = vadd.f32 %v1842, %v1952
      %v1961 = vadd.f32 %v1843, %v1953
      %v1962 = vadd.f32 %v1844, %v1954
      %v1963 = vadd.f32 %v1845, %v1955
      %v1964 = vadd.f32 %v1846, %v1956
      %1965 = vrot.lane.b32.xlu0 %v1533, 1
      %v1966 = vpop.permute.xlu0 %1965
      %1967 = vrot.lane.b32.xlu0 %v1535, 1
      %v1968 = vpop.permute.xlu0 %1967
      %1969 = vrot.lane.b32.xlu0 %v1537, 1
      %v1970 = vpop.permute.xlu0 %1969
      %1971 = vrot.lane.b32.xlu0 %v1539, 1
      %v1972 = vpop.permute.xlu0 %1971
      %1973 = vrot.lane.b32.xlu0 %v1534, 1
      %v1974 = vpop.permute.xlu0 %1973
      %1975 = vrot.lane.b32.xlu0 %v1536, 1
      %v1976 = vpop.permute.xlu0 %1975
      %1977 = vrot.lane.b32.xlu0 %v1538, 1
      %v1978 = vpop.permute.xlu0 %1977
      %1979 = vrot.lane.b32.xlu0 %v1540, 1
      %v1980 = vpop.permute.xlu0 %1979
      %v1981 = vsel %vm907, %v1966, %v1974
      %v1982 = vsel %vm907, %v1968, %v1976
      %v1983 = vsel %vm907, %v1970, %v1978
      %v1984 = vsel %vm907, %v1972, %v1980
      %v1985 = vsel %vm907, %v1974, %v1966
      %v1986 = vsel %vm907, %v1976, %v1968
      %v1987 = vsel %vm907, %v1978, %v1970
      %v1988 = vsel %vm907, %v1980, %v1972
      %v1989 = vpack.c.bf16 %v1986, %v1985
      %v1990 = vpack.c.bf16 %v1982, %v1981
      %v1991 = vpack.c.bf16 %v1988, %v1987
      %v1992 = vpack.c.bf16 %v1984, %v1983
      %s1993 = scalar_lea.vmem %s4, 48
      %v1994 = vld [vmem:[%s1993] sm:$0xf]
      %v1995 = vld [vmem:[%s1993 + $0x4] sm:$0xf]
      %v1996 = vld [vmem:[%s1993 + $0x8] sm:$0xf]
      %v1997 = vld [vmem:[%s1993 + $0xc] sm:$0xf]
      %v2002 = vunpack.c.l.b16 %v1994
      %v2003 = vunpack.c.l.b16 %v1995
      %v2004 = vunpack.c.l.b16 %v1996
      %v2005 = vunpack.c.l.b16 %v1997
      %v2006 = vpack.c.b16 %v2003, %v2002
      %v2007 = vpack.c.b16 %v2005, %v2004
      %v2009 = vsel %vm1592, %v2006, 0
      %v2012 = vsel %vm1592, %v2007, 0
      %2014 = vmatprep.subr.bf16.mxu0 %v1990
      %2015 = vmatpush1.bf16.msra.mxu0 %v1989
      %2016 = vmatprep.subr.bf16.mxu0 %v1992
      %2017 = vmatpush1.bf16.msra.mxu0 %v1991
      %2018 = vmatprep.subr.bf16.mxu0 0
      %2019 = vmatpush1.bf16.msra.mxu0 0
      %2020 = vmatprep.subr.bf16.mxu0 0
      %2021 = vmatpush1.bf16.msra.mxu0 0
      %2022 = vmatprep.subr.bf16.mxu0 0
      %2023 = vmatpush1.bf16.msra.mxu0 0
      %2024 = vmatprep.subr.bf16.mxu0 0
      %2025 = vmatpush1.bf16.msra.mxu0 0
      %2026 = vmatprep.subr.bf16.mxu0 0
      %2027 = vmatpush1.bf16.msra.mxu0 0
      %2028 = vmatprep.subr.bf16.mxu0 0
      %2029 = vmatpush1.bf16.msra.mxu0 0
      %2030 = vmatprep.subr.bf16.mxu0 0
      %2031 = vmatpush1.bf16.msra.mxu0 0
      %2032 = vmatprep.subr.bf16.mxu0 0
      %2033 = vmatpush1.bf16.msra.mxu0 0
      %2034 = vmatprep.subr.bf16.mxu0 0
      %2035 = vmatpush1.bf16.msra.mxu0 0
      %2036 = vmatprep.subr.bf16.mxu0 0
      %2037 = vmatpush1.bf16.msra.mxu0 0
      %2038 = vmatprep.subr.bf16.mxu0 0
      %2039 = vmatpush1.bf16.msra.mxu0 0
      %2040 = vmatprep.subr.bf16.mxu0 0
      %2041 = vmatpush1.bf16.msra.mxu0 0
      %2042 = vmatprep.subr.bf16.mxu0 0
      %2043 = vmatpush1.bf16.msra.mxu0 0
      %2044 = vmatprep.subr.bf16.mxu0 0
      %2045 = vmatpush1.bf16.msra.mxu0 0
      %2046 = vmatprep.mubr.bf16.mxu0 0
      %2047 = vmatmul.mubr.bf16.gmra.mrb[0].mxu0 %v2009
      %v2048 = vpop.f32.mrb[0].mxu0
      %v2049 = vadd.f32 0.0, %v2048
      %v2050 = vpop.f32.mrb[0].mxu0
      %v2051 = vadd.f32 0.0, %v2050
      %v2052 = vpop.f32.mrb[0].mxu0
      %v2053 = vadd.f32 0.0, %v2052
      %v2054 = vpop.f32.mrb[0].mxu0
      %v2055 = vadd.f32 0.0, %v2054
      %2056 = vmatprep.mubr.bf16.mxu0 0
      %2057 = vmatmul.mubr.bf16.gmra.mrb[0].mxu0 %v2012
      %v2058 = vpop.f32.mrb[0].mxu0
      %v2059 = vadd.f32 0.0, %v2058
      %v2060 = vpop.f32.mrb[0].mxu0
      %v2061 = vadd.f32 0.0, %v2060
      %v2062 = vpop.f32.mrb[0].mxu0
      %v2063 = vadd.f32 0.0, %v2062
      %v2064 = vpop.f32.mrb[0].mxu0
      %v2065 = vadd.f32 0.0, %v2064
      %2066 = vdwg.mxu0
      %v2067 = vmul.f32 %v998, %v2049
      %v2068 = vmul.f32 %v1002, %v2051
      %v2069 = vmul.f32 %v998, %v2053
      %v2070 = vmul.f32 %v1002, %v2055
      %v2071 = vmul.f32 %v998, %v2059
      %v2072 = vmul.f32 %v1002, %v2061
      %v2073 = vmul.f32 %v998, %v2063
      %v2074 = vmul.f32 %v1002, %v2065
      %v2075 = vadd.f32 %v1957, %v2067
      %v2076 = vadd.f32 %v1958, %v2068
      %v2077 = vadd.f32 %v1959, %v2069
      %v2078 = vadd.f32 %v1960, %v2070
      %v2079 = vadd.f32 %v1961, %v2071
      %v2080 = vadd.f32 %v1962, %v2072
      %v2081 = vadd.f32 %v1963, %v2073
      %v2082 = vadd.f32 %v1964, %v2074
      %2083 = vrot.lane.b32.xlu0 %v1533, 127
      %v2084 = vpop.permute.xlu0 %2083
      %2085 = vrot.lane.b32.xlu0 %v1535, 127
      %v2086 = vpop.permute.xlu0 %2085
      %2087 = vrot.lane.b32.xlu0 %v1537, 127
      %v2088 = vpop.permute.xlu0 %2087
      %2089 = vrot.lane.b32.xlu0 %v1539, 127
      %v2090 = vpop.permute.xlu0 %2089
      %2091 = vrot.lane.b32.xlu0 %v1534, 127
      %v2092 = vpop.permute.xlu0 %2091
      %2093 = vrot.lane.b32.xlu0 %v1536, 127
      %v2094 = vpop.permute.xlu0 %2093
      %2095 = vrot.lane.b32.xlu0 %v1538, 127
      %v2096 = vpop.permute.xlu0 %2095
      %2097 = vrot.lane.b32.xlu0 %v1540, 127
      %v2098 = vpop.permute.xlu0 %2097
      %v2099 = vsel %vm1025, %v2084, %v2092
      %v2100 = vsel %vm1025, %v2086, %v2094
      %v2101 = vsel %vm1025, %v2088, %v2096
      %v2102 = vsel %vm1025, %v2090, %v2098
      %v2103 = vsel %vm1025, %v2092, %v2084
      %v2104 = vsel %vm1025, %v2094, %v2086
      %v2105 = vsel %vm1025, %v2096, %v2088
      %v2106 = vsel %vm1025, %v2098, %v2090
      %v2107 = vpack.c.bf16 %v2100, %v2099
      %v2108 = vpack.c.bf16 %v2104, %v2103
      %v2109 = vpack.c.bf16 %v2102, %v2101
      %v2110 = vpack.c.bf16 %v2106, %v2105
      %s2111 = scalar_lea.vmem %s4, 80
      %v2112 = vld [vmem:[%s2111] sm:$0xf]
      %v2113 = vld [vmem:[%s2111 + $0x4] sm:$0xf]
      %v2114 = vld [vmem:[%s2111 + $0x8] sm:$0xf]
      %v2115 = vld [vmem:[%s2111 + $0xc] sm:$0xf]
      %v2120 = vunpack.c.l.b16 %v2112
      %v2121 = vunpack.c.l.b16 %v2113
      %v2122 = vunpack.c.l.b16 %v2114
      %v2123 = vunpack.c.l.b16 %v2115
      %v2124 = vpack.c.b16 %v2121, %v2120
      %v2125 = vpack.c.b16 %v2123, %v2122
      %v2127 = vsel %vm1592, %v2124, 0
      %v2130 = vsel %vm1592, %v2125, 0
      %2132 = vmatprep.subr.bf16.mxu0 %v2108
      %2133 = vmatpush1.bf16.msra.mxu0 %v2107
      %2134 = vmatprep.subr.bf16.mxu0 %v2110
      %2135 = vmatpush1.bf16.msra.mxu0 %v2109
      %2136 = vmatprep.subr.bf16.mxu0 0
      %2137 = vmatpush1.bf16.msra.mxu0 0
      %2138 = vmatprep.subr.bf16.mxu0 0
      %2139 = vmatpush1.bf16.msra.mxu0 0
      %2140 = vmatprep.subr.bf16.mxu0 0
      %2141 = vmatpush1.bf16.msra.mxu0 0
      %2142 = vmatprep.subr.bf16.mxu0 0
      %2143 = vmatpush1.bf16.msra.mxu0 0
      %2144 = vmatprep.subr.bf16.mxu0 0
      %2145 = vmatpush1.bf16.msra.mxu0 0
      %2146 = vmatprep.subr.bf16.mxu0 0
      %2147 = vmatpush1.bf16.msra.mxu0 0
      %2148 = vmatprep.subr.bf16.mxu0 0
      %2149 = vmatpush1.bf16.msra.mxu0 0
      %2150 = vmatprep.subr.bf16.mxu0 0
      %2151 = vmatpush1.bf16.msra.mxu0 0
      %2152 = vmatprep.subr.bf16.mxu0 0
      %2153 = vmatpush1.bf16.msra.mxu0 0
      %2154 = vmatprep.subr.bf16.mxu0 0
      %2155 = vmatpush1.bf16.msra.mxu0 0
      %2156 = vmatprep.subr.bf16.mxu0 0
      %2157 = vmatpush1.bf16.msra.mxu0 0
      %2158 = vmatprep.subr.bf16.mxu0 0
      %2159 = vmatpush1.bf16.msra.mxu0 0
      %2160 = vmatprep.subr.bf16.mxu0 0
      %2161 = vmatpush1.bf16.msra.mxu0 0
      %2162 = vmatprep.subr.bf16.mxu0 0
      %2163 = vmatpush1.bf16.msra.mxu0 0
      %2164 = vmatprep.mubr.bf16.mxu0 0
      %2165 = vmatmul.mubr.bf16.gmra.mrb[0].mxu0 %v2127
      %v2166 = vpop.f32.mrb[0].mxu0
      %v2167 = vadd.f32 0.0, %v2166
      %v2168 = vpop.f32.mrb[0].mxu0
      %v2169 = vadd.f32 0.0, %v2168
      %v2170 = vpop.f32.mrb[0].mxu0
      %v2171 = vadd.f32 0.0, %v2170
      %v2172 = vpop.f32.mrb[0].mxu0
      %v2173 = vadd.f32 0.0, %v2172
      %2174 = vmatprep.mubr.bf16.mxu0 0
      %2175 = vmatmul.mubr.bf16.gmra.mrb[0].mxu0 %v2130
      %v2176 = vpop.f32.mrb[0].mxu0
      %v2177 = vadd.f32 0.0, %v2176
      %v2178 = vpop.f32.mrb[0].mxu0
      %v2179 = vadd.f32 0.0, %v2178
      %v2180 = vpop.f32.mrb[0].mxu0
      %v2181 = vadd.f32 0.0, %v2180
      %v2182 = vpop.f32.mrb[0].mxu0
      %v2183 = vadd.f32 0.0, %v2182
      %2184 = vdwg.mxu0
      %v2185 = vmul.f32 %v1116, %v2167
      %v2186 = vmul.f32 %v1120, %v2169
      %v2187 = vmul.f32 %v1116, %v2171
      %v2188 = vmul.f32 %v1120, %v2173
      %v2189 = vmul.f32 %v1116, %v2177
      %v2190 = vmul.f32 %v1120, %v2179
      %v2191 = vmul.f32 %v1116, %v2181
      %v2192 = vmul.f32 %v1120, %v2183
      %v2193 = vadd.f32 %v2075, %v2185
      %v2194 = vadd.f32 %v2076, %v2186
      %v2195 = vadd.f32 %v2077, %v2187
      %v2196 = vadd.f32 %v2078, %v2188
      %v2197 = vadd.f32 %v2079, %v2189
      %v2198 = vadd.f32 %v2080, %v2190
      %v2199 = vadd.f32 %v2081, %v2191
      %v2200 = vadd.f32 %v2082, %v2192
      %2201 = vrot.lane.b32.xlu0 %v1533, 113
      %v2202 = vpop.permute.xlu0 %2201
      %2203 = vrot.lane.b32.xlu0 %v1535, 113
      %v2204 = vpop.permute.xlu0 %2203
      %2205 = vrot.lane.b32.xlu0 %v1537, 113
      %v2206 = vpop.permute.xlu0 %2205
      %2207 = vrot.lane.b32.xlu0 %v1539, 113
      %v2208 = vpop.permute.xlu0 %2207
      %2209 = vrot.lane.b32.xlu0 %v1534, 113
      %v2210 = vpop.permute.xlu0 %2209
      %2211 = vrot.lane.b32.xlu0 %v1536, 113
      %v2212 = vpop.permute.xlu0 %2211
      %2213 = vrot.lane.b32.xlu0 %v1538, 113
      %v2214 = vpop.permute.xlu0 %2213
      %2215 = vrot.lane.b32.xlu0 %v1540, 113
      %v2216 = vpop.permute.xlu0 %2215
      %v2217 = vsel %vm1143, %v2202, %v2210
      %v2218 = vsel %vm1143, %v2204, %v2212
      %v2219 = vsel %vm1143, %v2206, %v2214
      %v2220 = vsel %vm1143, %v2208, %v2216
      %v2221 = vsel %vm1143, %v2210, %v2202
      %v2222 = vsel %vm1143, %v2212, %v2204
      %v2223 = vsel %vm1143, %v2214, %v2206
      %v2224 = vsel %vm1143, %v2216, %v2208
      %v2225 = vpack.c.bf16 %v2218, %v2217
      %v2226 = vpack.c.bf16 %v2222, %v2221
      %v2227 = vpack.c.bf16 %v2220, %v2219
      %v2228 = vpack.c.bf16 %v2224, %v2223
      %s2229 = scalar_lea.vmem %s4, 96
      %v2230 = vld [vmem:[%s2229] sm:$0xf]
      %v2231 = vld [vmem:[%s2229 + $0x4] sm:$0xf]
      %v2232 = vld [vmem:[%s2229 + $0x8] sm:$0xf]
      %v2233 = vld [vmem:[%s2229 + $0xc] sm:$0xf]
      %v2238 = vunpack.c.l.b16 %v2230
      %v2239 = vunpack.c.l.b16 %v2231
      %v2240 = vunpack.c.l.b16 %v2232
      %v2241 = vunpack.c.l.b16 %v2233
      %v2242 = vpack.c.b16 %v2239, %v2238
      %v2243 = vpack.c.b16 %v2241, %v2240
      %v2245 = vsel %vm1592, %v2242, 0
      %v2248 = vsel %vm1592, %v2243, 0
      %2250 = vmatprep.subr.bf16.mxu0 %v2226
      %2251 = vmatpush1.bf16.msra.mxu0 %v2225
      %2252 = vmatprep.subr.bf16.mxu0 %v2228
      %2253 = vmatpush1.bf16.msra.mxu0 %v2227
      %2254 = vmatprep.subr.bf16.mxu0 0
      %2255 = vmatpush1.bf16.msra.mxu0 0
      %2256 = vmatprep.subr.bf16.mxu0 0
      %2257 = vmatpush1.bf16.msra.mxu0 0
      %2258 = vmatprep.subr.bf16.mxu0 0
      %2259 = vmatpush1.bf16.msra.mxu0 0
      %2260 = vmatprep.subr.bf16.mxu0 0
      %2261 = vmatpush1.bf16.msra.mxu0 0
      %2262 = vmatprep.subr.bf16.mxu0 0
      %2263 = vmatpush1.bf16.msra.mxu0 0
      %2264 = vmatprep.subr.bf16.mxu0 0
      %2265 = vmatpush1.bf16.msra.mxu0 0
      %2266 = vmatprep.subr.bf16.mxu0 0
      %2267 = vmatpush1.bf16.msra.mxu0 0
      %2268 = vmatprep.subr.bf16.mxu0 0
      %2269 = vmatpush1.bf16.msra.mxu0 0
      %2270 = vmatprep.subr.bf16.mxu0 0
      %2271 = vmatpush1.bf16.msra.mxu0 0
      %2272 = vmatprep.subr.bf16.mxu0 0
      %2273 = vmatpush1.bf16.msra.mxu0 0
      %2274 = vmatprep.subr.bf16.mxu0 0
      %2275 = vmatpush1.bf16.msra.mxu0 0
      %2276 = vmatprep.subr.bf16.mxu0 0
      %2277 = vmatpush1.bf16.msra.mxu0 0
      %2278 = vmatprep.subr.bf16.mxu0 0
      %2279 = vmatpush1.bf16.msra.mxu0 0
      %2280 = vmatprep.subr.bf16.mxu0 0
      %2281 = vmatpush1.bf16.msra.mxu0 0
      %2282 = vmatprep.mubr.bf16.mxu0 0
      %2283 = vmatmul.mubr.bf16.gmra.mrb[0].mxu0 %v2245
      %v2284 = vpop.f32.mrb[0].mxu0
      %v2285 = vadd.f32 0.0, %v2284
      %v2286 = vpop.f32.mrb[0].mxu0
      %v2287 = vadd.f32 0.0, %v2286
      %v2288 = vpop.f32.mrb[0].mxu0
      %v2289 = vadd.f32 0.0, %v2288
      %v2290 = vpop.f32.mrb[0].mxu0
      %v2291 = vadd.f32 0.0, %v2290
      %2292 = vmatprep.mubr.bf16.mxu0 0
      %2293 = vmatmul.mubr.bf16.gmra.mrb[0].mxu0 %v2248
      %v2294 = vpop.f32.mrb[0].mxu0
      %v2295 = vadd.f32 0.0, %v2294
      %v2296 = vpop.f32.mrb[0].mxu0
      %v2297 = vadd.f32 0.0, %v2296
      %v2298 = vpop.f32.mrb[0].mxu0
      %v2299 = vadd.f32 0.0, %v2298
      %v2300 = vpop.f32.mrb[0].mxu0
      %v2301 = vadd.f32 0.0, %v2300
      %2302 = vdwg.mxu0
      %v2303 = vmul.f32 %v1234, %v2285
      %v2304 = vmul.f32 %v1238, %v2287
      %v2305 = vmul.f32 %v1234, %v2289
      %v2306 = vmul.f32 %v1238, %v2291
      %v2307 = vmul.f32 %v1234, %v2295
      %v2308 = vmul.f32 %v1238, %v2297
      %v2309 = vmul.f32 %v1234, %v2299
      %v2310 = vmul.f32 %v1238, %v2301
      %v2311 = vadd.f32 %v2193, %v2303
      %v2312 = vadd.f32 %v2194, %v2304
      %v2313 = vadd.f32 %v2195, %v2305
      %v2314 = vadd.f32 %v2196, %v2306
      %v2315 = vadd.f32 %v2197, %v2307
      %v2316 = vadd.f32 %v2198, %v2308
      %v2317 = vadd.f32 %v2199, %v2309
      %v2318 = vadd.f32 %v2200, %v2310
      %2319 = vrot.lane.b32.xlu0 %v1533, 112
      %v2320 = vpop.permute.xlu0 %2319
      %2321 = vrot.lane.b32.xlu0 %v1535, 112
      %v2322 = vpop.permute.xlu0 %2321
      %2323 = vrot.lane.b32.xlu0 %v1537, 112
      %v2324 = vpop.permute.xlu0 %2323
      %2325 = vrot.lane.b32.xlu0 %v1539, 112
      %v2326 = vpop.permute.xlu0 %2325
      %2327 = vrot.lane.b32.xlu0 %v1534, 112
      %v2328 = vpop.permute.xlu0 %2327
      %2329 = vrot.lane.b32.xlu0 %v1536, 112
      %v2330 = vpop.permute.xlu0 %2329
      %2331 = vrot.lane.b32.xlu0 %v1538, 112
      %v2332 = vpop.permute.xlu0 %2331
      %2333 = vrot.lane.b32.xlu0 %v1540, 112
      %v2334 = vpop.permute.xlu0 %2333
      %v2335 = vsel %vm1261, %v2320, %v2328
      %v2336 = vsel %vm1261, %v2322, %v2330
      %v2337 = vsel %vm1261, %v2324, %v2332
      %v2338 = vsel %vm1261, %v2326, %v2334
      %v2339 = vsel %vm1261, %v2328, %v2320
      %v2340 = vsel %vm1261, %v2330, %v2322
      %v2341 = vsel %vm1261, %v2332, %v2324
      %v2342 = vsel %vm1261, %v2334, %v2326
      %v2343 = vpack.c.bf16 %v2336, %v2335
      %v2344 = vpack.c.bf16 %v2340, %v2339
      %v2345 = vpack.c.bf16 %v2338, %v2337
      %v2346 = vpack.c.bf16 %v2342, %v2341
      %s2347 = scalar_lea.vmem %s4, 112
      %v2348 = vld [vmem:[%s2347] sm:$0xf]
      %v2349 = vld [vmem:[%s2347 + $0x4] sm:$0xf]
      %v2350 = vld [vmem:[%s2347 + $0x8] sm:$0xf]
      %v2351 = vld [vmem:[%s2347 + $0xc] sm:$0xf]
      %v2356 = vunpack.c.l.b16 %v2348
      %v2357 = vunpack.c.l.b16 %v2349
      %v2358 = vunpack.c.l.b16 %v2350
      %v2359 = vunpack.c.l.b16 %v2351
      %v2360 = vpack.c.b16 %v2357, %v2356
      %v2361 = vpack.c.b16 %v2359, %v2358
      %v2363 = vsel %vm1592, %v2360, 0
      %v2366 = vsel %vm1592, %v2361, 0
      %2368 = vmatprep.subr.bf16.mxu0 %v2344
      %2369 = vmatpush1.bf16.msra.mxu0 %v2343
      %2370 = vmatprep.subr.bf16.mxu0 %v2346
      %2371 = vmatpush1.bf16.msra.mxu0 %v2345
      %2372 = vmatprep.subr.bf16.mxu0 0
      %2373 = vmatpush1.bf16.msra.mxu0 0
      %2374 = vmatprep.subr.bf16.mxu0 0
      %2375 = vmatpush1.bf16.msra.mxu0 0
      %2376 = vmatprep.subr.bf16.mxu0 0
      %2377 = vmatpush1.bf16.msra.mxu0 0
      %2378 = vmatprep.subr.bf16.mxu0 0
      %2379 = vmatpush1.bf16.msra.mxu0 0
      %2380 = vmatprep.subr.bf16.mxu0 0
      %2381 = vmatpush1.bf16.msra.mxu0 0
      %2382 = vmatprep.subr.bf16.mxu0 0
      %2383 = vmatpush1.bf16.msra.mxu0 0
      %2384 = vmatprep.subr.bf16.mxu0 0
      %2385 = vmatpush1.bf16.msra.mxu0 0
      %2386 = vmatprep.subr.bf16.mxu0 0
      %2387 = vmatpush1.bf16.msra.mxu0 0
      %2388 = vmatprep.subr.bf16.mxu0 0
      %2389 = vmatpush1.bf16.msra.mxu0 0
      %2390 = vmatprep.subr.bf16.mxu0 0
      %2391 = vmatpush1.bf16.msra.mxu0 0
      %2392 = vmatprep.subr.bf16.mxu0 0
      %2393 = vmatpush1.bf16.msra.mxu0 0
      %2394 = vmatprep.subr.bf16.mxu0 0
      %2395 = vmatpush1.bf16.msra.mxu0 0
      %2396 = vmatprep.subr.bf16.mxu0 0
      %2397 = vmatpush1.bf16.msra.mxu0 0
      %2398 = vmatprep.subr.bf16.mxu0 0
      %2399 = vmatpush1.bf16.msra.mxu0 0
      %2400 = vmatprep.mubr.bf16.mxu0 0
      %2401 = vmatmul.mubr.bf16.gmra.mrb[0].mxu0 %v2363
      %v2402 = vpop.f32.mrb[0].mxu0
      %v2403 = vadd.f32 0.0, %v2402
      %v2404 = vpop.f32.mrb[0].mxu0
      %v2405 = vadd.f32 0.0, %v2404
      %v2406 = vpop.f32.mrb[0].mxu0
      %v2407 = vadd.f32 0.0, %v2406
      %v2408 = vpop.f32.mrb[0].mxu0
      %v2409 = vadd.f32 0.0, %v2408
      %2410 = vmatprep.mubr.bf16.mxu0 0
      %2411 = vmatmul.mubr.bf16.gmra.mrb[0].mxu0 %v2366
      %v2412 = vpop.f32.mrb[0].mxu0
      %v2413 = vadd.f32 0.0, %v2412
      %v2414 = vpop.f32.mrb[0].mxu0
      %v2415 = vadd.f32 0.0, %v2414
      %v2416 = vpop.f32.mrb[0].mxu0
      %v2417 = vadd.f32 0.0, %v2416
      %v2418 = vpop.f32.mrb[0].mxu0
      %v2419 = vadd.f32 0.0, %v2418
      %2420 = vdwg.mxu0
      %v2421 = vmul.f32 %v1352, %v2403
      %v2422 = vmul.f32 %v1356, %v2405
      %v2423 = vmul.f32 %v1352, %v2407
      %v2424 = vmul.f32 %v1356, %v2409
      %v2425 = vmul.f32 %v1352, %v2413
      %v2426 = vmul.f32 %v1356, %v2415
      %v2427 = vmul.f32 %v1352, %v2417
      %v2428 = vmul.f32 %v1356, %v2419
      %v2429 = vadd.f32 %v2311, %v2421
      %v2430 = vadd.f32 %v2312, %v2422
      %v2431 = vadd.f32 %v2313, %v2423
      %v2432 = vadd.f32 %v2314, %v2424
      %v2433 = vadd.f32 %v2315, %v2425
      %v2434 = vadd.f32 %v2316, %v2426
      %v2435 = vadd.f32 %v2317, %v2427
      %v2436 = vadd.f32 %v2318, %v2428
      %2437 = vrot.lane.b32.xlu0 %v1533, 111
      %v2438 = vpop.permute.xlu0 %2437
      %2439 = vrot.lane.b32.xlu0 %v1535, 111
      %v2440 = vpop.permute.xlu0 %2439
      %2441 = vrot.lane.b32.xlu0 %v1537, 111
      %v2442 = vpop.permute.xlu0 %2441
      %2443 = vrot.lane.b32.xlu0 %v1539, 111
      %v2444 = vpop.permute.xlu0 %2443
      %2445 = vrot.lane.b32.xlu0 %v1534, 111
      %v2446 = vpop.permute.xlu0 %2445
      %2447 = vrot.lane.b32.xlu0 %v1536, 111
      %v2448 = vpop.permute.xlu0 %2447
      %2449 = vrot.lane.b32.xlu0 %v1538, 111
      %v2450 = vpop.permute.xlu0 %2449
      %2451 = vrot.lane.b32.xlu0 %v1540, 111
      %v2452 = vpop.permute.xlu0 %2451
      %v2453 = vsel %vm1379, %v2438, %v2446
      %v2454 = vsel %vm1379, %v2440, %v2448
      %v2455 = vsel %vm1379, %v2442, %v2450
      %v2456 = vsel %vm1379, %v2444, %v2452
      %v2457 = vsel %vm1379, %v2446, %v2438
      %v2458 = vsel %vm1379, %v2448, %v2440
      %v2459 = vsel %vm1379, %v2450, %v2442
      %v2460 = vsel %vm1379, %v2452, %v2444
      %v2461 = vpack.c.bf16 %v2454, %v2453
      %v2462 = vpack.c.bf16 %v2458, %v2457
      %v2463 = vpack.c.bf16 %v2456, %v2455
      %v2464 = vpack.c.bf16 %v2460, %v2459
      %s2465 = scalar_lea.vmem %s4, 128
      %v2466 = vld [vmem:[%s2465] sm:$0xf]
      %v2467 = vld [vmem:[%s2465 + $0x4] sm:$0xf]
      %v2468 = vld [vmem:[%s2465 + $0x8] sm:$0xf]
      %v2469 = vld [vmem:[%s2465 + $0xc] sm:$0xf]
      %v2474 = vunpack.c.l.b16 %v2466
      %v2475 = vunpack.c.l.b16 %v2467
      %v2476 = vunpack.c.l.b16 %v2468
      %v2477 = vunpack.c.l.b16 %v2469
      %v2478 = vpack.c.b16 %v2475, %v2474
      %v2479 = vpack.c.b16 %v2477, %v2476
      %v2481 = vsel %vm1592, %v2478, 0
      %v2484 = vsel %vm1592, %v2479, 0
      %2486 = vmatprep.subr.bf16.mxu0 %v2462
      %2487 = vmatpush1.bf16.msra.mxu0 %v2461
      %2488 = vmatprep.subr.bf16.mxu0 %v2464
      %2489 = vmatpush1.bf16.msra.mxu0 %v2463
      %2490 = vmatprep.subr.bf16.mxu0 0
      %2491 = vmatpush1.bf16.msra.mxu0 0
      %2492 = vmatprep.subr.bf16.mxu0 0
      %2493 = vmatpush1.bf16.msra.mxu0 0
      %2494 = vmatprep.subr.bf16.mxu0 0
      %2495 = vmatpush1.bf16.msra.mxu0 0
      %2496 = vmatprep.subr.bf16.mxu0 0
      %2497 = vmatpush1.bf16.msra.mxu0 0
      %2498 = vmatprep.subr.bf16.mxu0 0
      %2499 = vmatpush1.bf16.msra.mxu0 0
      %2500 = vmatprep.subr.bf16.mxu0 0
      %2501 = vmatpush1.bf16.msra.mxu0 0
      %2502 = vmatprep.subr.bf16.mxu0 0
      %2503 = vmatpush1.bf16.msra.mxu0 0
      %2504 = vmatprep.subr.bf16.mxu0 0
      %2505 = vmatpush1.bf16.msra.mxu0 0
      %2506 = vmatprep.subr.bf16.mxu0 0
      %2507 = vmatpush1.bf16.msra.mxu0 0
      %2508 = vmatprep.subr.bf16.mxu0 0
      %2509 = vmatpush1.bf16.msra.mxu0 0
      %2510 = vmatprep.subr.bf16.mxu0 0
      %2511 = vmatpush1.bf16.msra.mxu0 0
      %2512 = vmatprep.subr.bf16.mxu0 0
      %2513 = vmatpush1.bf16.msra.mxu0 0
      %2514 = vmatprep.subr.bf16.mxu0 0
      %2515 = vmatpush1.bf16.msra.mxu0 0
      %2516 = vmatprep.subr.bf16.mxu0 0
      %2517 = vmatpush1.bf16.msra.mxu0 0
      %2518 = vmatprep.mubr.bf16.mxu0 0
      %2519 = vmatmul.mubr.bf16.gmra.mrb[0].mxu0 %v2481
      %v2520 = vpop.f32.mrb[0].mxu0
      %v2521 = vadd.f32 0.0, %v2520
      %v2522 = vpop.f32.mrb[0].mxu0
      %v2523 = vadd.f32 0.0, %v2522
      %v2524 = vpop.f32.mrb[0].mxu0
      %v2525 = vadd.f32 0.0, %v2524
      %v2526 = vpop.f32.mrb[0].mxu0
      %v2527 = vadd.f32 0.0, %v2526
      %2528 = vmatprep.mubr.bf16.mxu0 0
      %2529 = vmatmul.mubr.bf16.gmra.mrb[0].mxu0 %v2484
      %v2530 = vpop.f32.mrb[0].mxu0
      %v2531 = vadd.f32 0.0, %v2530
      %v2532 = vpop.f32.mrb[0].mxu0
      %v2533 = vadd.f32 0.0, %v2532
      %v2534 = vpop.f32.mrb[0].mxu0
      %v2535 = vadd.f32 0.0, %v2534
      %v2536 = vpop.f32.mrb[0].mxu0
      %v2537 = vadd.f32 0.0, %v2536
      %2538 = vdwg.mxu0
      %v2539 = vmul.f32 %v1470, %v2521
      %v2540 = vmul.f32 %v1474, %v2523
      %v2541 = vmul.f32 %v1470, %v2525
      %v2542 = vmul.f32 %v1474, %v2527
      %v2543 = vmul.f32 %v1470, %v2531
      %v2544 = vmul.f32 %v1474, %v2533
      %v2545 = vmul.f32 %v1470, %v2535
      %v2546 = vmul.f32 %v1474, %v2537
      %v2547 = vadd.f32 %v2429, %v2539
      %v2548 = vadd.f32 %v2430, %v2540
      %v2549 = vadd.f32 %v2431, %v2541
      %v2550 = vadd.f32 %v2432, %v2542
      %v2551 = vadd.f32 %v2433, %v2543
      %v2552 = vadd.f32 %v2434, %v2544
      %v2553 = vadd.f32 %v2435, %v2545
      %v2554 = vadd.f32 %v2436, %v2546
      %v2555 = vld [vmem:[%s5] sm:$0xff]
      %v2556 = vld [vmem:[%s5 + $0x8] sm:$0xff]
      %v2557 = vld [vmem:[%s5 + $0x10] sm:$0xff]
      %v2558 = vld [vmem:[%s5 + $0x18] sm:$0xff]
      %2560 = vset.pattern.permute.xlu0 0
      %2561 = vperm.xlu0 %2560, %v2555
      %v2562 = vpop.permute.xlu0 %2561
      %2565 = vset.pattern.permute.xlu0 0
      %2566 = vperm.xlu0 %2565, %v2556
      %v2567 = vpop.permute.xlu0 %2566
      %2570 = vset.pattern.permute.xlu0 0
      %2571 = vperm.xlu0 %2570, %v2557
      %v2572 = vpop.permute.xlu0 %2571
      %2575 = vset.pattern.permute.xlu0 0
      %2576 = vperm.xlu0 %2575, %v2558
      %v2577 = vpop.permute.xlu0 %2576
      %v2579 = vadd.f32 %v2547, %v2562
      %v2580 = vadd.f32 %v2548, %v2562
      %v2581 = vadd.f32 %v2549, %v2567
      %v2582 = vadd.f32 %v2550, %v2567
      %v2583 = vadd.f32 %v2551, %v2572
      %v2584 = vadd.f32 %v2552, %v2572
      %v2585 = vadd.f32 %v2553, %v2577
      %v2586 = vadd.f32 %v2554, %v2577
      %v2587 = vmul.f32 %v2579, 0.1
      %v2588 = vmul.f32 %v2580, 0.1
      %v2589 = vmul.f32 %v2581, 0.1
      %v2590 = vmul.f32 %v2582, 0.1
      %v2591 = vmul.f32 %v2583, 0.1
      %v2592 = vmul.f32 %v2584, 0.1
      %v2593 = vmul.f32 %v2585, 0.1
      %v2594 = vmul.f32 %v2586, 0.1
      %v2595 = vmax.f32 %v2579, %v2587
      %v2596 = vmax.f32 %v2580, %v2588
      %v2597 = vmax.f32 %v2581, %v2589
      %v2598 = vmax.f32 %v2582, %v2590
      %v2599 = vmax.f32 %v2583, %v2591
      %v2600 = vmax.f32 %v2584, %v2592
      %v2601 = vmax.f32 %v2585, %v2593
      %v2602 = vmax.f32 %v2586, %v2594
      %v2603 = vpack.c.bf16 %v2597, %v2595
      %v2604 = vpack.c.bf16 %v2598, %v2596
      %v2605 = vpack.c.bf16 %v2601, %v2599
      %v2606 = vpack.c.bf16 %v2602, %v2600
      %s2607 = scalar_lea.vmem %s6, 64
      %v2608 = vld [vmem:[%s2607] sm:$0xf]
      %v2609 = vld [vmem:[%s2607 + $0x4] sm:$0xf]
      %v2610 = vld [vmem:[%s2607 + $0x8] sm:$0xf]
      %v2611 = vld [vmem:[%s2607 + $0xc] sm:$0xf]
      %2612 = vrot.lane.b32.xlu0 %v2595, 17
      %v2613 = vpop.permute.xlu0 %2612
      %2614 = vrot.lane.b32.xlu0 %v2597, 17
      %v2615 = vpop.permute.xlu0 %2614
      %2616 = vrot.lane.b32.xlu0 %v2599, 17
      %v2617 = vpop.permute.xlu0 %2616
      %2618 = vrot.lane.b32.xlu0 %v2601, 17
      %v2619 = vpop.permute.xlu0 %2618
      %2620 = vrot.lane.b32.xlu0 %v2596, 17
      %v2621 = vpop.permute.xlu0 %2620
      %2622 = vrot.lane.b32.xlu0 %v2598, 17
      %v2623 = vpop.permute.xlu0 %2622
      %2624 = vrot.lane.b32.xlu0 %v2600, 17
      %v2625 = vpop.permute.xlu0 %2624
      %2626 = vrot.lane.b32.xlu0 %v2602, 17
      %v2627 = vpop.permute.xlu0 %2626
      %v2628 = vsel %vm486, %v2613, %v2621
      %v2629 = vsel %vm486, %v2615, %v2623
      %v2630 = vsel %vm486, %v2617, %v2625
      %v2631 = vsel %vm486, %v2619, %v2627
      %v2632 = vsel %vm486, %v2621, %v2613
      %v2633 = vsel %vm486, %v2623, %v2615
      %v2634 = vsel %vm486, %v2625, %v2617
      %v2635 = vsel %vm486, %v2627, %v2619
      %v2636 = vpack.c.bf16 %v2633, %v2632
      %v2637 = vpack.c.bf16 %v2629, %v2628
      %v2638 = vpack.c.bf16 %v2635, %v2634
      %v2639 = vpack.c.bf16 %v2631, %v2630
      %v2640 = vld [vmem:[%s6] sm:$0xf]
      %v2641 = vld [vmem:[%s6 + $0x4] sm:$0xf]
      %v2642 = vld [vmem:[%s6 + $0x8] sm:$0xf]
      %v2643 = vld [vmem:[%s6 + $0xc] sm:$0xf]
      %v2648 = vunpack.c.l.b16 %v2640
      %v2649 = vunpack.c.l.b16 %v2641
      %v2650 = vunpack.c.l.b16 %v2642
      %v2651 = vunpack.c.l.b16 %v2643
      %v2652 = vpack.c.b16 %v2649, %v2648
      %v2653 = vpack.c.b16 %v2651, %v2650
      %v2655 = vsel %vm1592, %v2652, 0
      %v2658 = vsel %vm1592, %v2653, 0
      %2660 = vmatprep.subr.bf16.mxu0 %v2637
      %2661 = vmatpush1.bf16.msra.mxu0 %v2636
      %2662 = vmatprep.subr.bf16.mxu0 %v2639
      %2663 = vmatpush1.bf16.msra.mxu0 %v2638
      %2664 = vmatprep.subr.bf16.mxu0 0
      %2665 = vmatpush1.bf16.msra.mxu0 0
      %2666 = vmatprep.subr.bf16.mxu0 0
      %2667 = vmatpush1.bf16.msra.mxu0 0
      %2668 = vmatprep.subr.bf16.mxu0 0
      %2669 = vmatpush1.bf16.msra.mxu0 0
      %2670 = vmatprep.subr.bf16.mxu0 0
      %2671 = vmatpush1.bf16.msra.mxu0 0
      %2672 = vmatprep.subr.bf16.mxu0 0
      %2673 = vmatpush1.bf16.msra.mxu0 0
      %2674 = vmatprep.subr.bf16.mxu0 0
      %2675 = vmatpush1.bf16.msra.mxu0 0
      %2676 = vmatprep.subr.bf16.mxu0 0
      %2677 = vmatpush1.bf16.msra.mxu0 0
      %2678 = vmatprep.subr.bf16.mxu0 0
      %2679 = vmatpush1.bf16.msra.mxu0 0
      %2680 = vmatprep.subr.bf16.mxu0 0
      %2681 = vmatpush1.bf16.msra.mxu0 0
      %2682 = vmatprep.subr.bf16.mxu0 0
      %2683 = vmatpush1.bf16.msra.mxu0 0
      %2684 = vmatprep.subr.bf16.mxu0 0
      %2685 = vmatpush1.bf16.msra.mxu0 0
      %2686 = vmatprep.subr.bf16.mxu0 0
      %2687 = vmatpush1.bf16.msra.mxu0 0
      %2688 = vmatprep.subr.bf16.mxu0 0
      %2689 = vmatpush1.bf16.msra.mxu0 0
      %2690 = vmatprep.subr.bf16.mxu0 0
      %2691 = vmatpush1.bf16.msra.mxu0 0
      %2692 = vmatprep.mubr.bf16.mxu0 0
      %2693 = vmatmul.mubr.bf16.gmra.mrb[0].mxu0 %v2655
      %v2694 = vpop.f32.mrb[0].mxu0
      %v2695 = vadd.f32 0.0, %v2694
      %v2696 = vpop.f32.mrb[0].mxu0
      %v2697 = vadd.f32 0.0, %v2696
      %v2698 = vpop.f32.mrb[0].mxu0
      %v2699 = vadd.f32 0.0, %v2698
      %v2700 = vpop.f32.mrb[0].mxu0
      %v2701 = vadd.f32 0.0, %v2700
      %2702 = vmatprep.mubr.bf16.mxu0 0
      %2703 = vmatmul.mubr.bf16.gmra.mrb[0].mxu0 %v2658
      %v2704 = vpop.f32.mrb[0].mxu0
      %v2705 = vadd.f32 0.0, %v2704
      %v2706 = vpop.f32.mrb[0].mxu0
      %v2707 = vadd.f32 0.0, %v2706
      %v2708 = vpop.f32.mrb[0].mxu0
      %v2709 = vadd.f32 0.0, %v2708
      %v2710 = vpop.f32.mrb[0].mxu0
      %v2711 = vadd.f32 0.0, %v2710
      %2712 = vdwg.mxu0
      %v2713 = vmul.f32 %v577, %v2695
      %v2714 = vmul.f32 %v581, %v2697
      %v2715 = vmul.f32 %v577, %v2699
      %v2716 = vmul.f32 %v581, %v2701
      %v2717 = vmul.f32 %v577, %v2705
      %v2718 = vmul.f32 %v581, %v2707
      %v2719 = vmul.f32 %v577, %v2709
      %v2720 = vmul.f32 %v581, %v2711
      %v2725 = vunpack.c.l.b16 %v2608
      %v2726 = vunpack.c.l.b16 %v2609
      %v2727 = vunpack.c.l.b16 %v2610
      %v2728 = vunpack.c.l.b16 %v2611
      %v2729 = vpack.c.b16 %v2726, %v2725
      %v2730 = vpack.c.b16 %v2728, %v2727
      %v2732 = vsel %vm1592, %v2729, 0
      %v2735 = vsel %vm1592, %v2730, 0
      %2737 = vmatprep.subr.bf16.mxu0 %v2604
      %2738 = vmatpush1.bf16.msra.mxu0 %v2603
      %2739 = vmatprep.subr.bf16.mxu0 %v2606
      %2740 = vmatpush1.bf16.msra.mxu0 %v2605
      %2741 = vmatprep.subr.bf16.mxu0 0
      %2742 = vmatpush1.bf16.msra.mxu0 0
      %2743 = vmatprep.subr.bf16.mxu0 0
      %2744 = vmatpush1.bf16.msra.mxu0 0
      %2745 = vmatprep.subr.bf16.mxu0 0
      %2746 = vmatpush1.bf16.msra.mxu0 0
      %2747 = vmatprep.subr.bf16.mxu0 0
      %2748 = vmatpush1.bf16.msra.mxu0 0
      %2749 = vmatprep.subr.bf16.mxu0 0
      %2750 = vmatpush1.bf16.msra.mxu0 0
      %2751 = vmatprep.subr.bf16.mxu0 0
      %2752 = vmatpush1.bf16.msra.mxu0 0
      %2753 = vmatprep.subr.bf16.mxu0 0
      %2754 = vmatpush1.bf16.msra.mxu0 0
      %2755 = vmatprep.subr.bf16.mxu0 0
      %2756 = vmatpush1.bf16.msra.mxu0 0
      %2757 = vmatprep.subr.bf16.mxu0 0
      %2758 = vmatpush1.bf16.msra.mxu0 0
      %2759 = vmatprep.subr.bf16.mxu0 0
      %2760 = vmatpush1.bf16.msra.mxu0 0
      %2761 = vmatprep.subr.bf16.mxu0 0
      %2762 = vmatpush1.bf16.msra.mxu0 0
      %2763 = vmatprep.subr.bf16.mxu0 0
      %2764 = vmatpush1.bf16.msra.mxu0 0
      %2765 = vmatprep.subr.bf16.mxu0 0
      %2766 = vmatpush1.bf16.msra.mxu0 0
      %2767 = vmatprep.subr.bf16.mxu0 0
      %2768 = vmatpush1.bf16.msra.mxu0 0
      %2769 = vmatprep.mubr.bf16.mxu0 0
      %2770 = vmatmul.mubr.bf16.gmra.mrb[0].mxu0 %v2732
      %v2771 = vpop.f32.mrb[0].mxu0
      %v2772 = vadd.f32 %v2713, %v2771
      %v2773 = vpop.f32.mrb[0].mxu0
      %v2774 = vadd.f32 %v2714, %v2773
      %v2775 = vpop.f32.mrb[0].mxu0
      %v2776 = vadd.f32 %v2715, %v2775
      %v2777 = vpop.f32.mrb[0].mxu0
      %v2778 = vadd.f32 %v2716, %v2777
      %2779 = vmatprep.mubr.bf16.mxu0 0
      %2780 = vmatmul.mubr.bf16.gmra.mrb[0].mxu0 %v2735
      %v2781 = vpop.f32.mrb[0].mxu0
      %v2782 = vadd.f32 %v2717, %v2781
      %v2783 = vpop.f32.mrb[0].mxu0
      %v2784 = vadd.f32 %v2718, %v2783
      %v2785 = vpop.f32.mrb[0].mxu0
      %v2786 = vadd.f32 %v2719, %v2785
      %v2787 = vpop.f32.mrb[0].mxu0
      %v2788 = vadd.f32 %v2720, %v2787
      %2789 = vdwg.mxu0
      %2790 = vrot.lane.b32.xlu0 %v2595, 16
      %v2791 = vpop.permute.xlu0 %2790
      %2792 = vrot.lane.b32.xlu0 %v2597, 16
      %v2793 = vpop.permute.xlu0 %2792
      %2794 = vrot.lane.b32.xlu0 %v2599, 16
      %v2795 = vpop.permute.xlu0 %2794
      %2796 = vrot.lane.b32.xlu0 %v2601, 16
      %v2797 = vpop.permute.xlu0 %2796
      %2798 = vrot.lane.b32.xlu0 %v2596, 16
      %v2799 = vpop.permute.xlu0 %2798
      %2800 = vrot.lane.b32.xlu0 %v2598, 16
      %v2801 = vpop.permute.xlu0 %2800
      %2802 = vrot.lane.b32.xlu0 %v2600, 16
      %v2803 = vpop.permute.xlu0 %2802
      %2804 = vrot.lane.b32.xlu0 %v2602, 16
      %v2805 = vpop.permute.xlu0 %2804
      %v2806 = vsel %vm671, %v2791, %v2799
      %v2807 = vsel %vm671, %v2793, %v2801
      %v2808 = vsel %vm671, %v2795, %v2803
      %v2809 = vsel %vm671, %v2797, %v2805
      %v2810 = vsel %vm671, %v2799, %v2791
      %v2811 = vsel %vm671, %v2801, %v2793
      %v2812 = vsel %vm671, %v2803, %v2795
      %v2813 = vsel %vm671, %v2805, %v2797
      %v2814 = vpack.c.bf16 %v2811, %v2810
      %v2815 = vpack.c.bf16 %v2807, %v2806
      %v2816 = vpack.c.bf16 %v2813, %v2812
      %v2817 = vpack.c.bf16 %v2809, %v2808
      %s2818 = scalar_lea.vmem %s6, 16
      %v2819 = vld [vmem:[%s2818] sm:$0xf]
      %v2820 = vld [vmem:[%s2818 + $0x4] sm:$0xf]
      %v2821 = vld [vmem:[%s2818 + $0x8] sm:$0xf]
      %v2822 = vld [vmem:[%s2818 + $0xc] sm:$0xf]
      %v2827 = vunpack.c.l.b16 %v2819
      %v2828 = vunpack.c.l.b16 %v2820
      %v2829 = vunpack.c.l.b16 %v2821
      %v2830 = vunpack.c.l.b16 %v2822
      %v2831 = vpack.c.b16 %v2828, %v2827
      %v2832 = vpack.c.b16 %v2830, %v2829
      %v2834 = vsel %vm1592, %v2831, 0
      %v2837 = vsel %vm1592, %v2832, 0
      %2839 = vmatprep.subr.bf16.mxu0 %v2815
      %2840 = vmatpush1.bf16.msra.mxu0 %v2814
      %2841 = vmatprep.subr.bf16.mxu0 %v2817
      %2842 = vmatpush1.bf16.msra.mxu0 %v2816
      %2843 = vmatprep.subr.bf16.mxu0 0
      %2844 = vmatpush1.bf16.msra.mxu0 0
      %2845 = vmatprep.subr.bf16.mxu0 0
      %2846 = vmatpush1.bf16.msra.mxu0 0
      %2847 = vmatprep.subr.bf16.mxu0 0
      %2848 = vmatpush1.bf16.msra.mxu0 0
      %2849 = vmatprep.subr.bf16.mxu0 0
      %2850 = vmatpush1.bf16.msra.mxu0 0
      %2851 = vmatprep.subr.bf16.mxu0 0
      %2852 = vmatpush1.bf16.msra.mxu0 0
      %2853 = vmatprep.subr.bf16.mxu0 0
      %2854 = vmatpush1.bf16.msra.mxu0 0
      %2855 = vmatprep.subr.bf16.mxu0 0
      %2856 = vmatpush1.bf16.msra.mxu0 0
      %2857 = vmatprep.subr.bf16.mxu0 0
      %2858 = vmatpush1.bf16.msra.mxu0 0
      %2859 = vmatprep.subr.bf16.mxu0 0
      %2860 = vmatpush1.bf16.msra.mxu0 0
      %2861 = vmatprep.subr.bf16.mxu0 0
      %2862 = vmatpush1.bf16.msra.mxu0 0
      %2863 = vmatprep.subr.bf16.mxu0 0
      %2864 = vmatpush1.bf16.msra.mxu0 0
      %2865 = vmatprep.subr.bf16.mxu0 0
      %2866 = vmatpush1.bf16.msra.mxu0 0
      %2867 = vmatprep.subr.bf16.mxu0 0
      %2868 = vmatpush1.bf16.msra.mxu0 0
      %2869 = vmatprep.subr.bf16.mxu0 0
      %2870 = vmatpush1.bf16.msra.mxu0 0
      %2871 = vmatprep.mubr.bf16.mxu0 0
      %2872 = vmatmul.mubr.bf16.gmra.mrb[0].mxu0 %v2834
      %v2873 = vpop.f32.mrb[0].mxu0
      %v2874 = vadd.f32 0.0, %v2873
      %v2875 = vpop.f32.mrb[0].mxu0
      %v2876 = vadd.f32 0.0, %v2875
      %v2877 = vpop.f32.mrb[0].mxu0
      %v2878 = vadd.f32 0.0, %v2877
      %v2879 = vpop.f32.mrb[0].mxu0
      %v2880 = vadd.f32 0.0, %v2879
      %2881 = vmatprep.mubr.bf16.mxu0 0
      %2882 = vmatmul.mubr.bf16.gmra.mrb[0].mxu0 %v2837
      %v2883 = vpop.f32.mrb[0].mxu0
      %v2884 = vadd.f32 0.0, %v2883
      %v2885 = vpop.f32.mrb[0].mxu0
      %v2886 = vadd.f32 0.0, %v2885
      %v2887 = vpop.f32.mrb[0].mxu0
      %v2888 = vadd.f32 0.0, %v2887
      %v2889 = vpop.f32.mrb[0].mxu0
      %v2890 = vadd.f32 0.0, %v2889
      %2891 = vdwg.mxu0
      %v2892 = vmul.f32 %v762, %v2874
      %v2893 = vmul.f32 %v766, %v2876
      %v2894 = vmul.f32 %v762, %v2878
      %v2895 = vmul.f32 %v766, %v2880
      %v2896 = vmul.f32 %v762, %v2884
      %v2897 = vmul.f32 %v766, %v2886
      %v2898 = vmul.f32 %v762, %v2888
      %v2899 = vmul.f32 %v766, %v2890
      %v2900 = vadd.f32 %v2772, %v2892
      %v2901 = vadd.f32 %v2774, %v2893
      %v2902 = vadd.f32 %v2776, %v2894
      %v2903 = vadd.f32 %v2778, %v2895
      %v2904 = vadd.f32 %v2782, %v2896
      %v2905 = vadd.f32 %v2784, %v2897
      %v2906 = vadd.f32 %v2786, %v2898
      %v2907 = vadd.f32 %v2788, %v2899
      %2908 = vrot.lane.b32.xlu0 %v2595, 15
      %v2909 = vpop.permute.xlu0 %2908
      %2910 = vrot.lane.b32.xlu0 %v2597, 15
      %v2911 = vpop.permute.xlu0 %2910
      %2912 = vrot.lane.b32.xlu0 %v2599, 15
      %v2913 = vpop.permute.xlu0 %2912
      %2914 = vrot.lane.b32.xlu0 %v2601, 15
      %v2915 = vpop.permute.xlu0 %2914
      %2916 = vrot.lane.b32.xlu0 %v2596, 15
      %v2917 = vpop.permute.xlu0 %2916
      %2918 = vrot.lane.b32.xlu0 %v2598, 15
      %v2919 = vpop.permute.xlu0 %2918
      %2920 = vrot.lane.b32.xlu0 %v2600, 15
      %v2921 = vpop.permute.xlu0 %2920
      %2922 = vrot.lane.b32.xlu0 %v2602, 15
      %v2923 = vpop.permute.xlu0 %2922
      %v2924 = vsel %vm789, %v2909, %v2917
      %v2925 = vsel %vm789, %v2911, %v2919
      %v2926 = vsel %vm789, %v2913, %v2921
      %v2927 = vsel %vm789, %v2915, %v2923
      %v2928 = vsel %vm789, %v2917, %v2909
      %v2929 = vsel %vm789, %v2919, %v2911
      %v2930 = vsel %vm789, %v2921, %v2913
      %v2931 = vsel %vm789, %v2923, %v2915
      %v2932 = vpack.c.bf16 %v2929, %v2928
      %v2933 = vpack.c.bf16 %v2925, %v2924
      %v2934 = vpack.c.bf16 %v2931, %v2930
      %v2935 = vpack.c.bf16 %v2927, %v2926
      %s2936 = scalar_lea.vmem %s6, 32
      %v2937 = vld [vmem:[%s2936] sm:$0xf]
      %v2938 = vld [vmem:[%s2936 + $0x4] sm:$0xf]
      %v2939 = vld [vmem:[%s2936 + $0x8] sm:$0xf]
      %v2940 = vld [vmem:[%s2936 + $0xc] sm:$0xf]
      %v2945 = vunpack.c.l.b16 %v2937
      %v2946 = vunpack.c.l.b16 %v2938
      %v2947 = vunpack.c.l.b16 %v2939
      %v2948 = vunpack.c.l.b16 %v2940
      %v2949 = vpack.c.b16 %v2946, %v2945
      %v2950 = vpack.c.b16 %v2948, %v2947
      %v2952 = vsel %vm1592, %v2949, 0
      %v2955 = vsel %vm1592, %v2950, 0
      %2957 = vmatprep.subr.bf16.mxu0 %v2933
      %2958 = vmatpush1.bf16.msra.mxu0 %v2932
      %2959 = vmatprep.subr.bf16.mxu0 %v2935
      %2960 = vmatpush1.bf16.msra.mxu0 %v2934
      %2961 = vmatprep.subr.bf16.mxu0 0
      %2962 = vmatpush1.bf16.msra.mxu0 0
      %2963 = vmatprep.subr.bf16.mxu0 0
      %2964 = vmatpush1.bf16.msra.mxu0 0
      %2965 = vmatprep.subr.bf16.mxu0 0
      %2966 = vmatpush1.bf16.msra.mxu0 0
      %2967 = vmatprep.subr.bf16.mxu0 0
      %2968 = vmatpush1.bf16.msra.mxu0 0
      %2969 = vmatprep.subr.bf16.mxu0 0
      %2970 = vmatpush1.bf16.msra.mxu0 0
      %2971 = vmatprep.subr.bf16.mxu0 0
      %2972 = vmatpush1.bf16.msra.mxu0 0
      %2973 = vmatprep.subr.bf16.mxu0 0
      %2974 = vmatpush1.bf16.msra.mxu0 0
      %2975 = vmatprep.subr.bf16.mxu0 0
      %2976 = vmatpush1.bf16.msra.mxu0 0
      %2977 = vmatprep.subr.bf16.mxu0 0
      %2978 = vmatpush1.bf16.msra.mxu0 0
      %2979 = vmatprep.subr.bf16.mxu0 0
      %2980 = vmatpush1.bf16.msra.mxu0 0
      %2981 = vmatprep.subr.bf16.mxu0 0
      %2982 = vmatpush1.bf16.msra.mxu0 0
      %2983 = vmatprep.subr.bf16.mxu0 0
      %2984 = vmatpush1.bf16.msra.mxu0 0
      %2985 = vmatprep.subr.bf16.mxu0 0
      %2986 = vmatpush1.bf16.msra.mxu0 0
      %2987 = vmatprep.subr.bf16.mxu0 0
      %2988 = vmatpush1.bf16.msra.mxu0 0
      %2989 = vmatprep.mubr.bf16.mxu0 0
      %2990 = vmatmul.mubr.bf16.gmra.mrb[0].mxu0 %v2952
      %v2991 = vpop.f32.mrb[0].mxu0
      %v2992 = vadd.f32 0.0, %v2991
      %v2993 = vpop.f32.mrb[0].mxu0
      %v2994 = vadd.f32 0.0, %v2993
      %v2995 = vpop.f32.mrb[0].mxu0
      %v2996 = vadd.f32 0.0, %v2995
      %v2997 = vpop.f32.mrb[0].mxu0
      %v2998 = vadd.f32 0.0, %v2997
      %2999 = vmatprep.mubr.bf16.mxu0 0
      %3000 = vmatmul.mubr.bf16.gmra.mrb[0].mxu0 %v2955
      %v3001 = vpop.f32.mrb[0].mxu0
      %v3002 = vadd.f32 0.0, %v3001
      %v3003 = vpop.f32.mrb[0].mxu0
      %v3004 = vadd.f32 0.0, %v3003
      %v3005 = vpop.f32.mrb[0].mxu0
      %v3006 = vadd.f32 0.0, %v3005
      %v3007 = vpop.f32.mrb[0].mxu0
      %v3008 = vadd.f32 0.0, %v3007
      %3009 = vdwg.mxu0
      %v3010 = vmul.f32 %v880, %v2992
      %v3011 = vmul.f32 %v884, %v2994
      %v3012 = vmul.f32 %v880, %v2996
      %v3013 = vmul.f32 %v884, %v2998
      %v3014 = vmul.f32 %v880, %v3002
      %v3015 = vmul.f32 %v884, %v3004
      %v3016 = vmul.f32 %v880, %v3006
      %v3017 = vmul.f32 %v884, %v3008
      %v3018 = vadd.f32 %v2900, %v3010
      %v3019 = vadd.f32 %v2901, %v3011
      %v3020 = vadd.f32 %v2902, %v3012
      %v3021 = vadd.f32 %v2903, %v3013
      %v3022 = vadd.f32 %v2904, %v3014
      %v3023 = vadd.f32 %v2905, %v3015
      %v3024 = vadd.f32 %v2906, %v3016
      %v3025 = vadd.f32 %v2907, %v3017
      %3026 = vrot.lane.b32.xlu0 %v2595, 1
      %v3027 = vpop.permute.xlu0 %3026
      %3028 = vrot.lane.b32.xlu0 %v2597, 1
      %v3029 = vpop.permute.xlu0 %3028
      %3030 = vrot.lane.b32.xlu0 %v2599, 1
      %v3031 = vpop.permute.xlu0 %3030
      %3032 = vrot.lane.b32.xlu0 %v2601, 1
      %v3033 = vpop.permute.xlu0 %3032
      %3034 = vrot.lane.b32.xlu0 %v2596, 1
      %v3035 = vpop.permute.xlu0 %3034
      %3036 = vrot.lane.b32.xlu0 %v2598, 1
      %v3037 = vpop.permute.xlu0 %3036
      %3038 = vrot.lane.b32.xlu0 %v2600, 1
      %v3039 = vpop.permute.xlu0 %3038
      %3040 = vrot.lane.b32.xlu0 %v2602, 1
      %v3041 = vpop.permute.xlu0 %3040
      %v3042 = vsel %vm907, %v3027, %v3035
      %v3043 = vsel %vm907, %v3029, %v3037
      %v3044 = vsel %vm907, %v3031, %v3039
      %v3045 = vsel %vm907, %v3033, %v3041
      %v3046 = vsel %vm907, %v3035, %v3027
      %v3047 = vsel %vm907, %v3037, %v3029
      %v3048 = vsel %vm907, %v3039, %v3031
      %v3049 = vsel %vm907, %v3041, %v3033
      %v3050 = vpack.c.bf16 %v3047, %v3046
      %v3051 = vpack.c.bf16 %v3043, %v3042
      %v3052 = vpack.c.bf16 %v3049, %v3048
      %v3053 = vpack.c.bf16 %v3045, %v3044
      %s3054 = scalar_lea.vmem %s6, 48
      %v3055 = vld [vmem:[%s3054] sm:$0xf]
      %v3056 = vld [vmem:[%s3054 + $0x4] sm:$0xf]
      %v3057 = vld [vmem:[%s3054 + $0x8] sm:$0xf]
      %v3058 = vld [vmem:[%s3054 + $0xc] sm:$0xf]
      %v3063 = vunpack.c.l.b16 %v3055
      %v3064 = vunpack.c.l.b16 %v3056
      %v3065 = vunpack.c.l.b16 %v3057
      %v3066 = vunpack.c.l.b16 %v3058
      %v3067 = vpack.c.b16 %v3064, %v3063
      %v3068 = vpack.c.b16 %v3066, %v3065
      %v3070 = vsel %vm1592, %v3067, 0
      %v3073 = vsel %vm1592, %v3068, 0
      %3075 = vmatprep.subr.bf16.mxu0 %v3051
      %3076 = vmatpush1.bf16.msra.mxu0 %v3050
      %3077 = vmatprep.subr.bf16.mxu0 %v3053
      %3078 = vmatpush1.bf16.msra.mxu0 %v3052
      %3079 = vmatprep.subr.bf16.mxu0 0
      %3080 = vmatpush1.bf16.msra.mxu0 0
      %3081 = vmatprep.subr.bf16.mxu0 0
      %3082 = vmatpush1.bf16.msra.mxu0 0
      %3083 = vmatprep.subr.bf16.mxu0 0
      %3084 = vmatpush1.bf16.msra.mxu0 0
      %3085 = vmatprep.subr.bf16.mxu0 0
      %3086 = vmatpush1.bf16.msra.mxu0 0
      %3087 = vmatprep.subr.bf16.mxu0 0
      %3088 = vmatpush1.bf16.msra.mxu0 0
      %3089 = vmatprep.subr.bf16.mxu0 0
      %3090 = vmatpush1.bf16.msra.mxu0 0
      %3091 = vmatprep.subr.bf16.mxu0 0
      %3092 = vmatpush1.bf16.msra.mxu0 0
      %3093 = vmatprep.subr.bf16.mxu0 0
      %3094 = vmatpush1.bf16.msra.mxu0 0
      %3095 = vmatprep.subr.bf16.mxu0 0
      %3096 = vmatpush1.bf16.msra.mxu0 0
      %3097 = vmatprep.subr.bf16.mxu0 0
      %3098 = vmatpush1.bf16.msra.mxu0 0
      %3099 = vmatprep.subr.bf16.mxu0 0
      %3100 = vmatpush1.bf16.msra.mxu0 0
      %3101 = vmatprep.subr.bf16.mxu0 0
      %3102 = vmatpush1.bf16.msra.mxu0 0
      %3103 = vmatprep.subr.bf16.mxu0 0
      %3104 = vmatpush1.bf16.msra.mxu0 0
      %3105 = vmatprep.subr.bf16.mxu0 0
      %3106 = vmatpush1.bf16.msra.mxu0 0
      %3107 = vmatprep.mubr.bf16.mxu0 0
      %3108 = vmatmul.mubr.bf16.gmra.mrb[0].mxu0 %v3070
      %v3109 = vpop.f32.mrb[0].mxu0
      %v3110 = vadd.f32 0.0, %v3109
      %v3111 = vpop.f32.mrb[0].mxu0
      %v3112 = vadd.f32 0.0, %v3111
      %v3113 = vpop.f32.mrb[0].mxu0
      %v3114 = vadd.f32 0.0, %v3113
      %v3115 = vpop.f32.mrb[0].mxu0
      %v3116 = vadd.f32 0.0, %v3115
      %3117 = vmatprep.mubr.bf16.mxu0 0
      %3118 = vmatmul.mubr.bf16.gmra.mrb[0].mxu0 %v3073
      %v3119 = vpop.f32.mrb[0].mxu0
      %v3120 = vadd.f32 0.0, %v3119
      %v3121 = vpop.f32.mrb[0].mxu0
      %v3122 = vadd.f32 0.0, %v3121
      %v3123 = vpop.f32.mrb[0].mxu0
      %v3124 = vadd.f32 0.0, %v3123
      %v3125 = vpop.f32.mrb[0].mxu0
      %v3126 = vadd.f32 0.0, %v3125
      %3127 = vdwg.mxu0
      %v3128 = vmul.f32 %v998, %v3110
      %v3129 = vmul.f32 %v1002, %v3112
      %v3130 = vmul.f32 %v998, %v3114
      %v3131 = vmul.f32 %v1002, %v3116
      %v3132 = vmul.f32 %v998, %v3120
      %v3133 = vmul.f32 %v1002, %v3122
      %v3134 = vmul.f32 %v998, %v3124
      %v3135 = vmul.f32 %v1002, %v3126
      %v3136 = vadd.f32 %v3018, %v3128
      %v3137 = vadd.f32 %v3019, %v3129
      %v3138 = vadd.f32 %v3020, %v3130
      %v3139 = vadd.f32 %v3021, %v3131
      %v3140 = vadd.f32 %v3022, %v3132
      %v3141 = vadd.f32 %v3023, %v3133
      %v3142 = vadd.f32 %v3024, %v3134
      %v3143 = vadd.f32 %v3025, %v3135
      %3144 = vrot.lane.b32.xlu0 %v2595, 127
      %v3145 = vpop.permute.xlu0 %3144
      %3146 = vrot.lane.b32.xlu0 %v2597, 127
      %v3147 = vpop.permute.xlu0 %3146
      %3148 = vrot.lane.b32.xlu0 %v2599, 127
      %v3149 = vpop.permute.xlu0 %3148
      %3150 = vrot.lane.b32.xlu0 %v2601, 127
      %v3151 = vpop.permute.xlu0 %3150
      %3152 = vrot.lane.b32.xlu0 %v2596, 127
      %v3153 = vpop.permute.xlu0 %3152
      %3154 = vrot.lane.b32.xlu0 %v2598, 127
      %v3155 = vpop.permute.xlu0 %3154
      %3156 = vrot.lane.b32.xlu0 %v2600, 127
      %v3157 = vpop.permute.xlu0 %3156
      %3158 = vrot.lane.b32.xlu0 %v2602, 127
      %v3159 = vpop.permute.xlu0 %3158
      %v3160 = vsel %vm1025, %v3145, %v3153
      %v3161 = vsel %vm1025, %v3147, %v3155
      %v3162 = vsel %vm1025, %v3149, %v3157
      %v3163 = vsel %vm1025, %v3151, %v3159
      %v3164 = vsel %vm1025, %v3153, %v3145
      %v3165 = vsel %vm1025, %v3155, %v3147
      %v3166 = vsel %vm1025, %v3157, %v3149
      %v3167 = vsel %vm1025, %v3159, %v3151
      %v3168 = vpack.c.bf16 %v3161, %v3160
      %v3169 = vpack.c.bf16 %v3165, %v3164
      %v3170 = vpack.c.bf16 %v3163, %v3162
      %v3171 = vpack.c.bf16 %v3167, %v3166
      %s3172 = scalar_lea.vmem %s6, 80
      %v3173 = vld [vmem:[%s3172] sm:$0xf]
      %v3174 = vld [vmem:[%s3172 + $0x4] sm:$0xf]
      %v3175 = vld [vmem:[%s3172 + $0x8] sm:$0xf]
      %v3176 = vld [vmem:[%s3172 + $0xc] sm:$0xf]
      %v3181 = vunpack.c.l.b16 %v3173
      %v3182 = vunpack.c.l.b16 %v3174
      %v3183 = vunpack.c.l.b16 %v3175
      %v3184 = vunpack.c.l.b16 %v3176
      %v3185 = vpack.c.b16 %v3182, %v3181
      %v3186 = vpack.c.b16 %v3184, %v3183
      %v3188 = vsel %vm1592, %v3185, 0
      %v3191 = vsel %vm1592, %v3186, 0
      %3193 = vmatprep.subr.bf16.mxu0 %v3169
      %3194 = vmatpush1.bf16.msra.mxu0 %v3168
      %3195 = vmatprep.subr.bf16.mxu0 %v3171
      %3196 = vmatpush1.bf16.msra.mxu0 %v3170
      %3197 = vmatprep.subr.bf16.mxu0 0
      %3198 = vmatpush1.bf16.msra.mxu0 0
      %3199 = vmatprep.subr.bf16.mxu0 0
      %3200 = vmatpush1.bf16.msra.mxu0 0
      %3201 = vmatprep.subr.bf16.mxu0 0
      %3202 = vmatpush1.bf16.msra.mxu0 0
      %3203 = vmatprep.subr.bf16.mxu0 0
      %3204 = vmatpush1.bf16.msra.mxu0 0
      %3205 = vmatprep.subr.bf16.mxu0 0
      %3206 = vmatpush1.bf16.msra.mxu0 0
      %3207 = vmatprep.subr.bf16.mxu0 0
      %3208 = vmatpush1.bf16.msra.mxu0 0
      %3209 = vmatprep.subr.bf16.mxu0 0
      %3210 = vmatpush1.bf16.msra.mxu0 0
      %3211 = vmatprep.subr.bf16.mxu0 0
      %3212 = vmatpush1.bf16.msra.mxu0 0
      %3213 = vmatprep.subr.bf16.mxu0 0
      %3214 = vmatpush1.bf16.msra.mxu0 0
      %3215 = vmatprep.subr.bf16.mxu0 0
      %3216 = vmatpush1.bf16.msra.mxu0 0
      %3217 = vmatprep.subr.bf16.mxu0 0
      %3218 = vmatpush1.bf16.msra.mxu0 0
      %3219 = vmatprep.subr.bf16.mxu0 0
      %3220 = vmatpush1.bf16.msra.mxu0 0
      %3221 = vmatprep.subr.bf16.mxu0 0
      %3222 = vmatpush1.bf16.msra.mxu0 0
      %3223 = vmatprep.subr.bf16.mxu0 0
      %3224 = vmatpush1.bf16.msra.mxu0 0
      %3225 = vmatprep.mubr.bf16.mxu0 0
      %3226 = vmatmul.mubr.bf16.gmra.mrb[0].mxu0 %v3188
      %v3227 = vpop.f32.mrb[0].mxu0
      %v3228 = vadd.f32 0.0, %v3227
      %v3229 = vpop.f32.mrb[0].mxu0
      %v3230 = vadd.f32 0.0, %v3229
      %v3231 = vpop.f32.mrb[0].mxu0
      %v3232 = vadd.f32 0.0, %v3231
      %v3233 = vpop.f32.mrb[0].mxu0
      %v3234 = vadd.f32 0.0, %v3233
      %3235 = vmatprep.mubr.bf16.mxu0 0
      %3236 = vmatmul.mubr.bf16.gmra.mrb[0].mxu0 %v3191
      %v3237 = vpop.f32.mrb[0].mxu0
      %v3238 = vadd.f32 0.0, %v3237
      %v3239 = vpop.f32.mrb[0].mxu0
      %v3240 = vadd.f32 0.0, %v3239
      %v3241 = vpop.f32.mrb[0].mxu0
      %v3242 = vadd.f32 0.0, %v3241
      %v3243 = vpop.f32.mrb[0].mxu0
      %v3244 = vadd.f32 0.0, %v3243
      %3245 = vdwg.mxu0
      %v3246 = vmul.f32 %v1116, %v3228
      %v3247 = vmul.f32 %v1120, %v3230
      %v3248 = vmul.f32 %v1116, %v3232
      %v3249 = vmul.f32 %v1120, %v3234
      %v3250 = vmul.f32 %v1116, %v3238
      %v3251 = vmul.f32 %v1120, %v3240
      %v3252 = vmul.f32 %v1116, %v3242
      %v3253 = vmul.f32 %v1120, %v3244
      %v3254 = vadd.f32 %v3136, %v3246
      %v3255 = vadd.f32 %v3137, %v3247
      %v3256 = vadd.f32 %v3138, %v3248
      %v3257 = vadd.f32 %v3139, %v3249
      %v3258 = vadd.f32 %v3140, %v3250
      %v3259 = vadd.f32 %v3141, %v3251
      %v3260 = vadd.f32 %v3142, %v3252
      %v3261 = vadd.f32 %v3143, %v3253
      %3262 = vrot.lane.b32.xlu0 %v2595, 113
      %v3263 = vpop.permute.xlu0 %3262
      %3264 = vrot.lane.b32.xlu0 %v2597, 113
      %v3265 = vpop.permute.xlu0 %3264
      %3266 = vrot.lane.b32.xlu0 %v2599, 113
      %v3267 = vpop.permute.xlu0 %3266
      %3268 = vrot.lane.b32.xlu0 %v2601, 113
      %v3269 = vpop.permute.xlu0 %3268
      %3270 = vrot.lane.b32.xlu0 %v2596, 113
      %v3271 = vpop.permute.xlu0 %3270
      %3272 = vrot.lane.b32.xlu0 %v2598, 113
      %v3273 = vpop.permute.xlu0 %3272
      %3274 = vrot.lane.b32.xlu0 %v2600, 113
      %v3275 = vpop.permute.xlu0 %3274
      %3276 = vrot.lane.b32.xlu0 %v2602, 113
      %v3277 = vpop.permute.xlu0 %3276
      %v3278 = vsel %vm1143, %v3263, %v3271
      %v3279 = vsel %vm1143, %v3265, %v3273
      %v3280 = vsel %vm1143, %v3267, %v3275
      %v3281 = vsel %vm1143, %v3269, %v3277
      %v3282 = vsel %vm1143, %v3271, %v3263
      %v3283 = vsel %vm1143, %v3273, %v3265
      %v3284 = vsel %vm1143, %v3275, %v3267
      %v3285 = vsel %vm1143, %v3277, %v3269
      %v3286 = vpack.c.bf16 %v3279, %v3278
      %v3287 = vpack.c.bf16 %v3283, %v3282
      %v3288 = vpack.c.bf16 %v3281, %v3280
      %v3289 = vpack.c.bf16 %v3285, %v3284
      %s3290 = scalar_lea.vmem %s6, 96
      %v3291 = vld [vmem:[%s3290] sm:$0xf]
      %v3292 = vld [vmem:[%s3290 + $0x4] sm:$0xf]
      %v3293 = vld [vmem:[%s3290 + $0x8] sm:$0xf]
      %v3294 = vld [vmem:[%s3290 + $0xc] sm:$0xf]
      %v3299 = vunpack.c.l.b16 %v3291
      %v3300 = vunpack.c.l.b16 %v3292
      %v3301 = vunpack.c.l.b16 %v3293
      %v3302 = vunpack.c.l.b16 %v3294
      %v3303 = vpack.c.b16 %v3300, %v3299
      %v3304 = vpack.c.b16 %v3302, %v3301
      %v3306 = vsel %vm1592, %v3303, 0
      %v3309 = vsel %vm1592, %v3304, 0
      %3311 = vmatprep.subr.bf16.mxu0 %v3287
      %3312 = vmatpush1.bf16.msra.mxu0 %v3286
      %3313 = vmatprep.subr.bf16.mxu0 %v3289
      %3314 = vmatpush1.bf16.msra.mxu0 %v3288
      %3315 = vmatprep.subr.bf16.mxu0 0
      %3316 = vmatpush1.bf16.msra.mxu0 0
      %3317 = vmatprep.subr.bf16.mxu0 0
      %3318 = vmatpush1.bf16.msra.mxu0 0
      %3319 = vmatprep.subr.bf16.mxu0 0
      %3320 = vmatpush1.bf16.msra.mxu0 0
      %3321 = vmatprep.subr.bf16.mxu0 0
      %3322 = vmatpush1.bf16.msra.mxu0 0
      %3323 = vmatprep.subr.bf16.mxu0 0
      %3324 = vmatpush1.bf16.msra.mxu0 0
      %3325 = vmatprep.subr.bf16.mxu0 0
      %3326 = vmatpush1.bf16.msra.mxu0 0
      %3327 = vmatprep.subr.bf16.mxu0 0
      %3328 = vmatpush1.bf16.msra.mxu0 0
      %3329 = vmatprep.subr.bf16.mxu0 0
      %3330 = vmatpush1.bf16.msra.mxu0 0
      %3331 = vmatprep.subr.bf16.mxu0 0
      %3332 = vmatpush1.bf16.msra.mxu0 0
      %3333 = vmatprep.subr.bf16.mxu0 0
      %3334 = vmatpush1.bf16.msra.mxu0 0
      %3335 = vmatprep.subr.bf16.mxu0 0
      %3336 = vmatpush1.bf16.msra.mxu0 0
      %3337 = vmatprep.subr.bf16.mxu0 0
      %3338 = vmatpush1.bf16.msra.mxu0 0
      %3339 = vmatprep.subr.bf16.mxu0 0
      %3340 = vmatpush1.bf16.msra.mxu0 0
      %3341 = vmatprep.subr.bf16.mxu0 0
      %3342 = vmatpush1.bf16.msra.mxu0 0
      %3343 = vmatprep.mubr.bf16.mxu0 0
      %3344 = vmatmul.mubr.bf16.gmra.mrb[0].mxu0 %v3306
      %v3345 = vpop.f32.mrb[0].mxu0
      %v3346 = vadd.f32 0.0, %v3345
      %v3347 = vpop.f32.mrb[0].mxu0
      %v3348 = vadd.f32 0.0, %v3347
      %v3349 = vpop.f32.mrb[0].mxu0
      %v3350 = vadd.f32 0.0, %v3349
      %v3351 = vpop.f32.mrb[0].mxu0
      %v3352 = vadd.f32 0.0, %v3351
      %3353 = vmatprep.mubr.bf16.mxu0 0
      %3354 = vmatmul.mubr.bf16.gmra.mrb[0].mxu0 %v3309
      %v3355 = vpop.f32.mrb[0].mxu0
      %v3356 = vadd.f32 0.0, %v3355
      %v3357 = vpop.f32.mrb[0].mxu0
      %v3358 = vadd.f32 0.0, %v3357
      %v3359 = vpop.f32.mrb[0].mxu0
      %v3360 = vadd.f32 0.0, %v3359
      %v3361 = vpop.f32.mrb[0].mxu0
      %v3362 = vadd.f32 0.0, %v3361
      %3363 = vdwg.mxu0
      %v3364 = vmul.f32 %v1234, %v3346
      %v3365 = vmul.f32 %v1238, %v3348
      %v3366 = vmul.f32 %v1234, %v3350
      %v3367 = vmul.f32 %v1238, %v3352
      %v3368 = vmul.f32 %v1234, %v3356
      %v3369 = vmul.f32 %v1238, %v3358
      %v3370 = vmul.f32 %v1234, %v3360
      %v3371 = vmul.f32 %v1238, %v3362
      %v3372 = vadd.f32 %v3254, %v3364
      %v3373 = vadd.f32 %v3255, %v3365
      %v3374 = vadd.f32 %v3256, %v3366
      %v3375 = vadd.f32 %v3257, %v3367
      %v3376 = vadd.f32 %v3258, %v3368
      %v3377 = vadd.f32 %v3259, %v3369
      %v3378 = vadd.f32 %v3260, %v3370
      %v3379 = vadd.f32 %v3261, %v3371
      %3380 = vrot.lane.b32.xlu0 %v2595, 112
      %v3381 = vpop.permute.xlu0 %3380
      %3382 = vrot.lane.b32.xlu0 %v2597, 112
      %v3383 = vpop.permute.xlu0 %3382
      %3384 = vrot.lane.b32.xlu0 %v2599, 112
      %v3385 = vpop.permute.xlu0 %3384
      %3386 = vrot.lane.b32.xlu0 %v2601, 112
      %v3387 = vpop.permute.xlu0 %3386
      %3388 = vrot.lane.b32.xlu0 %v2596, 112
      %v3389 = vpop.permute.xlu0 %3388
      %3390 = vrot.lane.b32.xlu0 %v2598, 112
      %v3391 = vpop.permute.xlu0 %3390
      %3392 = vrot.lane.b32.xlu0 %v2600, 112
      %v3393 = vpop.permute.xlu0 %3392
      %3394 = vrot.lane.b32.xlu0 %v2602, 112
      %v3395 = vpop.permute.xlu0 %3394
      %v3396 = vsel %vm1261, %v3381, %v3389
      %v3397 = vsel %vm1261, %v3383, %v3391
      %v3398 = vsel %vm1261, %v3385, %v3393
      %v3399 = vsel %vm1261, %v3387, %v3395
      %v3400 = vsel %vm1261, %v3389, %v3381
      %v3401 = vsel %vm1261, %v3391, %v3383
      %v3402 = vsel %vm1261, %v3393, %v3385
      %v3403 = vsel %vm1261, %v3395, %v3387
      %v3404 = vpack.c.bf16 %v3397, %v3396
      %v3405 = vpack.c.bf16 %v3401, %v3400
      %v3406 = vpack.c.bf16 %v3399, %v3398
      %v3407 = vpack.c.bf16 %v3403, %v3402
      %s3408 = scalar_lea.vmem %s6, 112
      %v3409 = vld [vmem:[%s3408] sm:$0xf]
      %v3410 = vld [vmem:[%s3408 + $0x4] sm:$0xf]
      %v3411 = vld [vmem:[%s3408 + $0x8] sm:$0xf]
      %v3412 = vld [vmem:[%s3408 + $0xc] sm:$0xf]
      %v3417 = vunpack.c.l.b16 %v3409
      %v3418 = vunpack.c.l.b16 %v3410
      %v3419 = vunpack.c.l.b16 %v3411
      %v3420 = vunpack.c.l.b16 %v3412
      %v3421 = vpack.c.b16 %v3418, %v3417
      %v3422 = vpack.c.b16 %v3420, %v3419
      %v3424 = vsel %vm1592, %v3421, 0
      %v3427 = vsel %vm1592, %v3422, 0
      %3429 = vmatprep.subr.bf16.mxu0 %v3405
      %3430 = vmatpush1.bf16.msra.mxu0 %v3404
      %3431 = vmatprep.subr.bf16.mxu0 %v3407
      %3432 = vmatpush1.bf16.msra.mxu0 %v3406
      %3433 = vmatprep.subr.bf16.mxu0 0
      %3434 = vmatpush1.bf16.msra.mxu0 0
      %3435 = vmatprep.subr.bf16.mxu0 0
      %3436 = vmatpush1.bf16.msra.mxu0 0
      %3437 = vmatprep.subr.bf16.mxu0 0
      %3438 = vmatpush1.bf16.msra.mxu0 0
      %3439 = vmatprep.subr.bf16.mxu0 0
      %3440 = vmatpush1.bf16.msra.mxu0 0
      %3441 = vmatprep.subr.bf16.mxu0 0
      %3442 = vmatpush1.bf16.msra.mxu0 0
      %3443 = vmatprep.subr.bf16.mxu0 0
      %3444 = vmatpush1.bf16.msra.mxu0 0
      %3445 = vmatprep.subr.bf16.mxu0 0
      %3446 = vmatpush1.bf16.msra.mxu0 0
      %3447 = vmatprep.subr.bf16.mxu0 0
      %3448 = vmatpush1.bf16.msra.mxu0 0
      %3449 = vmatprep.subr.bf16.mxu0 0
      %3450 = vmatpush1.bf16.msra.mxu0 0
      %3451 = vmatprep.subr.bf16.mxu0 0
      %3452 = vmatpush1.bf16.msra.mxu0 0
      %3453 = vmatprep.subr.bf16.mxu0 0
      %3454 = vmatpush1.bf16.msra.mxu0 0
      %3455 = vmatprep.subr.bf16.mxu0 0
      %3456 = vmatpush1.bf16.msra.mxu0 0
      %3457 = vmatprep.subr.bf16.mxu0 0
      %3458 = vmatpush1.bf16.msra.mxu0 0
      %3459 = vmatprep.subr.bf16.mxu0 0
      %3460 = vmatpush1.bf16.msra.mxu0 0
      %3461 = vmatprep.mubr.bf16.mxu0 0
      %3462 = vmatmul.mubr.bf16.gmra.mrb[0].mxu0 %v3424
      %v3463 = vpop.f32.mrb[0].mxu0
      %v3464 = vadd.f32 0.0, %v3463
      %v3465 = vpop.f32.mrb[0].mxu0
      %v3466 = vadd.f32 0.0, %v3465
      %v3467 = vpop.f32.mrb[0].mxu0
      %v3468 = vadd.f32 0.0, %v3467
      %v3469 = vpop.f32.mrb[0].mxu0
      %v3470 = vadd.f32 0.0, %v3469
      %3471 = vmatprep.mubr.bf16.mxu0 0
      %3472 = vmatmul.mubr.bf16.gmra.mrb[0].mxu0 %v3427
      %v3473 = vpop.f32.mrb[0].mxu0
      %v3474 = vadd.f32 0.0, %v3473
      %v3475 = vpop.f32.mrb[0].mxu0
      %v3476 = vadd.f32 0.0, %v3475
      %v3477 = vpop.f32.mrb[0].mxu0
      %v3478 = vadd.f32 0.0, %v3477
      %v3479 = vpop.f32.mrb[0].mxu0
      %v3480 = vadd.f32 0.0, %v3479
      %3481 = vdwg.mxu0
      %v3482 = vmul.f32 %v1352, %v3464
      %v3483 = vmul.f32 %v1356, %v3466
      %v3484 = vmul.f32 %v1352, %v3468
      %v3485 = vmul.f32 %v1356, %v3470
      %v3486 = vmul.f32 %v1352, %v3474
      %v3487 = vmul.f32 %v1356, %v3476
      %v3488 = vmul.f32 %v1352, %v3478
      %v3489 = vmul.f32 %v1356, %v3480
      %v3490 = vadd.f32 %v3372, %v3482
      %v3491 = vadd.f32 %v3373, %v3483
      %v3492 = vadd.f32 %v3374, %v3484
      %v3493 = vadd.f32 %v3375, %v3485
      %v3494 = vadd.f32 %v3376, %v3486
      %v3495 = vadd.f32 %v3377, %v3487
      %v3496 = vadd.f32 %v3378, %v3488
      %v3497 = vadd.f32 %v3379, %v3489
      %3498 = vrot.lane.b32.xlu0 %v2595, 111
      %v3499 = vpop.permute.xlu0 %3498
      %3500 = vrot.lane.b32.xlu0 %v2597, 111
      %v3501 = vpop.permute.xlu0 %3500
      %3502 = vrot.lane.b32.xlu0 %v2599, 111
      %v3503 = vpop.permute.xlu0 %3502
      %3504 = vrot.lane.b32.xlu0 %v2601, 111
      %v3505 = vpop.permute.xlu0 %3504
      %3506 = vrot.lane.b32.xlu0 %v2596, 111
      %v3507 = vpop.permute.xlu0 %3506
      %3508 = vrot.lane.b32.xlu0 %v2598, 111
      %v3509 = vpop.permute.xlu0 %3508
      %3510 = vrot.lane.b32.xlu0 %v2600, 111
      %v3511 = vpop.permute.xlu0 %3510
      %3512 = vrot.lane.b32.xlu0 %v2602, 111
      %v3513 = vpop.permute.xlu0 %3512
      %v3514 = vsel %vm1379, %v3499, %v3507
      %v3515 = vsel %vm1379, %v3501, %v3509
      %v3516 = vsel %vm1379, %v3503, %v3511
      %v3517 = vsel %vm1379, %v3505, %v3513
      %v3518 = vsel %vm1379, %v3507, %v3499
      %v3519 = vsel %vm1379, %v3509, %v3501
      %v3520 = vsel %vm1379, %v3511, %v3503
      %v3521 = vsel %vm1379, %v3513, %v3505
      %v3522 = vpack.c.bf16 %v3515, %v3514
      %v3523 = vpack.c.bf16 %v3519, %v3518
      %v3524 = vpack.c.bf16 %v3517, %v3516
      %v3525 = vpack.c.bf16 %v3521, %v3520
      %s3526 = scalar_lea.vmem %s6, 128
      %v3527 = vld [vmem:[%s3526] sm:$0xf]
      %v3528 = vld [vmem:[%s3526 + $0x4] sm:$0xf]
      %v3529 = vld [vmem:[%s3526 + $0x8] sm:$0xf]
      %v3530 = vld [vmem:[%s3526 + $0xc] sm:$0xf]
      %v3535 = vunpack.c.l.b16 %v3527
      %v3536 = vunpack.c.l.b16 %v3528
      %v3537 = vunpack.c.l.b16 %v3529
      %v3538 = vunpack.c.l.b16 %v3530
      %v3539 = vpack.c.b16 %v3536, %v3535
      %v3540 = vpack.c.b16 %v3538, %v3537
      %v3542 = vsel %vm1592, %v3539, 0
      %v3545 = vsel %vm1592, %v3540, 0
      %3547 = vmatprep.subr.bf16.mxu0 %v3523
      %3548 = vmatpush1.bf16.msra.mxu0 %v3522
      %3549 = vmatprep.subr.bf16.mxu0 %v3525
      %3550 = vmatpush1.bf16.msra.mxu0 %v3524
      %3551 = vmatprep.subr.bf16.mxu0 0
      %3552 = vmatpush1.bf16.msra.mxu0 0
      %3553 = vmatprep.subr.bf16.mxu0 0
      %3554 = vmatpush1.bf16.msra.mxu0 0
      %3555 = vmatprep.subr.bf16.mxu0 0
      %3556 = vmatpush1.bf16.msra.mxu0 0
      %3557 = vmatprep.subr.bf16.mxu0 0
      %3558 = vmatpush1.bf16.msra.mxu0 0
      %3559 = vmatprep.subr.bf16.mxu0 0
      %3560 = vmatpush1.bf16.msra.mxu0 0
      %3561 = vmatprep.subr.bf16.mxu0 0
      %3562 = vmatpush1.bf16.msra.mxu0 0
      %3563 = vmatprep.subr.bf16.mxu0 0
      %3564 = vmatpush1.bf16.msra.mxu0 0
      %3565 = vmatprep.subr.bf16.mxu0 0
      %3566 = vmatpush1.bf16.msra.mxu0 0
      %3567 = vmatprep.subr.bf16.mxu0 0
      %3568 = vmatpush1.bf16.msra.mxu0 0
      %3569 = vmatprep.subr.bf16.mxu0 0
      %3570 = vmatpush1.bf16.msra.mxu0 0
      %3571 = vmatprep.subr.bf16.mxu0 0
      %3572 = vmatpush1.bf16.msra.mxu0 0
      %3573 = vmatprep.subr.bf16.mxu0 0
      %3574 = vmatpush1.bf16.msra.mxu0 0
      %3575 = vmatprep.subr.bf16.mxu0 0
      %3576 = vmatpush1.bf16.msra.mxu0 0
      %3577 = vmatprep.subr.bf16.mxu0 0
      %3578 = vmatpush1.bf16.msra.mxu0 0
      %3579 = vmatprep.mubr.bf16.mxu0 0
      %3580 = vmatmul.mubr.bf16.gmra.mrb[0].mxu0 %v3542
      %v3581 = vpop.f32.mrb[0].mxu0
      %v3582 = vadd.f32 0.0, %v3581
      %v3583 = vpop.f32.mrb[0].mxu0
      %v3584 = vadd.f32 0.0, %v3583
      %v3585 = vpop.f32.mrb[0].mxu0
      %v3586 = vadd.f32 0.0, %v3585
      %v3587 = vpop.f32.mrb[0].mxu0
      %v3588 = vadd.f32 0.0, %v3587
      %3589 = vmatprep.mubr.bf16.mxu0 0
      %3590 = vmatmul.mubr.bf16.gmra.mrb[0].mxu0 %v3545
      %v3591 = vpop.f32.mrb[0].mxu0
      %v3592 = vadd.f32 0.0, %v3591
      %v3593 = vpop.f32.mrb[0].mxu0
      %v3594 = vadd.f32 0.0, %v3593
      %v3595 = vpop.f32.mrb[0].mxu0
      %v3596 = vadd.f32 0.0, %v3595
      %v3597 = vpop.f32.mrb[0].mxu0
      %v3598 = vadd.f32 0.0, %v3597
      %3599 = vdwg.mxu0
      %v3600 = vmul.f32 %v1470, %v3582
      %v3601 = vmul.f32 %v1474, %v3584
      %v3602 = vmul.f32 %v1470, %v3586
      %v3603 = vmul.f32 %v1474, %v3588
      %v3604 = vmul.f32 %v1470, %v3592
      %v3605 = vmul.f32 %v1474, %v3594
      %v3606 = vmul.f32 %v1470, %v3596
      %v3607 = vmul.f32 %v1474, %v3598
      %v3608 = vadd.f32 %v3490, %v3600
      %v3609 = vadd.f32 %v3491, %v3601
      %v3610 = vadd.f32 %v3492, %v3602
      %v3611 = vadd.f32 %v3493, %v3603
      %v3612 = vadd.f32 %v3494, %v3604
      %v3613 = vadd.f32 %v3495, %v3605
      %v3614 = vadd.f32 %v3496, %v3606
      %v3615 = vadd.f32 %v3497, %v3607
      %v3616 = vld [vmem:[%s7] sm:$0xff]
      %v3617 = vld [vmem:[%s7 + $0x8] sm:$0xff]
      %v3618 = vld [vmem:[%s7 + $0x10] sm:$0xff]
      %v3619 = vld [vmem:[%s7 + $0x18] sm:$0xff]
      %3621 = vset.pattern.permute.xlu0 0
      %3622 = vperm.xlu0 %3621, %v3616
      %v3623 = vpop.permute.xlu0 %3622
      %3626 = vset.pattern.permute.xlu0 0
      %3627 = vperm.xlu0 %3626, %v3617
      %v3628 = vpop.permute.xlu0 %3627
      %3631 = vset.pattern.permute.xlu0 0
      %3632 = vperm.xlu0 %3631, %v3618
      %v3633 = vpop.permute.xlu0 %3632
      %3636 = vset.pattern.permute.xlu0 0
      %3637 = vperm.xlu0 %3636, %v3619
      %v3638 = vpop.permute.xlu0 %3637
      %v3640 = vadd.f32 %v3608, %v3623
      %v3641 = vadd.f32 %v3609, %v3623
      %v3642 = vadd.f32 %v3610, %v3628
      %v3643 = vadd.f32 %v3611, %v3628
      %v3644 = vadd.f32 %v3612, %v3633
      %v3645 = vadd.f32 %v3613, %v3633
      %v3646 = vadd.f32 %v3614, %v3638
      %v3647 = vadd.f32 %v3615, %v3638
      %v3648 = vmul.f32 %v3640, 0.1
      %v3649 = vmul.f32 %v3641, 0.1
      %v3650 = vmul.f32 %v3642, 0.1
      %v3651 = vmul.f32 %v3643, 0.1
      %v3652 = vmul.f32 %v3644, 0.1
      %v3653 = vmul.f32 %v3645, 0.1
      %v3654 = vmul.f32 %v3646, 0.1
      %v3655 = vmul.f32 %v3647, 0.1
      %v3656 = vmax.f32 %v3640, %v3648
      %v3657 = vmax.f32 %v3641, %v3649
      %v3658 = vmax.f32 %v3642, %v3650
      %v3659 = vmax.f32 %v3643, %v3651
      %v3660 = vmax.f32 %v3644, %v3652
      %v3661 = vmax.f32 %v3645, %v3653
      %v3662 = vmax.f32 %v3646, %v3654
      %v3663 = vmax.f32 %v3647, %v3655
      %v3664 = vpack.c.bf16 %v3658, %v3656
      %v3665 = vpack.c.bf16 %v3659, %v3657
      %v3666 = vpack.c.bf16 %v3662, %v3660
      %v3667 = vpack.c.bf16 %v3663, %v3661
      %s3668 = scalar_lea.vmem %s8, 64
      %v3669 = vld [vmem:[%s3668] sm:$0xf]
      %v3670 = vld [vmem:[%s3668 + $0x4] sm:$0xf]
      %v3671 = vld [vmem:[%s3668 + $0x8] sm:$0xf]
      %v3672 = vld [vmem:[%s3668 + $0xc] sm:$0xf]
      %3673 = vrot.lane.b32.xlu0 %v3656, 17
      %v3674 = vpop.permute.xlu0 %3673
      %3675 = vrot.lane.b32.xlu0 %v3658, 17
      %v3676 = vpop.permute.xlu0 %3675
      %3677 = vrot.lane.b32.xlu0 %v3660, 17
      %v3678 = vpop.permute.xlu0 %3677
      %3679 = vrot.lane.b32.xlu0 %v3662, 17
      %v3680 = vpop.permute.xlu0 %3679
      %3681 = vrot.lane.b32.xlu0 %v3657, 17
      %v3682 = vpop.permute.xlu0 %3681
      %3683 = vrot.lane.b32.xlu0 %v3659, 17
      %v3684 = vpop.permute.xlu0 %3683
      %3685 = vrot.lane.b32.xlu0 %v3661, 17
      %v3686 = vpop.permute.xlu0 %3685
      %3687 = vrot.lane.b32.xlu0 %v3663, 17
      %v3688 = vpop.permute.xlu0 %3687
      %v3689 = vsel %vm486, %v3674, %v3682
      %v3690 = vsel %vm486, %v3676, %v3684
      %v3691 = vsel %vm486, %v3678, %v3686
      %v3692 = vsel %vm486, %v3680, %v3688
      %v3693 = vsel %vm486, %v3682, %v3674
      %v3694 = vsel %vm486, %v3684, %v3676
      %v3695 = vsel %vm486, %v3686, %v3678
      %v3696 = vsel %vm486, %v3688, %v3680
      %v3697 = vpack.c.bf16 %v3694, %v3693
      %v3698 = vpack.c.bf16 %v3690, %v3689
      %v3699 = vpack.c.bf16 %v3696, %v3695
      %v3700 = vpack.c.bf16 %v3692, %v3691
      %v3701 = vld [vmem:[%s8] sm:$0xf]
      %v3702 = vld [vmem:[%s8 + $0x4] sm:$0xf]
      %v3703 = vld [vmem:[%s8 + $0x8] sm:$0xf]
      %v3704 = vld [vmem:[%s8 + $0xc] sm:$0xf]
      %v3709 = vunpack.c.l.b16 %v3701
      %v3710 = vunpack.c.l.b16 %v3702
      %v3711 = vunpack.c.l.b16 %v3703
      %v3712 = vunpack.c.l.b16 %v3704
      %v3713 = vpack.c.b16 %v3710, %v3709
      %v3714 = vpack.c.b16 %v3712, %v3711
      %v3716 = vsel %vm1592, %v3713, 0
      %v3719 = vsel %vm1592, %v3714, 0
      %3721 = vmatprep.subr.bf16.mxu0 %v3698
      %3722 = vmatpush1.bf16.msra.mxu0 %v3697
      %3723 = vmatprep.subr.bf16.mxu0 %v3700
      %3724 = vmatpush1.bf16.msra.mxu0 %v3699
      %3725 = vmatprep.subr.bf16.mxu0 0
      %3726 = vmatpush1.bf16.msra.mxu0 0
      %3727 = vmatprep.subr.bf16.mxu0 0
      %3728 = vmatpush1.bf16.msra.mxu0 0
      %3729 = vmatprep.subr.bf16.mxu0 0
      %3730 = vmatpush1.bf16.msra.mxu0 0
      %3731 = vmatprep.subr.bf16.mxu0 0
      %3732 = vmatpush1.bf16.msra.mxu0 0
      %3733 = vmatprep.subr.bf16.mxu0 0
      %3734 = vmatpush1.bf16.msra.mxu0 0
      %3735 = vmatprep.subr.bf16.mxu0 0
      %3736 = vmatpush1.bf16.msra.mxu0 0
      %3737 = vmatprep.subr.bf16.mxu0 0
      %3738 = vmatpush1.bf16.msra.mxu0 0
      %3739 = vmatprep.subr.bf16.mxu0 0
      %3740 = vmatpush1.bf16.msra.mxu0 0
      %3741 = vmatprep.subr.bf16.mxu0 0
      %3742 = vmatpush1.bf16.msra.mxu0 0
      %3743 = vmatprep.subr.bf16.mxu0 0
      %3744 = vmatpush1.bf16.msra.mxu0 0
      %3745 = vmatprep.subr.bf16.mxu0 0
      %3746 = vmatpush1.bf16.msra.mxu0 0
      %3747 = vmatprep.subr.bf16.mxu0 0
      %3748 = vmatpush1.bf16.msra.mxu0 0
      %3749 = vmatprep.subr.bf16.mxu0 0
      %3750 = vmatpush1.bf16.msra.mxu0 0
      %3751 = vmatprep.subr.bf16.mxu0 0
      %3752 = vmatpush1.bf16.msra.mxu0 0
      %3753 = vmatprep.mubr.bf16.mxu0 0
      %3754 = vmatmul.mubr.bf16.gmra.mrb[0].mxu0 %v3716
      %v3755 = vpop.f32.mrb[0].mxu0
      %v3756 = vadd.f32 0.0, %v3755
      %v3757 = vpop.f32.mrb[0].mxu0
      %v3758 = vadd.f32 0.0, %v3757
      %v3759 = vpop.f32.mrb[0].mxu0
      %v3760 = vadd.f32 0.0, %v3759
      %v3761 = vpop.f32.mrb[0].mxu0
      %v3762 = vadd.f32 0.0, %v3761
      %3763 = vmatprep.mubr.bf16.mxu0 0
      %3764 = vmatmul.mubr.bf16.gmra.mrb[0].mxu0 %v3719
      %v3765 = vpop.f32.mrb[0].mxu0
      %v3766 = vadd.f32 0.0, %v3765
      %v3767 = vpop.f32.mrb[0].mxu0
      %v3768 = vadd.f32 0.0, %v3767
      %v3769 = vpop.f32.mrb[0].mxu0
      %v3770 = vadd.f32 0.0, %v3769
      %v3771 = vpop.f32.mrb[0].mxu0
      %v3772 = vadd.f32 0.0, %v3771
      %3773 = vdwg.mxu0
      %v3774 = vmul.f32 %v577, %v3756
      %v3775 = vmul.f32 %v581, %v3758
      %v3776 = vmul.f32 %v577, %v3760
      %v3777 = vmul.f32 %v581, %v3762
      %v3778 = vmul.f32 %v577, %v3766
      %v3779 = vmul.f32 %v581, %v3768
      %v3780 = vmul.f32 %v577, %v3770
      %v3781 = vmul.f32 %v581, %v3772
      %v3786 = vunpack.c.l.b16 %v3669
      %v3787 = vunpack.c.l.b16 %v3670
      %v3788 = vunpack.c.l.b16 %v3671
      %v3789 = vunpack.c.l.b16 %v3672
      %v3790 = vpack.c.b16 %v3787, %v3786
      %v3791 = vpack.c.b16 %v3789, %v3788
      %v3793 = vsel %vm1592, %v3790, 0
      %v3796 = vsel %vm1592, %v3791, 0
      %3798 = vmatprep.subr.bf16.mxu0 %v3665
      %3799 = vmatpush1.bf16.msra.mxu0 %v3664
      %3800 = vmatprep.subr.bf16.mxu0 %v3667
      %3801 = vmatpush1.bf16.msra.mxu0 %v3666
      %3802 = vmatprep.subr.bf16.mxu0 0
      %3803 = vmatpush1.bf16.msra.mxu0 0
      %3804 = vmatprep.subr.bf16.mxu0 0
      %3805 = vmatpush1.bf16.msra.mxu0 0
      %3806 = vmatprep.subr.bf16.mxu0 0
      %3807 = vmatpush1.bf16.msra.mxu0 0
      %3808 = vmatprep.subr.bf16.mxu0 0
      %3809 = vmatpush1.bf16.msra.mxu0 0
      %3810 = vmatprep.subr.bf16.mxu0 0
      %3811 = vmatpush1.bf16.msra.mxu0 0
      %3812 = vmatprep.subr.bf16.mxu0 0
      %3813 = vmatpush1.bf16.msra.mxu0 0
      %3814 = vmatprep.subr.bf16.mxu0 0
      %3815 = vmatpush1.bf16.msra.mxu0 0
      %3816 = vmatprep.subr.bf16.mxu0 0
      %3817 = vmatpush1.bf16.msra.mxu0 0
      %3818 = vmatprep.subr.bf16.mxu0 0
      %3819 = vmatpush1.bf16.msra.mxu0 0
      %3820 = vmatprep.subr.bf16.mxu0 0
      %3821 = vmatpush1.bf16.msra.mxu0 0
      %3822 = vmatprep.subr.bf16.mxu0 0
      %3823 = vmatpush1.bf16.msra.mxu0 0
      %3824 = vmatprep.subr.bf16.mxu0 0
      %3825 = vmatpush1.bf16.msra.mxu0 0
      %3826 = vmatprep.subr.bf16.mxu0 0
      %3827 = vmatpush1.bf16.msra.mxu0 0
      %3828 = vmatprep.subr.bf16.mxu0 0
      %3829 = vmatpush1.bf16.msra.mxu0 0
      %3830 = vmatprep.mubr.bf16.mxu0 0
      %3831 = vmatmul.mubr.bf16.gmra.mrb[0].mxu0 %v3793
      %v3832 = vpop.f32.mrb[0].mxu0
      %v3833 = vadd.f32 %v3774, %v3832
      %v3834 = vpop.f32.mrb[0].mxu0
      %v3835 = vadd.f32 %v3775, %v3834
      %v3836 = vpop.f32.mrb[0].mxu0
      %v3837 = vadd.f32 %v3776, %v3836
      %v3838 = vpop.f32.mrb[0].mxu0
      %v3839 = vadd.f32 %v3777, %v3838
      %3840 = vmatprep.mubr.bf16.mxu0 0
      %3841 = vmatmul.mubr.bf16.gmra.mrb[0].mxu0 %v3796
      %v3842 = vpop.f32.mrb[0].mxu0
      %v3843 = vadd.f32 %v3778, %v3842
      %v3844 = vpop.f32.mrb[0].mxu0
      %v3845 = vadd.f32 %v3779, %v3844
      %v3846 = vpop.f32.mrb[0].mxu0
      %v3847 = vadd.f32 %v3780, %v3846
      %v3848 = vpop.f32.mrb[0].mxu0
      %v3849 = vadd.f32 %v3781, %v3848
      %3850 = vdwg.mxu0
      %3851 = vrot.lane.b32.xlu0 %v3656, 16
      %v3852 = vpop.permute.xlu0 %3851
      %3853 = vrot.lane.b32.xlu0 %v3658, 16
      %v3854 = vpop.permute.xlu0 %3853
      %3855 = vrot.lane.b32.xlu0 %v3660, 16
      %v3856 = vpop.permute.xlu0 %3855
      %3857 = vrot.lane.b32.xlu0 %v3662, 16
      %v3858 = vpop.permute.xlu0 %3857
      %3859 = vrot.lane.b32.xlu0 %v3657, 16
      %v3860 = vpop.permute.xlu0 %3859
      %3861 = vrot.lane.b32.xlu0 %v3659, 16
      %v3862 = vpop.permute.xlu0 %3861
      %3863 = vrot.lane.b32.xlu0 %v3661, 16
      %v3864 = vpop.permute.xlu0 %3863
      %3865 = vrot.lane.b32.xlu0 %v3663, 16
      %v3866 = vpop.permute.xlu0 %3865
      %v3867 = vsel %vm671, %v3852, %v3860
      %v3868 = vsel %vm671, %v3854, %v3862
      %v3869 = vsel %vm671, %v3856, %v3864
      %v3870 = vsel %vm671, %v3858, %v3866
      %v3871 = vsel %vm671, %v3860, %v3852
      %v3872 = vsel %vm671, %v3862, %v3854
      %v3873 = vsel %vm671, %v3864, %v3856
      %v3874 = vsel %vm671, %v3866, %v3858
      %v3875 = vpack.c.bf16 %v3872, %v3871
      %v3876 = vpack.c.bf16 %v3868, %v3867
      %v3877 = vpack.c.bf16 %v3874, %v3873
      %v3878 = vpack.c.bf16 %v3870, %v3869
      %s3879 = scalar_lea.vmem %s8, 16
      %v3880 = vld [vmem:[%s3879] sm:$0xf]
      %v3881 = vld [vmem:[%s3879 + $0x4] sm:$0xf]
      %v3882 = vld [vmem:[%s3879 + $0x8] sm:$0xf]
      %v3883 = vld [vmem:[%s3879 + $0xc] sm:$0xf]
      %v3888 = vunpack.c.l.b16 %v3880
      %v3889 = vunpack.c.l.b16 %v3881
      %v3890 = vunpack.c.l.b16 %v3882
      %v3891 = vunpack.c.l.b16 %v3883
      %v3892 = vpack.c.b16 %v3889, %v3888
      %v3893 = vpack.c.b16 %v3891, %v3890
      %v3895 = vsel %vm1592, %v3892, 0
      %v3898 = vsel %vm1592, %v3893, 0
      %3900 = vmatprep.subr.bf16.mxu0 %v3876
      %3901 = vmatpush1.bf16.msra.mxu0 %v3875
      %3902 = vmatprep.subr.bf16.mxu0 %v3878
      %3903 = vmatpush1.bf16.msra.mxu0 %v3877
      %3904 = vmatprep.subr.bf16.mxu0 0
      %3905 = vmatpush1.bf16.msra.mxu0 0
      %3906 = vmatprep.subr.bf16.mxu0 0
      %3907 = vmatpush1.bf16.msra.mxu0 0
      %3908 = vmatprep.subr.bf16.mxu0 0
      %3909 = vmatpush1.bf16.msra.mxu0 0
      %3910 = vmatprep.subr.bf16.mxu0 0
      %3911 = vmatpush1.bf16.msra.mxu0 0
      %3912 = vmatprep.subr.bf16.mxu0 0
      %3913 = vmatpush1.bf16.msra.mxu0 0
      %3914 = vmatprep.subr.bf16.mxu0 0
      %3915 = vmatpush1.bf16.msra.mxu0 0
      %3916 = vmatprep.subr.bf16.mxu0 0
      %3917 = vmatpush1.bf16.msra.mxu0 0
      %3918 = vmatprep.subr.bf16.mxu0 0
      %3919 = vmatpush1.bf16.msra.mxu0 0
      %3920 = vmatprep.subr.bf16.mxu0 0
      %3921 = vmatpush1.bf16.msra.mxu0 0
      %3922 = vmatprep.subr.bf16.mxu0 0
      %3923 = vmatpush1.bf16.msra.mxu0 0
      %3924 = vmatprep.subr.bf16.mxu0 0
      %3925 = vmatpush1.bf16.msra.mxu0 0
      %3926 = vmatprep.subr.bf16.mxu0 0
      %3927 = vmatpush1.bf16.msra.mxu0 0
      %3928 = vmatprep.subr.bf16.mxu0 0
      %3929 = vmatpush1.bf16.msra.mxu0 0
      %3930 = vmatprep.subr.bf16.mxu0 0
      %3931 = vmatpush1.bf16.msra.mxu0 0
      %3932 = vmatprep.mubr.bf16.mxu0 0
      %3933 = vmatmul.mubr.bf16.gmra.mrb[0].mxu0 %v3895
      %v3934 = vpop.f32.mrb[0].mxu0
      %v3935 = vadd.f32 0.0, %v3934
      %v3936 = vpop.f32.mrb[0].mxu0
      %v3937 = vadd.f32 0.0, %v3936
      %v3938 = vpop.f32.mrb[0].mxu0
      %v3939 = vadd.f32 0.0, %v3938
      %v3940 = vpop.f32.mrb[0].mxu0
      %v3941 = vadd.f32 0.0, %v3940
      %3942 = vmatprep.mubr.bf16.mxu0 0
      %3943 = vmatmul.mubr.bf16.gmra.mrb[0].mxu0 %v3898
      %v3944 = vpop.f32.mrb[0].mxu0
      %v3945 = vadd.f32 0.0, %v3944
      %v3946 = vpop.f32.mrb[0].mxu0
      %v3947 = vadd.f32 0.0, %v3946
      %v3948 = vpop.f32.mrb[0].mxu0
      %v3949 = vadd.f32 0.0, %v3948
      %v3950 = vpop.f32.mrb[0].mxu0
      %v3951 = vadd.f32 0.0, %v3950
      %3952 = vdwg.mxu0
      %v3953 = vmul.f32 %v762, %v3935
      %v3954 = vmul.f32 %v766, %v3937
      %v3955 = vmul.f32 %v762, %v3939
      %v3956 = vmul.f32 %v766, %v3941
      %v3957 = vmul.f32 %v762, %v3945
      %v3958 = vmul.f32 %v766, %v3947
      %v3959 = vmul.f32 %v762, %v3949
      %v3960 = vmul.f32 %v766, %v3951
      %v3961 = vadd.f32 %v3833, %v3953
      %v3962 = vadd.f32 %v3835, %v3954
      %v3963 = vadd.f32 %v3837, %v3955
      %v3964 = vadd.f32 %v3839, %v3956
      %v3965 = vadd.f32 %v3843, %v3957
      %v3966 = vadd.f32 %v3845, %v3958
      %v3967 = vadd.f32 %v3847, %v3959
      %v3968 = vadd.f32 %v3849, %v3960
      %3969 = vrot.lane.b32.xlu0 %v3656, 15
      %v3970 = vpop.permute.xlu0 %3969
      %3971 = vrot.lane.b32.xlu0 %v3658, 15
      %v3972 = vpop.permute.xlu0 %3971
      %3973 = vrot.lane.b32.xlu0 %v3660, 15
      %v3974 = vpop.permute.xlu0 %3973
      %3975 = vrot.lane.b32.xlu0 %v3662, 15
      %v3976 = vpop.permute.xlu0 %3975
      %3977 = vrot.lane.b32.xlu0 %v3657, 15
      %v3978 = vpop.permute.xlu0 %3977
      %3979 = vrot.lane.b32.xlu0 %v3659, 15
      %v3980 = vpop.permute.xlu0 %3979
      %3981 = vrot.lane.b32.xlu0 %v3661, 15
      %v3982 = vpop.permute.xlu0 %3981
      %3983 = vrot.lane.b32.xlu0 %v3663, 15
      %v3984 = vpop.permute.xlu0 %3983
      %v3985 = vsel %vm789, %v3970, %v3978
      %v3986 = vsel %vm789, %v3972, %v3980
      %v3987 = vsel %vm789, %v3974, %v3982
      %v3988 = vsel %vm789, %v3976, %v3984
      %v3989 = vsel %vm789, %v3978, %v3970
      %v3990 = vsel %vm789, %v3980, %v3972
      %v3991 = vsel %vm789, %v3982, %v3974
      %v3992 = vsel %vm789, %v3984, %v3976
      %v3993 = vpack.c.bf16 %v3990, %v3989
      %v3994 = vpack.c.bf16 %v3986, %v3985
      %v3995 = vpack.c.bf16 %v3992, %v3991
      %v3996 = vpack.c.bf16 %v3988, %v3987
      %s3997 = scalar_lea.vmem %s8, 32
      %v3998 = vld [vmem:[%s3997] sm:$0xf]
      %v3999 = vld [vmem:[%s3997 + $0x4] sm:$0xf]
      %v4000 = vld [vmem:[%s3997 + $0x8] sm:$0xf]
      %v4001 = vld [vmem:[%s3997 + $0xc] sm:$0xf]
      %v4006 = vunpack.c.l.b16 %v3998
      %v4007 = vunpack.c.l.b16 %v3999
      %v4008 = vunpack.c.l.b16 %v4000
      %v4009 = vunpack.c.l.b16 %v4001
      %v4010 = vpack.c.b16 %v4007, %v4006
      %v4011 = vpack.c.b16 %v4009, %v4008
      %v4013 = vsel %vm1592, %v4010, 0
      %v4016 = vsel %vm1592, %v4011, 0
      %4018 = vmatprep.subr.bf16.mxu0 %v3994
      %4019 = vmatpush1.bf16.msra.mxu0 %v3993
      %4020 = vmatprep.subr.bf16.mxu0 %v3996
      %4021 = vmatpush1.bf16.msra.mxu0 %v3995
      %4022 = vmatprep.subr.bf16.mxu0 0
      %4023 = vmatpush1.bf16.msra.mxu0 0
      %4024 = vmatprep.subr.bf16.mxu0 0
      %4025 = vmatpush1.bf16.msra.mxu0 0
      %4026 = vmatprep.subr.bf16.mxu0 0
      %4027 = vmatpush1.bf16.msra.mxu0 0
      %4028 = vmatprep.subr.bf16.mxu0 0
      %4029 = vmatpush1.bf16.msra.mxu0 0
      %4030 = vmatprep.subr.bf16.mxu0 0
      %4031 = vmatpush1.bf16.msra.mxu0 0
      %4032 = vmatprep.subr.bf16.mxu0 0
      %4033 = vmatpush1.bf16.msra.mxu0 0
      %4034 = vmatprep.subr.bf16.mxu0 0
      %4035 = vmatpush1.bf16.msra.mxu0 0
      %4036 = vmatprep.subr.bf16.mxu0 0
      %4037 = vmatpush1.bf16.msra.mxu0 0
      %4038 = vmatprep.subr.bf16.mxu0 0
      %4039 = vmatpush1.bf16.msra.mxu0 0
      %4040 = vmatprep.subr.bf16.mxu0 0
      %4041 = vmatpush1.bf16.msra.mxu0 0
      %4042 = vmatprep.subr.bf16.mxu0 0
      %4043 = vmatpush1.bf16.msra.mxu0 0
      %4044 = vmatprep.subr.bf16.mxu0 0
      %4045 = vmatpush1.bf16.msra.mxu0 0
      %4046 = vmatprep.subr.bf16.mxu0 0
      %4047 = vmatpush1.bf16.msra.mxu0 0
      %4048 = vmatprep.subr.bf16.mxu0 0
      %4049 = vmatpush1.bf16.msra.mxu0 0
      %4050 = vmatprep.mubr.bf16.mxu0 0
      %4051 = vmatmul.mubr.bf16.gmra.mrb[0].mxu0 %v4013
      %v4052 = vpop.f32.mrb[0].mxu0
      %v4053 = vadd.f32 0.0, %v4052
      %v4054 = vpop.f32.mrb[0].mxu0
      %v4055 = vadd.f32 0.0, %v4054
      %v4056 = vpop.f32.mrb[0].mxu0
      %v4057 = vadd.f32 0.0, %v4056
      %v4058 = vpop.f32.mrb[0].mxu0
      %v4059 = vadd.f32 0.0, %v4058
      %4060 = vmatprep.mubr.bf16.mxu0 0
      %4061 = vmatmul.mubr.bf16.gmra.mrb[0].mxu0 %v4016
      %v4062 = vpop.f32.mrb[0].mxu0
      %v4063 = vadd.f32 0.0, %v4062
      %v4064 = vpop.f32.mrb[0].mxu0
      %v4065 = vadd.f32 0.0, %v4064
      %v4066 = vpop.f32.mrb[0].mxu0
      %v4067 = vadd.f32 0.0, %v4066
      %v4068 = vpop.f32.mrb[0].mxu0
      %v4069 = vadd.f32 0.0, %v4068
      %4070 = vdwg.mxu0
      %v4071 = vmul.f32 %v880, %v4053
      %v4072 = vmul.f32 %v884, %v4055
      %v4073 = vmul.f32 %v880, %v4057
      %v4074 = vmul.f32 %v884, %v4059
      %v4075 = vmul.f32 %v880, %v4063
      %v4076 = vmul.f32 %v884, %v4065
      %v4077 = vmul.f32 %v880, %v4067
      %v4078 = vmul.f32 %v884, %v4069
      %v4079 = vadd.f32 %v3961, %v4071
      %v4080 = vadd.f32 %v3962, %v4072
      %v4081 = vadd.f32 %v3963, %v4073
      %v4082 = vadd.f32 %v3964, %v4074
      %v4083 = vadd.f32 %v3965, %v4075
      %v4084 = vadd.f32 %v3966, %v4076
      %v4085 = vadd.f32 %v3967, %v4077
      %v4086 = vadd.f32 %v3968, %v4078
      %4087 = vrot.lane.b32.xlu0 %v3656, 1
      %v4088 = vpop.permute.xlu0 %4087
      %4089 = vrot.lane.b32.xlu0 %v3658, 1
      %v4090 = vpop.permute.xlu0 %4089
      %4091 = vrot.lane.b32.xlu0 %v3660, 1
      %v4092 = vpop.permute.xlu0 %4091
      %4093 = vrot.lane.b32.xlu0 %v3662, 1
      %v4094 = vpop.permute.xlu0 %4093
      %4095 = vrot.lane.b32.xlu0 %v3657, 1
      %v4096 = vpop.permute.xlu0 %4095
      %4097 = vrot.lane.b32.xlu0 %v3659, 1
      %v4098 = vpop.permute.xlu0 %4097
      %4099 = vrot.lane.b32.xlu0 %v3661, 1
      %v4100 = vpop.permute.xlu0 %4099
      %4101 = vrot.lane.b32.xlu0 %v3663, 1
      %v4102 = vpop.permute.xlu0 %4101
      %v4103 = vsel %vm907, %v4088, %v4096
      %v4104 = vsel %vm907, %v4090, %v4098
      %v4105 = vsel %vm907, %v4092, %v4100
      %v4106 = vsel %vm907, %v4094, %v4102
      %v4107 = vsel %vm907, %v4096, %v4088
      %v4108 = vsel %vm907, %v4098, %v4090
      %v4109 = vsel %vm907, %v4100, %v4092
      %v4110 = vsel %vm907, %v4102, %v4094
      %v4111 = vpack.c.bf16 %v4108, %v4107
      %v4112 = vpack.c.bf16 %v4104, %v4103
      %v4113 = vpack.c.bf16 %v4110, %v4109
      %v4114 = vpack.c.bf16 %v4106, %v4105
      %s4115 = scalar_lea.vmem %s8, 48
      %v4116 = vld [vmem:[%s4115] sm:$0xf]
      %v4117 = vld [vmem:[%s4115 + $0x4] sm:$0xf]
      %v4118 = vld [vmem:[%s4115 + $0x8] sm:$0xf]
      %v4119 = vld [vmem:[%s4115 + $0xc] sm:$0xf]
      %v4124 = vunpack.c.l.b16 %v4116
      %v4125 = vunpack.c.l.b16 %v4117
      %v4126 = vunpack.c.l.b16 %v4118
      %v4127 = vunpack.c.l.b16 %v4119
      %v4128 = vpack.c.b16 %v4125, %v4124
      %v4129 = vpack.c.b16 %v4127, %v4126
      %v4131 = vsel %vm1592, %v4128, 0
      %v4134 = vsel %vm1592, %v4129, 0
      %4136 = vmatprep.subr.bf16.mxu0 %v4112
      %4137 = vmatpush1.bf16.msra.mxu0 %v4111
      %4138 = vmatprep.subr.bf16.mxu0 %v4114
      %4139 = vmatpush1.bf16.msra.mxu0 %v4113
      %4140 = vmatprep.subr.bf16.mxu0 0
      %4141 = vmatpush1.bf16.msra.mxu0 0
      %4142 = vmatprep.subr.bf16.mxu0 0
      %4143 = vmatpush1.bf16.msra.mxu0 0
      %4144 = vmatprep.subr.bf16.mxu0 0
      %4145 = vmatpush1.bf16.msra.mxu0 0
      %4146 = vmatprep.subr.bf16.mxu0 0
      %4147 = vmatpush1.bf16.msra.mxu0 0
      %4148 = vmatprep.subr.bf16.mxu0 0
      %4149 = vmatpush1.bf16.msra.mxu0 0
      %4150 = vmatprep.subr.bf16.mxu0 0
      %4151 = vmatpush1.bf16.msra.mxu0 0
      %4152 = vmatprep.subr.bf16.mxu0 0
      %4153 = vmatpush1.bf16.msra.mxu0 0
      %4154 = vmatprep.subr.bf16.mxu0 0
      %4155 = vmatpush1.bf16.msra.mxu0 0
      %4156 = vmatprep.subr.bf16.mxu0 0
      %4157 = vmatpush1.bf16.msra.mxu0 0
      %4158 = vmatprep.subr.bf16.mxu0 0
      %4159 = vmatpush1.bf16.msra.mxu0 0
      %4160 = vmatprep.subr.bf16.mxu0 0
      %4161 = vmatpush1.bf16.msra.mxu0 0
      %4162 = vmatprep.subr.bf16.mxu0 0
      %4163 = vmatpush1.bf16.msra.mxu0 0
      %4164 = vmatprep.subr.bf16.mxu0 0
      %4165 = vmatpush1.bf16.msra.mxu0 0
      %4166 = vmatprep.subr.bf16.mxu0 0
      %4167 = vmatpush1.bf16.msra.mxu0 0
      %4168 = vmatprep.mubr.bf16.mxu0 0
      %4169 = vmatmul.mubr.bf16.gmra.mrb[0].mxu0 %v4131
      %v4170 = vpop.f32.mrb[0].mxu0
      %v4171 = vadd.f32 0.0, %v4170
      %v4172 = vpop.f32.mrb[0].mxu0
      %v4173 = vadd.f32 0.0, %v4172
      %v4174 = vpop.f32.mrb[0].mxu0
      %v4175 = vadd.f32 0.0, %v4174
      %v4176 = vpop.f32.mrb[0].mxu0
      %v4177 = vadd.f32 0.0, %v4176
      %4178 = vmatprep.mubr.bf16.mxu0 0
      %4179 = vmatmul.mubr.bf16.gmra.mrb[0].mxu0 %v4134
      %v4180 = vpop.f32.mrb[0].mxu0
      %v4181 = vadd.f32 0.0, %v4180
      %v4182 = vpop.f32.mrb[0].mxu0
      %v4183 = vadd.f32 0.0, %v4182
      %v4184 = vpop.f32.mrb[0].mxu0
      %v4185 = vadd.f32 0.0, %v4184
      %v4186 = vpop.f32.mrb[0].mxu0
      %v4187 = vadd.f32 0.0, %v4186
      %4188 = vdwg.mxu0
      %v4189 = vmul.f32 %v998, %v4171
      %v4190 = vmul.f32 %v1002, %v4173
      %v4191 = vmul.f32 %v998, %v4175
      %v4192 = vmul.f32 %v1002, %v4177
      %v4193 = vmul.f32 %v998, %v4181
      %v4194 = vmul.f32 %v1002, %v4183
      %v4195 = vmul.f32 %v998, %v4185
      %v4196 = vmul.f32 %v1002, %v4187
      %v4197 = vadd.f32 %v4079, %v4189
      %v4198 = vadd.f32 %v4080, %v4190
      %v4199 = vadd.f32 %v4081, %v4191
      %v4200 = vadd.f32 %v4082, %v4192
      %v4201 = vadd.f32 %v4083, %v4193
      %v4202 = vadd.f32 %v4084, %v4194
      %v4203 = vadd.f32 %v4085, %v4195
      %v4204 = vadd.f32 %v4086, %v4196
      %4205 = vrot.lane.b32.xlu0 %v3656, 127
      %v4206 = vpop.permute.xlu0 %4205
      %4207 = vrot.lane.b32.xlu0 %v3658, 127
      %v4208 = vpop.permute.xlu0 %4207
      %4209 = vrot.lane.b32.xlu0 %v3660, 127
      %v4210 = vpop.permute.xlu0 %4209
      %4211 = vrot.lane.b32.xlu0 %v3662, 127
      %v4212 = vpop.permute.xlu0 %4211
      %4213 = vrot.lane.b32.xlu0 %v3657, 127
      %v4214 = vpop.permute.xlu0 %4213
      %4215 = vrot.lane.b32.xlu0 %v3659, 127
      %v4216 = vpop.permute.xlu0 %4215
      %4217 = vrot.lane.b32.xlu0 %v3661, 127
      %v4218 = vpop.permute.xlu0 %4217
      %4219 = vrot.lane.b32.xlu0 %v3663, 127
      %v4220 = vpop.permute.xlu0 %4219
      %v4221 = vsel %vm1025, %v4206, %v4214
      %v4222 = vsel %vm1025, %v4208, %v4216
      %v4223 = vsel %vm1025, %v4210, %v4218
      %v4224 = vsel %vm1025, %v4212, %v4220
      %v4225 = vsel %vm1025, %v4214, %v4206
      %v4226 = vsel %vm1025, %v4216, %v4208
      %v4227 = vsel %vm1025, %v4218, %v4210
      %v4228 = vsel %vm1025, %v4220, %v4212
      %v4229 = vpack.c.bf16 %v4222, %v4221
      %v4230 = vpack.c.bf16 %v4226, %v4225
      %v4231 = vpack.c.bf16 %v4224, %v4223
      %v4232 = vpack.c.bf16 %v4228, %v4227
      %s4233 = scalar_lea.vmem %s8, 80
      %v4234 = vld [vmem:[%s4233] sm:$0xf]
      %v4235 = vld [vmem:[%s4233 + $0x4] sm:$0xf]
      %v4236 = vld [vmem:[%s4233 + $0x8] sm:$0xf]
      %v4237 = vld [vmem:[%s4233 + $0xc] sm:$0xf]
      %v4242 = vunpack.c.l.b16 %v4234
      %v4243 = vunpack.c.l.b16 %v4235
      %v4244 = vunpack.c.l.b16 %v4236
      %v4245 = vunpack.c.l.b16 %v4237
      %v4246 = vpack.c.b16 %v4243, %v4242
      %v4247 = vpack.c.b16 %v4245, %v4244
      %v4249 = vsel %vm1592, %v4246, 0
      %v4252 = vsel %vm1592, %v4247, 0
      %4254 = vmatprep.subr.bf16.mxu0 %v4230
      %4255 = vmatpush1.bf16.msra.mxu0 %v4229
      %4256 = vmatprep.subr.bf16.mxu0 %v4232
      %4257 = vmatpush1.bf16.msra.mxu0 %v4231
      %4258 = vmatprep.subr.bf16.mxu0 0
      %4259 = vmatpush1.bf16.msra.mxu0 0
      %4260 = vmatprep.subr.bf16.mxu0 0
      %4261 = vmatpush1.bf16.msra.mxu0 0
      %4262 = vmatprep.subr.bf16.mxu0 0
      %4263 = vmatpush1.bf16.msra.mxu0 0
      %4264 = vmatprep.subr.bf16.mxu0 0
      %4265 = vmatpush1.bf16.msra.mxu0 0
      %4266 = vmatprep.subr.bf16.mxu0 0
      %4267 = vmatpush1.bf16.msra.mxu0 0
      %4268 = vmatprep.subr.bf16.mxu0 0
      %4269 = vmatpush1.bf16.msra.mxu0 0
      %4270 = vmatprep.subr.bf16.mxu0 0
      %4271 = vmatpush1.bf16.msra.mxu0 0
      %4272 = vmatprep.subr.bf16.mxu0 0
      %4273 = vmatpush1.bf16.msra.mxu0 0
      %4274 = vmatprep.subr.bf16.mxu0 0
      %4275 = vmatpush1.bf16.msra.mxu0 0
      %4276 = vmatprep.subr.bf16.mxu0 0
      %4277 = vmatpush1.bf16.msra.mxu0 0
      %4278 = vmatprep.subr.bf16.mxu0 0
      %4279 = vmatpush1.bf16.msra.mxu0 0
      %4280 = vmatprep.subr.bf16.mxu0 0
      %4281 = vmatpush1.bf16.msra.mxu0 0
      %4282 = vmatprep.subr.bf16.mxu0 0
      %4283 = vmatpush1.bf16.msra.mxu0 0
      %4284 = vmatprep.subr.bf16.mxu0 0
      %4285 = vmatpush1.bf16.msra.mxu0 0
      %4286 = vmatprep.mubr.bf16.mxu0 0
      %4287 = vmatmul.mubr.bf16.gmra.mrb[0].mxu0 %v4249
      %v4288 = vpop.f32.mrb[0].mxu0
      %v4289 = vadd.f32 0.0, %v4288
      %v4290 = vpop.f32.mrb[0].mxu0
      %v4291 = vadd.f32 0.0, %v4290
      %v4292 = vpop.f32.mrb[0].mxu0
      %v4293 = vadd.f32 0.0, %v4292
      %v4294 = vpop.f32.mrb[0].mxu0
      %v4295 = vadd.f32 0.0, %v4294
      %4296 = vmatprep.mubr.bf16.mxu0 0
      %4297 = vmatmul.mubr.bf16.gmra.mrb[0].mxu0 %v4252
      %v4298 = vpop.f32.mrb[0].mxu0
      %v4299 = vadd.f32 0.0, %v4298
      %v4300 = vpop.f32.mrb[0].mxu0
      %v4301 = vadd.f32 0.0, %v4300
      %v4302 = vpop.f32.mrb[0].mxu0
      %v4303 = vadd.f32 0.0, %v4302
      %v4304 = vpop.f32.mrb[0].mxu0
      %v4305 = vadd.f32 0.0, %v4304
      %4306 = vdwg.mxu0
      %v4307 = vmul.f32 %v1116, %v4289
      %v4308 = vmul.f32 %v1120, %v4291
      %v4309 = vmul.f32 %v1116, %v4293
      %v4310 = vmul.f32 %v1120, %v4295
      %v4311 = vmul.f32 %v1116, %v4299
      %v4312 = vmul.f32 %v1120, %v4301
      %v4313 = vmul.f32 %v1116, %v4303
      %v4314 = vmul.f32 %v1120, %v4305
      %v4315 = vadd.f32 %v4197, %v4307
      %v4316 = vadd.f32 %v4198, %v4308
      %v4317 = vadd.f32 %v4199, %v4309
      %v4318 = vadd.f32 %v4200, %v4310
      %v4319 = vadd.f32 %v4201, %v4311
      %v4320 = vadd.f32 %v4202, %v4312
      %v4321 = vadd.f32 %v4203, %v4313
      %v4322 = vadd.f32 %v4204, %v4314
      %4323 = vrot.lane.b32.xlu0 %v3656, 113
      %v4324 = vpop.permute.xlu0 %4323
      %4325 = vrot.lane.b32.xlu0 %v3658, 113
      %v4326 = vpop.permute.xlu0 %4325
      %4327 = vrot.lane.b32.xlu0 %v3660, 113
      %v4328 = vpop.permute.xlu0 %4327
      %4329 = vrot.lane.b32.xlu0 %v3662, 113
      %v4330 = vpop.permute.xlu0 %4329
      %4331 = vrot.lane.b32.xlu0 %v3657, 113
      %v4332 = vpop.permute.xlu0 %4331
      %4333 = vrot.lane.b32.xlu0 %v3659, 113
      %v4334 = vpop.permute.xlu0 %4333
      %4335 = vrot.lane.b32.xlu0 %v3661, 113
      %v4336 = vpop.permute.xlu0 %4335
      %4337 = vrot.lane.b32.xlu0 %v3663, 113
      %v4338 = vpop.permute.xlu0 %4337
      %v4339 = vsel %vm1143, %v4324, %v4332
      %v4340 = vsel %vm1143, %v4326, %v4334
      %v4341 = vsel %vm1143, %v4328, %v4336
      %v4342 = vsel %vm1143, %v4330, %v4338
      %v4343 = vsel %vm1143, %v4332, %v4324
      %v4344 = vsel %vm1143, %v4334, %v4326
      %v4345 = vsel %vm1143, %v4336, %v4328
      %v4346 = vsel %vm1143, %v4338, %v4330
      %v4347 = vpack.c.bf16 %v4340, %v4339
      %v4348 = vpack.c.bf16 %v4344, %v4343
      %v4349 = vpack.c.bf16 %v4342, %v4341
      %v4350 = vpack.c.bf16 %v4346, %v4345
      %s4351 = scalar_lea.vmem %s8, 96
      %v4352 = vld [vmem:[%s4351] sm:$0xf]
      %v4353 = vld [vmem:[%s4351 + $0x4] sm:$0xf]
      %v4354 = vld [vmem:[%s4351 + $0x8] sm:$0xf]
      %v4355 = vld [vmem:[%s4351 + $0xc] sm:$0xf]
      %v4360 = vunpack.c.l.b16 %v4352
      %v4361 = vunpack.c.l.b16 %v4353
      %v4362 = vunpack.c.l.b16 %v4354
      %v4363 = vunpack.c.l.b16 %v4355
      %v4364 = vpack.c.b16 %v4361, %v4360
      %v4365 = vpack.c.b16 %v4363, %v4362
      %v4367 = vsel %vm1592, %v4364, 0
      %v4370 = vsel %vm1592, %v4365, 0
      %4372 = vmatprep.subr.bf16.mxu0 %v4348
      %4373 = vmatpush1.bf16.msra.mxu0 %v4347
      %4374 = vmatprep.subr.bf16.mxu0 %v4350
      %4375 = vmatpush1.bf16.msra.mxu0 %v4349
      %4376 = vmatprep.subr.bf16.mxu0 0
      %4377 = vmatpush1.bf16.msra.mxu0 0
      %4378 = vmatprep.subr.bf16.mxu0 0
      %4379 = vmatpush1.bf16.msra.mxu0 0
      %4380 = vmatprep.subr.bf16.mxu0 0
      %4381 = vmatpush1.bf16.msra.mxu0 0
      %4382 = vmatprep.subr.bf16.mxu0 0
      %4383 = vmatpush1.bf16.msra.mxu0 0
      %4384 = vmatprep.subr.bf16.mxu0 0
      %4385 = vmatpush1.bf16.msra.mxu0 0
      %4386 = vmatprep.subr.bf16.mxu0 0
      %4387 = vmatpush1.bf16.msra.mxu0 0
      %4388 = vmatprep.subr.bf16.mxu0 0
      %4389 = vmatpush1.bf16.msra.mxu0 0
      %4390 = vmatprep.subr.bf16.mxu0 0
      %4391 = vmatpush1.bf16.msra.mxu0 0
      %4392 = vmatprep.subr.bf16.mxu0 0
      %4393 = vmatpush1.bf16.msra.mxu0 0
      %4394 = vmatprep.subr.bf16.mxu0 0
      %4395 = vmatpush1.bf16.msra.mxu0 0
      %4396 = vmatprep.subr.bf16.mxu0 0
      %4397 = vmatpush1.bf16.msra.mxu0 0
      %4398 = vmatprep.subr.bf16.mxu0 0
      %4399 = vmatpush1.bf16.msra.mxu0 0
      %4400 = vmatprep.subr.bf16.mxu0 0
      %4401 = vmatpush1.bf16.msra.mxu0 0
      %4402 = vmatprep.subr.bf16.mxu0 0
      %4403 = vmatpush1.bf16.msra.mxu0 0
      %4404 = vmatprep.mubr.bf16.mxu0 0
      %4405 = vmatmul.mubr.bf16.gmra.mrb[0].mxu0 %v4367
      %v4406 = vpop.f32.mrb[0].mxu0
      %v4407 = vadd.f32 0.0, %v4406
      %v4408 = vpop.f32.mrb[0].mxu0
      %v4409 = vadd.f32 0.0, %v4408
      %v4410 = vpop.f32.mrb[0].mxu0
      %v4411 = vadd.f32 0.0, %v4410
      %v4412 = vpop.f32.mrb[0].mxu0
      %v4413 = vadd.f32 0.0, %v4412
      %4414 = vmatprep.mubr.bf16.mxu0 0
      %4415 = vmatmul.mubr.bf16.gmra.mrb[0].mxu0 %v4370
      %v4416 = vpop.f32.mrb[0].mxu0
      %v4417 = vadd.f32 0.0, %v4416
      %v4418 = vpop.f32.mrb[0].mxu0
      %v4419 = vadd.f32 0.0, %v4418
      %v4420 = vpop.f32.mrb[0].mxu0
      %v4421 = vadd.f32 0.0, %v4420
      %v4422 = vpop.f32.mrb[0].mxu0
      %v4423 = vadd.f32 0.0, %v4422
      %4424 = vdwg.mxu0
      %v4425 = vmul.f32 %v1234, %v4407
      %v4426 = vmul.f32 %v1238, %v4409
      %v4427 = vmul.f32 %v1234, %v4411
      %v4428 = vmul.f32 %v1238, %v4413
      %v4429 = vmul.f32 %v1234, %v4417
      %v4430 = vmul.f32 %v1238, %v4419
      %v4431 = vmul.f32 %v1234, %v4421
      %v4432 = vmul.f32 %v1238, %v4423
      %v4433 = vadd.f32 %v4315, %v4425
      %v4434 = vadd.f32 %v4316, %v4426
      %v4435 = vadd.f32 %v4317, %v4427
      %v4436 = vadd.f32 %v4318, %v4428
      %v4437 = vadd.f32 %v4319, %v4429
      %v4438 = vadd.f32 %v4320, %v4430
      %v4439 = vadd.f32 %v4321, %v4431
      %v4440 = vadd.f32 %v4322, %v4432
      %4441 = vrot.lane.b32.xlu0 %v3656, 112
      %v4442 = vpop.permute.xlu0 %4441
      %4443 = vrot.lane.b32.xlu0 %v3658, 112
      %v4444 = vpop.permute.xlu0 %4443
      %4445 = vrot.lane.b32.xlu0 %v3660, 112
      %v4446 = vpop.permute.xlu0 %4445
      %4447 = vrot.lane.b32.xlu0 %v3662, 112
      %v4448 = vpop.permute.xlu0 %4447
      %4449 = vrot.lane.b32.xlu0 %v3657, 112
      %v4450 = vpop.permute.xlu0 %4449
      %4451 = vrot.lane.b32.xlu0 %v3659, 112
      %v4452 = vpop.permute.xlu0 %4451
      %4453 = vrot.lane.b32.xlu0 %v3661, 112
      %v4454 = vpop.permute.xlu0 %4453
      %4455 = vrot.lane.b32.xlu0 %v3663, 112
      %v4456 = vpop.permute.xlu0 %4455
      %v4457 = vsel %vm1261, %v4442, %v4450
      %v4458 = vsel %vm1261, %v4444, %v4452
      %v4459 = vsel %vm1261, %v4446, %v4454
      %v4460 = vsel %vm1261, %v4448, %v4456
      %v4461 = vsel %vm1261, %v4450, %v4442
      %v4462 = vsel %vm1261, %v4452, %v4444
      %v4463 = vsel %vm1261, %v4454, %v4446
      %v4464 = vsel %vm1261, %v4456, %v4448
      %v4465 = vpack.c.bf16 %v4458, %v4457
      %v4466 = vpack.c.bf16 %v4462, %v4461
      %v4467 = vpack.c.bf16 %v4460, %v4459
      %v4468 = vpack.c.bf16 %v4464, %v4463
      %s4469 = scalar_lea.vmem %s8, 112
      %v4470 = vld [vmem:[%s4469] sm:$0xf]
      %v4471 = vld [vmem:[%s4469 + $0x4] sm:$0xf]
      %v4472 = vld [vmem:[%s4469 + $0x8] sm:$0xf]
      %v4473 = vld [vmem:[%s4469 + $0xc] sm:$0xf]
      %v4478 = vunpack.c.l.b16 %v4470
      %v4479 = vunpack.c.l.b16 %v4471
      %v4480 = vunpack.c.l.b16 %v4472
      %v4481 = vunpack.c.l.b16 %v4473
      %v4482 = vpack.c.b16 %v4479, %v4478
      %v4483 = vpack.c.b16 %v4481, %v4480
      %v4485 = vsel %vm1592, %v4482, 0
      %v4488 = vsel %vm1592, %v4483, 0
      %4490 = vmatprep.subr.bf16.mxu0 %v4466
      %4491 = vmatpush1.bf16.msra.mxu0 %v4465
      %4492 = vmatprep.subr.bf16.mxu0 %v4468
      %4493 = vmatpush1.bf16.msra.mxu0 %v4467
      %4494 = vmatprep.subr.bf16.mxu0 0
      %4495 = vmatpush1.bf16.msra.mxu0 0
      %4496 = vmatprep.subr.bf16.mxu0 0
      %4497 = vmatpush1.bf16.msra.mxu0 0
      %4498 = vmatprep.subr.bf16.mxu0 0
      %4499 = vmatpush1.bf16.msra.mxu0 0
      %4500 = vmatprep.subr.bf16.mxu0 0
      %4501 = vmatpush1.bf16.msra.mxu0 0
      %4502 = vmatprep.subr.bf16.mxu0 0
      %4503 = vmatpush1.bf16.msra.mxu0 0
      %4504 = vmatprep.subr.bf16.mxu0 0
      %4505 = vmatpush1.bf16.msra.mxu0 0
      %4506 = vmatprep.subr.bf16.mxu0 0
      %4507 = vmatpush1.bf16.msra.mxu0 0
      %4508 = vmatprep.subr.bf16.mxu0 0
      %4509 = vmatpush1.bf16.msra.mxu0 0
      %4510 = vmatprep.subr.bf16.mxu0 0
      %4511 = vmatpush1.bf16.msra.mxu0 0
      %4512 = vmatprep.subr.bf16.mxu0 0
      %4513 = vmatpush1.bf16.msra.mxu0 0
      %4514 = vmatprep.subr.bf16.mxu0 0
      %4515 = vmatpush1.bf16.msra.mxu0 0
      %4516 = vmatprep.subr.bf16.mxu0 0
      %4517 = vmatpush1.bf16.msra.mxu0 0
      %4518 = vmatprep.subr.bf16.mxu0 0
      %4519 = vmatpush1.bf16.msra.mxu0 0
      %4520 = vmatprep.subr.bf16.mxu0 0
      %4521 = vmatpush1.bf16.msra.mxu0 0
      %4522 = vmatprep.mubr.bf16.mxu0 0
      %4523 = vmatmul.mubr.bf16.gmra.mrb[0].mxu0 %v4485
      %v4524 = vpop.f32.mrb[0].mxu0
      %v4525 = vadd.f32 0.0, %v4524
      %v4526 = vpop.f32.mrb[0].mxu0
      %v4527 = vadd.f32 0.0, %v4526
      %v4528 = vpop.f32.mrb[0].mxu0
      %v4529 = vadd.f32 0.0, %v4528
      %v4530 = vpop.f32.mrb[0].mxu0
      %v4531 = vadd.f32 0.0, %v4530
      %4532 = vmatprep.mubr.bf16.mxu0 0
      %4533 = vmatmul.mubr.bf16.gmra.mrb[0].mxu0 %v4488
      %v4534 = vpop.f32.mrb[0].mxu0
      %v4535 = vadd.f32 0.0, %v4534
      %v4536 = vpop.f32.mrb[0].mxu0
      %v4537 = vadd.f32 0.0, %v4536
      %v4538 = vpop.f32.mrb[0].mxu0
      %v4539 = vadd.f32 0.0, %v4538
      %v4540 = vpop.f32.mrb[0].mxu0
      %v4541 = vadd.f32 0.0, %v4540
      %4542 = vdwg.mxu0
      %v4543 = vmul.f32 %v1352, %v4525
      %v4544 = vmul.f32 %v1356, %v4527
      %v4545 = vmul.f32 %v1352, %v4529
      %v4546 = vmul.f32 %v1356, %v4531
      %v4547 = vmul.f32 %v1352, %v4535
      %v4548 = vmul.f32 %v1356, %v4537
      %v4549 = vmul.f32 %v1352, %v4539
      %v4550 = vmul.f32 %v1356, %v4541
      %v4551 = vadd.f32 %v4433, %v4543
      %v4552 = vadd.f32 %v4434, %v4544
      %v4553 = vadd.f32 %v4435, %v4545
      %v4554 = vadd.f32 %v4436, %v4546
      %v4555 = vadd.f32 %v4437, %v4547
      %v4556 = vadd.f32 %v4438, %v4548
      %v4557 = vadd.f32 %v4439, %v4549
      %v4558 = vadd.f32 %v4440, %v4550
      %4559 = vrot.lane.b32.xlu0 %v3656, 111
      %v4560 = vpop.permute.xlu0 %4559
      %4561 = vrot.lane.b32.xlu0 %v3658, 111
      %v4562 = vpop.permute.xlu0 %4561
      %4563 = vrot.lane.b32.xlu0 %v3660, 111
      %v4564 = vpop.permute.xlu0 %4563
      %4565 = vrot.lane.b32.xlu0 %v3662, 111
      %v4566 = vpop.permute.xlu0 %4565
      %4567 = vrot.lane.b32.xlu0 %v3657, 111
      %v4568 = vpop.permute.xlu0 %4567
      %4569 = vrot.lane.b32.xlu0 %v3659, 111
      %v4570 = vpop.permute.xlu0 %4569
      %4571 = vrot.lane.b32.xlu0 %v3661, 111
      %v4572 = vpop.permute.xlu0 %4571
      %4573 = vrot.lane.b32.xlu0 %v3663, 111
      %v4574 = vpop.permute.xlu0 %4573
      %v4575 = vsel %vm1379, %v4560, %v4568
      %v4576 = vsel %vm1379, %v4562, %v4570
      %v4577 = vsel %vm1379, %v4564, %v4572
      %v4578 = vsel %vm1379, %v4566, %v4574
      %v4579 = vsel %vm1379, %v4568, %v4560
      %v4580 = vsel %vm1379, %v4570, %v4562
      %v4581 = vsel %vm1379, %v4572, %v4564
      %v4582 = vsel %vm1379, %v4574, %v4566
      %v4583 = vpack.c.bf16 %v4576, %v4575
      %v4584 = vpack.c.bf16 %v4580, %v4579
      %v4585 = vpack.c.bf16 %v4578, %v4577
      %v4586 = vpack.c.bf16 %v4582, %v4581
      %s4587 = scalar_lea.vmem %s8, 128
      %v4588 = vld [vmem:[%s4587] sm:$0xf]
      %v4589 = vld [vmem:[%s4587 + $0x4] sm:$0xf]
      %v4590 = vld [vmem:[%s4587 + $0x8] sm:$0xf]
      %v4591 = vld [vmem:[%s4587 + $0xc] sm:$0xf]
      %v4596 = vunpack.c.l.b16 %v4588
      %v4597 = vunpack.c.l.b16 %v4589
      %v4598 = vunpack.c.l.b16 %v4590
      %v4599 = vunpack.c.l.b16 %v4591
      %v4600 = vpack.c.b16 %v4597, %v4596
      %v4601 = vpack.c.b16 %v4599, %v4598
      %v4603 = vsel %vm1592, %v4600, 0
      %v4606 = vsel %vm1592, %v4601, 0
      %4608 = vmatprep.subr.bf16.mxu0 %v4584
      %4609 = vmatpush1.bf16.msra.mxu0 %v4583
      %4610 = vmatprep.subr.bf16.mxu0 %v4586
      %4611 = vmatpush1.bf16.msra.mxu0 %v4585
      %4612 = vmatprep.subr.bf16.mxu0 0
      %4613 = vmatpush1.bf16.msra.mxu0 0
      %4614 = vmatprep.subr.bf16.mxu0 0
      %4615 = vmatpush1.bf16.msra.mxu0 0
      %4616 = vmatprep.subr.bf16.mxu0 0
      %4617 = vmatpush1.bf16.msra.mxu0 0
      %4618 = vmatprep.subr.bf16.mxu0 0
      %4619 = vmatpush1.bf16.msra.mxu0 0
      %4620 = vmatprep.subr.bf16.mxu0 0
      %4621 = vmatpush1.bf16.msra.mxu0 0
      %4622 = vmatprep.subr.bf16.mxu0 0
      %4623 = vmatpush1.bf16.msra.mxu0 0
      %4624 = vmatprep.subr.bf16.mxu0 0
      %4625 = vmatpush1.bf16.msra.mxu0 0
      %4626 = vmatprep.subr.bf16.mxu0 0
      %4627 = vmatpush1.bf16.msra.mxu0 0
      %4628 = vmatprep.subr.bf16.mxu0 0
      %4629 = vmatpush1.bf16.msra.mxu0 0
      %4630 = vmatprep.subr.bf16.mxu0 0
      %4631 = vmatpush1.bf16.msra.mxu0 0
      %4632 = vmatprep.subr.bf16.mxu0 0
      %4633 = vmatpush1.bf16.msra.mxu0 0
      %4634 = vmatprep.subr.bf16.mxu0 0
      %4635 = vmatpush1.bf16.msra.mxu0 0
      %4636 = vmatprep.subr.bf16.mxu0 0
      %4637 = vmatpush1.bf16.msra.mxu0 0
      %4638 = vmatprep.subr.bf16.mxu0 0
      %4639 = vmatpush1.bf16.msra.mxu0 0
      %4640 = vmatprep.mubr.bf16.mxu0 0
      %4641 = vmatmul.mubr.bf16.gmra.mrb[0].mxu0 %v4603
      %v4642 = vpop.f32.mrb[0].mxu0
      %v4643 = vadd.f32 0.0, %v4642
      %v4644 = vpop.f32.mrb[0].mxu0
      %v4645 = vadd.f32 0.0, %v4644
      %v4646 = vpop.f32.mrb[0].mxu0
      %v4647 = vadd.f32 0.0, %v4646
      %v4648 = vpop.f32.mrb[0].mxu0
      %v4649 = vadd.f32 0.0, %v4648
      %4650 = vmatprep.mubr.bf16.mxu0 0
      %4651 = vmatmul.mubr.bf16.gmra.mrb[0].mxu0 %v4606
      %v4652 = vpop.f32.mrb[0].mxu0
      %v4653 = vadd.f32 0.0, %v4652
      %v4654 = vpop.f32.mrb[0].mxu0
      %v4655 = vadd.f32 0.0, %v4654
      %v4656 = vpop.f32.mrb[0].mxu0
      %v4657 = vadd.f32 0.0, %v4656
      %v4658 = vpop.f32.mrb[0].mxu0
      %v4659 = vadd.f32 0.0, %v4658
      %4660 = vdwg.mxu0
      %v4661 = vmul.f32 %v1470, %v4643
      %v4662 = vmul.f32 %v1474, %v4645
      %v4663 = vmul.f32 %v1470, %v4647
      %v4664 = vmul.f32 %v1474, %v4649
      %v4665 = vmul.f32 %v1470, %v4653
      %v4666 = vmul.f32 %v1474, %v4655
      %v4667 = vmul.f32 %v1470, %v4657
      %v4668 = vmul.f32 %v1474, %v4659
      %v4669 = vadd.f32 %v4551, %v4661
      %v4670 = vadd.f32 %v4552, %v4662
      %v4671 = vadd.f32 %v4553, %v4663
      %v4672 = vadd.f32 %v4554, %v4664
      %v4673 = vadd.f32 %v4555, %v4665
      %v4674 = vadd.f32 %v4556, %v4666
      %v4675 = vadd.f32 %v4557, %v4667
      %v4676 = vadd.f32 %v4558, %v4668
      %v4677 = vld [vmem:[%s9] sm:$0xff]
      %v4678 = vld [vmem:[%s9 + $0x8] sm:$0xff]
      %v4679 = vld [vmem:[%s9 + $0x10] sm:$0xff]
      %v4680 = vld [vmem:[%s9 + $0x18] sm:$0xff]
      %4682 = vset.pattern.permute.xlu0 0
      %4683 = vperm.xlu0 %4682, %v4677
      %v4684 = vpop.permute.xlu0 %4683
      %4687 = vset.pattern.permute.xlu0 0
      %4688 = vperm.xlu0 %4687, %v4678
      %v4689 = vpop.permute.xlu0 %4688
      %4692 = vset.pattern.permute.xlu0 0
      %4693 = vperm.xlu0 %4692, %v4679
      %v4694 = vpop.permute.xlu0 %4693
      %4697 = vset.pattern.permute.xlu0 0
      %4698 = vperm.xlu0 %4697, %v4680
      %v4699 = vpop.permute.xlu0 %4698
      %v4701 = vadd.f32 %v4669, %v4684
      %v4702 = vadd.f32 %v4670, %v4684
      %v4703 = vadd.f32 %v4671, %v4689
      %v4704 = vadd.f32 %v4672, %v4689
      %v4705 = vadd.f32 %v4673, %v4694
      %v4706 = vadd.f32 %v4674, %v4694
      %v4707 = vadd.f32 %v4675, %v4699
      %v4708 = vadd.f32 %v4676, %v4699
      %v4709 = vmul.f32 %v4701, 0.1
      %v4710 = vmul.f32 %v4702, 0.1
      %v4711 = vmul.f32 %v4703, 0.1
      %v4712 = vmul.f32 %v4704, 0.1
      %v4713 = vmul.f32 %v4705, 0.1
      %v4714 = vmul.f32 %v4706, 0.1
      %v4715 = vmul.f32 %v4707, 0.1
      %v4716 = vmul.f32 %v4708, 0.1
      %v4717 = vmax.f32 %v4701, %v4709
      %v4718 = vmax.f32 %v4702, %v4710
      %v4719 = vmax.f32 %v4703, %v4711
      %v4720 = vmax.f32 %v4704, %v4712
      %v4721 = vmax.f32 %v4705, %v4713
      %v4722 = vmax.f32 %v4706, %v4714
      %v4723 = vmax.f32 %v4707, %v4715
      %v4724 = vmax.f32 %v4708, %v4716
      %v4725 = vpack.c.bf16 %v4719, %v4717
      %v4726 = vpack.c.bf16 %v4720, %v4718
      %v4727 = vpack.c.bf16 %v4723, %v4721
      %v4728 = vpack.c.bf16 %v4724, %v4722
      %s4729 = scalar_lea.vmem %s10, 128
      %v4730 = vld [vmem:[%s4729] sm:$0xf]
      %v4731 = vld [vmem:[%s4729 + $0x4] sm:$0xf]
      %v4732 = vld [vmem:[%s4729 + $0x8] sm:$0xf]
      %v4733 = vld [vmem:[%s4729 + $0xc] sm:$0xf]
      %v4734 = vld [vmem:[%s4729 + $0x10] sm:$0xf]
      %v4735 = vld [vmem:[%s4729 + $0x14] sm:$0xf]
      %v4736 = vld [vmem:[%s4729 + $0x18] sm:$0xf]
      %v4737 = vld [vmem:[%s4729 + $0x1c] sm:$0xf]
      %4738 = vrot.lane.b32.xlu0 %v4717, 17
      %v4739 = vpop.permute.xlu0 %4738
      %4740 = vrot.lane.b32.xlu0 %v4719, 17
      %v4741 = vpop.permute.xlu0 %4740
      %4742 = vrot.lane.b32.xlu0 %v4721, 17
      %v4743 = vpop.permute.xlu0 %4742
      %4744 = vrot.lane.b32.xlu0 %v4723, 17
      %v4745 = vpop.permute.xlu0 %4744
      %4746 = vrot.lane.b32.xlu0 %v4718, 17
      %v4747 = vpop.permute.xlu0 %4746
      %4748 = vrot.lane.b32.xlu0 %v4720, 17
      %v4749 = vpop.permute.xlu0 %4748
      %4750 = vrot.lane.b32.xlu0 %v4722, 17
      %v4751 = vpop.permute.xlu0 %4750
      %4752 = vrot.lane.b32.xlu0 %v4724, 17
      %v4753 = vpop.permute.xlu0 %4752
      %v4754 = vsel %vm486, %v4739, %v4747
      %v4755 = vsel %vm486, %v4741, %v4749
      %v4756 = vsel %vm486, %v4743, %v4751
      %v4757 = vsel %vm486, %v4745, %v4753
      %v4758 = vsel %vm486, %v4747, %v4739
      %v4759 = vsel %vm486, %v4749, %v4741
      %v4760 = vsel %vm486, %v4751, %v4743
      %v4761 = vsel %vm486, %v4753, %v4745
      %v4762 = vpack.c.bf16 %v4759, %v4758
      %v4763 = vpack.c.bf16 %v4755, %v4754
      %v4764 = vpack.c.bf16 %v4761, %v4760
      %v4765 = vpack.c.bf16 %v4757, %v4756
      %v4766 = vld [vmem:[%s10] sm:$0xf]
      %v4767 = vld [vmem:[%s10 + $0x4] sm:$0xf]
      %v4768 = vld [vmem:[%s10 + $0x8] sm:$0xf]
      %v4769 = vld [vmem:[%s10 + $0xc] sm:$0xf]
      %v4770 = vld [vmem:[%s10 + $0x10] sm:$0xf]
      %v4771 = vld [vmem:[%s10 + $0x14] sm:$0xf]
      %v4772 = vld [vmem:[%s10 + $0x18] sm:$0xf]
      %v4773 = vld [vmem:[%s10 + $0x1c] sm:$0xf]
      %v4782 = vunpack.c.l.b16 %v4766
      %v4783 = vunpack.c.l.b16 %v4767
      %v4784 = vunpack.c.l.b16 %v4768
      %v4785 = vunpack.c.l.b16 %v4769
      %v4786 = vunpack.c.l.b16 %v4770
      %v4787 = vunpack.c.l.b16 %v4771
      %v4788 = vunpack.c.l.b16 %v4772
      %v4789 = vunpack.c.l.b16 %v4773
      %v4790 = vpack.c.b16 %v4783, %v4782
      %v4791 = vpack.c.b16 %v4785, %v4784
      %v4792 = vpack.c.b16 %v4787, %v4786
      %v4793 = vpack.c.b16 %v4789, %v4788
      %v4795 = vsel %vm1592, %v4790, 0
      %v4798 = vsel %vm1592, %v4791, 0
      %v4801 = vsel %vm1592, %v4792, 0
      %v4804 = vsel %vm1592, %v4793, 0
      %4806 = vmatprep.subr.bf16.mxu0 %v4763
      %4807 = vmatpush1.bf16.msra.mxu0 %v4762
      %4808 = vmatprep.subr.bf16.mxu0 %v4765
      %4809 = vmatpush1.bf16.msra.mxu0 %v4764
      %4810 = vmatprep.subr.bf16.mxu0 0
      %4811 = vmatpush1.bf16.msra.mxu0 0
      %4812 = vmatprep.subr.bf16.mxu0 0
      %4813 = vmatpush1.bf16.msra.mxu0 0
      %4814 = vmatprep.subr.bf16.mxu0 0
      %4815 = vmatpush1.bf16.msra.mxu0 0
      %4816 = vmatprep.subr.bf16.mxu0 0
      %4817 = vmatpush1.bf16.msra.mxu0 0
      %4818 = vmatprep.subr.bf16.mxu0 0
      %4819 = vmatpush1.bf16.msra.mxu0 0
      %4820 = vmatprep.subr.bf16.mxu0 0
      %4821 = vmatpush1.bf16.msra.mxu0 0
      %4822 = vmatprep.subr.bf16.mxu0 0
      %4823 = vmatpush1.bf16.msra.mxu0 0
      %4824 = vmatprep.subr.bf16.mxu0 0
      %4825 = vmatpush1.bf16.msra.mxu0 0
      %4826 = vmatprep.subr.bf16.mxu0 0
      %4827 = vmatpush1.bf16.msra.mxu0 0
      %4828 = vmatprep.subr.bf16.mxu0 0
      %4829 = vmatpush1.bf16.msra.mxu0 0
      %4830 = vmatprep.subr.bf16.mxu0 0
      %4831 = vmatpush1.bf16.msra.mxu0 0
      %4832 = vmatprep.subr.bf16.mxu0 0
      %4833 = vmatpush1.bf16.msra.mxu0 0
      %4834 = vmatprep.subr.bf16.mxu0 0
      %4835 = vmatpush1.bf16.msra.mxu0 0
      %4836 = vmatprep.subr.bf16.mxu0 0
      %4837 = vmatpush1.bf16.msra.mxu0 0
      %4838 = vmatprep.mubr.bf16.mxu0 0
      %4839 = vmatmul.mubr.bf16.gmra.mrb[0].mxu0 %v4795
      %v4840 = vpop.f32.mrb[0].mxu0
      %v4841 = vadd.f32 0.0, %v4840
      %v4842 = vpop.f32.mrb[0].mxu0
      %v4843 = vadd.f32 0.0, %v4842
      %v4844 = vpop.f32.mrb[0].mxu0
      %v4845 = vadd.f32 0.0, %v4844
      %v4846 = vpop.f32.mrb[0].mxu0
      %v4847 = vadd.f32 0.0, %v4846
      %4848 = vmatprep.mubr.bf16.mxu0 0
      %4849 = vmatmul.mubr.bf16.gmra.mrb[0].mxu0 %v4798
      %v4850 = vpop.f32.mrb[0].mxu0
      %v4851 = vadd.f32 0.0, %v4850
      %v4852 = vpop.f32.mrb[0].mxu0
      %v4853 = vadd.f32 0.0, %v4852
      %v4854 = vpop.f32.mrb[0].mxu0
      %v4855 = vadd.f32 0.0, %v4854
      %v4856 = vpop.f32.mrb[0].mxu0
      %v4857 = vadd.f32 0.0, %v4856
      %4858 = vmatprep.mubr.bf16.mxu0 0
      %4859 = vmatmul.mubr.bf16.gmra.mrb[0].mxu0 %v4801
      %v4860 = vpop.f32.mrb[0].mxu0
      %v4861 = vadd.f32 0.0, %v4860
      %v4862 = vpop.f32.mrb[0].mxu0
      %v4863 = vadd.f32 0.0, %v4862
      %v4864 = vpop.f32.mrb[0].mxu0
      %v4865 = vadd.f32 0.0, %v4864
      %v4866 = vpop.f32.mrb[0].mxu0
      %v4867 = vadd.f32 0.0, %v4866
      %4868 = vmatprep.mubr.bf16.mxu0 0
      %4869 = vmatmul.mubr.bf16.gmra.mrb[0].mxu0 %v4804
      %v4870 = vpop.f32.mrb[0].mxu0
      %v4871 = vadd.f32 0.0, %v4870
      %v4872 = vpop.f32.mrb[0].mxu0
      %v4873 = vadd.f32 0.0, %v4872
      %v4874 = vpop.f32.mrb[0].mxu0
      %v4875 = vadd.f32 0.0, %v4874
      %v4876 = vpop.f32.mrb[0].mxu0
      %v4877 = vadd.f32 0.0, %v4876
      %4878 = vdwg.mxu0
      %v4879 = vmul.f32 %v577, %v4841
      %v4880 = vmul.f32 %v581, %v4843
      %v4881 = vmul.f32 %v577, %v4845
      %v4882 = vmul.f32 %v581, %v4847
      %v4883 = vmul.f32 %v577, %v4851
      %v4884 = vmul.f32 %v581, %v4853
      %v4885 = vmul.f32 %v577, %v4855
      %v4886 = vmul.f32 %v581, %v4857
      %v4887 = vmul.f32 %v577, %v4861
      %v4888 = vmul.f32 %v581, %v4863
      %v4889 = vmul.f32 %v577, %v4865
      %v4890 = vmul.f32 %v581, %v4867
      %v4891 = vmul.f32 %v577, %v4871
      %v4892 = vmul.f32 %v581, %v4873
      %v4893 = vmul.f32 %v577, %v4875
      %v4894 = vmul.f32 %v581, %v4877
      %v4903 = vunpack.c.l.b16 %v4730
      %v4904 = vunpack.c.l.b16 %v4731
      %v4905 = vunpack.c.l.b16 %v4732
      %v4906 = vunpack.c.l.b16 %v4733
      %v4907 = vunpack.c.l.b16 %v4734
      %v4908 = vunpack.c.l.b16 %v4735
      %v4909 = vunpack.c.l.b16 %v4736
      %v4910 = vunpack.c.l.b16 %v4737
      %v4911 = vpack.c.b16 %v4904, %v4903
      %v4912 = vpack.c.b16 %v4906, %v4905
      %v4913 = vpack.c.b16 %v4908, %v4907
      %v4914 = vpack.c.b16 %v4910, %v4909
      %v4916 = vsel %vm1592, %v4911, 0
      %v4919 = vsel %vm1592, %v4912, 0
      %v4922 = vsel %vm1592, %v4913, 0
      %v4925 = vsel %vm1592, %v4914, 0
      %4927 = vmatprep.subr.bf16.mxu0 %v4726
      %4928 = vmatpush1.bf16.msra.mxu0 %v4725
      %4929 = vmatprep.subr.bf16.mxu0 %v4728
      %4930 = vmatpush1.bf16.msra.mxu0 %v4727
      %4931 = vmatprep.subr.bf16.mxu0 0
      %4932 = vmatpush1.bf16.msra.mxu0 0
      %4933 = vmatprep.subr.bf16.mxu0 0
      %4934 = vmatpush1.bf16.msra.mxu0 0
      %4935 = vmatprep.subr.bf16.mxu0 0
      %4936 = vmatpush1.bf16.msra.mxu0 0
      %4937 = vmatprep.subr.bf16.mxu0 0
      %4938 = vmatpush1.bf16.msra.mxu0 0
      %4939 = vmatprep.subr.bf16.mxu0 0
      %4940 = vmatpush1.bf16.msra.mxu0 0
      %4941 = vmatprep.subr.bf16.mxu0 0
      %4942 = vmatpush1.bf16.msra.mxu0 0
      %4943 = vmatprep.subr.bf16.mxu0 0
      %4944 = vmatpush1.bf16.msra.mxu0 0
      %4945 = vmatprep.subr.bf16.mxu0 0
      %4946 = vmatpush1.bf16.msra.mxu0 0
      %4947 = vmatprep.subr.bf16.mxu0 0
      %4948 = vmatpush1.bf16.msra.mxu0 0
      %4949 = vmatprep.subr.bf16.mxu0 0
      %4950 = vmatpush1.bf16.msra.mxu0 0
      %4951 = vmatprep.subr.bf16.mxu0 0
      %4952 = vmatpush1.bf16.msra.mxu0 0
      %4953 = vmatprep.subr.bf16.mxu0 0
      %4954 = vmatpush1.bf16.msra.mxu0 0
      %4955 = vmatprep.subr.bf16.mxu0 0
      %4956 = vmatpush1.bf16.msra.mxu0 0
      %4957 = vmatprep.subr.bf16.mxu0 0
      %4958 = vmatpush1.bf16.msra.mxu0 0
      %4959 = vmatprep.mubr.bf16.mxu0 0
      %4960 = vmatmul.mubr.bf16.gmra.mrb[0].mxu0 %v4916
      %v4961 = vpop.f32.mrb[0].mxu0
      %v4962 = vadd.f32 %v4879, %v4961
      %v4963 = vpop.f32.mrb[0].mxu0
      %v4964 = vadd.f32 %v4880, %v4963
      %v4965 = vpop.f32.mrb[0].mxu0
      %v4966 = vadd.f32 %v4881, %v4965
      %v4967 = vpop.f32.mrb[0].mxu0
      %v4968 = vadd.f32 %v4882, %v4967
      %4969 = vmatprep.mubr.bf16.mxu0 0
      %4970 = vmatmul.mubr.bf16.gmra.mrb[0].mxu0 %v4919
      %v4971 = vpop.f32.mrb[0].mxu0
      %v4972 = vadd.f32 %v4883, %v4971
      %v4973 = vpop.f32.mrb[0].mxu0
      %v4974 = vadd.f32 %v4884, %v4973
      %v4975 = vpop.f32.mrb[0].mxu0
      %v4976 = vadd.f32 %v4885, %v4975
      %v4977 = vpop.f32.mrb[0].mxu0
      %v4978 = vadd.f32 %v4886, %v4977
      %4979 = vmatprep.mubr.bf16.mxu0 0
      %4980 = vmatmul.mubr.bf16.gmra.mrb[0].mxu0 %v4922
      %v4981 = vpop.f32.mrb[0].mxu0
      %v4982 = vadd.f32 %v4887, %v4981
      %v4983 = vpop.f32.mrb[0].mxu0
      %v4984 = vadd.f32 %v4888, %v4983
      %v4985 = vpop.f32.mrb[0].mxu0
      %v4986 = vadd.f32 %v4889, %v4985
      %v4987 = vpop.f32.mrb[0].mxu0
      %v4988 = vadd.f32 %v4890, %v4987
      %4989 = vmatprep.mubr.bf16.mxu0 0
      %4990 = vmatmul.mubr.bf16.gmra.mrb[0].mxu0 %v4925
      %v4991 = vpop.f32.mrb[0].mxu0
      %v4992 = vadd.f32 %v4891, %v4991
      %v4993 = vpop.f32.mrb[0].mxu0
      %v4994 = vadd.f32 %v4892, %v4993
      %v4995 = vpop.f32.mrb[0].mxu0
      %v4996 = vadd.f32 %v4893, %v4995
      %v4997 = vpop.f32.mrb[0].mxu0
      %v4998 = vadd.f32 %v4894, %v4997
      %4999 = vdwg.mxu0
      %5000 = vrot.lane.b32.xlu0 %v4717, 16
      %v5001 = vpop.permute.xlu0 %5000
      %5002 = vrot.lane.b32.xlu0 %v4719, 16
      %v5003 = vpop.permute.xlu0 %5002
      %5004 = vrot.lane.b32.xlu0 %v4721, 16
      %v5005 = vpop.permute.xlu0 %5004
      %5006 = vrot.lane.b32.xlu0 %v4723, 16
      %v5007 = vpop.permute.xlu0 %5006
      %5008 = vrot.lane.b32.xlu0 %v4718, 16
      %v5009 = vpop.permute.xlu0 %5008
      %5010 = vrot.lane.b32.xlu0 %v4720, 16
      %v5011 = vpop.permute.xlu0 %5010
      %5012 = vrot.lane.b32.xlu0 %v4722, 16
      %v5013 = vpop.permute.xlu0 %5012
      %5014 = vrot.lane.b32.xlu0 %v4724, 16
      %v5015 = vpop.permute.xlu0 %5014
      %v5016 = vsel %vm671, %v5001, %v5009
      %v5017 = vsel %vm671, %v5003, %v5011
      %v5018 = vsel %vm671, %v5005, %v5013
      %v5019 = vsel %vm671, %v5007, %v5015
      %v5020 = vsel %vm671, %v5009, %v5001
      %v5021 = vsel %vm671, %v5011, %v5003
      %v5022 = vsel %vm671, %v5013, %v5005
      %v5023 = vsel %vm671, %v5015, %v5007
      %v5024 = vpack.c.bf16 %v5021, %v5020
      %v5025 = vpack.c.bf16 %v5017, %v5016
      %v5026 = vpack.c.bf16 %v5023, %v5022
      %v5027 = vpack.c.bf16 %v5019, %v5018
      %s5028 = scalar_lea.vmem %s10, 32
      %v5029 = vld [vmem:[%s5028] sm:$0xf]
      %v5030 = vld [vmem:[%s5028 + $0x4] sm:$0xf]
      %v5031 = vld [vmem:[%s5028 + $0x8] sm:$0xf]
      %v5032 = vld [vmem:[%s5028 + $0xc] sm:$0xf]
      %v5033 = vld [vmem:[%s5028 + $0x10] sm:$0xf]
      %v5034 = vld [vmem:[%s5028 + $0x14] sm:$0xf]
      %v5035 = vld [vmem:[%s5028 + $0x18] sm:$0xf]
      %v5036 = vld [vmem:[%s5028 + $0x1c] sm:$0xf]
      %v5045 = vunpack.c.l.b16 %v5029
      %v5046 = vunpack.c.l.b16 %v5030
      %v5047 = vunpack.c.l.b16 %v5031
      %v5048 = vunpack.c.l.b16 %v5032
      %v5049 = vunpack.c.l.b16 %v5033
      %v5050 = vunpack.c.l.b16 %v5034
      %v5051 = vunpack.c.l.b16 %v5035
      %v5052 = vunpack.c.l.b16 %v5036
      %v5053 = vpack.c.b16 %v5046, %v5045
      %v5054 = vpack.c.b16 %v5048, %v5047
      %v5055 = vpack.c.b16 %v5050, %v5049
      %v5056 = vpack.c.b16 %v5052, %v5051
      %v5058 = vsel %vm1592, %v5053, 0
      %v5061 = vsel %vm1592, %v5054, 0
      %v5064 = vsel %vm1592, %v5055, 0
      %v5067 = vsel %vm1592, %v5056, 0
      %5069 = vmatprep.subr.bf16.mxu0 %v5025
      %5070 = vmatpush1.bf16.msra.mxu0 %v5024
      %5071 = vmatprep.subr.bf16.mxu0 %v5027
      %5072 = vmatpush1.bf16.msra.mxu0 %v5026
      %5073 = vmatprep.subr.bf16.mxu0 0
      %5074 = vmatpush1.bf16.msra.mxu0 0
      %5075 = vmatprep.subr.bf16.mxu0 0
      %5076 = vmatpush1.bf16.msra.mxu0 0
      %5077 = vmatprep.subr.bf16.mxu0 0
      %5078 = vmatpush1.bf16.msra.mxu0 0
      %5079 = vmatprep.subr.bf16.mxu0 0
      %5080 = vmatpush1.bf16.msra.mxu0 0
      %5081 = vmatprep.subr.bf16.mxu0 0
      %5082 = vmatpush1.bf16.msra.mxu0 0
      %5083 = vmatprep.subr.bf16.mxu0 0
      %5084 = vmatpush1.bf16.msra.mxu0 0
      %5085 = vmatprep.subr.bf16.mxu0 0
      %5086 = vmatpush1.bf16.msra.mxu0 0
      %5087 = vmatprep.subr.bf16.mxu0 0
      %5088 = vmatpush1.bf16.msra.mxu0 0
      %5089 = vmatprep.subr.bf16.mxu0 0
      %5090 = vmatpush1.bf16.msra.mxu0 0
      %5091 = vmatprep.subr.bf16.mxu0 0
      %5092 = vmatpush1.bf16.msra.mxu0 0
      %5093 = vmatprep.subr.bf16.mxu0 0
      %5094 = vmatpush1.bf16.msra.mxu0 0
      %5095 = vmatprep.subr.bf16.mxu0 0
      %5096 = vmatpush1.bf16.msra.mxu0 0
      %5097 = vmatprep.subr.bf16.mxu0 0
      %5098 = vmatpush1.bf16.msra.mxu0 0
      %5099 = vmatprep.subr.bf16.mxu0 0
      %5100 = vmatpush1.bf16.msra.mxu0 0
      %5101 = vmatprep.mubr.bf16.mxu0 0
      %5102 = vmatmul.mubr.bf16.gmra.mrb[0].mxu0 %v5058
      %v5103 = vpop.f32.mrb[0].mxu0
      %v5104 = vadd.f32 0.0, %v5103
      %v5105 = vpop.f32.mrb[0].mxu0
      %v5106 = vadd.f32 0.0, %v5105
      %v5107 = vpop.f32.mrb[0].mxu0
      %v5108 = vadd.f32 0.0, %v5107
      %v5109 = vpop.f32.mrb[0].mxu0
      %v5110 = vadd.f32 0.0, %v5109
      %5111 = vmatprep.mubr.bf16.mxu0 0
      %5112 = vmatmul.mubr.bf16.gmra.mrb[0].mxu0 %v5061
      %v5113 = vpop.f32.mrb[0].mxu0
      %v5114 = vadd.f32 0.0, %v5113
      %v5115 = vpop.f32.mrb[0].mxu0
      %v5116 = vadd.f32 0.0, %v5115
      %v5117 = vpop.f32.mrb[0].mxu0
      %v5118 = vadd.f32 0.0, %v5117
      %v5119 = vpop.f32.mrb[0].mxu0
      %v5120 = vadd.f32 0.0, %v5119
      %5121 = vmatprep.mubr.bf16.mxu0 0
      %5122 = vmatmul.mubr.bf16.gmra.mrb[0].mxu0 %v5064
      %v5123 = vpop.f32.mrb[0].mxu0
      %v5124 = vadd.f32 0.0, %v5123
      %v5125 = vpop.f32.mrb[0].mxu0
      %v5126 = vadd.f32 0.0, %v5125
      %v5127 = vpop.f32.mrb[0].mxu0
      %v5128 = vadd.f32 0.0, %v5127
      %v5129 = vpop.f32.mrb[0].mxu0
      %v5130 = vadd.f32 0.0, %v5129
      %5131 = vmatprep.mubr.bf16.mxu0 0
      %5132 = vmatmul.mubr.bf16.gmra.mrb[0].mxu0 %v5067
      %v5133 = vpop.f32.mrb[0].mxu0
      %v5134 = vadd.f32 0.0, %v5133
      %v5135 = vpop.f32.mrb[0].mxu0
      %v5136 = vadd.f32 0.0, %v5135
      %v5137 = vpop.f32.mrb[0].mxu0
      %v5138 = vadd.f32 0.0, %v5137
      %v5139 = vpop.f32.mrb[0].mxu0
      %v5140 = vadd.f32 0.0, %v5139
      %5141 = vdwg.mxu0
      %v5142 = vmul.f32 %v762, %v5104
      %v5143 = vmul.f32 %v766, %v5106
      %v5144 = vmul.f32 %v762, %v5108
      %v5145 = vmul.f32 %v766, %v5110
      %v5146 = vmul.f32 %v762, %v5114
      %v5147 = vmul.f32 %v766, %v5116
      %v5148 = vmul.f32 %v762, %v5118
      %v5149 = vmul.f32 %v766, %v5120
      %v5150 = vmul.f32 %v762, %v5124
      %v5151 = vmul.f32 %v766, %v5126
      %v5152 = vmul.f32 %v762, %v5128
      %v5153 = vmul.f32 %v766, %v5130
      %v5154 = vmul.f32 %v762, %v5134
      %v5155 = vmul.f32 %v766, %v5136
      %v5156 = vmul.f32 %v762, %v5138
      %v5157 = vmul.f32 %v766, %v5140
      %v5158 = vadd.f32 %v4962, %v5142
      %v5159 = vadd.f32 %v4964, %v5143
      %v5160 = vadd.f32 %v4966, %v5144
      %v5161 = vadd.f32 %v4968, %v5145
      %v5162 = vadd.f32 %v4972, %v5146
      %v5163 = vadd.f32 %v4974, %v5147
      %v5164 = vadd.f32 %v4976, %v5148
      %v5165 = vadd.f32 %v4978, %v5149
      %v5166 = vadd.f32 %v4982, %v5150
      %v5167 = vadd.f32 %v4984, %v5151
      %v5168 = vadd.f32 %v4986, %v5152
      %v5169 = vadd.f32 %v4988, %v5153
      %v5170 = vadd.f32 %v4992, %v5154
      %v5171 = vadd.f32 %v4994, %v5155
      %v5172 = vadd.f32 %v4996, %v5156
      %v5173 = vadd.f32 %v4998, %v5157
      %5174 = vrot.lane.b32.xlu0 %v4717, 15
      %v5175 = vpop.permute.xlu0 %5174
      %5176 = vrot.lane.b32.xlu0 %v4719, 15
      %v5177 = vpop.permute.xlu0 %5176
      %5178 = vrot.lane.b32.xlu0 %v4721, 15
      %v5179 = vpop.permute.xlu0 %5178
      %5180 = vrot.lane.b32.xlu0 %v4723, 15
      %v5181 = vpop.permute.xlu0 %5180
      %5182 = vrot.lane.b32.xlu0 %v4718, 15
      %v5183 = vpop.permute.xlu0 %5182
      %5184 = vrot.lane.b32.xlu0 %v4720, 15
      %v5185 = vpop.permute.xlu0 %5184
      %5186 = vrot.lane.b32.xlu0 %v4722, 15
      %v5187 = vpop.permute.xlu0 %5186
      %5188 = vrot.lane.b32.xlu0 %v4724, 15
      %v5189 = vpop.permute.xlu0 %5188
      %v5190 = vsel %vm789, %v5175, %v5183
      %v5191 = vsel %vm789, %v5177, %v5185
      %v5192 = vsel %vm789, %v5179, %v5187
      %v5193 = vsel %vm789, %v5181, %v5189
      %v5194 = vsel %vm789, %v5183, %v5175
      %v5195 = vsel %vm789, %v5185, %v5177
      %v5196 = vsel %vm789, %v5187, %v5179
      %v5197 = vsel %vm789, %v5189, %v5181
      %v5198 = vpack.c.bf16 %v5195, %v5194
      %v5199 = vpack.c.bf16 %v5191, %v5190
      %v5200 = vpack.c.bf16 %v5197, %v5196
      %v5201 = vpack.c.bf16 %v5193, %v5192
      %s5202 = scalar_lea.vmem %s10, 64
      %v5203 = vld [vmem:[%s5202] sm:$0xf]
      %v5204 = vld [vmem:[%s5202 + $0x4] sm:$0xf]
      %v5205 = vld [vmem:[%s5202 + $0x8] sm:$0xf]
      %v5206 = vld [vmem:[%s5202 + $0xc] sm:$0xf]
      %v5207 = vld [vmem:[%s5202 + $0x10] sm:$0xf]
      %v5208 = vld [vmem:[%s5202 + $0x14] sm:$0xf]
      %v5209 = vld [vmem:[%s5202 + $0x18] sm:$0xf]
      %v5210 = vld [vmem:[%s5202 + $0x1c] sm:$0xf]
      %v5219 = vunpack.c.l.b16 %v5203
      %v5220 = vunpack.c.l.b16 %v5204
      %v5221 = vunpack.c.l.b16 %v5205
      %v5222 = vunpack.c.l.b16 %v5206
      %v5223 = vunpack.c.l.b16 %v5207
      %v5224 = vunpack.c.l.b16 %v5208
      %v5225 = vunpack.c.l.b16 %v5209
      %v5226 = vunpack.c.l.b16 %v5210
      %v5227 = vpack.c.b16 %v5220, %v5219
      %v5228 = vpack.c.b16 %v5222, %v5221
      %v5229 = vpack.c.b16 %v5224, %v5223
      %v5230 = vpack.c.b16 %v5226, %v5225
      %v5232 = vsel %vm1592, %v5227, 0
      %v5235 = vsel %vm1592, %v5228, 0
      %v5238 = vsel %vm1592, %v5229, 0
      %v5241 = vsel %vm1592, %v5230, 0
      %5243 = vmatprep.subr.bf16.mxu0 %v5199
      %5244 = vmatpush1.bf16.msra.mxu0 %v5198
      %5245 = vmatprep.subr.bf16.mxu0 %v5201
      %5246 = vmatpush1.bf16.msra.mxu0 %v5200
      %5247 = vmatprep.subr.bf16.mxu0 0
      %5248 = vmatpush1.bf16.msra.mxu0 0
      %5249 = vmatprep.subr.bf16.mxu0 0
      %5250 = vmatpush1.bf16.msra.mxu0 0
      %5251 = vmatprep.subr.bf16.mxu0 0
      %5252 = vmatpush1.bf16.msra.mxu0 0
      %5253 = vmatprep.subr.bf16.mxu0 0
      %5254 = vmatpush1.bf16.msra.mxu0 0
      %5255 = vmatprep.subr.bf16.mxu0 0
      %5256 = vmatpush1.bf16.msra.mxu0 0
      %5257 = vmatprep.subr.bf16.mxu0 0
      %5258 = vmatpush1.bf16.msra.mxu0 0
      %5259 = vmatprep.subr.bf16.mxu0 0
      %5260 = vmatpush1.bf16.msra.mxu0 0
      %5261 = vmatprep.subr.bf16.mxu0 0
      %5262 = vmatpush1.bf16.msra.mxu0 0
      %5263 = vmatprep.subr.bf16.mxu0 0
      %5264 = vmatpush1.bf16.msra.mxu0 0
      %5265 = vmatprep.subr.bf16.mxu0 0
      %5266 = vmatpush1.bf16.msra.mxu0 0
      %5267 = vmatprep.subr.bf16.mxu0 0
      %5268 = vmatpush1.bf16.msra.mxu0 0
      %5269 = vmatprep.subr.bf16.mxu0 0
      %5270 = vmatpush1.bf16.msra.mxu0 0
      %5271 = vmatprep.subr.bf16.mxu0 0
      %5272 = vmatpush1.bf16.msra.mxu0 0
      %5273 = vmatprep.subr.bf16.mxu0 0
      %5274 = vmatpush1.bf16.msra.mxu0 0
      %5275 = vmatprep.mubr.bf16.mxu0 0
      %5276 = vmatmul.mubr.bf16.gmra.mrb[0].mxu0 %v5232
      %v5277 = vpop.f32.mrb[0].mxu0
      %v5278 = vadd.f32 0.0, %v5277
      %v5279 = vpop.f32.mrb[0].mxu0
      %v5280 = vadd.f32 0.0, %v5279
      %v5281 = vpop.f32.mrb[0].mxu0
      %v5282 = vadd.f32 0.0, %v5281
      %v5283 = vpop.f32.mrb[0].mxu0
      %v5284 = vadd.f32 0.0, %v5283
      %5285 = vmatprep.mubr.bf16.mxu0 0
      %5286 = vmatmul.mubr.bf16.gmra.mrb[0].mxu0 %v5235
      %v5287 = vpop.f32.mrb[0].mxu0
      %v5288 = vadd.f32 0.0, %v5287
      %v5289 = vpop.f32.mrb[0].mxu0
      %v5290 = vadd.f32 0.0, %v5289
      %v5291 = vpop.f32.mrb[0].mxu0
      %v5292 = vadd.f32 0.0, %v5291
      %v5293 = vpop.f32.mrb[0].mxu0
      %v5294 = vadd.f32 0.0, %v5293
      %5295 = vmatprep.mubr.bf16.mxu0 0
      %5296 = vmatmul.mubr.bf16.gmra.mrb[0].mxu0 %v5238
      %v5297 = vpop.f32.mrb[0].mxu0
      %v5298 = vadd.f32 0.0, %v5297
      %v5299 = vpop.f32.mrb[0].mxu0
      %v5300 = vadd.f32 0.0, %v5299
      %v5301 = vpop.f32.mrb[0].mxu0
      %v5302 = vadd.f32 0.0, %v5301
      %v5303 = vpop.f32.mrb[0].mxu0
      %v5304 = vadd.f32 0.0, %v5303
      %5305 = vmatprep.mubr.bf16.mxu0 0
      %5306 = vmatmul.mubr.bf16.gmra.mrb[0].mxu0 %v5241
      %v5307 = vpop.f32.mrb[0].mxu0
      %v5308 = vadd.f32 0.0, %v5307
      %v5309 = vpop.f32.mrb[0].mxu0
      %v5310 = vadd.f32 0.0, %v5309
      %v5311 = vpop.f32.mrb[0].mxu0
      %v5312 = vadd.f32 0.0, %v5311
      %v5313 = vpop.f32.mrb[0].mxu0
      %v5314 = vadd.f32 0.0, %v5313
      %5315 = vdwg.mxu0
      %v5316 = vmul.f32 %v880, %v5278
      %v5317 = vmul.f32 %v884, %v5280
      %v5318 = vmul.f32 %v880, %v5282
      %v5319 = vmul.f32 %v884, %v5284
      %v5320 = vmul.f32 %v880, %v5288
      %v5321 = vmul.f32 %v884, %v5290
      %v5322 = vmul.f32 %v880, %v5292
      %v5323 = vmul.f32 %v884, %v5294
      %v5324 = vmul.f32 %v880, %v5298
      %v5325 = vmul.f32 %v884, %v5300
      %v5326 = vmul.f32 %v880, %v5302
      %v5327 = vmul.f32 %v884, %v5304
      %v5328 = vmul.f32 %v880, %v5308
      %v5329 = vmul.f32 %v884, %v5310
      %v5330 = vmul.f32 %v880, %v5312
      %v5331 = vmul.f32 %v884, %v5314
      %v5332 = vadd.f32 %v5158, %v5316
      %v5333 = vadd.f32 %v5159, %v5317
      %v5334 = vadd.f32 %v5160, %v5318
      %v5335 = vadd.f32 %v5161, %v5319
      %v5336 = vadd.f32 %v5162, %v5320
      %v5337 = vadd.f32 %v5163, %v5321
      %v5338 = vadd.f32 %v5164, %v5322
      %v5339 = vadd.f32 %v5165, %v5323
      %v5340 = vadd.f32 %v5166, %v5324
      %v5341 = vadd.f32 %v5167, %v5325
      %v5342 = vadd.f32 %v5168, %v5326
      %v5343 = vadd.f32 %v5169, %v5327
      %v5344 = vadd.f32 %v5170, %v5328
      %v5345 = vadd.f32 %v5171, %v5329
      %v5346 = vadd.f32 %v5172, %v5330
      %v5347 = vadd.f32 %v5173, %v5331
      %5348 = vrot.lane.b32.xlu0 %v4717, 1
      %v5349 = vpop.permute.xlu0 %5348
      %5350 = vrot.lane.b32.xlu0 %v4719, 1
      %v5351 = vpop.permute.xlu0 %5350
      %5352 = vrot.lane.b32.xlu0 %v4721, 1
      %v5353 = vpop.permute.xlu0 %5352
      %5354 = vrot.lane.b32.xlu0 %v4723, 1
      %v5355 = vpop.permute.xlu0 %5354
      %5356 = vrot.lane.b32.xlu0 %v4718, 1
      %v5357 = vpop.permute.xlu0 %5356
      %5358 = vrot.lane.b32.xlu0 %v4720, 1
      %v5359 = vpop.permute.xlu0 %5358
      %5360 = vrot.lane.b32.xlu0 %v4722, 1
      %v5361 = vpop.permute.xlu0 %5360
      %5362 = vrot.lane.b32.xlu0 %v4724, 1
      %v5363 = vpop.permute.xlu0 %5362
      %v5364 = vsel %vm907, %v5349, %v5357
      %v5365 = vsel %vm907, %v5351, %v5359
      %v5366 = vsel %vm907, %v5353, %v5361
      %v5367 = vsel %vm907, %v5355, %v5363
      %v5368 = vsel %vm907, %v5357, %v5349
      %v5369 = vsel %vm907, %v5359, %v5351
      %v5370 = vsel %vm907, %v5361, %v5353
      %v5371 = vsel %vm907, %v5363, %v5355
      %v5372 = vpack.c.bf16 %v5369, %v5368
      %v5373 = vpack.c.bf16 %v5365, %v5364
      %v5374 = vpack.c.bf16 %v5371, %v5370
      %v5375 = vpack.c.bf16 %v5367, %v5366
      %s5376 = scalar_lea.vmem %s10, 96
      %v5377 = vld [vmem:[%s5376] sm:$0xf]
      %v5378 = vld [vmem:[%s5376 + $0x4] sm:$0xf]
      %v5379 = vld [vmem:[%s5376 + $0x8] sm:$0xf]
      %v5380 = vld [vmem:[%s5376 + $0xc] sm:$0xf]
      %v5381 = vld [vmem:[%s5376 + $0x10] sm:$0xf]
      %v5382 = vld [vmem:[%s5376 + $0x14] sm:$0xf]
      %v5383 = vld [vmem:[%s5376 + $0x18] sm:$0xf]
      %v5384 = vld [vmem:[%s5376 + $0x1c] sm:$0xf]
      %v5393 = vunpack.c.l.b16 %v5377
      %v5394 = vunpack.c.l.b16 %v5378
      %v5395 = vunpack.c.l.b16 %v5379
      %v5396 = vunpack.c.l.b16 %v5380
      %v5397 = vunpack.c.l.b16 %v5381
      %v5398 = vunpack.c.l.b16 %v5382
      %v5399 = vunpack.c.l.b16 %v5383
      %v5400 = vunpack.c.l.b16 %v5384
      %v5401 = vpack.c.b16 %v5394, %v5393
      %v5402 = vpack.c.b16 %v5396, %v5395
      %v5403 = vpack.c.b16 %v5398, %v5397
      %v5404 = vpack.c.b16 %v5400, %v5399
      %v5406 = vsel %vm1592, %v5401, 0
      %v5409 = vsel %vm1592, %v5402, 0
      %v5412 = vsel %vm1592, %v5403, 0
      %v5415 = vsel %vm1592, %v5404, 0
      %5417 = vmatprep.subr.bf16.mxu0 %v5373
      %5418 = vmatpush1.bf16.msra.mxu0 %v5372
      %5419 = vmatprep.subr.bf16.mxu0 %v5375
      %5420 = vmatpush1.bf16.msra.mxu0 %v5374
      %5421 = vmatprep.subr.bf16.mxu0 0
      %5422 = vmatpush1.bf16.msra.mxu0 0
      %5423 = vmatprep.subr.bf16.mxu0 0
      %5424 = vmatpush1.bf16.msra.mxu0 0
      %5425 = vmatprep.subr.bf16.mxu0 0
      %5426 = vmatpush1.bf16.msra.mxu0 0
      %5427 = vmatprep.subr.bf16.mxu0 0
      %5428 = vmatpush1.bf16.msra.mxu0 0
      %5429 = vmatprep.subr.bf16.mxu0 0
      %5430 = vmatpush1.bf16.msra.mxu0 0
      %5431 = vmatprep.subr.bf16.mxu0 0
      %5432 = vmatpush1.bf16.msra.mxu0 0
      %5433 = vmatprep.subr.bf16.mxu0 0
      %5434 = vmatpush1.bf16.msra.mxu0 0
      %5435 = vmatprep.subr.bf16.mxu0 0
      %5436 = vmatpush1.bf16.msra.mxu0 0
      %5437 = vmatprep.subr.bf16.mxu0 0
      %5438 = vmatpush1.bf16.msra.mxu0 0
      %5439 = vmatprep.subr.bf16.mxu0 0
      %5440 = vmatpush1.bf16.msra.mxu0 0
      %5441 = vmatprep.subr.bf16.mxu0 0
      %5442 = vmatpush1.bf16.msra.mxu0 0
      %5443 = vmatprep.subr.bf16.mxu0 0
      %5444 = vmatpush1.bf16.msra.mxu0 0
      %5445 = vmatprep.subr.bf16.mxu0 0
      %5446 = vmatpush1.bf16.msra.mxu0 0
      %5447 = vmatprep.subr.bf16.mxu0 0
      %5448 = vmatpush1.bf16.msra.mxu0 0
      %5449 = vmatprep.mubr.bf16.mxu0 0
      %5450 = vmatmul.mubr.bf16.gmra.mrb[0].mxu0 %v5406
      %v5451 = vpop.f32.mrb[0].mxu0
      %v5452 = vadd.f32 0.0, %v5451
      %v5453 = vpop.f32.mrb[0].mxu0
      %v5454 = vadd.f32 0.0, %v5453
      %v5455 = vpop.f32.mrb[0].mxu0
      %v5456 = vadd.f32 0.0, %v5455
      %v5457 = vpop.f32.mrb[0].mxu0
      %v5458 = vadd.f32 0.0, %v5457
      %5459 = vmatprep.mubr.bf16.mxu0 0
      %5460 = vmatmul.mubr.bf16.gmra.mrb[0].mxu0 %v5409
      %v5461 = vpop.f32.mrb[0].mxu0
      %v5462 = vadd.f32 0.0, %v5461
      %v5463 = vpop.f32.mrb[0].mxu0
      %v5464 = vadd.f32 0.0, %v5463
      %v5465 = vpop.f32.mrb[0].mxu0
      %v5466 = vadd.f32 0.0, %v5465
      %v5467 = vpop.f32.mrb[0].mxu0
      %v5468 = vadd.f32 0.0, %v5467
      %5469 = vmatprep.mubr.bf16.mxu0 0
      %5470 = vmatmul.mubr.bf16.gmra.mrb[0].mxu0 %v5412
      %v5471 = vpop.f32.mrb[0].mxu0
      %v5472 = vadd.f32 0.0, %v5471
      %v5473 = vpop.f32.mrb[0].mxu0
      %v5474 = vadd.f32 0.0, %v5473
      %v5475 = vpop.f32.mrb[0].mxu0
      %v5476 = vadd.f32 0.0, %v5475
      %v5477 = vpop.f32.mrb[0].mxu0
      %v5478 = vadd.f32 0.0, %v5477
      %5479 = vmatprep.mubr.bf16.mxu0 0
      %5480 = vmatmul.mubr.bf16.gmra.mrb[0].mxu0 %v5415
      %v5481 = vpop.f32.mrb[0].mxu0
      %v5482 = vadd.f32 0.0, %v5481
      %v5483 = vpop.f32.mrb[0].mxu0
      %v5484 = vadd.f32 0.0, %v5483
      %v5485 = vpop.f32.mrb[0].mxu0
      %v5486 = vadd.f32 0.0, %v5485
      %v5487 = vpop.f32.mrb[0].mxu0
      %v5488 = vadd.f32 0.0, %v5487
      %5489 = vdwg.mxu0
      %v5490 = vmul.f32 %v998, %v5452
      %v5491 = vmul.f32 %v1002, %v5454
      %v5492 = vmul.f32 %v998, %v5456
      %v5493 = vmul.f32 %v1002, %v5458
      %v5494 = vmul.f32 %v998, %v5462
      %v5495 = vmul.f32 %v1002, %v5464
      %v5496 = vmul.f32 %v998, %v5466
      %v5497 = vmul.f32 %v1002, %v5468
      %v5498 = vmul.f32 %v998, %v5472
      %v5499 = vmul.f32 %v1002, %v5474
      %v5500 = vmul.f32 %v998, %v5476
      %v5501 = vmul.f32 %v1002, %v5478
      %v5502 = vmul.f32 %v998, %v5482
      %v5503 = vmul.f32 %v1002, %v5484
      %v5504 = vmul.f32 %v998, %v5486
      %v5505 = vmul.f32 %v1002, %v5488
      %v5506 = vadd.f32 %v5332, %v5490
      %v5507 = vadd.f32 %v5333, %v5491
      %v5508 = vadd.f32 %v5334, %v5492
      %v5509 = vadd.f32 %v5335, %v5493
      %v5510 = vadd.f32 %v5336, %v5494
      %v5511 = vadd.f32 %v5337, %v5495
      %v5512 = vadd.f32 %v5338, %v5496
      %v5513 = vadd.f32 %v5339, %v5497
      %v5514 = vadd.f32 %v5340, %v5498
      %v5515 = vadd.f32 %v5341, %v5499
      %v5516 = vadd.f32 %v5342, %v5500
      %v5517 = vadd.f32 %v5343, %v5501
      %v5518 = vadd.f32 %v5344, %v5502
      %v5519 = vadd.f32 %v5345, %v5503
      %v5520 = vadd.f32 %v5346, %v5504
      %v5521 = vadd.f32 %v5347, %v5505
      %5522 = vrot.lane.b32.xlu0 %v4717, 127
      %v5523 = vpop.permute.xlu0 %5522
      %5524 = vrot.lane.b32.xlu0 %v4719, 127
      %v5525 = vpop.permute.xlu0 %5524
      %5526 = vrot.lane.b32.xlu0 %v4721, 127
      %v5527 = vpop.permute.xlu0 %5526
      %5528 = vrot.lane.b32.xlu0 %v4723, 127
      %v5529 = vpop.permute.xlu0 %5528
      %5530 = vrot.lane.b32.xlu0 %v4718, 127
      %v5531 = vpop.permute.xlu0 %5530
      %5532 = vrot.lane.b32.xlu0 %v4720, 127
      %v5533 = vpop.permute.xlu0 %5532
      %5534 = vrot.lane.b32.xlu0 %v4722, 127
      %v5535 = vpop.permute.xlu0 %5534
      %5536 = vrot.lane.b32.xlu0 %v4724, 127
      %v5537 = vpop.permute.xlu0 %5536
      %v5538 = vsel %vm1025, %v5523, %v5531
      %v5539 = vsel %vm1025, %v5525, %v5533
      %v5540 = vsel %vm1025, %v5527, %v5535
      %v5541 = vsel %vm1025, %v5529, %v5537
      %v5542 = vsel %vm1025, %v5531, %v5523
      %v5543 = vsel %vm1025, %v5533, %v5525
      %v5544 = vsel %vm1025, %v5535, %v5527
      %v5545 = vsel %vm1025, %v5537, %v5529
      %v5546 = vpack.c.bf16 %v5539, %v5538
      %v5547 = vpack.c.bf16 %v5543, %v5542
      %v5548 = vpack.c.bf16 %v5541, %v5540
      %v5549 = vpack.c.bf16 %v5545, %v5544
      %s5550 = scalar_lea.vmem %s10, 160
      %v5551 = vld [vmem:[%s5550] sm:$0xf]
      %v5552 = vld [vmem:[%s5550 + $0x4] sm:$0xf]
      %v5553 = vld [vmem:[%s5550 + $0x8] sm:$0xf]
      %v5554 = vld [vmem:[%s5550 + $0xc] sm:$0xf]
      %v5555 = vld [vmem:[%s5550 + $0x10] sm:$0xf]
      %v5556 = vld [vmem:[%s5550 + $0x14] sm:$0xf]
      %v5557 = vld [vmem:[%s5550 + $0x18] sm:$0xf]
      %v5558 = vld [vmem:[%s5550 + $0x1c] sm:$0xf]
      %v5567 = vunpack.c.l.b16 %v5551
      %v5568 = vunpack.c.l.b16 %v5552
      %v5569 = vunpack.c.l.b16 %v5553
      %v5570 = vunpack.c.l.b16 %v5554
      %v5571 = vunpack.c.l.b16 %v5555
      %v5572 = vunpack.c.l.b16 %v5556
      %v5573 = vunpack.c.l.b16 %v5557
      %v5574 = vunpack.c.l.b16 %v5558
      %v5575 = vpack.c.b16 %v5568, %v5567
      %v5576 = vpack.c.b16 %v5570, %v5569
      %v5577 = vpack.c.b16 %v5572, %v5571
      %v5578 = vpack.c.b16 %v5574, %v5573
      %v5580 = vsel %vm1592, %v5575, 0
      %v5583 = vsel %vm1592, %v5576, 0
      %v5586 = vsel %vm1592, %v5577, 0
      %v5589 = vsel %vm1592, %v5578, 0
      %5591 = vmatprep.subr.bf16.mxu0 %v5547
      %5592 = vmatpush1.bf16.msra.mxu0 %v5546
      %5593 = vmatprep.subr.bf16.mxu0 %v5549
      %5594 = vmatpush1.bf16.msra.mxu0 %v5548
      %5595 = vmatprep.subr.bf16.mxu0 0
      %5596 = vmatpush1.bf16.msra.mxu0 0
      %5597 = vmatprep.subr.bf16.mxu0 0
      %5598 = vmatpush1.bf16.msra.mxu0 0
      %5599 = vmatprep.subr.bf16.mxu0 0
      %5600 = vmatpush1.bf16.msra.mxu0 0
      %5601 = vmatprep.subr.bf16.mxu0 0
      %5602 = vmatpush1.bf16.msra.mxu0 0
      %5603 = vmatprep.subr.bf16.mxu0 0
      %5604 = vmatpush1.bf16.msra.mxu0 0
      %5605 = vmatprep.subr.bf16.mxu0 0
      %5606 = vmatpush1.bf16.msra.mxu0 0
      %5607 = vmatprep.subr.bf16.mxu0 0
      %5608 = vmatpush1.bf16.msra.mxu0 0
      %5609 = vmatprep.subr.bf16.mxu0 0
      %5610 = vmatpush1.bf16.msra.mxu0 0
      %5611 = vmatprep.subr.bf16.mxu0 0
      %5612 = vmatpush1.bf16.msra.mxu0 0
      %5613 = vmatprep.subr.bf16.mxu0 0
      %5614 = vmatpush1.bf16.msra.mxu0 0
      %5615 = vmatprep.subr.bf16.mxu0 0
      %5616 = vmatpush1.bf16.msra.mxu0 0
      %5617 = vmatprep.subr.bf16.mxu0 0
      %5618 = vmatpush1.bf16.msra.mxu0 0
      %5619 = vmatprep.subr.bf16.mxu0 0
      %5620 = vmatpush1.bf16.msra.mxu0 0
      %5621 = vmatprep.subr.bf16.mxu0 0
      %5622 = vmatpush1.bf16.msra.mxu0 0
      %5623 = vmatprep.mubr.bf16.mxu0 0
      %5624 = vmatmul.mubr.bf16.gmra.mrb[0].mxu0 %v5580
      %v5625 = vpop.f32.mrb[0].mxu0
      %v5626 = vadd.f32 0.0, %v5625
      %v5627 = vpop.f32.mrb[0].mxu0
      %v5628 = vadd.f32 0.0, %v5627
      %v5629 = vpop.f32.mrb[0].mxu0
      %v5630 = vadd.f32 0.0, %v5629
      %v5631 = vpop.f32.mrb[0].mxu0
      %v5632 = vadd.f32 0.0, %v5631
      %5633 = vmatprep.mubr.bf16.mxu0 0
      %5634 = vmatmul.mubr.bf16.gmra.mrb[0].mxu0 %v5583
      %v5635 = vpop.f32.mrb[0].mxu0
      %v5636 = vadd.f32 0.0, %v5635
      %v5637 = vpop.f32.mrb[0].mxu0
      %v5638 = vadd.f32 0.0, %v5637
      %v5639 = vpop.f32.mrb[0].mxu0
      %v5640 = vadd.f32 0.0, %v5639
      %v5641 = vpop.f32.mrb[0].mxu0
      %v5642 = vadd.f32 0.0, %v5641
      %5643 = vmatprep.mubr.bf16.mxu0 0
      %5644 = vmatmul.mubr.bf16.gmra.mrb[0].mxu0 %v5586
      %v5645 = vpop.f32.mrb[0].mxu0
      %v5646 = vadd.f32 0.0, %v5645
      %v5647 = vpop.f32.mrb[0].mxu0
      %v5648 = vadd.f32 0.0, %v5647
      %v5649 = vpop.f32.mrb[0].mxu0
      %v5650 = vadd.f32 0.0, %v5649
      %v5651 = vpop.f32.mrb[0].mxu0
      %v5652 = vadd.f32 0.0, %v5651
      %5653 = vmatprep.mubr.bf16.mxu0 0
      %5654 = vmatmul.mubr.bf16.gmra.mrb[0].mxu0 %v5589
      %v5655 = vpop.f32.mrb[0].mxu0
      %v5656 = vadd.f32 0.0, %v5655
      %v5657 = vpop.f32.mrb[0].mxu0
      %v5658 = vadd.f32 0.0, %v5657
      %v5659 = vpop.f32.mrb[0].mxu0
      %v5660 = vadd.f32 0.0, %v5659
      %v5661 = vpop.f32.mrb[0].mxu0
      %v5662 = vadd.f32 0.0, %v5661
      %5663 = vdwg.mxu0
      %v5664 = vmul.f32 %v1116, %v5626
      %v5665 = vmul.f32 %v1120, %v5628
      %v5666 = vmul.f32 %v1116, %v5630
      %v5667 = vmul.f32 %v1120, %v5632
      %v5668 = vmul.f32 %v1116, %v5636
      %v5669 = vmul.f32 %v1120, %v5638
      %v5670 = vmul.f32 %v1116, %v5640
      %v5671 = vmul.f32 %v1120, %v5642
      %v5672 = vmul.f32 %v1116, %v5646
      %v5673 = vmul.f32 %v1120, %v5648
      %v5674 = vmul.f32 %v1116, %v5650
      %v5675 = vmul.f32 %v1120, %v5652
      %v5676 = vmul.f32 %v1116, %v5656
      %v5677 = vmul.f32 %v1120, %v5658
      %v5678 = vmul.f32 %v1116, %v5660
      %v5679 = vmul.f32 %v1120, %v5662
      %v5680 = vadd.f32 %v5506, %v5664
      %v5681 = vadd.f32 %v5507, %v5665
      %v5682 = vadd.f32 %v5508, %v5666
      %v5683 = vadd.f32 %v5509, %v5667
      %v5684 = vadd.f32 %v5510, %v5668
      %v5685 = vadd.f32 %v5511, %v5669
      %v5686 = vadd.f32 %v5512, %v5670
      %v5687 = vadd.f32 %v5513, %v5671
      %v5688 = vadd.f32 %v5514, %v5672
      %v5689 = vadd.f32 %v5515, %v5673
      %v5690 = vadd.f32 %v5516, %v5674
      %v5691 = vadd.f32 %v5517, %v5675
      %v5692 = vadd.f32 %v5518, %v5676
      %v5693 = vadd.f32 %v5519, %v5677
      %v5694 = vadd.f32 %v5520, %v5678
      %v5695 = vadd.f32 %v5521, %v5679
      %5696 = vrot.lane.b32.xlu0 %v4717, 113
      %v5697 = vpop.permute.xlu0 %5696
      %5698 = vrot.lane.b32.xlu0 %v4719, 113
      %v5699 = vpop.permute.xlu0 %5698
      %5700 = vrot.lane.b32.xlu0 %v4721, 113
      %v5701 = vpop.permute.xlu0 %5700
      %5702 = vrot.lane.b32.xlu0 %v4723, 113
      %v5703 = vpop.permute.xlu0 %5702
      %5704 = vrot.lane.b32.xlu0 %v4718, 113
      %v5705 = vpop.permute.xlu0 %5704
      %5706 = vrot.lane.b32.xlu0 %v4720, 113
      %v5707 = vpop.permute.xlu0 %5706
      %5708 = vrot.lane.b32.xlu0 %v4722, 113
      %v5709 = vpop.permute.xlu0 %5708
      %5710 = vrot.lane.b32.xlu0 %v4724, 113
      %v5711 = vpop.permute.xlu0 %5710
      %v5712 = vsel %vm1143, %v5697, %v5705
      %v5713 = vsel %vm1143, %v5699, %v5707
      %v5714 = vsel %vm1143, %v5701, %v5709
      %v5715 = vsel %vm1143, %v5703, %v5711
      %v5716 = vsel %vm1143, %v5705, %v5697
      %v5717 = vsel %vm1143, %v5707, %v5699
      %v5718 = vsel %vm1143, %v5709, %v5701
      %v5719 = vsel %vm1143, %v5711, %v5703
      %v5720 = vpack.c.bf16 %v5713, %v5712
      %v5721 = vpack.c.bf16 %v5717, %v5716
      %v5722 = vpack.c.bf16 %v5715, %v5714
      %v5723 = vpack.c.bf16 %v5719, %v5718
      %s5724 = scalar_lea.vmem %s10, 192
      %v5725 = vld [vmem:[%s5724] sm:$0xf]
      %v5726 = vld [vmem:[%s5724 + $0x4] sm:$0xf]
      %v5727 = vld [vmem:[%s5724 + $0x8] sm:$0xf]
      %v5728 = vld [vmem:[%s5724 + $0xc] sm:$0xf]
      %v5729 = vld [vmem:[%s5724 + $0x10] sm:$0xf]
      %v5730 = vld [vmem:[%s5724 + $0x14] sm:$0xf]
      %v5731 = vld [vmem:[%s5724 + $0x18] sm:$0xf]
      %v5732 = vld [vmem:[%s5724 + $0x1c] sm:$0xf]
      %v5741 = vunpack.c.l.b16 %v5725
      %v5742 = vunpack.c.l.b16 %v5726
      %v5743 = vunpack.c.l.b16 %v5727
      %v5744 = vunpack.c.l.b16 %v5728
      %v5745 = vunpack.c.l.b16 %v5729
      %v5746 = vunpack.c.l.b16 %v5730
      %v5747 = vunpack.c.l.b16 %v5731
      %v5748 = vunpack.c.l.b16 %v5732
      %v5749 = vpack.c.b16 %v5742, %v5741
      %v5750 = vpack.c.b16 %v5744, %v5743
      %v5751 = vpack.c.b16 %v5746, %v5745
      %v5752 = vpack.c.b16 %v5748, %v5747
      %v5754 = vsel %vm1592, %v5749, 0
      %v5757 = vsel %vm1592, %v5750, 0
      %v5760 = vsel %vm1592, %v5751, 0
      %v5763 = vsel %vm1592, %v5752, 0
      %5765 = vmatprep.subr.bf16.mxu0 %v5721
      %5766 = vmatpush1.bf16.msra.mxu0 %v5720
      %5767 = vmatprep.subr.bf16.mxu0 %v5723
      %5768 = vmatpush1.bf16.msra.mxu0 %v5722
      %5769 = vmatprep.subr.bf16.mxu0 0
      %5770 = vmatpush1.bf16.msra.mxu0 0
      %5771 = vmatprep.subr.bf16.mxu0 0
      %5772 = vmatpush1.bf16.msra.mxu0 0
      %5773 = vmatprep.subr.bf16.mxu0 0
      %5774 = vmatpush1.bf16.msra.mxu0 0
      %5775 = vmatprep.subr.bf16.mxu0 0
      %5776 = vmatpush1.bf16.msra.mxu0 0
      %5777 = vmatprep.subr.bf16.mxu0 0
      %5778 = vmatpush1.bf16.msra.mxu0 0
      %5779 = vmatprep.subr.bf16.mxu0 0
      %5780 = vmatpush1.bf16.msra.mxu0 0
      %5781 = vmatprep.subr.bf16.mxu0 0
      %5782 = vmatpush1.bf16.msra.mxu0 0
      %5783 = vmatprep.subr.bf16.mxu0 0
      %5784 = vmatpush1.bf16.msra.mxu0 0
      %5785 = vmatprep.subr.bf16.mxu0 0
      %5786 = vmatpush1.bf16.msra.mxu0 0
      %5787 = vmatprep.subr.bf16.mxu0 0
      %5788 = vmatpush1.bf16.msra.mxu0 0
      %5789 = vmatprep.subr.bf16.mxu0 0
      %5790 = vmatpush1.bf16.msra.mxu0 0
      %5791 = vmatprep.subr.bf16.mxu0 0
      %5792 = vmatpush1.bf16.msra.mxu0 0
      %5793 = vmatprep.subr.bf16.mxu0 0
      %5794 = vmatpush1.bf16.msra.mxu0 0
      %5795 = vmatprep.subr.bf16.mxu0 0
      %5796 = vmatpush1.bf16.msra.mxu0 0
      %5797 = vmatprep.mubr.bf16.mxu0 0
      %5798 = vmatmul.mubr.bf16.gmra.mrb[0].mxu0 %v5754
      %v5799 = vpop.f32.mrb[0].mxu0
      %v5800 = vadd.f32 0.0, %v5799
      %v5801 = vpop.f32.mrb[0].mxu0
      %v5802 = vadd.f32 0.0, %v5801
      %v5803 = vpop.f32.mrb[0].mxu0
      %v5804 = vadd.f32 0.0, %v5803
      %v5805 = vpop.f32.mrb[0].mxu0
      %v5806 = vadd.f32 0.0, %v5805
      %5807 = vmatprep.mubr.bf16.mxu0 0
      %5808 = vmatmul.mubr.bf16.gmra.mrb[0].mxu0 %v5757
      %v5809 = vpop.f32.mrb[0].mxu0
      %v5810 = vadd.f32 0.0, %v5809
      %v5811 = vpop.f32.mrb[0].mxu0
      %v5812 = vadd.f32 0.0, %v5811
      %v5813 = vpop.f32.mrb[0].mxu0
      %v5814 = vadd.f32 0.0, %v5813
      %v5815 = vpop.f32.mrb[0].mxu0
      %v5816 = vadd.f32 0.0, %v5815
      %5817 = vmatprep.mubr.bf16.mxu0 0
      %5818 = vmatmul.mubr.bf16.gmra.mrb[0].mxu0 %v5760
      %v5819 = vpop.f32.mrb[0].mxu0
      %v5820 = vadd.f32 0.0, %v5819
      %v5821 = vpop.f32.mrb[0].mxu0
      %v5822 = vadd.f32 0.0, %v5821
      %v5823 = vpop.f32.mrb[0].mxu0
      %v5824 = vadd.f32 0.0, %v5823
      %v5825 = vpop.f32.mrb[0].mxu0
      %v5826 = vadd.f32 0.0, %v5825
      %5827 = vmatprep.mubr.bf16.mxu0 0
      %5828 = vmatmul.mubr.bf16.gmra.mrb[0].mxu0 %v5763
      %v5829 = vpop.f32.mrb[0].mxu0
      %v5830 = vadd.f32 0.0, %v5829
      %v5831 = vpop.f32.mrb[0].mxu0
      %v5832 = vadd.f32 0.0, %v5831
      %v5833 = vpop.f32.mrb[0].mxu0
      %v5834 = vadd.f32 0.0, %v5833
      %v5835 = vpop.f32.mrb[0].mxu0
      %v5836 = vadd.f32 0.0, %v5835
      %5837 = vdwg.mxu0
      %v5838 = vmul.f32 %v1234, %v5800
      %v5839 = vmul.f32 %v1238, %v5802
      %v5840 = vmul.f32 %v1234, %v5804
      %v5841 = vmul.f32 %v1238, %v5806
      %v5842 = vmul.f32 %v1234, %v5810
      %v5843 = vmul.f32 %v1238, %v5812
      %v5844 = vmul.f32 %v1234, %v5814
      %v5845 = vmul.f32 %v1238, %v5816
      %v5846 = vmul.f32 %v1234, %v5820
      %v5847 = vmul.f32 %v1238, %v5822
      %v5848 = vmul.f32 %v1234, %v5824
      %v5849 = vmul.f32 %v1238, %v5826
      %v5850 = vmul.f32 %v1234, %v5830
      %v5851 = vmul.f32 %v1238, %v5832
      %v5852 = vmul.f32 %v1234, %v5834
      %v5853 = vmul.f32 %v1238, %v5836
      %v5854 = vadd.f32 %v5680, %v5838
      %v5855 = vadd.f32 %v5681, %v5839
      %v5856 = vadd.f32 %v5682, %v5840
      %v5857 = vadd.f32 %v5683, %v5841
      %v5858 = vadd.f32 %v5684, %v5842
      %v5859 = vadd.f32 %v5685, %v5843
      %v5860 = vadd.f32 %v5686, %v5844
      %v5861 = vadd.f32 %v5687, %v5845
      %v5862 = vadd.f32 %v5688, %v5846
      %v5863 = vadd.f32 %v5689, %v5847
      %v5864 = vadd.f32 %v5690, %v5848
      %v5865 = vadd.f32 %v5691, %v5849
      %v5866 = vadd.f32 %v5692, %v5850
      %v5867 = vadd.f32 %v5693, %v5851
      %v5868 = vadd.f32 %v5694, %v5852
      %v5869 = vadd.f32 %v5695, %v5853
      %5870 = vrot.lane.b32.xlu0 %v4717, 112
      %v5871 = vpop.permute.xlu0 %5870
      %5872 = vrot.lane.b32.xlu0 %v4719, 112
      %v5873 = vpop.permute.xlu0 %5872
      %5874 = vrot.lane.b32.xlu0 %v4721, 112
      %v5875 = vpop.permute.xlu0 %5874
      %5876 = vrot.lane.b32.xlu0 %v4723, 112
      %v5877 = vpop.permute.xlu0 %5876
      %5878 = vrot.lane.b32.xlu0 %v4718, 112
      %v5879 = vpop.permute.xlu0 %5878
      %5880 = vrot.lane.b32.xlu0 %v4720, 112
      %v5881 = vpop.permute.xlu0 %5880
      %5882 = vrot.lane.b32.xlu0 %v4722, 112
      %v5883 = vpop.permute.xlu0 %5882
      %5884 = vrot.lane.b32.xlu0 %v4724, 112
      %v5885 = vpop.permute.xlu0 %5884
      %v5886 = vsel %vm1261, %v5871, %v5879
      %v5887 = vsel %vm1261, %v5873, %v5881
      %v5888 = vsel %vm1261, %v5875, %v5883
      %v5889 = vsel %vm1261, %v5877, %v5885
      %v5890 = vsel %vm1261, %v5879, %v5871
      %v5891 = vsel %vm1261, %v5881, %v5873
      %v5892 = vsel %vm1261, %v5883, %v5875
      %v5893 = vsel %vm1261, %v5885, %v5877
      %v5894 = vpack.c.bf16 %v5887, %v5886
      %v5895 = vpack.c.bf16 %v5891, %v5890
      %v5896 = vpack.c.bf16 %v5889, %v5888
      %v5897 = vpack.c.bf16 %v5893, %v5892
      %s5898 = scalar_lea.vmem %s10, 224
      %v5899 = vld [vmem:[%s5898] sm:$0xf]
      %v5900 = vld [vmem:[%s5898 + $0x4] sm:$0xf]
      %v5901 = vld [vmem:[%s5898 + $0x8] sm:$0xf]
      %v5902 = vld [vmem:[%s5898 + $0xc] sm:$0xf]
      %v5903 = vld [vmem:[%s5898 + $0x10] sm:$0xf]
      %v5904 = vld [vmem:[%s5898 + $0x14] sm:$0xf]
      %v5905 = vld [vmem:[%s5898 + $0x18] sm:$0xf]
      %v5906 = vld [vmem:[%s5898 + $0x1c] sm:$0xf]
      %v5915 = vunpack.c.l.b16 %v5899
      %v5916 = vunpack.c.l.b16 %v5900
      %v5917 = vunpack.c.l.b16 %v5901
      %v5918 = vunpack.c.l.b16 %v5902
      %v5919 = vunpack.c.l.b16 %v5903
      %v5920 = vunpack.c.l.b16 %v5904
      %v5921 = vunpack.c.l.b16 %v5905
      %v5922 = vunpack.c.l.b16 %v5906
      %v5923 = vpack.c.b16 %v5916, %v5915
      %v5924 = vpack.c.b16 %v5918, %v5917
      %v5925 = vpack.c.b16 %v5920, %v5919
      %v5926 = vpack.c.b16 %v5922, %v5921
      %v5928 = vsel %vm1592, %v5923, 0
      %v5931 = vsel %vm1592, %v5924, 0
      %v5934 = vsel %vm1592, %v5925, 0
      %v5937 = vsel %vm1592, %v5926, 0
      %5939 = vmatprep.subr.bf16.mxu0 %v5895
      %5940 = vmatpush1.bf16.msra.mxu0 %v5894
      %5941 = vmatprep.subr.bf16.mxu0 %v5897
      %5942 = vmatpush1.bf16.msra.mxu0 %v5896
      %5943 = vmatprep.subr.bf16.mxu0 0
      %5944 = vmatpush1.bf16.msra.mxu0 0
      %5945 = vmatprep.subr.bf16.mxu0 0
      %5946 = vmatpush1.bf16.msra.mxu0 0
      %5947 = vmatprep.subr.bf16.mxu0 0
      %5948 = vmatpush1.bf16.msra.mxu0 0
      %5949 = vmatprep.subr.bf16.mxu0 0
      %5950 = vmatpush1.bf16.msra.mxu0 0
      %5951 = vmatprep.subr.bf16.mxu0 0
      %5952 = vmatpush1.bf16.msra.mxu0 0
      %5953 = vmatprep.subr.bf16.mxu0 0
      %5954 = vmatpush1.bf16.msra.mxu0 0
      %5955 = vmatprep.subr.bf16.mxu0 0
      %5956 = vmatpush1.bf16.msra.mxu0 0
      %5957 = vmatprep.subr.bf16.mxu0 0
      %5958 = vmatpush1.bf16.msra.mxu0 0
      %5959 = vmatprep.subr.bf16.mxu0 0
      %5960 = vmatpush1.bf16.msra.mxu0 0
      %5961 = vmatprep.subr.bf16.mxu0 0
      %5962 = vmatpush1.bf16.msra.mxu0 0
      %5963 = vmatprep.subr.bf16.mxu0 0
      %5964 = vmatpush1.bf16.msra.mxu0 0
      %5965 = vmatprep.subr.bf16.mxu0 0
      %5966 = vmatpush1.bf16.msra.mxu0 0
      %5967 = vmatprep.subr.bf16.mxu0 0
      %5968 = vmatpush1.bf16.msra.mxu0 0
      %5969 = vmatprep.subr.bf16.mxu0 0
      %5970 = vmatpush1.bf16.msra.mxu0 0
      %5971 = vmatprep.mubr.bf16.mxu0 0
      %5972 = vmatmul.mubr.bf16.gmra.mrb[0].mxu0 %v5928
      %v5973 = vpop.f32.mrb[0].mxu0
      %v5974 = vadd.f32 0.0, %v5973
      %v5975 = vpop.f32.mrb[0].mxu0
      %v5976 = vadd.f32 0.0, %v5975
      %v5977 = vpop.f32.mrb[0].mxu0
      %v5978 = vadd.f32 0.0, %v5977
      %v5979 = vpop.f32.mrb[0].mxu0
      %v5980 = vadd.f32 0.0, %v5979
      %5981 = vmatprep.mubr.bf16.mxu0 0
      %5982 = vmatmul.mubr.bf16.gmra.mrb[0].mxu0 %v5931
      %v5983 = vpop.f32.mrb[0].mxu0
      %v5984 = vadd.f32 0.0, %v5983
      %v5985 = vpop.f32.mrb[0].mxu0
      %v5986 = vadd.f32 0.0, %v5985
      %v5987 = vpop.f32.mrb[0].mxu0
      %v5988 = vadd.f32 0.0, %v5987
      %v5989 = vpop.f32.mrb[0].mxu0
      %v5990 = vadd.f32 0.0, %v5989
      %5991 = vmatprep.mubr.bf16.mxu0 0
      %5992 = vmatmul.mubr.bf16.gmra.mrb[0].mxu0 %v5934
      %v5993 = vpop.f32.mrb[0].mxu0
      %v5994 = vadd.f32 0.0, %v5993
      %v5995 = vpop.f32.mrb[0].mxu0
      %v5996 = vadd.f32 0.0, %v5995
      %v5997 = vpop.f32.mrb[0].mxu0
      %v5998 = vadd.f32 0.0, %v5997
      %v5999 = vpop.f32.mrb[0].mxu0
      %v6000 = vadd.f32 0.0, %v5999
      %6001 = vmatprep.mubr.bf16.mxu0 0
      %6002 = vmatmul.mubr.bf16.gmra.mrb[0].mxu0 %v5937
      %v6003 = vpop.f32.mrb[0].mxu0
      %v6004 = vadd.f32 0.0, %v6003
      %v6005 = vpop.f32.mrb[0].mxu0
      %v6006 = vadd.f32 0.0, %v6005
      %v6007 = vpop.f32.mrb[0].mxu0
      %v6008 = vadd.f32 0.0, %v6007
      %v6009 = vpop.f32.mrb[0].mxu0
      %v6010 = vadd.f32 0.0, %v6009
      %6011 = vdwg.mxu0
      %v6012 = vmul.f32 %v1352, %v5974
      %v6013 = vmul.f32 %v1356, %v5976
      %v6014 = vmul.f32 %v1352, %v5978
      %v6015 = vmul.f32 %v1356, %v5980
      %v6016 = vmul.f32 %v1352, %v5984
      %v6017 = vmul.f32 %v1356, %v5986
      %v6018 = vmul.f32 %v1352, %v5988
      %v6019 = vmul.f32 %v1356, %v5990
      %v6020 = vmul.f32 %v1352, %v5994
      %v6021 = vmul.f32 %v1356, %v5996
      %v6022 = vmul.f32 %v1352, %v5998
      %v6023 = vmul.f32 %v1356, %v6000
      %v6024 = vmul.f32 %v1352, %v6004
      %v6025 = vmul.f32 %v1356, %v6006
      %v6026 = vmul.f32 %v1352, %v6008
      %v6027 = vmul.f32 %v1356, %v6010
      %v6028 = vadd.f32 %v5854, %v6012
      %v6029 = vadd.f32 %v5855, %v6013
      %v6030 = vadd.f32 %v5856, %v6014
      %v6031 = vadd.f32 %v5857, %v6015
      %v6032 = vadd.f32 %v5858, %v6016
      %v6033 = vadd.f32 %v5859, %v6017
      %v6034 = vadd.f32 %v5860, %v6018
      %v6035 = vadd.f32 %v5861, %v6019
      %v6036 = vadd.f32 %v5862, %v6020
      %v6037 = vadd.f32 %v5863, %v6021
      %v6038 = vadd.f32 %v5864, %v6022
      %v6039 = vadd.f32 %v5865, %v6023
      %v6040 = vadd.f32 %v5866, %v6024
      %v6041 = vadd.f32 %v5867, %v6025
      %v6042 = vadd.f32 %v5868, %v6026
      %v6043 = vadd.f32 %v5869, %v6027
      %6044 = vrot.lane.b32.xlu0 %v4717, 111
      %v6045 = vpop.permute.xlu0 %6044
      %6046 = vrot.lane.b32.xlu0 %v4719, 111
      %v6047 = vpop.permute.xlu0 %6046
      %6048 = vrot.lane.b32.xlu0 %v4721, 111
      %v6049 = vpop.permute.xlu0 %6048
      %6050 = vrot.lane.b32.xlu0 %v4723, 111
      %v6051 = vpop.permute.xlu0 %6050
      %6052 = vrot.lane.b32.xlu0 %v4718, 111
      %v6053 = vpop.permute.xlu0 %6052
      %6054 = vrot.lane.b32.xlu0 %v4720, 111
      %v6055 = vpop.permute.xlu0 %6054
      %6056 = vrot.lane.b32.xlu0 %v4722, 111
      %v6057 = vpop.permute.xlu0 %6056
      %6058 = vrot.lane.b32.xlu0 %v4724, 111
      %v6059 = vpop.permute.xlu0 %6058
      %v6060 = vsel %vm1379, %v6045, %v6053
      %v6061 = vsel %vm1379, %v6047, %v6055
      %v6062 = vsel %vm1379, %v6049, %v6057
      %v6063 = vsel %vm1379, %v6051, %v6059
      %v6064 = vsel %vm1379, %v6053, %v6045
      %v6065 = vsel %vm1379, %v6055, %v6047
      %v6066 = vsel %vm1379, %v6057, %v6049
      %v6067 = vsel %vm1379, %v6059, %v6051
      %v6068 = vpack.c.bf16 %v6061, %v6060
      %v6069 = vpack.c.bf16 %v6065, %v6064
      %v6070 = vpack.c.bf16 %v6063, %v6062
      %v6071 = vpack.c.bf16 %v6067, %v6066
      %s6072 = scalar_lea.vmem %s10, 256
      %v6073 = vld [vmem:[%s6072] sm:$0xf]
      %v6074 = vld [vmem:[%s6072 + $0x4] sm:$0xf]
      %v6075 = vld [vmem:[%s6072 + $0x8] sm:$0xf]
      %v6076 = vld [vmem:[%s6072 + $0xc] sm:$0xf]
      %v6077 = vld [vmem:[%s6072 + $0x10] sm:$0xf]
      %v6078 = vld [vmem:[%s6072 + $0x14] sm:$0xf]
      %v6079 = vld [vmem:[%s6072 + $0x18] sm:$0xf]
      %v6080 = vld [vmem:[%s6072 + $0x1c] sm:$0xf]
      %v6089 = vunpack.c.l.b16 %v6073
      %v6090 = vunpack.c.l.b16 %v6074
      %v6091 = vunpack.c.l.b16 %v6075
      %v6092 = vunpack.c.l.b16 %v6076
      %v6093 = vunpack.c.l.b16 %v6077
      %v6094 = vunpack.c.l.b16 %v6078
      %v6095 = vunpack.c.l.b16 %v6079
      %v6096 = vunpack.c.l.b16 %v6080
      %v6097 = vpack.c.b16 %v6090, %v6089
      %v6098 = vpack.c.b16 %v6092, %v6091
      %v6099 = vpack.c.b16 %v6094, %v6093
      %v6100 = vpack.c.b16 %v6096, %v6095
      %v6102 = vsel %vm1592, %v6097, 0
      %v6105 = vsel %vm1592, %v6098, 0
      %v6108 = vsel %vm1592, %v6099, 0
      %v6111 = vsel %vm1592, %v6100, 0
      %6113 = vmatprep.subr.bf16.mxu0 %v6069
      %6114 = vmatpush1.bf16.msra.mxu0 %v6068
      %6115 = vmatprep.subr.bf16.mxu0 %v6071
      %6116 = vmatpush1.bf16.msra.mxu0 %v6070
      %6117 = vmatprep.subr.bf16.mxu0 0
      %6118 = vmatpush1.bf16.msra.mxu0 0
      %6119 = vmatprep.subr.bf16.mxu0 0
      %6120 = vmatpush1.bf16.msra.mxu0 0
      %6121 = vmatprep.subr.bf16.mxu0 0
      %6122 = vmatpush1.bf16.msra.mxu0 0
      %6123 = vmatprep.subr.bf16.mxu0 0
      %6124 = vmatpush1.bf16.msra.mxu0 0
      %6125 = vmatprep.subr.bf16.mxu0 0
      %6126 = vmatpush1.bf16.msra.mxu0 0
      %6127 = vmatprep.subr.bf16.mxu0 0
      %6128 = vmatpush1.bf16.msra.mxu0 0
      %6129 = vmatprep.subr.bf16.mxu0 0
      %6130 = vmatpush1.bf16.msra.mxu0 0
      %6131 = vmatprep.subr.bf16.mxu0 0
      %6132 = vmatpush1.bf16.msra.mxu0 0
      %6133 = vmatprep.subr.bf16.mxu0 0
      %6134 = vmatpush1.bf16.msra.mxu0 0
      %6135 = vmatprep.subr.bf16.mxu0 0
      %6136 = vmatpush1.bf16.msra.mxu0 0
      %6137 = vmatprep.subr.bf16.mxu0 0
      %6138 = vmatpush1.bf16.msra.mxu0 0
      %6139 = vmatprep.subr.bf16.mxu0 0
      %6140 = vmatpush1.bf16.msra.mxu0 0
      %6141 = vmatprep.subr.bf16.mxu0 0
      %6142 = vmatpush1.bf16.msra.mxu0 0
      %6143 = vmatprep.subr.bf16.mxu0 0
      %6144 = vmatpush1.bf16.msra.mxu0 0
      %6145 = vmatprep.mubr.bf16.mxu0 0
      %6146 = vmatmul.mubr.bf16.gmra.mrb[0].mxu0 %v6102
      %v6147 = vpop.f32.mrb[0].mxu0
      %v6148 = vadd.f32 0.0, %v6147
      %v6149 = vpop.f32.mrb[0].mxu0
      %v6150 = vadd.f32 0.0, %v6149
      %v6151 = vpop.f32.mrb[0].mxu0
      %v6152 = vadd.f32 0.0, %v6151
      %v6153 = vpop.f32.mrb[0].mxu0
      %v6154 = vadd.f32 0.0, %v6153
      %6155 = vmatprep.mubr.bf16.mxu0 0
      %6156 = vmatmul.mubr.bf16.gmra.mrb[0].mxu0 %v6105
      %v6157 = vpop.f32.mrb[0].mxu0
      %v6158 = vadd.f32 0.0, %v6157
      %v6159 = vpop.f32.mrb[0].mxu0
      %v6160 = vadd.f32 0.0, %v6159
      %v6161 = vpop.f32.mrb[0].mxu0
      %v6162 = vadd.f32 0.0, %v6161
      %v6163 = vpop.f32.mrb[0].mxu0
      %v6164 = vadd.f32 0.0, %v6163
      %6165 = vmatprep.mubr.bf16.mxu0 0
      %6166 = vmatmul.mubr.bf16.gmra.mrb[0].mxu0 %v6108
      %v6167 = vpop.f32.mrb[0].mxu0
      %v6168 = vadd.f32 0.0, %v6167
      %v6169 = vpop.f32.mrb[0].mxu0
      %v6170 = vadd.f32 0.0, %v6169
      %v6171 = vpop.f32.mrb[0].mxu0
      %v6172 = vadd.f32 0.0, %v6171
      %v6173 = vpop.f32.mrb[0].mxu0
      %v6174 = vadd.f32 0.0, %v6173
      %6175 = vmatprep.mubr.bf16.mxu0 0
      %6176 = vmatmul.mubr.bf16.gmra.mrb[0].mxu0 %v6111
      %v6177 = vpop.f32.mrb[0].mxu0
      %v6178 = vadd.f32 0.0, %v6177
      %v6179 = vpop.f32.mrb[0].mxu0
      %v6180 = vadd.f32 0.0, %v6179
      %v6181 = vpop.f32.mrb[0].mxu0
      %v6182 = vadd.f32 0.0, %v6181
      %v6183 = vpop.f32.mrb[0].mxu0
      %v6184 = vadd.f32 0.0, %v6183
      %6185 = vdwg.mxu0
      %v6186 = vmul.f32 %v1470, %v6148
      %v6187 = vmul.f32 %v1474, %v6150
      %v6188 = vmul.f32 %v1470, %v6152
      %v6189 = vmul.f32 %v1474, %v6154
      %v6190 = vmul.f32 %v1470, %v6158
      %v6191 = vmul.f32 %v1474, %v6160
      %v6192 = vmul.f32 %v1470, %v6162
      %v6193 = vmul.f32 %v1474, %v6164
      %v6194 = vmul.f32 %v1470, %v6168
      %v6195 = vmul.f32 %v1474, %v6170
      %v6196 = vmul.f32 %v1470, %v6172
      %v6197 = vmul.f32 %v1474, %v6174
      %v6198 = vmul.f32 %v1470, %v6178
      %v6199 = vmul.f32 %v1474, %v6180
      %v6200 = vmul.f32 %v1470, %v6182
      %v6201 = vmul.f32 %v1474, %v6184
      %v6202 = vadd.f32 %v6028, %v6186
      %v6203 = vadd.f32 %v6029, %v6187
      %v6204 = vadd.f32 %v6030, %v6188
      %v6205 = vadd.f32 %v6031, %v6189
      %v6206 = vadd.f32 %v6032, %v6190
      %v6207 = vadd.f32 %v6033, %v6191
      %v6208 = vadd.f32 %v6034, %v6192
      %v6209 = vadd.f32 %v6035, %v6193
      %v6210 = vadd.f32 %v6036, %v6194
      %v6211 = vadd.f32 %v6037, %v6195
      %v6212 = vadd.f32 %v6038, %v6196
      %v6213 = vadd.f32 %v6039, %v6197
      %v6214 = vadd.f32 %v6040, %v6198
      %v6215 = vadd.f32 %v6041, %v6199
      %v6216 = vadd.f32 %v6042, %v6200
      %v6217 = vadd.f32 %v6043, %v6201
      %v6218 = vld [vmem:[%s11] sm:$0xff]
      %v6219 = vld [vmem:[%s11 + $0x8] sm:$0xff]
      %v6220 = vld [vmem:[%s11 + $0x10] sm:$0xff]
      %v6221 = vld [vmem:[%s11 + $0x18] sm:$0xff]
      %v6222 = vld [vmem:[%s11 + $0x20] sm:$0xff]
      %v6223 = vld [vmem:[%s11 + $0x28] sm:$0xff]
      %v6224 = vld [vmem:[%s11 + $0x30] sm:$0xff]
      %v6225 = vld [vmem:[%s11 + $0x38] sm:$0xff]
      %6227 = vset.pattern.permute.xlu0 0
      %6228 = vperm.xlu0 %6227, %v6218
      %v6229 = vpop.permute.xlu0 %6228
      %6232 = vset.pattern.permute.xlu0 0
      %6233 = vperm.xlu0 %6232, %v6219
      %v6234 = vpop.permute.xlu0 %6233
      %6237 = vset.pattern.permute.xlu0 0
      %6238 = vperm.xlu0 %6237, %v6220
      %v6239 = vpop.permute.xlu0 %6238
      %6242 = vset.pattern.permute.xlu0 0
      %6243 = vperm.xlu0 %6242, %v6221
      %v6244 = vpop.permute.xlu0 %6243
      %6247 = vset.pattern.permute.xlu0 0
      %6248 = vperm.xlu0 %6247, %v6222
      %v6249 = vpop.permute.xlu0 %6248
      %6252 = vset.pattern.permute.xlu0 0
      %6253 = vperm.xlu0 %6252, %v6223
      %v6254 = vpop.permute.xlu0 %6253
      %6257 = vset.pattern.permute.xlu0 0
      %6258 = vperm.xlu0 %6257, %v6224
      %v6259 = vpop.permute.xlu0 %6258
      %6262 = vset.pattern.permute.xlu0 0
      %6263 = vperm.xlu0 %6262, %v6225
      %v6264 = vpop.permute.xlu0 %6263
      %v6266 = vadd.f32 %v6202, %v6229
      %v6267 = vadd.f32 %v6203, %v6229
      %v6268 = vadd.f32 %v6204, %v6234
      %v6269 = vadd.f32 %v6205, %v6234
      %v6270 = vadd.f32 %v6206, %v6239
      %v6271 = vadd.f32 %v6207, %v6239
      %v6272 = vadd.f32 %v6208, %v6244
      %v6273 = vadd.f32 %v6209, %v6244
      %v6274 = vadd.f32 %v6210, %v6249
      %v6275 = vadd.f32 %v6211, %v6249
      %v6276 = vadd.f32 %v6212, %v6254
      %v6277 = vadd.f32 %v6213, %v6254
      %v6278 = vadd.f32 %v6214, %v6259
      %v6279 = vadd.f32 %v6215, %v6259
      %v6280 = vadd.f32 %v6216, %v6264
      %v6281 = vadd.f32 %v6217, %v6264
      %v6282 = vmul.f32 %v6266, 0.1
      %v6283 = vmul.f32 %v6267, 0.1
      %v6284 = vmul.f32 %v6268, 0.1
      %v6285 = vmul.f32 %v6269, 0.1
      %v6286 = vmul.f32 %v6270, 0.1
      %v6287 = vmul.f32 %v6271, 0.1
      %v6288 = vmul.f32 %v6272, 0.1
      %v6289 = vmul.f32 %v6273, 0.1
      %v6290 = vmul.f32 %v6274, 0.1
      %v6291 = vmul.f32 %v6275, 0.1
      %v6292 = vmul.f32 %v6276, 0.1
      %v6293 = vmul.f32 %v6277, 0.1
      %v6294 = vmul.f32 %v6278, 0.1
      %v6295 = vmul.f32 %v6279, 0.1
      %v6296 = vmul.f32 %v6280, 0.1
      %v6297 = vmul.f32 %v6281, 0.1
      %v6298 = vmax.f32 %v6266, %v6282
      %v6299 = vmax.f32 %v6267, %v6283
      %v6300 = vmax.f32 %v6268, %v6284
      %v6301 = vmax.f32 %v6269, %v6285
      %v6302 = vmax.f32 %v6270, %v6286
      %v6303 = vmax.f32 %v6271, %v6287
      %v6304 = vmax.f32 %v6272, %v6288
      %v6305 = vmax.f32 %v6273, %v6289
      %v6306 = vmax.f32 %v6274, %v6290
      %v6307 = vmax.f32 %v6275, %v6291
      %v6308 = vmax.f32 %v6276, %v6292
      %v6309 = vmax.f32 %v6277, %v6293
      %v6310 = vmax.f32 %v6278, %v6294
      %v6311 = vmax.f32 %v6279, %v6295
      %v6312 = vmax.f32 %v6280, %v6296
      %v6313 = vmax.f32 %v6281, %v6297
      %v6314 = vpack.c.bf16 %v6300, %v6298
      %v6315 = vpack.c.bf16 %v6301, %v6299
      %v6316 = vpack.c.bf16 %v6304, %v6302
      %v6317 = vpack.c.bf16 %v6305, %v6303
      %v6318 = vpack.c.bf16 %v6308, %v6306
      %v6319 = vpack.c.bf16 %v6309, %v6307
      %v6320 = vpack.c.bf16 %v6312, %v6310
      %v6321 = vpack.c.bf16 %v6313, %v6311
      %s6322 = scalar_lea.vmem %s12, 64
      %v6323 = vld [vmem:[%s6322] sm:$0xf]
      %v6324 = vld [vmem:[%s6322 + $0x4] sm:$0xf]
      %v6325 = vld [vmem:[%s6322 + $0x8] sm:$0xf]
      %v6326 = vld [vmem:[%s6322 + $0xc] sm:$0xf]
      %6327 = vrot.lane.b32.xlu0 %v6298, 17
      %v6328 = vpop.permute.xlu0 %6327
      %6329 = vrot.lane.b32.xlu0 %v6300, 17
      %v6330 = vpop.permute.xlu0 %6329
      %6331 = vrot.lane.b32.xlu0 %v6302, 17
      %v6332 = vpop.permute.xlu0 %6331
      %6333 = vrot.lane.b32.xlu0 %v6304, 17
      %v6334 = vpop.permute.xlu0 %6333
      %6335 = vrot.lane.b32.xlu0 %v6306, 17
      %v6336 = vpop.permute.xlu0 %6335
      %6337 = vrot.lane.b32.xlu0 %v6308, 17
      %v6338 = vpop.permute.xlu0 %6337
      %6339 = vrot.lane.b32.xlu0 %v6310, 17
      %v6340 = vpop.permute.xlu0 %6339
      %6341 = vrot.lane.b32.xlu0 %v6312, 17
      %v6342 = vpop.permute.xlu0 %6341
      %6343 = vrot.lane.b32.xlu0 %v6299, 17
      %v6344 = vpop.permute.xlu0 %6343
      %6345 = vrot.lane.b32.xlu0 %v6301, 17
      %v6346 = vpop.permute.xlu0 %6345
      %6347 = vrot.lane.b32.xlu0 %v6303, 17
      %v6348 = vpop.permute.xlu0 %6347
      %6349 = vrot.lane.b32.xlu0 %v6305, 17
      %v6350 = vpop.permute.xlu0 %6349
      %6351 = vrot.lane.b32.xlu0 %v6307, 17
      %v6352 = vpop.permute.xlu0 %6351
      %6353 = vrot.lane.b32.xlu0 %v6309, 17
      %v6354 = vpop.permute.xlu0 %6353
      %6355 = vrot.lane.b32.xlu0 %v6311, 17
      %v6356 = vpop.permute.xlu0 %6355
      %6357 = vrot.lane.b32.xlu0 %v6313, 17
      %v6358 = vpop.permute.xlu0 %6357
      %v6359 = vsel %vm486, %v6328, %v6344
      %v6360 = vsel %vm486, %v6330, %v6346
      %v6361 = vsel %vm486, %v6332, %v6348
      %v6362 = vsel %vm486, %v6334, %v6350
      %v6363 = vsel %vm486, %v6336, %v6352
      %v6364 = vsel %vm486, %v6338, %v6354
      %v6365 = vsel %vm486, %v6340, %v6356
      %v6366 = vsel %vm486, %v6342, %v6358
      %v6367 = vsel %vm486, %v6344, %v6328
      %v6368 = vsel %vm486, %v6346, %v6330
      %v6369 = vsel %vm486, %v6348, %v6332
      %v6370 = vsel %vm486, %v6350, %v6334
      %v6371 = vsel %vm486, %v6352, %v6336
      %v6372 = vsel %vm486, %v6354, %v6338
      %v6373 = vsel %vm486, %v6356, %v6340
      %v6374 = vsel %vm486, %v6358, %v6342
      %v6375 = vpack.c.bf16 %v6368, %v6367
      %v6376 = vpack.c.bf16 %v6360, %v6359
      %v6377 = vpack.c.bf16 %v6370, %v6369
      %v6378 = vpack.c.bf16 %v6362, %v6361
      %v6379 = vpack.c.bf16 %v6372, %v6371
      %v6380 = vpack.c.bf16 %v6364, %v6363
      %v6381 = vpack.c.bf16 %v6374, %v6373
      %v6382 = vpack.c.bf16 %v6366, %v6365
      %v6383 = vld [vmem:[%s12] sm:$0xf]
      %v6384 = vld [vmem:[%s12 + $0x4] sm:$0xf]
      %v6385 = vld [vmem:[%s12 + $0x8] sm:$0xf]
      %v6386 = vld [vmem:[%s12 + $0xc] sm:$0xf]
      %v6391 = vunpack.c.l.b16 %v6383
      %v6392 = vunpack.c.l.b16 %v6384
      %v6393 = vunpack.c.l.b16 %v6385
      %v6394 = vunpack.c.l.b16 %v6386
      %v6395 = vpack.c.b16 %v6392, %v6391
      %v6396 = vpack.c.b16 %v6394, %v6393
      %vm6397 = vcmask 523264
      %v6399 = vsel %vm6397, %v6395, 0
      %v6402 = vsel %vm6397, %v6396, 0
      %6404 = vmatprep.subr.bf16.mxu0 %v6376
      %6405 = vmatpush1.bf16.msra.mxu0 %v6375
      %6406 = vmatprep.subr.bf16.mxu0 %v6378
      %6407 = vmatpush1.bf16.msra.mxu0 %v6377
      %6408 = vmatprep.subr.bf16.mxu0 %v6380
      %6409 = vmatpush1.bf16.msra.mxu0 %v6379
      %6410 = vmatprep.subr.bf16.mxu0 %v6382
      %6411 = vmatpush1.bf16.msra.mxu0 %v6381
      %6412 = vmatprep.subr.bf16.mxu0 0
      %6413 = vmatpush1.bf16.msra.mxu0 0
      %6414 = vmatprep.subr.bf16.mxu0 0
      %6415 = vmatpush1.bf16.msra.mxu0 0
      %6416 = vmatprep.subr.bf16.mxu0 0
      %6417 = vmatpush1.bf16.msra.mxu0 0
      %6418 = vmatprep.subr.bf16.mxu0 0
      %6419 = vmatpush1.bf16.msra.mxu0 0
      %6420 = vmatprep.subr.bf16.mxu0 0
      %6421 = vmatpush1.bf16.msra.mxu0 0
      %6422 = vmatprep.subr.bf16.mxu0 0
      %6423 = vmatpush1.bf16.msra.mxu0 0
      %6424 = vmatprep.subr.bf16.mxu0 0
      %6425 = vmatpush1.bf16.msra.mxu0 0
      %6426 = vmatprep.subr.bf16.mxu0 0
      %6427 = vmatpush1.bf16.msra.mxu0 0
      %6428 = vmatprep.subr.bf16.mxu0 0
      %6429 = vmatpush1.bf16.msra.mxu0 0
      %6430 = vmatprep.subr.bf16.mxu0 0
      %6431 = vmatpush1.bf16.msra.mxu0 0
      %6432 = vmatprep.subr.bf16.mxu0 0
      %6433 = vmatpush1.bf16.msra.mxu0 0
      %6434 = vmatprep.subr.bf16.mxu0 0
      %6435 = vmatpush1.bf16.msra.mxu0 0
      %6436 = vmatprep.mubr.bf16.mxu0 0
      %6437 = vmatmul.mubr.bf16.gmra.mrb[0].mxu0 %v6399
      %v6438 = vpop.f32.mrb[0].mxu0
      %v6439 = vadd.f32 0.0, %v6438
      %v6440 = vpop.f32.mrb[0].mxu0
      %v6441 = vadd.f32 0.0, %v6440
      %v6442 = vpop.f32.mrb[0].mxu0
      %v6443 = vadd.f32 0.0, %v6442
      %v6444 = vpop.f32.mrb[0].mxu0
      %v6445 = vadd.f32 0.0, %v6444
      %6446 = vmatprep.mubr.bf16.mxu0 0
      %6447 = vmatmul.mubr.bf16.gmra.mrb[0].mxu0 %v6402
      %v6448 = vpop.f32.mrb[0].mxu0
      %v6449 = vadd.f32 0.0, %v6448
      %v6450 = vpop.f32.mrb[0].mxu0
      %v6451 = vadd.f32 0.0, %v6450
      %v6452 = vpop.f32.mrb[0].mxu0
      %v6453 = vadd.f32 0.0, %v6452
      %v6454 = vpop.f32.mrb[0].mxu0
      %v6455 = vadd.f32 0.0, %v6454
      %6456 = vdwg.mxu0
      %v6457 = vmul.f32 %v577, %v6439
      %v6458 = vmul.f32 %v581, %v6441
      %v6459 = vmul.f32 %v577, %v6443
      %v6460 = vmul.f32 %v581, %v6445
      %v6461 = vmul.f32 %v577, %v6449
      %v6462 = vmul.f32 %v581, %v6451
      %v6463 = vmul.f32 %v577, %v6453
      %v6464 = vmul.f32 %v581, %v6455
      %v6469 = vunpack.c.l.b16 %v6323
      %v6470 = vunpack.c.l.b16 %v6324
      %v6471 = vunpack.c.l.b16 %v6325
      %v6472 = vunpack.c.l.b16 %v6326
      %v6473 = vpack.c.b16 %v6470, %v6469
      %v6474 = vpack.c.b16 %v6472, %v6471
      %v6476 = vsel %vm6397, %v6473, 0
      %v6479 = vsel %vm6397, %v6474, 0
      %6481 = vmatprep.subr.bf16.mxu0 %v6315
      %6482 = vmatpush1.bf16.msra.mxu0 %v6314
      %6483 = vmatprep.subr.bf16.mxu0 %v6317
      %6484 = vmatpush1.bf16.msra.mxu0 %v6316
      %6485 = vmatprep.subr.bf16.mxu0 %v6319
      %6486 = vmatpush1.bf16.msra.mxu0 %v6318
      %6487 = vmatprep.subr.bf16.mxu0 %v6321
      %6488 = vmatpush1.bf16.msra.mxu0 %v6320
      %6489 = vmatprep.subr.bf16.mxu0 0
      %6490 = vmatpush1.bf16.msra.mxu0 0
      %6491 = vmatprep.subr.bf16.mxu0 0
      %6492 = vmatpush1.bf16.msra.mxu0 0
      %6493 = vmatprep.subr.bf16.mxu0 0
      %6494 = vmatpush1.bf16.msra.mxu0 0
      %6495 = vmatprep.subr.bf16.mxu0 0
      %6496 = vmatpush1.bf16.msra.mxu0 0
      %6497 = vmatprep.subr.bf16.mxu0 0
      %6498 = vmatpush1.bf16.msra.mxu0 0
      %6499 = vmatprep.subr.bf16.mxu0 0
      %6500 = vmatpush1.bf16.msra.mxu0 0
      %6501 = vmatprep.subr.bf16.mxu0 0
      %6502 = vmatpush1.bf16.msra.mxu0 0
      %6503 = vmatprep.subr.bf16.mxu0 0
      %6504 = vmatpush1.bf16.msra.mxu0 0
      %6505 = vmatprep.subr.bf16.mxu0 0
      %6506 = vmatpush1.bf16.msra.mxu0 0
      %6507 = vmatprep.subr.bf16.mxu0 0
      %6508 = vmatpush1.bf16.msra.mxu0 0
      %6509 = vmatprep.subr.bf16.mxu0 0
      %6510 = vmatpush1.bf16.msra.mxu0 0
      %6511 = vmatprep.subr.bf16.mxu0 0
      %6512 = vmatpush1.bf16.msra.mxu0 0
      %6513 = vmatprep.mubr.bf16.mxu0 0
      %6514 = vmatmul.mubr.bf16.gmra.mrb[0].mxu0 %v6476
      %v6515 = vpop.f32.mrb[0].mxu0
      %v6516 = vadd.f32 %v6457, %v6515
      %v6517 = vpop.f32.mrb[0].mxu0
      %v6518 = vadd.f32 %v6458, %v6517
      %v6519 = vpop.f32.mrb[0].mxu0
      %v6520 = vadd.f32 %v6459, %v6519
      %v6521 = vpop.f32.mrb[0].mxu0
      %v6522 = vadd.f32 %v6460, %v6521
      %6523 = vmatprep.mubr.bf16.mxu0 0
      %6524 = vmatmul.mubr.bf16.gmra.mrb[0].mxu0 %v6479
      %v6525 = vpop.f32.mrb[0].mxu0
      %v6526 = vadd.f32 %v6461, %v6525
      %v6527 = vpop.f32.mrb[0].mxu0
      %v6528 = vadd.f32 %v6462, %v6527
      %v6529 = vpop.f32.mrb[0].mxu0
      %v6530 = vadd.f32 %v6463, %v6529
      %v6531 = vpop.f32.mrb[0].mxu0
      %v6532 = vadd.f32 %v6464, %v6531
      %6533 = vdwg.mxu0
      %6534 = vrot.lane.b32.xlu0 %v6298, 16
      %v6535 = vpop.permute.xlu0 %6534
      %6536 = vrot.lane.b32.xlu0 %v6300, 16
      %v6537 = vpop.permute.xlu0 %6536
      %6538 = vrot.lane.b32.xlu0 %v6302, 16
      %v6539 = vpop.permute.xlu0 %6538
      %6540 = vrot.lane.b32.xlu0 %v6304, 16
      %v6541 = vpop.permute.xlu0 %6540
      %6542 = vrot.lane.b32.xlu0 %v6306, 16
      %v6543 = vpop.permute.xlu0 %6542
      %6544 = vrot.lane.b32.xlu0 %v6308, 16
      %v6545 = vpop.permute.xlu0 %6544
      %6546 = vrot.lane.b32.xlu0 %v6310, 16
      %v6547 = vpop.permute.xlu0 %6546
      %6548 = vrot.lane.b32.xlu0 %v6312, 16
      %v6549 = vpop.permute.xlu0 %6548
      %6550 = vrot.lane.b32.xlu0 %v6299, 16
      %v6551 = vpop.permute.xlu0 %6550
      %6552 = vrot.lane.b32.xlu0 %v6301, 16
      %v6553 = vpop.permute.xlu0 %6552
      %6554 = vrot.lane.b32.xlu0 %v6303, 16
      %v6555 = vpop.permute.xlu0 %6554
      %6556 = vrot.lane.b32.xlu0 %v6305, 16
      %v6557 = vpop.permute.xlu0 %6556
      %6558 = vrot.lane.b32.xlu0 %v6307, 16
      %v6559 = vpop.permute.xlu0 %6558
      %6560 = vrot.lane.b32.xlu0 %v6309, 16
      %v6561 = vpop.permute.xlu0 %6560
      %6562 = vrot.lane.b32.xlu0 %v6311, 16
      %v6563 = vpop.permute.xlu0 %6562
      %6564 = vrot.lane.b32.xlu0 %v6313, 16
      %v6565 = vpop.permute.xlu0 %6564
      %v6566 = vsel %vm671, %v6535, %v6551
      %v6567 = vsel %vm671, %v6537, %v6553
      %v6568 = vsel %vm671, %v6539, %v6555
      %v6569 = vsel %vm671, %v6541, %v6557
      %v6570 = vsel %vm671, %v6543, %v6559
      %v6571 = vsel %vm671, %v6545, %v6561
      %v6572 = vsel %vm671, %v6547, %v6563
      %v6573 = vsel %vm671, %v6549, %v6565
      %v6574 = vsel %vm671, %v6551, %v6535
      %v6575 = vsel %vm671, %v6553, %v6537
      %v6576 = vsel %vm671, %v6555, %v6539
      %v6577 = vsel %vm671, %v6557, %v6541
      %v6578 = vsel %vm671, %v6559, %v6543
      %v6579 = vsel %vm671, %v6561, %v6545
      %v6580 = vsel %vm671, %v6563, %v6547
      %v6581 = vsel %vm671, %v6565, %v6549
      %v6582 = vpack.c.bf16 %v6575, %v6574
      %v6583 = vpack.c.bf16 %v6567, %v6566
      %v6584 = vpack.c.bf16 %v6577, %v6576
      %v6585 = vpack.c.bf16 %v6569, %v6568
      %v6586 = vpack.c.bf16 %v6579, %v6578
      %v6587 = vpack.c.bf16 %v6571, %v6570
      %v6588 = vpack.c.bf16 %v6581, %v6580
      %v6589 = vpack.c.bf16 %v6573, %v6572
      %s6590 = scalar_lea.vmem %s12, 16
      %v6591 = vld [vmem:[%s6590] sm:$0xf]
      %v6592 = vld [vmem:[%s6590 + $0x4] sm:$0xf]
      %v6593 = vld [vmem:[%s6590 + $0x8] sm:$0xf]
      %v6594 = vld [vmem:[%s6590 + $0xc] sm:$0xf]
      %v6599 = vunpack.c.l.b16 %v6591
      %v6600 = vunpack.c.l.b16 %v6592
      %v6601 = vunpack.c.l.b16 %v6593
      %v6602 = vunpack.c.l.b16 %v6594
      %v6603 = vpack.c.b16 %v6600, %v6599
      %v6604 = vpack.c.b16 %v6602, %v6601
      %v6606 = vsel %vm6397, %v6603, 0
      %v6609 = vsel %vm6397, %v6604, 0
      %6611 = vmatprep.subr.bf16.mxu0 %v6583
      %6612 = vmatpush1.bf16.msra.mxu0 %v6582
      %6613 = vmatprep.subr.bf16.mxu0 %v6585
      %6614 = vmatpush1.bf16.msra.mxu0 %v6584
      %6615 = vmatprep.subr.bf16.mxu0 %v6587
      %6616 = vmatpush1.bf16.msra.mxu0 %v6586
      %6617 = vmatprep.subr.bf16.mxu0 %v6589
      %6618 = vmatpush1.bf16.msra.mxu0 %v6588
      %6619 = vmatprep.subr.bf16.mxu0 0
      %6620 = vmatpush1.bf16.msra.mxu0 0
      %6621 = vmatprep.subr.bf16.mxu0 0
      %6622 = vmatpush1.bf16.msra.mxu0 0
      %6623 = vmatprep.subr.bf16.mxu0 0
      %6624 = vmatpush1.bf16.msra.mxu0 0
      %6625 = vmatprep.subr.bf16.mxu0 0
      %6626 = vmatpush1.bf16.msra.mxu0 0
      %6627 = vmatprep.subr.bf16.mxu0 0
      %6628 = vmatpush1.bf16.msra.mxu0 0
      %6629 = vmatprep.subr.bf16.mxu0 0
      %6630 = vmatpush1.bf16.msra.mxu0 0
      %6631 = vmatprep.subr.bf16.mxu0 0
      %6632 = vmatpush1.bf16.msra.mxu0 0
      %6633 = vmatprep.subr.bf16.mxu0 0
      %6634 = vmatpush1.bf16.msra.mxu0 0
      %6635 = vmatprep.subr.bf16.mxu0 0
      %6636 = vmatpush1.bf16.msra.mxu0 0
      %6637 = vmatprep.subr.bf16.mxu0 0
      %6638 = vmatpush1.bf16.msra.mxu0 0
      %6639 = vmatprep.subr.bf16.mxu0 0
      %6640 = vmatpush1.bf16.msra.mxu0 0
      %6641 = vmatprep.subr.bf16.mxu0 0
      %6642 = vmatpush1.bf16.msra.mxu0 0
      %6643 = vmatprep.mubr.bf16.mxu0 0
      %6644 = vmatmul.mubr.bf16.gmra.mrb[0].mxu0 %v6606
      %v6645 = vpop.f32.mrb[0].mxu0
      %v6646 = vadd.f32 0.0, %v6645
      %v6647 = vpop.f32.mrb[0].mxu0
      %v6648 = vadd.f32 0.0, %v6647
      %v6649 = vpop.f32.mrb[0].mxu0
      %v6650 = vadd.f32 0.0, %v6649
      %v6651 = vpop.f32.mrb[0].mxu0
      %v6652 = vadd.f32 0.0, %v6651
      %6653 = vmatprep.mubr.bf16.mxu0 0
      %6654 = vmatmul.mubr.bf16.gmra.mrb[0].mxu0 %v6609
      %v6655 = vpop.f32.mrb[0].mxu0
      %v6656 = vadd.f32 0.0, %v6655
      %v6657 = vpop.f32.mrb[0].mxu0
      %v6658 = vadd.f32 0.0, %v6657
      %v6659 = vpop.f32.mrb[0].mxu0
      %v6660 = vadd.f32 0.0, %v6659
      %v6661 = vpop.f32.mrb[0].mxu0
      %v6662 = vadd.f32 0.0, %v6661
      %6663 = vdwg.mxu0
      %v6664 = vmul.f32 %v762, %v6646
      %v6665 = vmul.f32 %v766, %v6648
      %v6666 = vmul.f32 %v762, %v6650
      %v6667 = vmul.f32 %v766, %v6652
      %v6668 = vmul.f32 %v762, %v6656
      %v6669 = vmul.f32 %v766, %v6658
      %v6670 = vmul.f32 %v762, %v6660
      %v6671 = vmul.f32 %v766, %v6662
      %v6672 = vadd.f32 %v6516, %v6664
      %v6673 = vadd.f32 %v6518, %v6665
      %v6674 = vadd.f32 %v6520, %v6666
      %v6675 = vadd.f32 %v6522, %v6667
      %v6676 = vadd.f32 %v6526, %v6668
      %v6677 = vadd.f32 %v6528, %v6669
      %v6678 = vadd.f32 %v6530, %v6670
      %v6679 = vadd.f32 %v6532, %v6671
      %6680 = vrot.lane.b32.xlu0 %v6298, 15
      %v6681 = vpop.permute.xlu0 %6680
      %6682 = vrot.lane.b32.xlu0 %v6300, 15
      %v6683 = vpop.permute.xlu0 %6682
      %6684 = vrot.lane.b32.xlu0 %v6302, 15
      %v6685 = vpop.permute.xlu0 %6684
      %6686 = vrot.lane.b32.xlu0 %v6304, 15
      %v6687 = vpop.permute.xlu0 %6686
      %6688 = vrot.lane.b32.xlu0 %v6306, 15
      %v6689 = vpop.permute.xlu0 %6688
      %6690 = vrot.lane.b32.xlu0 %v6308, 15
      %v6691 = vpop.permute.xlu0 %6690
      %6692 = vrot.lane.b32.xlu0 %v6310, 15
      %v6693 = vpop.permute.xlu0 %6692
      %6694 = vrot.lane.b32.xlu0 %v6312, 15
      %v6695 = vpop.permute.xlu0 %6694
      %6696 = vrot.lane.b32.xlu0 %v6299, 15
      %v6697 = vpop.permute.xlu0 %6696
      %6698 = vrot.lane.b32.xlu0 %v6301, 15
      %v6699 = vpop.permute.xlu0 %6698
      %6700 = vrot.lane.b32.xlu0 %v6303, 15
      %v6701 = vpop.permute.xlu0 %6700
      %6702 = vrot.lane.b32.xlu0 %v6305, 15
      %v6703 = vpop.permute.xlu0 %6702
      %6704 = vrot.lane.b32.xlu0 %v6307, 15
      %v6705 = vpop.permute.xlu0 %6704
      %6706 = vrot.lane.b32.xlu0 %v6309, 15
      %v6707 = vpop.permute.xlu0 %6706
      %6708 = vrot.lane.b32.xlu0 %v6311, 15
      %v6709 = vpop.permute.xlu0 %6708
      %6710 = vrot.lane.b32.xlu0 %v6313, 15
      %v6711 = vpop.permute.xlu0 %6710
      %v6712 = vsel %vm789, %v6681, %v6697
      %v6713 = vsel %vm789, %v6683, %v6699
      %v6714 = vsel %vm789, %v6685, %v6701
      %v6715 = vsel %vm789, %v6687, %v6703
      %v6716 = vsel %vm789, %v6689, %v6705
      %v6717 = vsel %vm789, %v6691, %v6707
      %v6718 = vsel %vm789, %v6693, %v6709
      %v6719 = vsel %vm789, %v6695, %v6711
      %v6720 = vsel %vm789, %v6697, %v6681
      %v6721 = vsel %vm789, %v6699, %v6683
      %v6722 = vsel %vm789, %v6701, %v6685
      %v6723 = vsel %vm789, %v6703, %v6687
      %v6724 = vsel %vm789, %v6705, %v6689
      %v6725 = vsel %vm789, %v6707, %v6691
      %v6726 = vsel %vm789, %v6709, %v6693
      %v6727 = vsel %vm789, %v6711, %v6695
      %v6728 = vpack.c.bf16 %v6721, %v6720
      %v6729 = vpack.c.bf16 %v6713, %v6712
      %v6730 = vpack.c.bf16 %v6723, %v6722
      %v6731 = vpack.c.bf16 %v6715, %v6714
      %v6732 = vpack.c.bf16 %v6725, %v6724
      %v6733 = vpack.c.bf16 %v6717, %v6716
      %v6734 = vpack.c.bf16 %v6727, %v6726
      %v6735 = vpack.c.bf16 %v6719, %v6718
      %s6736 = scalar_lea.vmem %s12, 32
      %v6737 = vld [vmem:[%s6736] sm:$0xf]
      %v6738 = vld [vmem:[%s6736 + $0x4] sm:$0xf]
      %v6739 = vld [vmem:[%s6736 + $0x8] sm:$0xf]
      %v6740 = vld [vmem:[%s6736 + $0xc] sm:$0xf]
      %v6745 = vunpack.c.l.b16 %v6737
      %v6746 = vunpack.c.l.b16 %v6738
      %v6747 = vunpack.c.l.b16 %v6739
      %v6748 = vunpack.c.l.b16 %v6740
      %v6749 = vpack.c.b16 %v6746, %v6745
      %v6750 = vpack.c.b16 %v6748, %v6747
      %v6752 = vsel %vm6397, %v6749, 0
      %v6755 = vsel %vm6397, %v6750, 0
      %6757 = vmatprep.subr.bf16.mxu0 %v6729
      %6758 = vmatpush1.bf16.msra.mxu0 %v6728
      %6759 = vmatprep.subr.bf16.mxu0 %v6731
      %6760 = vmatpush1.bf16.msra.mxu0 %v6730
      %6761 = vmatprep.subr.bf16.mxu0 %v6733
      %6762 = vmatpush1.bf16.msra.mxu0 %v6732
      %6763 = vmatprep.subr.bf16.mxu0 %v6735
      %6764 = vmatpush1.bf16.msra.mxu0 %v6734
      %6765 = vmatprep.subr.bf16.mxu0 0
      %6766 = vmatpush1.bf16.msra.mxu0 0
      %6767 = vmatprep.subr.bf16.mxu0 0
      %6768 = vmatpush1.bf16.msra.mxu0 0
      %6769 = vmatprep.subr.bf16.mxu0 0
      %6770 = vmatpush1.bf16.msra.mxu0 0
      %6771 = vmatprep.subr.bf16.mxu0 0
      %6772 = vmatpush1.bf16.msra.mxu0 0
      %6773 = vmatprep.subr.bf16.mxu0 0
      %6774 = vmatpush1.bf16.msra.mxu0 0
      %6775 = vmatprep.subr.bf16.mxu0 0
      %6776 = vmatpush1.bf16.msra.mxu0 0
      %6777 = vmatprep.subr.bf16.mxu0 0
      %6778 = vmatpush1.bf16.msra.mxu0 0
      %6779 = vmatprep.subr.bf16.mxu0 0
      %6780 = vmatpush1.bf16.msra.mxu0 0
      %6781 = vmatprep.subr.bf16.mxu0 0
      %6782 = vmatpush1.bf16.msra.mxu0 0
      %6783 = vmatprep.subr.bf16.mxu0 0
      %6784 = vmatpush1.bf16.msra.mxu0 0
      %6785 = vmatprep.subr.bf16.mxu0 0
      %6786 = vmatpush1.bf16.msra.mxu0 0
      %6787 = vmatprep.subr.bf16.mxu0 0
      %6788 = vmatpush1.bf16.msra.mxu0 0
      %6789 = vmatprep.mubr.bf16.mxu0 0
      %6790 = vmatmul.mubr.bf16.gmra.mrb[0].mxu0 %v6752
      %v6791 = vpop.f32.mrb[0].mxu0
      %v6792 = vadd.f32 0.0, %v6791
      %v6793 = vpop.f32.mrb[0].mxu0
      %v6794 = vadd.f32 0.0, %v6793
      %v6795 = vpop.f32.mrb[0].mxu0
      %v6796 = vadd.f32 0.0, %v6795
      %v6797 = vpop.f32.mrb[0].mxu0
      %v6798 = vadd.f32 0.0, %v6797
      %6799 = vmatprep.mubr.bf16.mxu0 0
      %6800 = vmatmul.mubr.bf16.gmra.mrb[0].mxu0 %v6755
      %v6801 = vpop.f32.mrb[0].mxu0
      %v6802 = vadd.f32 0.0, %v6801
      %v6803 = vpop.f32.mrb[0].mxu0
      %v6804 = vadd.f32 0.0, %v6803
      %v6805 = vpop.f32.mrb[0].mxu0
      %v6806 = vadd.f32 0.0, %v6805
      %v6807 = vpop.f32.mrb[0].mxu0
      %v6808 = vadd.f32 0.0, %v6807
      %6809 = vdwg.mxu0
      %v6810 = vmul.f32 %v880, %v6792
      %v6811 = vmul.f32 %v884, %v6794
      %v6812 = vmul.f32 %v880, %v6796
      %v6813 = vmul.f32 %v884, %v6798
      %v6814 = vmul.f32 %v880, %v6802
      %v6815 = vmul.f32 %v884, %v6804
      %v6816 = vmul.f32 %v880, %v6806
      %v6817 = vmul.f32 %v884, %v6808
      %v6818 = vadd.f32 %v6672, %v6810
      %v6819 = vadd.f32 %v6673, %v6811
      %v6820 = vadd.f32 %v6674, %v6812
      %v6821 = vadd.f32 %v6675, %v6813
      %v6822 = vadd.f32 %v6676, %v6814
      %v6823 = vadd.f32 %v6677, %v6815
      %v6824 = vadd.f32 %v6678, %v6816
      %v6825 = vadd.f32 %v6679, %v6817
      %6826 = vrot.lane.b32.xlu0 %v6298, 1
      %v6827 = vpop.permute.xlu0 %6826
      %6828 = vrot.lane.b32.xlu0 %v6300, 1
      %v6829 = vpop.permute.xlu0 %6828
      %6830 = vrot.lane.b32.xlu0 %v6302, 1
      %v6831 = vpop.permute.xlu0 %6830
      %6832 = vrot.lane.b32.xlu0 %v6304, 1
      %v6833 = vpop.permute.xlu0 %6832
      %6834 = vrot.lane.b32.xlu0 %v6306, 1
      %v6835 = vpop.permute.xlu0 %6834
      %6836 = vrot.lane.b32.xlu0 %v6308, 1
      %v6837 = vpop.permute.xlu0 %6836
      %6838 = vrot.lane.b32.xlu0 %v6310, 1
      %v6839 = vpop.permute.xlu0 %6838
      %6840 = vrot.lane.b32.xlu0 %v6312, 1
      %v6841 = vpop.permute.xlu0 %6840
      %6842 = vrot.lane.b32.xlu0 %v6299, 1
      %v6843 = vpop.permute.xlu0 %6842
      %6844 = vrot.lane.b32.xlu0 %v6301, 1
      %v6845 = vpop.permute.xlu0 %6844
      %6846 = vrot.lane.b32.xlu0 %v6303, 1
      %v6847 = vpop.permute.xlu0 %6846
      %6848 = vrot.lane.b32.xlu0 %v6305, 1
      %v6849 = vpop.permute.xlu0 %6848
      %6850 = vrot.lane.b32.xlu0 %v6307, 1
      %v6851 = vpop.permute.xlu0 %6850
      %6852 = vrot.lane.b32.xlu0 %v6309, 1
      %v6853 = vpop.permute.xlu0 %6852
      %6854 = vrot.lane.b32.xlu0 %v6311, 1
      %v6855 = vpop.permute.xlu0 %6854
      %6856 = vrot.lane.b32.xlu0 %v6313, 1
      %v6857 = vpop.permute.xlu0 %6856
      %v6858 = vsel %vm907, %v6827, %v6843
      %v6859 = vsel %vm907, %v6829, %v6845
      %v6860 = vsel %vm907, %v6831, %v6847
      %v6861 = vsel %vm907, %v6833, %v6849
      %v6862 = vsel %vm907, %v6835, %v6851
      %v6863 = vsel %vm907, %v6837, %v6853
      %v6864 = vsel %vm907, %v6839, %v6855
      %v6865 = vsel %vm907, %v6841, %v6857
      %v6866 = vsel %vm907, %v6843, %v6827
      %v6867 = vsel %vm907, %v6845, %v6829
      %v6868 = vsel %vm907, %v6847, %v6831
      %v6869 = vsel %vm907, %v6849, %v6833
      %v6870 = vsel %vm907, %v6851, %v6835
      %v6871 = vsel %vm907, %v6853, %v6837
      %v6872 = vsel %vm907, %v6855, %v6839
      %v6873 = vsel %vm907, %v6857, %v6841
      %v6874 = vpack.c.bf16 %v6867, %v6866
      %v6875 = vpack.c.bf16 %v6859, %v6858
      %v6876 = vpack.c.bf16 %v6869, %v6868
      %v6877 = vpack.c.bf16 %v6861, %v6860
      %v6878 = vpack.c.bf16 %v6871, %v6870
      %v6879 = vpack.c.bf16 %v6863, %v6862
      %v6880 = vpack.c.bf16 %v6873, %v6872
      %v6881 = vpack.c.bf16 %v6865, %v6864
      %s6882 = scalar_lea.vmem %s12, 48
      %v6883 = vld [vmem:[%s6882] sm:$0xf]
      %v6884 = vld [vmem:[%s6882 + $0x4] sm:$0xf]
      %v6885 = vld [vmem:[%s6882 + $0x8] sm:$0xf]
      %v6886 = vld [vmem:[%s6882 + $0xc] sm:$0xf]
      %v6891 = vunpack.c.l.b16 %v6883
      %v6892 = vunpack.c.l.b16 %v6884
      %v6893 = vunpack.c.l.b16 %v6885
      %v6894 = vunpack.c.l.b16 %v6886
      %v6895 = vpack.c.b16 %v6892, %v6891
      %v6896 = vpack.c.b16 %v6894, %v6893
      %v6898 = vsel %vm6397, %v6895, 0
      %v6901 = vsel %vm6397, %v6896, 0
      %6903 = vmatprep.subr.bf16.mxu0 %v6875
      %6904 = vmatpush1.bf16.msra.mxu0 %v6874
      %6905 = vmatprep.subr.bf16.mxu0 %v6877
      %6906 = vmatpush1.bf16.msra.mxu0 %v6876
      %6907 = vmatprep.subr.bf16.mxu0 %v6879
      %6908 = vmatpush1.bf16.msra.mxu0 %v6878
      %6909 = vmatprep.subr.bf16.mxu0 %v6881
      %6910 = vmatpush1.bf16.msra.mxu0 %v6880
      %6911 = vmatprep.subr.bf16.mxu0 0
      %6912 = vmatpush1.bf16.msra.mxu0 0
      %6913 = vmatprep.subr.bf16.mxu0 0
      %6914 = vmatpush1.bf16.msra.mxu0 0
      %6915 = vmatprep.subr.bf16.mxu0 0
      %6916 = vmatpush1.bf16.msra.mxu0 0
      %6917 = vmatprep.subr.bf16.mxu0 0
      %6918 = vmatpush1.bf16.msra.mxu0 0
      %6919 = vmatprep.subr.bf16.mxu0 0
      %6920 = vmatpush1.bf16.msra.mxu0 0
      %6921 = vmatprep.subr.bf16.mxu0 0
      %6922 = vmatpush1.bf16.msra.mxu0 0
      %6923 = vmatprep.subr.bf16.mxu0 0
      %6924 = vmatpush1.bf16.msra.mxu0 0
      %6925 = vmatprep.subr.bf16.mxu0 0
      %6926 = vmatpush1.bf16.msra.mxu0 0
      %6927 = vmatprep.subr.bf16.mxu0 0
      %6928 = vmatpush1.bf16.msra.mxu0 0
      %6929 = vmatprep.subr.bf16.mxu0 0
      %6930 = vmatpush1.bf16.msra.mxu0 0
      %6931 = vmatprep.subr.bf16.mxu0 0
      %6932 = vmatpush1.bf16.msra.mxu0 0
      %6933 = vmatprep.subr.bf16.mxu0 0
      %6934 = vmatpush1.bf16.msra.mxu0 0
      %6935 = vmatprep.mubr.bf16.mxu0 0
      %6936 = vmatmul.mubr.bf16.gmra.mrb[0].mxu0 %v6898
      %v6937 = vpop.f32.mrb[0].mxu0
      %v6938 = vadd.f32 0.0, %v6937
      %v6939 = vpop.f32.mrb[0].mxu0
      %v6940 = vadd.f32 0.0, %v6939
      %v6941 = vpop.f32.mrb[0].mxu0
      %v6942 = vadd.f32 0.0, %v6941
      %v6943 = vpop.f32.mrb[0].mxu0
      %v6944 = vadd.f32 0.0, %v6943
      %6945 = vmatprep.mubr.bf16.mxu0 0
      %6946 = vmatmul.mubr.bf16.gmra.mrb[0].mxu0 %v6901
      %v6947 = vpop.f32.mrb[0].mxu0
      %v6948 = vadd.f32 0.0, %v6947
      %v6949 = vpop.f32.mrb[0].mxu0
      %v6950 = vadd.f32 0.0, %v6949
      %v6951 = vpop.f32.mrb[0].mxu0
      %v6952 = vadd.f32 0.0, %v6951
      %v6953 = vpop.f32.mrb[0].mxu0
      %v6954 = vadd.f32 0.0, %v6953
      %6955 = vdwg.mxu0
      %v6956 = vmul.f32 %v998, %v6938
      %v6957 = vmul.f32 %v1002, %v6940
      %v6958 = vmul.f32 %v998, %v6942
      %v6959 = vmul.f32 %v1002, %v6944
      %v6960 = vmul.f32 %v998, %v6948
      %v6961 = vmul.f32 %v1002, %v6950
      %v6962 = vmul.f32 %v998, %v6952
      %v6963 = vmul.f32 %v1002, %v6954
      %v6964 = vadd.f32 %v6818, %v6956
      %v6965 = vadd.f32 %v6819, %v6957
      %v6966 = vadd.f32 %v6820, %v6958
      %v6967 = vadd.f32 %v6821, %v6959
      %v6968 = vadd.f32 %v6822, %v6960
      %v6969 = vadd.f32 %v6823, %v6961
      %v6970 = vadd.f32 %v6824, %v6962
      %v6971 = vadd.f32 %v6825, %v6963
      %6972 = vrot.lane.b32.xlu0 %v6298, 127
      %v6973 = vpop.permute.xlu0 %6972
      %6974 = vrot.lane.b32.xlu0 %v6300, 127
      %v6975 = vpop.permute.xlu0 %6974
      %6976 = vrot.lane.b32.xlu0 %v6302, 127
      %v6977 = vpop.permute.xlu0 %6976
      %6978 = vrot.lane.b32.xlu0 %v6304, 127
      %v6979 = vpop.permute.xlu0 %6978
      %6980 = vrot.lane.b32.xlu0 %v6306, 127
      %v6981 = vpop.permute.xlu0 %6980
      %6982 = vrot.lane.b32.xlu0 %v6308, 127
      %v6983 = vpop.permute.xlu0 %6982
      %6984 = vrot.lane.b32.xlu0 %v6310, 127
      %v6985 = vpop.permute.xlu0 %6984
      %6986 = vrot.lane.b32.xlu0 %v6312, 127
      %v6987 = vpop.permute.xlu0 %6986
      %6988 = vrot.lane.b32.xlu0 %v6299, 127
      %v6989 = vpop.permute.xlu0 %6988
      %6990 = vrot.lane.b32.xlu0 %v6301, 127
      %v6991 = vpop.permute.xlu0 %6990
      %6992 = vrot.lane.b32.xlu0 %v6303, 127
      %v6993 = vpop.permute.xlu0 %6992
      %6994 = vrot.lane.b32.xlu0 %v6305, 127
      %v6995 = vpop.permute.xlu0 %6994
      %6996 = vrot.lane.b32.xlu0 %v6307, 127
      %v6997 = vpop.permute.xlu0 %6996
      %6998 = vrot.lane.b32.xlu0 %v6309, 127
      %v6999 = vpop.permute.xlu0 %6998
      %7000 = vrot.lane.b32.xlu0 %v6311, 127
      %v7001 = vpop.permute.xlu0 %7000
      %7002 = vrot.lane.b32.xlu0 %v6313, 127
      %v7003 = vpop.permute.xlu0 %7002
      %v7004 = vsel %vm1025, %v6973, %v6989
      %v7005 = vsel %vm1025, %v6975, %v6991
      %v7006 = vsel %vm1025, %v6977, %v6993
      %v7007 = vsel %vm1025, %v6979, %v6995
      %v7008 = vsel %vm1025, %v6981, %v6997
      %v7009 = vsel %vm1025, %v6983, %v6999
      %v7010 = vsel %vm1025, %v6985, %v7001
      %v7011 = vsel %vm1025, %v6987, %v7003
      %v7012 = vsel %vm1025, %v6989, %v6973
      %v7013 = vsel %vm1025, %v6991, %v6975
      %v7014 = vsel %vm1025, %v6993, %v6977
      %v7015 = vsel %vm1025, %v6995, %v6979
      %v7016 = vsel %vm1025, %v6997, %v6981
      %v7017 = vsel %vm1025, %v6999, %v6983
      %v7018 = vsel %vm1025, %v7001, %v6985
      %v7019 = vsel %vm1025, %v7003, %v6987
      %v7020 = vpack.c.bf16 %v7005, %v7004
      %v7021 = vpack.c.bf16 %v7013, %v7012
      %v7022 = vpack.c.bf16 %v7007, %v7006
      %v7023 = vpack.c.bf16 %v7015, %v7014
      %v7024 = vpack.c.bf16 %v7009, %v7008
      %v7025 = vpack.c.bf16 %v7017, %v7016
      %v7026 = vpack.c.bf16 %v7011, %v7010
      %v7027 = vpack.c.bf16 %v7019, %v7018
      %s7028 = scalar_lea.vmem %s12, 80
      %v7029 = vld [vmem:[%s7028] sm:$0xf]
      %v7030 = vld [vmem:[%s7028 + $0x4] sm:$0xf]
      %v7031 = vld [vmem:[%s7028 + $0x8] sm:$0xf]
      %v7032 = vld [vmem:[%s7028 + $0xc] sm:$0xf]
      %v7037 = vunpack.c.l.b16 %v7029
      %v7038 = vunpack.c.l.b16 %v7030
      %v7039 = vunpack.c.l.b16 %v7031
      %v7040 = vunpack.c.l.b16 %v7032
      %v7041 = vpack.c.b16 %v7038, %v7037
      %v7042 = vpack.c.b16 %v7040, %v7039
      %v7044 = vsel %vm6397, %v7041, 0
      %v7047 = vsel %vm6397, %v7042, 0
      %7049 = vmatprep.subr.bf16.mxu0 %v7021
      %7050 = vmatpush1.bf16.msra.mxu0 %v7020
      %7051 = vmatprep.subr.bf16.mxu0 %v7023
      %7052 = vmatpush1.bf16.msra.mxu0 %v7022
      %7053 = vmatprep.subr.bf16.mxu0 %v7025
      %7054 = vmatpush1.bf16.msra.mxu0 %v7024
      %7055 = vmatprep.subr.bf16.mxu0 %v7027
      %7056 = vmatpush1.bf16.msra.mxu0 %v7026
      %7057 = vmatprep.subr.bf16.mxu0 0
      %7058 = vmatpush1.bf16.msra.mxu0 0
      %7059 = vmatprep.subr.bf16.mxu0 0
      %7060 = vmatpush1.bf16.msra.mxu0 0
      %7061 = vmatprep.subr.bf16.mxu0 0
      %7062 = vmatpush1.bf16.msra.mxu0 0
      %7063 = vmatprep.subr.bf16.mxu0 0
      %7064 = vmatpush1.bf16.msra.mxu0 0
      %7065 = vmatprep.subr.bf16.mxu0 0
      %7066 = vmatpush1.bf16.msra.mxu0 0
      %7067 = vmatprep.subr.bf16.mxu0 0
      %7068 = vmatpush1.bf16.msra.mxu0 0
      %7069 = vmatprep.subr.bf16.mxu0 0
      %7070 = vmatpush1.bf16.msra.mxu0 0
      %7071 = vmatprep.subr.bf16.mxu0 0
      %7072 = vmatpush1.bf16.msra.mxu0 0
      %7073 = vmatprep.subr.bf16.mxu0 0
      %7074 = vmatpush1.bf16.msra.mxu0 0
      %7075 = vmatprep.subr.bf16.mxu0 0
      %7076 = vmatpush1.bf16.msra.mxu0 0
      %7077 = vmatprep.subr.bf16.mxu0 0
      %7078 = vmatpush1.bf16.msra.mxu0 0
      %7079 = vmatprep.subr.bf16.mxu0 0
      %7080 = vmatpush1.bf16.msra.mxu0 0
      %7081 = vmatprep.mubr.bf16.mxu0 0
      %7082 = vmatmul.mubr.bf16.gmra.mrb[0].mxu0 %v7044
      %v7083 = vpop.f32.mrb[0].mxu0
      %v7084 = vadd.f32 0.0, %v7083
      %v7085 = vpop.f32.mrb[0].mxu0
      %v7086 = vadd.f32 0.0, %v7085
      %v7087 = vpop.f32.mrb[0].mxu0
      %v7088 = vadd.f32 0.0, %v7087
      %v7089 = vpop.f32.mrb[0].mxu0
      %v7090 = vadd.f32 0.0, %v7089
      %7091 = vmatprep.mubr.bf16.mxu0 0
      %7092 = vmatmul.mubr.bf16.gmra.mrb[0].mxu0 %v7047
      %v7093 = vpop.f32.mrb[0].mxu0
      %v7094 = vadd.f32 0.0, %v7093
      %v7095 = vpop.f32.mrb[0].mxu0
      %v7096 = vadd.f32 0.0, %v7095
      %v7097 = vpop.f32.mrb[0].mxu0
      %v7098 = vadd.f32 0.0, %v7097
      %v7099 = vpop.f32.mrb[0].mxu0
      %v7100 = vadd.f32 0.0, %v7099
      %7101 = vdwg.mxu0
      %v7102 = vmul.f32 %v1116, %v7084
      %v7103 = vmul.f32 %v1120, %v7086
      %v7104 = vmul.f32 %v1116, %v7088
      %v7105 = vmul.f32 %v1120, %v7090
      %v7106 = vmul.f32 %v1116, %v7094
      %v7107 = vmul.f32 %v1120, %v7096
      %v7108 = vmul.f32 %v1116, %v7098
      %v7109 = vmul.f32 %v1120, %v7100
      %v7110 = vadd.f32 %v6964, %v7102
      %v7111 = vadd.f32 %v6965, %v7103
      %v7112 = vadd.f32 %v6966, %v7104
      %v7113 = vadd.f32 %v6967, %v7105
      %v7114 = vadd.f32 %v6968, %v7106
      %v7115 = vadd.f32 %v6969, %v7107
      %v7116 = vadd.f32 %v6970, %v7108
      %v7117 = vadd.f32 %v6971, %v7109
      %7118 = vrot.lane.b32.xlu0 %v6298, 113
      %v7119 = vpop.permute.xlu0 %7118
      %7120 = vrot.lane.b32.xlu0 %v6300, 113
      %v7121 = vpop.permute.xlu0 %7120
      %7122 = vrot.lane.b32.xlu0 %v6302, 113
      %v7123 = vpop.permute.xlu0 %7122
      %7124 = vrot.lane.b32.xlu0 %v6304, 113
      %v7125 = vpop.permute.xlu0 %7124
      %7126 = vrot.lane.b32.xlu0 %v6306, 113
      %v7127 = vpop.permute.xlu0 %7126
      %7128 = vrot.lane.b32.xlu0 %v6308, 113
      %v7129 = vpop.permute.xlu0 %7128
      %7130 = vrot.lane.b32.xlu0 %v6310, 113
      %v7131 = vpop.permute.xlu0 %7130
      %7132 = vrot.lane.b32.xlu0 %v6312, 113
      %v7133 = vpop.permute.xlu0 %7132
      %7134 = vrot.lane.b32.xlu0 %v6299, 113
      %v7135 = vpop.permute.xlu0 %7134
      %7136 = vrot.lane.b32.xlu0 %v6301, 113
      %v7137 = vpop.permute.xlu0 %7136
      %7138 = vrot.lane.b32.xlu0 %v6303, 113
      %v7139 = vpop.permute.xlu0 %7138
      %7140 = vrot.lane.b32.xlu0 %v6305, 113
      %v7141 = vpop.permute.xlu0 %7140
      %7142 = vrot.lane.b32.xlu0 %v6307, 113
      %v7143 = vpop.permute.xlu0 %7142
      %7144 = vrot.lane.b32.xlu0 %v6309, 113
      %v7145 = vpop.permute.xlu0 %7144
      %7146 = vrot.lane.b32.xlu0 %v6311, 113
      %v7147 = vpop.permute.xlu0 %7146
      %7148 = vrot.lane.b32.xlu0 %v6313, 113
      %v7149 = vpop.permute.xlu0 %7148
      %v7150 = vsel %vm1143, %v7119, %v7135
      %v7151 = vsel %vm1143, %v7121, %v7137
      %v7152 = vsel %vm1143, %v7123, %v7139
      %v7153 = vsel %vm1143, %v7125, %v7141
      %v7154 = vsel %vm1143, %v7127, %v7143
      %v7155 = vsel %vm1143, %v7129, %v7145
      %v7156 = vsel %vm1143, %v7131, %v7147
      %v7157 = vsel %vm1143, %v7133, %v7149
      %v7158 = vsel %vm1143, %v7135, %v7119
      %v7159 = vsel %vm1143, %v7137, %v7121
      %v7160 = vsel %vm1143, %v7139, %v7123
      %v7161 = vsel %vm1143, %v7141, %v7125
      %v7162 = vsel %vm1143, %v7143, %v7127
      %v7163 = vsel %vm1143, %v7145, %v7129
      %v7164 = vsel %vm1143, %v7147, %v7131
      %v7165 = vsel %vm1143, %v7149, %v7133
      %v7166 = vpack.c.bf16 %v7151, %v7150
      %v7167 = vpack.c.bf16 %v7159, %v7158
      %v7168 = vpack.c.bf16 %v7153, %v7152
      %v7169 = vpack.c.bf16 %v7161, %v7160
      %v7170 = vpack.c.bf16 %v7155, %v7154
      %v7171 = vpack.c.bf16 %v7163, %v7162
      %v7172 = vpack.c.bf16 %v7157, %v7156
      %v7173 = vpack.c.bf16 %v7165, %v7164
      %s7174 = scalar_lea.vmem %s12, 96
      %v7175 = vld [vmem:[%s7174] sm:$0xf]
      %v7176 = vld [vmem:[%s7174 + $0x4] sm:$0xf]
      %v7177 = vld [vmem:[%s7174 + $0x8] sm:$0xf]
      %v7178 = vld [vmem:[%s7174 + $0xc] sm:$0xf]
      %v7183 = vunpack.c.l.b16 %v7175
      %v7184 = vunpack.c.l.b16 %v7176
      %v7185 = vunpack.c.l.b16 %v7177
      %v7186 = vunpack.c.l.b16 %v7178
      %v7187 = vpack.c.b16 %v7184, %v7183
      %v7188 = vpack.c.b16 %v7186, %v7185
      %v7190 = vsel %vm6397, %v7187, 0
      %v7193 = vsel %vm6397, %v7188, 0
      %7195 = vmatprep.subr.bf16.mxu0 %v7167
      %7196 = vmatpush1.bf16.msra.mxu0 %v7166
      %7197 = vmatprep.subr.bf16.mxu0 %v7169
      %7198 = vmatpush1.bf16.msra.mxu0 %v7168
      %7199 = vmatprep.subr.bf16.mxu0 %v7171
      %7200 = vmatpush1.bf16.msra.mxu0 %v7170
      %7201 = vmatprep.subr.bf16.mxu0 %v7173
      %7202 = vmatpush1.bf16.msra.mxu0 %v7172
      %7203 = vmatprep.subr.bf16.mxu0 0
      %7204 = vmatpush1.bf16.msra.mxu0 0
      %7205 = vmatprep.subr.bf16.mxu0 0
      %7206 = vmatpush1.bf16.msra.mxu0 0
      %7207 = vmatprep.subr.bf16.mxu0 0
      %7208 = vmatpush1.bf16.msra.mxu0 0
      %7209 = vmatprep.subr.bf16.mxu0 0
      %7210 = vmatpush1.bf16.msra.mxu0 0
      %7211 = vmatprep.subr.bf16.mxu0 0
      %7212 = vmatpush1.bf16.msra.mxu0 0
      %7213 = vmatprep.subr.bf16.mxu0 0
      %7214 = vmatpush1.bf16.msra.mxu0 0
      %7215 = vmatprep.subr.bf16.mxu0 0
      %7216 = vmatpush1.bf16.msra.mxu0 0
      %7217 = vmatprep.subr.bf16.mxu0 0
      %7218 = vmatpush1.bf16.msra.mxu0 0
      %7219 = vmatprep.subr.bf16.mxu0 0
      %7220 = vmatpush1.bf16.msra.mxu0 0
      %7221 = vmatprep.subr.bf16.mxu0 0
      %7222 = vmatpush1.bf16.msra.mxu0 0
      %7223 = vmatprep.subr.bf16.mxu0 0
      %7224 = vmatpush1.bf16.msra.mxu0 0
      %7225 = vmatprep.subr.bf16.mxu0 0
      %7226 = vmatpush1.bf16.msra.mxu0 0
      %7227 = vmatprep.mubr.bf16.mxu0 0
      %7228 = vmatmul.mubr.bf16.gmra.mrb[0].mxu0 %v7190
      %v7229 = vpop.f32.mrb[0].mxu0
      %v7230 = vadd.f32 0.0, %v7229
      %v7231 = vpop.f32.mrb[0].mxu0
      %v7232 = vadd.f32 0.0, %v7231
      %v7233 = vpop.f32.mrb[0].mxu0
      %v7234 = vadd.f32 0.0, %v7233
      %v7235 = vpop.f32.mrb[0].mxu0
      %v7236 = vadd.f32 0.0, %v7235
      %7237 = vmatprep.mubr.bf16.mxu0 0
      %7238 = vmatmul.mubr.bf16.gmra.mrb[0].mxu0 %v7193
      %v7239 = vpop.f32.mrb[0].mxu0
      %v7240 = vadd.f32 0.0, %v7239
      %v7241 = vpop.f32.mrb[0].mxu0
      %v7242 = vadd.f32 0.0, %v7241
      %v7243 = vpop.f32.mrb[0].mxu0
      %v7244 = vadd.f32 0.0, %v7243
      %v7245 = vpop.f32.mrb[0].mxu0
      %v7246 = vadd.f32 0.0, %v7245
      %7247 = vdwg.mxu0
      %v7248 = vmul.f32 %v1234, %v7230
      %v7249 = vmul.f32 %v1238, %v7232
      %v7250 = vmul.f32 %v1234, %v7234
      %v7251 = vmul.f32 %v1238, %v7236
      %v7252 = vmul.f32 %v1234, %v7240
      %v7253 = vmul.f32 %v1238, %v7242
      %v7254 = vmul.f32 %v1234, %v7244
      %v7255 = vmul.f32 %v1238, %v7246
      %v7256 = vadd.f32 %v7110, %v7248
      %v7257 = vadd.f32 %v7111, %v7249
      %v7258 = vadd.f32 %v7112, %v7250
      %v7259 = vadd.f32 %v7113, %v7251
      %v7260 = vadd.f32 %v7114, %v7252
      %v7261 = vadd.f32 %v7115, %v7253
      %v7262 = vadd.f32 %v7116, %v7254
      %v7263 = vadd.f32 %v7117, %v7255
      %7264 = vrot.lane.b32.xlu0 %v6298, 112
      %v7265 = vpop.permute.xlu0 %7264
      %7266 = vrot.lane.b32.xlu0 %v6300, 112
      %v7267 = vpop.permute.xlu0 %7266
      %7268 = vrot.lane.b32.xlu0 %v6302, 112
      %v7269 = vpop.permute.xlu0 %7268
      %7270 = vrot.lane.b32.xlu0 %v6304, 112
      %v7271 = vpop.permute.xlu0 %7270
      %7272 = vrot.lane.b32.xlu0 %v6306, 112
      %v7273 = vpop.permute.xlu0 %7272
      %7274 = vrot.lane.b32.xlu0 %v6308, 112
      %v7275 = vpop.permute.xlu0 %7274
      %7276 = vrot.lane.b32.xlu0 %v6310, 112
      %v7277 = vpop.permute.xlu0 %7276
      %7278 = vrot.lane.b32.xlu0 %v6312, 112
      %v7279 = vpop.permute.xlu0 %7278
      %7280 = vrot.lane.b32.xlu0 %v6299, 112
      %v7281 = vpop.permute.xlu0 %7280
      %7282 = vrot.lane.b32.xlu0 %v6301, 112
      %v7283 = vpop.permute.xlu0 %7282
      %7284 = vrot.lane.b32.xlu0 %v6303, 112
      %v7285 = vpop.permute.xlu0 %7284
      %7286 = vrot.lane.b32.xlu0 %v6305, 112
      %v7287 = vpop.permute.xlu0 %7286
      %7288 = vrot.lane.b32.xlu0 %v6307, 112
      %v7289 = vpop.permute.xlu0 %7288
      %7290 = vrot.lane.b32.xlu0 %v6309, 112
      %v7291 = vpop.permute.xlu0 %7290
      %7292 = vrot.lane.b32.xlu0 %v6311, 112
      %v7293 = vpop.permute.xlu0 %7292
      %7294 = vrot.lane.b32.xlu0 %v6313, 112
      %v7295 = vpop.permute.xlu0 %7294
      %v7296 = vsel %vm1261, %v7265, %v7281
      %v7297 = vsel %vm1261, %v7267, %v7283
      %v7298 = vsel %vm1261, %v7269, %v7285
      %v7299 = vsel %vm1261, %v7271, %v7287
      %v7300 = vsel %vm1261, %v7273, %v7289
      %v7301 = vsel %vm1261, %v7275, %v7291
      %v7302 = vsel %vm1261, %v7277, %v7293
      %v7303 = vsel %vm1261, %v7279, %v7295
      %v7304 = vsel %vm1261, %v7281, %v7265
      %v7305 = vsel %vm1261, %v7283, %v7267
      %v7306 = vsel %vm1261, %v7285, %v7269
      %v7307 = vsel %vm1261, %v7287, %v7271
      %v7308 = vsel %vm1261, %v7289, %v7273
      %v7309 = vsel %vm1261, %v7291, %v7275
      %v7310 = vsel %vm1261, %v7293, %v7277
      %v7311 = vsel %vm1261, %v7295, %v7279
      %v7312 = vpack.c.bf16 %v7297, %v7296
      %v7313 = vpack.c.bf16 %v7305, %v7304
      %v7314 = vpack.c.bf16 %v7299, %v7298
      %v7315 = vpack.c.bf16 %v7307, %v7306
      %v7316 = vpack.c.bf16 %v7301, %v7300
      %v7317 = vpack.c.bf16 %v7309, %v7308
      %v7318 = vpack.c.bf16 %v7303, %v7302
      %v7319 = vpack.c.bf16 %v7311, %v7310
      %s7320 = scalar_lea.vmem %s12, 112
      %v7321 = vld [vmem:[%s7320] sm:$0xf]
      %v7322 = vld [vmem:[%s7320 + $0x4] sm:$0xf]
      %v7323 = vld [vmem:[%s7320 + $0x8] sm:$0xf]
      %v7324 = vld [vmem:[%s7320 + $0xc] sm:$0xf]
      %v7329 = vunpack.c.l.b16 %v7321
      %v7330 = vunpack.c.l.b16 %v7322
      %v7331 = vunpack.c.l.b16 %v7323
      %v7332 = vunpack.c.l.b16 %v7324
      %v7333 = vpack.c.b16 %v7330, %v7329
      %v7334 = vpack.c.b16 %v7332, %v7331
      %v7336 = vsel %vm6397, %v7333, 0
      %v7339 = vsel %vm6397, %v7334, 0
      %7341 = vmatprep.subr.bf16.mxu0 %v7313
      %7342 = vmatpush1.bf16.msra.mxu0 %v7312
      %7343 = vmatprep.subr.bf16.mxu0 %v7315
      %7344 = vmatpush1.bf16.msra.mxu0 %v7314
      %7345 = vmatprep.subr.bf16.mxu0 %v7317
      %7346 = vmatpush1.bf16.msra.mxu0 %v7316
      %7347 = vmatprep.subr.bf16.mxu0 %v7319
      %7348 = vmatpush1.bf16.msra.mxu0 %v7318
      %7349 = vmatprep.subr.bf16.mxu0 0
      %7350 = vmatpush1.bf16.msra.mxu0 0
      %7351 = vmatprep.subr.bf16.mxu0 0
      %7352 = vmatpush1.bf16.msra.mxu0 0
      %7353 = vmatprep.subr.bf16.mxu0 0
      %7354 = vmatpush1.bf16.msra.mxu0 0
      %7355 = vmatprep.subr.bf16.mxu0 0
      %7356 = vmatpush1.bf16.msra.mxu0 0
      %7357 = vmatprep.subr.bf16.mxu0 0
      %7358 = vmatpush1.bf16.msra.mxu0 0
      %7359 = vmatprep.subr.bf16.mxu0 0
      %7360 = vmatpush1.bf16.msra.mxu0 0
      %7361 = vmatprep.subr.bf16.mxu0 0
      %7362 = vmatpush1.bf16.msra.mxu0 0
      %7363 = vmatprep.subr.bf16.mxu0 0
      %7364 = vmatpush1.bf16.msra.mxu0 0
      %7365 = vmatprep.subr.bf16.mxu0 0
      %7366 = vmatpush1.bf16.msra.mxu0 0
      %7367 = vmatprep.subr.bf16.mxu0 0
      %7368 = vmatpush1.bf16.msra.mxu0 0
      %7369 = vmatprep.subr.bf16.mxu0 0
      %7370 = vmatpush1.bf16.msra.mxu0 0
      %7371 = vmatprep.subr.bf16.mxu0 0
      %7372 = vmatpush1.bf16.msra.mxu0 0
      %7373 = vmatprep.mubr.bf16.mxu0 0
      %7374 = vmatmul.mubr.bf16.gmra.mrb[0].mxu0 %v7336
      %v7375 = vpop.f32.mrb[0].mxu0
      %v7376 = vadd.f32 0.0, %v7375
      %v7377 = vpop.f32.mrb[0].mxu0
      %v7378 = vadd.f32 0.0, %v7377
      %v7379 = vpop.f32.mrb[0].mxu0
      %v7380 = vadd.f32 0.0, %v7379
      %v7381 = vpop.f32.mrb[0].mxu0
      %v7382 = vadd.f32 0.0, %v7381
      %7383 = vmatprep.mubr.bf16.mxu0 0
      %7384 = vmatmul.mubr.bf16.gmra.mrb[0].mxu0 %v7339
      %v7385 = vpop.f32.mrb[0].mxu0
      %v7386 = vadd.f32 0.0, %v7385
      %v7387 = vpop.f32.mrb[0].mxu0
      %v7388 = vadd.f32 0.0, %v7387
      %v7389 = vpop.f32.mrb[0].mxu0
      %v7390 = vadd.f32 0.0, %v7389
      %v7391 = vpop.f32.mrb[0].mxu0
      %v7392 = vadd.f32 0.0, %v7391
      %7393 = vdwg.mxu0
      %v7394 = vmul.f32 %v1352, %v7376
      %v7395 = vmul.f32 %v1356, %v7378
      %v7396 = vmul.f32 %v1352, %v7380
      %v7397 = vmul.f32 %v1356, %v7382
      %v7398 = vmul.f32 %v1352, %v7386
      %v7399 = vmul.f32 %v1356, %v7388
      %v7400 = vmul.f32 %v1352, %v7390
      %v7401 = vmul.f32 %v1356, %v7392
      %v7402 = vadd.f32 %v7256, %v7394
      %v7403 = vadd.f32 %v7257, %v7395
      %v7404 = vadd.f32 %v7258, %v7396
      %v7405 = vadd.f32 %v7259, %v7397
      %v7406 = vadd.f32 %v7260, %v7398
      %v7407 = vadd.f32 %v7261, %v7399
      %v7408 = vadd.f32 %v7262, %v7400
      %v7409 = vadd.f32 %v7263, %v7401
      %7410 = vrot.lane.b32.xlu0 %v6298, 111
      %v7411 = vpop.permute.xlu0 %7410
      %7412 = vrot.lane.b32.xlu0 %v6300, 111
      %v7413 = vpop.permute.xlu0 %7412
      %7414 = vrot.lane.b32.xlu0 %v6302, 111
      %v7415 = vpop.permute.xlu0 %7414
      %7416 = vrot.lane.b32.xlu0 %v6304, 111
      %v7417 = vpop.permute.xlu0 %7416
      %7418 = vrot.lane.b32.xlu0 %v6306, 111
      %v7419 = vpop.permute.xlu0 %7418
      %7420 = vrot.lane.b32.xlu0 %v6308, 111
      %v7421 = vpop.permute.xlu0 %7420
      %7422 = vrot.lane.b32.xlu0 %v6310, 111
      %v7423 = vpop.permute.xlu0 %7422
      %7424 = vrot.lane.b32.xlu0 %v6312, 111
      %v7425 = vpop.permute.xlu0 %7424
      %7426 = vrot.lane.b32.xlu0 %v6299, 111
      %v7427 = vpop.permute.xlu0 %7426
      %7428 = vrot.lane.b32.xlu0 %v6301, 111
      %v7429 = vpop.permute.xlu0 %7428
      %7430 = vrot.lane.b32.xlu0 %v6303, 111
      %v7431 = vpop.permute.xlu0 %7430
      %7432 = vrot.lane.b32.xlu0 %v6305, 111
      %v7433 = vpop.permute.xlu0 %7432
      %7434 = vrot.lane.b32.xlu0 %v6307, 111
      %v7435 = vpop.permute.xlu0 %7434
      %7436 = vrot.lane.b32.xlu0 %v6309, 111
      %v7437 = vpop.permute.xlu0 %7436
      %7438 = vrot.lane.b32.xlu0 %v6311, 111
      %v7439 = vpop.permute.xlu0 %7438
      %7440 = vrot.lane.b32.xlu0 %v6313, 111
      %v7441 = vpop.permute.xlu0 %7440
      %v7442 = vsel %vm1379, %v7411, %v7427
      %v7443 = vsel %vm1379, %v7413, %v7429
      %v7444 = vsel %vm1379, %v7415, %v7431
      %v7445 = vsel %vm1379, %v7417, %v7433
      %v7446 = vsel %vm1379, %v7419, %v7435
      %v7447 = vsel %vm1379, %v7421, %v7437
      %v7448 = vsel %vm1379, %v7423, %v7439
      %v7449 = vsel %vm1379, %v7425, %v7441
      %v7450 = vsel %vm1379, %v7427, %v7411
      %v7451 = vsel %vm1379, %v7429, %v7413
      %v7452 = vsel %vm1379, %v7431, %v7415
      %v7453 = vsel %vm1379, %v7433, %v7417
      %v7454 = vsel %vm1379, %v7435, %v7419
      %v7455 = vsel %vm1379, %v7437, %v7421
      %v7456 = vsel %vm1379, %v7439, %v7423
      %v7457 = vsel %vm1379, %v7441, %v7425
      %v7458 = vpack.c.bf16 %v7443, %v7442
      %v7459 = vpack.c.bf16 %v7451, %v7450
      %v7460 = vpack.c.bf16 %v7445, %v7444
      %v7461 = vpack.c.bf16 %v7453, %v7452
      %v7462 = vpack.c.bf16 %v7447, %v7446
      %v7463 = vpack.c.bf16 %v7455, %v7454
      %v7464 = vpack.c.bf16 %v7449, %v7448
      %v7465 = vpack.c.bf16 %v7457, %v7456
      %s7466 = scalar_lea.vmem %s12, 128
      %v7467 = vld [vmem:[%s7466] sm:$0xf]
      %v7468 = vld [vmem:[%s7466 + $0x4] sm:$0xf]
      %v7469 = vld [vmem:[%s7466 + $0x8] sm:$0xf]
      %v7470 = vld [vmem:[%s7466 + $0xc] sm:$0xf]
      %v7475 = vunpack.c.l.b16 %v7467
      %v7476 = vunpack.c.l.b16 %v7468
      %v7477 = vunpack.c.l.b16 %v7469
      %v7478 = vunpack.c.l.b16 %v7470
      %v7479 = vpack.c.b16 %v7476, %v7475
      %v7480 = vpack.c.b16 %v7478, %v7477
      %v7482 = vsel %vm6397, %v7479, 0
      %v7485 = vsel %vm6397, %v7480, 0
      %7487 = vmatprep.subr.bf16.mxu0 %v7459
      %7488 = vmatpush1.bf16.msra.mxu0 %v7458
      %7489 = vmatprep.subr.bf16.mxu0 %v7461
      %7490 = vmatpush1.bf16.msra.mxu0 %v7460
      %7491 = vmatprep.subr.bf16.mxu0 %v7463
      %7492 = vmatpush1.bf16.msra.mxu0 %v7462
      %7493 = vmatprep.subr.bf16.mxu0 %v7465
      %7494 = vmatpush1.bf16.msra.mxu0 %v7464
      %7495 = vmatprep.subr.bf16.mxu0 0
      %7496 = vmatpush1.bf16.msra.mxu0 0
      %7497 = vmatprep.subr.bf16.mxu0 0
      %7498 = vmatpush1.bf16.msra.mxu0 0
      %7499 = vmatprep.subr.bf16.mxu0 0
      %7500 = vmatpush1.bf16.msra.mxu0 0
      %7501 = vmatprep.subr.bf16.mxu0 0
      %7502 = vmatpush1.bf16.msra.mxu0 0
      %7503 = vmatprep.subr.bf16.mxu0 0
      %7504 = vmatpush1.bf16.msra.mxu0 0
      %7505 = vmatprep.subr.bf16.mxu0 0
      %7506 = vmatpush1.bf16.msra.mxu0 0
      %7507 = vmatprep.subr.bf16.mxu0 0
      %7508 = vmatpush1.bf16.msra.mxu0 0
      %7509 = vmatprep.subr.bf16.mxu0 0
      %7510 = vmatpush1.bf16.msra.mxu0 0
      %7511 = vmatprep.subr.bf16.mxu0 0
      %7512 = vmatpush1.bf16.msra.mxu0 0
      %7513 = vmatprep.subr.bf16.mxu0 0
      %7514 = vmatpush1.bf16.msra.mxu0 0
      %7515 = vmatprep.subr.bf16.mxu0 0
      %7516 = vmatpush1.bf16.msra.mxu0 0
      %7517 = vmatprep.subr.bf16.mxu0 0
      %7518 = vmatpush1.bf16.msra.mxu0 0
      %7519 = vmatprep.mubr.bf16.mxu0 0
      %7520 = vmatmul.mubr.bf16.gmra.mrb[0].mxu0 %v7482
      %v7521 = vpop.f32.mrb[0].mxu0
      %v7522 = vadd.f32 0.0, %v7521
      %v7523 = vpop.f32.mrb[0].mxu0
      %v7524 = vadd.f32 0.0, %v7523
      %v7525 = vpop.f32.mrb[0].mxu0
      %v7526 = vadd.f32 0.0, %v7525
      %v7527 = vpop.f32.mrb[0].mxu0
      %v7528 = vadd.f32 0.0, %v7527
      %7529 = vmatprep.mubr.bf16.mxu0 0
      %7530 = vmatmul.mubr.bf16.gmra.mrb[0].mxu0 %v7485
      %v7531 = vpop.f32.mrb[0].mxu0
      %v7532 = vadd.f32 0.0, %v7531
      %v7533 = vpop.f32.mrb[0].mxu0
      %v7534 = vadd.f32 0.0, %v7533
      %v7535 = vpop.f32.mrb[0].mxu0
      %v7536 = vadd.f32 0.0, %v7535
      %v7537 = vpop.f32.mrb[0].mxu0
      %v7538 = vadd.f32 0.0, %v7537
      %7539 = vdwg.mxu0
      %v7540 = vmul.f32 %v1470, %v7522
      %v7541 = vmul.f32 %v1474, %v7524
      %v7542 = vmul.f32 %v1470, %v7526
      %v7543 = vmul.f32 %v1474, %v7528
      %v7544 = vmul.f32 %v1470, %v7532
      %v7545 = vmul.f32 %v1474, %v7534
      %v7546 = vmul.f32 %v1470, %v7536
      %v7547 = vmul.f32 %v1474, %v7538
      %v7548 = vadd.f32 %v7402, %v7540
      %v7549 = vadd.f32 %v7403, %v7541
      %v7550 = vadd.f32 %v7404, %v7542
      %v7551 = vadd.f32 %v7405, %v7543
      %v7552 = vadd.f32 %v7406, %v7544
      %v7553 = vadd.f32 %v7407, %v7545
      %v7554 = vadd.f32 %v7408, %v7546
      %v7555 = vadd.f32 %v7409, %v7547
      %v7556 = vld [vmem:[%s13] sm:$0xff]
      %v7557 = vld [vmem:[%s13 + $0x8] sm:$0xff]
      %v7558 = vld [vmem:[%s13 + $0x10] sm:$0xff]
      %v7559 = vld [vmem:[%s13 + $0x18] sm:$0xff]
      %7561 = vset.pattern.permute.xlu0 0
      %7562 = vperm.xlu0 %7561, %v7556
      %v7563 = vpop.permute.xlu0 %7562
      %7566 = vset.pattern.permute.xlu0 0
      %7567 = vperm.xlu0 %7566, %v7557
      %v7568 = vpop.permute.xlu0 %7567
      %7571 = vset.pattern.permute.xlu0 0
      %7572 = vperm.xlu0 %7571, %v7558
      %v7573 = vpop.permute.xlu0 %7572
      %7576 = vset.pattern.permute.xlu0 0
      %7577 = vperm.xlu0 %7576, %v7559
      %v7578 = vpop.permute.xlu0 %7577
      %v7580 = vadd.f32 %v7548, %v7563
      %v7581 = vadd.f32 %v7549, %v7563
      %v7582 = vadd.f32 %v7550, %v7568
      %v7583 = vadd.f32 %v7551, %v7568
      %v7584 = vadd.f32 %v7552, %v7573
      %v7585 = vadd.f32 %v7553, %v7573
      %v7586 = vadd.f32 %v7554, %v7578
      %v7587 = vadd.f32 %v7555, %v7578
      %v7588 = vmul.f32 %v7580, 0.1
      %v7589 = vmul.f32 %v7581, 0.1
      %v7590 = vmul.f32 %v7582, 0.1
      %v7591 = vmul.f32 %v7583, 0.1
      %v7592 = vmul.f32 %v7584, 0.1
      %v7593 = vmul.f32 %v7585, 0.1
      %v7594 = vmul.f32 %v7586, 0.1
      %v7595 = vmul.f32 %v7587, 0.1
      %v7596 = vmax.f32 %v7580, %v7588
      %v7597 = vmax.f32 %v7581, %v7589
      %v7598 = vmax.f32 %v7582, %v7590
      %v7599 = vmax.f32 %v7583, %v7591
      %v7600 = vmax.f32 %v7584, %v7592
      %v7601 = vmax.f32 %v7585, %v7593
      %v7602 = vmax.f32 %v7586, %v7594
      %v7603 = vmax.f32 %v7587, %v7595
      %7604 = vst [vmem:[%s467] sm:$0xff] %v7596
      %7605 = vst [vmem:[%s467 + $0x8] sm:$0xff] %v7597
      %7606 = vst [vmem:[%s467 + $0x10] sm:$0xff] %v7598
      %7607 = vst [vmem:[%s467 + $0x18] sm:$0xff] %v7599
      %7608 = vst [vmem:[%s467 + $0x20] sm:$0xff] %v7600
      %7609 = vst [vmem:[%s467 + $0x28] sm:$0xff] %v7601
      %7610 = vst [vmem:[%s467 + $0x30] sm:$0xff] %v7602
      %7611 = vst [vmem:[%s467 + $0x38] sm:$0xff] %v7603
      %p7612 = scmp.lt.s32.totalorder %s25, 1
      %s7613 = scalar_select %p7612, %s25, 1
      %s7614 = smul.addr %s7613, 8
      %s7615 = smul.addr %s7614, 8
      %s7616 = scalar_lea.vmem %s14, %s7615
      // Predicated region
      $region77: #{decoder_forward.1} parent=75 // pred_check
        %p7617 = pneg %p342
      $region78: #{decoder_forward.1} parent=75 // pred_check_branch
        %7619 = sbr.rel (%p7617) target = $region80
      $region79: #{decoder_forward.1} parent=75 // pred_region
        _
      $region80: #{decoder_forward.1} parent=75 // pred_fallthru
        _
    $region76: #{decoder_forward.1} parent=5 // pred_fallthru
      _
    %p7620 = scmp.le.s32.totalorder 2, %s20
    // Predicated region
    $region81: #{decoder_forward.1} parent=5 // pred_check
      %p7621 = pneg %p7620
    $region82: #{decoder_forward.1} parent=5 // pred_check_branch
      %7623 = sbr.rel (%p7621) target = $region84
    $region83: #{decoder_forward.1} parent=5 // pred_region
      %s7624 = ssub.s32 %s20, 2
      // Predicated region
      $region85: #{decoder_forward.1} parent=83 // pred_check
        %p7625 = pneg %p348
      $region86: #{decoder_forward.1} parent=83 // pred_check_branch
        %7627 = sbr.rel (%p7625) target = $region88
      $region87: #{decoder_forward.1} parent=83 // pred_region
        %p7628 = scmp.lt.s32.totalorder %s26, 1
        %s7629 = scalar_select %p7628, %s26, 1
        %s7630 = smul.addr %s7629, 8
        %s7631 = smul.addr %s7630, 8
        %s7632 = scalar_lea.vmem %s14, %s7631
      $region88: #{decoder_forward.1} parent=83 // pred_fallthru
        _
    $region84: #{decoder_forward.1} parent=5 // pred_fallthru
      _
  $region6: #{decoder_forward.1} parent=0 // loop_footer
    %s24 = sadd.s32 1, %s20
  $region7: #{decoder_forward.1} parent=0 // loop_footer_branch
    %19 = sbr.rel target = $region3
  $region8: #{decoder_forward.1} parent=0 // loop_exit
    _

</llo_original>
